<compile_context>
chip_gen: v7x
topology: tpu7x:2x2x1
jax: 0.10.0
libtpu: 0.0.40
codegen_flags: <defaults>
</compile_context>

<pallas_src>
import numpy as np
import jax
import jax.numpy as jnp
from jax.experimental import pallas as pl
from jax.experimental.pallas import tpu as pltpu


_ACC2_BUDGET = 6 * 1024 * 1024     # per-chunk f32 conv2 accumulator budget
_MAX_CHUNK_ROWS = 32               # amortizes ~0.35us/step without blowing VMEM
_SLACK_ROWS = 8                    # in-bounds slack for the shifted tap slices


def _vmem_limit_bytes():
    # Generation-aware scoped-VMEM limit: half of physical VMEM, capped.
    # (v5e/v6e: 128 MiB physical -> 64 MiB; v7x: 64 MiB physical -> 32 MiB.)
    try:
        cap = pltpu.get_tpu_info().vmem_capacity_bytes
    except Exception:
        cap = 64 * 1024 * 1024
    return int(min(cap // 2, 96 * 1024 * 1024))


def _pick_row_chunk(H, W, c_out):
    """Largest divisor of H (<= _MAX_CHUNK_ROWS) whose conv2 accumulator fits."""
    for th in range(min(H, _MAX_CHUNK_ROWS), 0, -1):
        if H % th == 0 and th * (W + 4) * c_out * 4 <= _ACC2_BUDGET:
            return th
    return 1


def _build_masks(H, W, th):
    """0/1 keep-masks for the width-(W+4) flattened layout (trace-time constants)."""
    wp = W + 4
    r = np.arange(H + 2)[:, None]
    c = np.arange(wp)[None, :]
    # conv1 extended output: keep only real positions (zero the conv-pad ring +
    # the two junk columns of the wide flattening).
    m1 = ((r >= 1) & (r <= H) & (c >= 1) & (c <= W)).astype(np.float32)
    m1 = m1.reshape((H + 2) * wp, 1)
    # conv2 wide output: keep only the W real columns of each output row.
    m2 = np.broadcast_to(np.arange(wp)[None, :] < W, (th, wp)).astype(np.float32)
    m2 = m2.reshape(th * wp, 1)
    return jnp.asarray(m1), jnp.asarray(m2)


# --------------------------------------------------------------------------
# Fused kernel: conv1 -> conv2 -> MAC max pool -> L2N -> fc
# --------------------------------------------------------------------------
def _make_fused_kernel(wp, c_mid, rows1, rows2, rows1_alloc, n_chunks):
    def kernel(x_ref, m1_ref, m2_ref, w1_ref, b1_ref, w2_ref, b2_ref, wfc_ref,
               out_ref, h1w_ref, acc2_ref, pooled_ref):
        s = pl.program_id(1)

        @pl.when(s == 0)
        def _init():
            pooled_ref[...] = jnp.zeros_like(pooled_ref)      # ReLU output >= 0

        x_start = s * rows2         # first flat row of this chunk's padded input

        # ---- conv1: 9 shifted (rows1, Cin) @ (Cin, Cmid) bf16 matmuls, f32 acc
        acc1 = None
        for t in range(9):
            dh, dw = divmod(t, 3)
            lhs = x_ref[0, pl.ds(x_start + dh * wp + dw, rows1), :]
            part = jnp.dot(lhs.astype(jnp.bfloat16), w1_ref[t],
                           preferred_element_type=jnp.float32)
            acc1 = part if acc1 is None else acc1 + part
        h1 = jnp.maximum(acc1 + b1_ref[...], 0.0)
        h1 = h1 * m1_ref[pl.ds(s * rows2, rows1), :]          # zero the pad ring
        h1w_ref[pl.ds(0, rows1), :] = h1
        # zero the slack rows so junk (masked) conv2 taps never see NaN/Inf
        h1w_ref[pl.ds(rows1, rows1_alloc - rows1), :] = jnp.zeros(
            (rows1_alloc - rows1, c_mid), jnp.float32)

        # ---- conv2: 9 shifted (rows2, Cmid) @ (Cmid, Cout) bf16 matmuls ------
        for t in range(9):
            dh, dw = divmod(t, 3)
            lhs = h1w_ref[pl.ds(dh * wp + dw, rows2), :]
            part = jnp.dot(lhs.astype(jnp.bfloat16), w2_ref[t],
                           preferred_element_type=jnp.float32)
            if t == 0:
                acc2_ref[...] = part
            else:
                acc2_ref[...] += part

        # bias + ReLU, mask junk columns, fold into the running MAC max (XLU).
        h2 = jnp.maximum(acc2_ref[...] + b2_ref[...], 0.0) * m2_ref[...]
        pooled_ref[...] = jnp.maximum(pooled_ref[...],
                                      jnp.max(h2, axis=0, keepdims=True))

        # ---- epilogue on the last chunk: L2N + bias-free fc ------------------
        @pl.when(s == n_chunks - 1)
        def _finish():
            pooled = pooled_ref[...]                          # (1, Cout) f32
            nrm = jnp.sqrt(jnp.sum(pooled * pooled, axis=-1, keepdims=True))
            inv = pl.reciprocal(nrm + 1e-6, approx=True)      # EUP slot
            logits = jnp.dot(pooled * inv, wfc_ref[...],
                             preferred_element_type=jnp.float32)
            out_ref[...] = logits[None].astype(out_ref.dtype)

    return kernel


def camnet_forward(x_nchw, prep, row_chunk=None):
    """CamNet forward: fc(L2N(MAC(features(x)))), fully fused in one pallas_call."""
    B, c_in, H, W = x_nchw.shape
    c_mid = prep["w1"].shape[-1]
    c_out = prep["w2"].shape[-1]
    nc = prep["w_fc"].shape[-1]

    th = row_chunk if row_chunk is not None else _pick_row_chunk(H, W, c_out)
    if H % th != 0:
        raise ValueError(f"row_chunk {th} must divide H={H}")
    wp = W + 4
    rows1 = (th + 2) * wp            # conv1 extended chunk rows
    rows2 = th * wp                  # conv2 wide chunk rows
    rows1_alloc = rows1 + _SLACK_ROWS
    n_chunks = H // th

    # NCHW -> NHWC, 2-pixel halo (conv1 + conv2), flatten at width W+4 and add a
    # few zero slack rows so every shifted tap slice stays in bounds.
    x = jnp.transpose(x_nchw, (0, 2, 3, 1)).astype(jnp.float32)
    x = jnp.pad(x, ((0, 0), (2, 2), (2, 2), (0, 0)))
    x_flat = x.reshape(B, (H + 4) * wp, c_in)
    x_flat = jnp.pad(x_flat, ((0, 0), (0, _SLACK_ROWS), (0, 0)))
    r_in = x_flat.shape[1]

    m1, m2 = _build_masks(H, W, th)
    kernel = _make_fused_kernel(wp, c_mid, rows1, rows2, rows1_alloc, n_chunks)

    out = pl.pallas_call(
        kernel,
        out_shape=jax.ShapeDtypeStruct((B, 1, nc), x_nchw.dtype),
        grid=(B, n_chunks),                                   # reduction axis last
        in_specs=[
            pl.BlockSpec((1, r_in, c_in), lambda b, s: (b, 0, 0)),    # padded image, resident over s
            pl.BlockSpec((m1.shape[0], 1), lambda b, s: (0, 0)),      # conv1 pad-ring mask
            pl.BlockSpec((rows2, 1), lambda b, s: (0, 0)),            # conv2 junk-col mask
            pl.BlockSpec((9, c_in, c_mid), lambda b, s: (0, 0, 0)),   # w1 per tap (bf16)
            pl.BlockSpec((1, c_mid), lambda b, s: (0, 0)),            # b1
            pl.BlockSpec((9, c_mid, c_out), lambda b, s: (0, 0, 0)),  # w2 per tap (bf16)
            pl.BlockSpec((1, c_out), lambda b, s: (0, 0)),            # b2
            pl.BlockSpec((c_out, nc), lambda b, s: (0, 0)),           # fc weight (transposed)
        ],
        out_specs=pl.BlockSpec((1, 1, nc), lambda b, s: (b, 0, 0)),
        scratch_shapes=[
            pltpu.VMEM((rows1_alloc, c_mid), jnp.float32),            # conv1 chunk (padded layout)
            pltpu.VMEM((rows2, c_out), jnp.float32),                  # conv2 f32 accumulator
            pltpu.VMEM((1, c_out), jnp.float32),                      # running MAC max
        ],
        compiler_params=pltpu.CompilerParams(
            dimension_semantics=("parallel", "arbitrary"),
            vmem_limit_bytes=_vmem_limit_bytes()),
    )(x_flat, m1, m2, prep["w1"], prep["b1"], prep["w2"], prep["b2"], prep["w_fc"])
    return out.reshape(B, nc)


# --------------------------------------------------------------------------
# Parameters: PyTorch-layout init + one-time layout/dtype prep (outside jit)
# --------------------------------------------------------------------------
def init_params(key, c_in=4, c_mid=64, c_out=512, num_class=10):
    k1, k2, k3, k4, k5 = jax.random.split(key, 5)
    return {
        "w1": 0.05 * jax.random.normal(k1, (c_mid, c_in, 3, 3), jnp.float32),
        "b1": 0.01 * jax.random.normal(k2, (c_mid,), jnp.float32),
        "w2": 0.05 * jax.random.normal(k3, (c_out, c_mid, 3, 3), jnp.float32),
        "b2": 0.01 * jax.random.normal(k4, (c_out,), jnp.float32),
        # nn.Linear(512, num_class, bias=False): weight shape (num_class, 512)
        "w_fc": 0.05 * jax.random.normal(k5, (num_class, c_out), jnp.float32),
    }


def prepare_params(p):
    """Reshape/cast weights once, outside jit, to the layouts the kernel consumes."""
    c_mid, c_in = p["w1"].shape[0], p["w1"].shape[1]
    c_out = p["w2"].shape[0]
    # (O, I, kh, kw) -> (kh, kw, I, O) -> (9, I, O); bf16 feeds the MXU,
    # accumulation stays f32 inside the kernel.
    w1 = jnp.transpose(p["w1"], (2, 3, 1, 0)).reshape(9, c_in, c_mid)
    w2 = jnp.transpose(p["w2"], (2, 3, 1, 0)).reshape(9, c_mid, c_out)
    return {
        "w1": w1.astype(jnp.bfloat16),
        "b1": p["b1"].reshape(1, c_mid).astype(jnp.float32),
        "w2": w2.astype(jnp.bfloat16),
        "b2": p["b2"].reshape(1, c_out).astype(jnp.float32),
        "w_fc": jnp.transpose(p["w_fc"], (1, 0)).astype(jnp.float32),  # (512, nc)
    }


# --------------------------------------------------------------------------
# Pure-JAX reference (mirrors the kernel's bf16 MXU inputs / f32 accumulation)
# --------------------------------------------------------------------------
def camnet_reference(x_nchw, params):
    x = jnp.transpose(x_nchw, (0, 2, 3, 1)).astype(jnp.bfloat16)
    w1 = jnp.transpose(params["w1"], (2, 3, 1, 0)).astype(jnp.bfloat16)
    w2 = jnp.transpose(params["w2"], (2, 3, 1, 0)).astype(jnp.bfloat16)

    def conv3x3_relu(h, w, b):
        y = jax.lax.conv_general_dilated(
            h, w, window_strides=(1, 1), padding="SAME",
            dimension_numbers=("NHWC", "HWIO", "NHWC"),
            preferred_element_type=jnp.float32)
        return jnp.maximum(y + b, 0.0)

    h1 = conv3x3_relu(x, w1, params["b1"]).astype(jnp.bfloat16)
    h2 = conv3x3_relu(h1, w2, params["b2"])
    pooled = jnp.max(h2, axis=(1, 2))                          # MAC pool
    nrm = jnp.sqrt(jnp.sum(pooled * pooled, axis=-1, keepdims=True))
    normed = pooled / (nrm + 1e-6)                             # L2N, eps=1e-6
    return normed @ params["w_fc"].T                           # bias-free fc


if __name__ == "__main__":
    key = jax.random.PRNGKey(0)
    k_x, k_p = jax.random.split(key)

    B, C, H, W = 2, 4, 16, 16
    num_class = 10
    x = jax.random.normal(k_x, (B, C, H, W), jnp.float32)      # NCHW like PyTorch
    params = init_params(k_p, c_in=C, num_class=num_class)
    prep = prepare_params(params)                              # one-time, outside jit

    fwd = jax.jit(camnet_forward, static_argnames=("row_chunk",))
    out = fwd(x, prep, row_chunk=8)   # 2 spatial chunks: exercises the running-max path
    jax.block_until_ready(out)

    ref = jax.jit(camnet_reference)(x, params)
    assert out.shape == (B, num_class), out.shape
    assert bool(jnp.all(jnp.isfinite(out)))
    # bf16 MXU inputs + EUP approximate reciprocal => not bit-exact vs f32 torch.
    assert bool(jnp.allclose(out, ref, rtol=1e-2, atol=1e-2)), (out, ref)
    print("KERNEL_OK")
</pallas_src>

<mosaic_0001>
module attributes {stable_mosaic.version = 11 : i64} {
  func.func @kernel(%arg0: i32, %arg1: i32, %arg2: memref<1x408x4xf32, #tpu.memory_space<vmem>>, %arg3: memref<360x1xf32, #tpu.memory_space<vmem>>, %arg4: memref<160x1xf32, #tpu.memory_space<vmem>>, %arg5: memref<9x4x64xbf16, #tpu.memory_space<vmem>>, %arg6: memref<1x64xf32, #tpu.memory_space<vmem>>, %arg7: memref<9x64x512xbf16, #tpu.memory_space<vmem>>, %arg8: memref<1x512xf32, #tpu.memory_space<vmem>>, %arg9: memref<512x10xf32, #tpu.memory_space<vmem>>, %arg10: memref<1x1x10xf32, #tpu.memory_space<vmem>>, %arg11: memref<208x64xf32, #tpu.memory_space<vmem>>, %arg12: memref<160x512xf32, #tpu.memory_space<vmem>>, %arg13: memref<1x512xf32, #tpu.memory_space<vmem>>) attributes {dimension_semantics = [#tpu.dimension_semantics<parallel>, #tpu.dimension_semantics<arbitrary>], iteration_bounds = array<i64: 2, 2>, scalar_prefetch = 0 : i64, scratch_operands = 3 : i64, tpu.core_type = #tpu.core_type<tc>, window_params = [{transform_indices = @transform_0, window_bounds = array<i64: 1, 408, 4>}, {pipeline_mode = #tpu.pipeline_mode<synchronous>, transform_indices = @transform_1, window_bounds = array<i64: 360, 1>}, {pipeline_mode = #tpu.pipeline_mode<synchronous>, transform_indices = @transform_2, window_bounds = array<i64: 160, 1>}, {pipeline_mode = #tpu.pipeline_mode<synchronous>, transform_indices = @transform_3, window_bounds = array<i64: 9, 4, 64>}, {pipeline_mode = #tpu.pipeline_mode<synchronous>, transform_indices = @transform_4, window_bounds = array<i64: 1, 64>}, {pipeline_mode = #tpu.pipeline_mode<synchronous>, transform_indices = @transform_5, window_bounds = array<i64: 9, 64, 512>}, {pipeline_mode = #tpu.pipeline_mode<synchronous>, transform_indices = @transform_6, window_bounds = array<i64: 1, 512>}, {pipeline_mode = #tpu.pipeline_mode<synchronous>, transform_indices = @transform_7, window_bounds = array<i64: 512, 10>}, {transform_indices = @transform_8, window_bounds = array<i64: 1, 1, 10>}]} {
    %c0_i32 = arith.constant 0 : i32
    %0 = arith.cmpi eq, %arg1, %c0_i32 : i32
    %1 = arith.extui %0 : i1 to i32
    %c0_i32_0 = arith.constant 0 : i32
    %2 = arith.cmpi ne, %1, %c0_i32_0 : i32
    scf.if %2 {
      %cst_164 = arith.constant 0.000000e+00 : f32
      %193 = vector.broadcast %cst_164 : f32 to vector<1x512xf32>
      %c0_165 = arith.constant 0 : index
      %c0_166 = arith.constant 0 : index
      %194 = vector.load %arg13[%c0_165, %c0_166] : memref<1x512xf32, #tpu.memory_space<vmem>>, vector<1x512xf32>
      tpu.vector_store %arg13[%c0_165, %c0_166], %193 {strides = array<i32>} : memref<1x512xf32, #tpu.memory_space<vmem>>, vector<1x512xf32>,
    } else {
    }
    %c160_i32 = arith.constant 160 : i32
    %3 = arith.muli %arg1, %c160_i32 : i32
    %c0_i32_1 = arith.constant 0 : i32
    %4 = arith.addi %3, %c0_i32_1 : i32
    %c0_i32_2 = arith.constant 0 : i32
    %5 = arith.addi %4, %c0_i32_2 : i32
    %c0 = arith.constant 0 : index
    %6 = arith.index_cast %5 : i32 to index
    %c0_3 = arith.constant 0 : index
    %7 = vector.load %arg2[%c0, %6, %c0_3] : memref<1x408x4xf32, #tpu.memory_space<vmem>>, vector<1x200x4xf32>
    %8 = vector.shape_cast %7 : vector<1x200x4xf32> to vector<200x4xf32>
    %9 = arith.truncf %8 : vector<200x4xf32> to vector<200x4xbf16>
    %c0_4 = arith.constant 0 : index
    %c0_5 = arith.constant 0 : index
    %c0_6 = arith.constant 0 : index
    %10 = vector.load %arg5[%c0_4, %c0_5, %c0_6] : memref<9x4x64xbf16, #tpu.memory_space<vmem>>, vector<1x4x64xbf16>
    %11 = vector.shape_cast %10 : vector<1x4x64xbf16> to vector<4x64xbf16>
    %cst = arith.constant dense<0.000000e+00> : vector<200x64xf32>
    %12 = tpu.matmul %9, %11, %cst {dimension_numbers = #tpu.dot_dimension_numbers<[1], [0], [0], [1], [0, 0, 1, 1], [], []>} : vector<200x4xbf16>, vector<4x64xbf16>, vector<200x64xf32> -> vector<200x64xf32>
    %c0_i32_7 = arith.constant 0 : i32
    %13 = arith.addi %3, %c0_i32_7 : i32
    %c1_i32 = arith.constant 1 : i32
    %14 = arith.addi %13, %c1_i32 : i32
    %c0_8 = arith.constant 0 : index
    %15 = arith.index_cast %14 : i32 to index
    %c0_9 = arith.constant 0 : index
    %16 = vector.load %arg2[%c0_8, %15, %c0_9] : memref<1x408x4xf32, #tpu.memory_space<vmem>>, vector<1x200x4xf32>
    %17 = vector.shape_cast %16 : vector<1x200x4xf32> to vector<200x4xf32>
    %18 = arith.truncf %17 : vector<200x4xf32> to vector<200x4xbf16>
    %c1 = arith.constant 1 : index
    %c0_10 = arith.constant 0 : index
    %c0_11 = arith.constant 0 : index
    %19 = vector.load %arg5[%c1, %c0_10, %c0_11] : memref<9x4x64xbf16, #tpu.memory_space<vmem>>, vector<1x4x64xbf16>
    %20 = vector.shape_cast %19 : vector<1x4x64xbf16> to vector<4x64xbf16>
    %cst_12 = arith.constant dense<0.000000e+00> : vector<200x64xf32>
    %21 = tpu.matmul %18, %20, %cst_12 {dimension_numbers = #tpu.dot_dimension_numbers<[1], [0], [0], [1], [0, 0, 1, 1], [], []>} : vector<200x4xbf16>, vector<4x64xbf16>, vector<200x64xf32> -> vector<200x64xf32>
    %22 = arith.addf %12, %21 : vector<200x64xf32>
    %c0_i32_13 = arith.constant 0 : i32
    %23 = arith.addi %3, %c0_i32_13 : i32
    %c2_i32 = arith.constant 2 : i32
    %24 = arith.addi %23, %c2_i32 : i32
    %c0_14 = arith.constant 0 : index
    %25 = arith.index_cast %24 : i32 to index
    %c0_15 = arith.constant 0 : index
    %26 = vector.load %arg2[%c0_14, %25, %c0_15] : memref<1x408x4xf32, #tpu.memory_space<vmem>>, vector<1x200x4xf32>
    %27 = vector.shape_cast %26 : vector<1x200x4xf32> to vector<200x4xf32>
    %28 = arith.truncf %27 : vector<200x4xf32> to vector<200x4xbf16>
    %c2 = arith.constant 2 : index
    %c0_16 = arith.constant 0 : index
    %c0_17 = arith.constant 0 : index
    %29 = vector.load %arg5[%c2, %c0_16, %c0_17] : memref<9x4x64xbf16, #tpu.memory_space<vmem>>, vector<1x4x64xbf16>
    %30 = vector.shape_cast %29 : vector<1x4x64xbf16> to vector<4x64xbf16>
    %cst_18 = arith.constant dense<0.000000e+00> : vector<200x64xf32>
    %31 = tpu.matmul %28, %30, %cst_18 {dimension_numbers = #tpu.dot_dimension_numbers<[1], [0], [0], [1], [0, 0, 1, 1], [], []>} : vector<200x4xbf16>, vector<4x64xbf16>, vector<200x64xf32> -> vector<200x64xf32>
    %32 = arith.addf %22, %31 : vector<200x64xf32>
    %c20_i32 = arith.constant 20 : i32
    %33 = arith.addi %3, %c20_i32 : i32
    %c0_i32_19 = arith.constant 0 : i32
    %34 = arith.addi %33, %c0_i32_19 : i32
    %c0_20 = arith.constant 0 : index
    %35 = arith.index_cast %34 : i32 to index
    %c0_21 = arith.constant 0 : index
    %36 = vector.load %arg2[%c0_20, %35, %c0_21] : memref<1x408x4xf32, #tpu.memory_space<vmem>>, vector<1x200x4xf32>
    %37 = vector.shape_cast %36 : vector<1x200x4xf32> to vector<200x4xf32>
    %38 = arith.truncf %37 : vector<200x4xf32> to vector<200x4xbf16>
    %c3 = arith.constant 3 : index
    %c0_22 = arith.constant 0 : index
    %c0_23 = arith.constant 0 : index
    %39 = vector.load %arg5[%c3, %c0_22, %c0_23] : memref<9x4x64xbf16, #tpu.memory_space<vmem>>, vector<1x4x64xbf16>
    %40 = vector.shape_cast %39 : vector<1x4x64xbf16> to vector<4x64xbf16>
    %cst_24 = arith.constant dense<0.000000e+00> : vector<200x64xf32>
    %41 = tpu.matmul %38, %40, %cst_24 {dimension_numbers = #tpu.dot_dimension_numbers<[1], [0], [0], [1], [0, 0, 1, 1], [], []>} : vector<200x4xbf16>, vector<4x64xbf16>, vector<200x64xf32> -> vector<200x64xf32>
    %42 = arith.addf %32, %41 : vector<200x64xf32>
    %c20_i32_25 = arith.constant 20 : i32
    %43 = arith.addi %3, %c20_i32_25 : i32
    %c1_i32_26 = arith.constant 1 : i32
    %44 = arith.addi %43, %c1_i32_26 : i32
    %c0_27 = arith.constant 0 : index
    %45 = arith.index_cast %44 : i32 to index
    %c0_28 = arith.constant 0 : index
    %46 = vector.load %arg2[%c0_27, %45, %c0_28] : memref<1x408x4xf32, #tpu.memory_space<vmem>>, vector<1x200x4xf32>
    %47 = vector.shape_cast %46 : vector<1x200x4xf32> to vector<200x4xf32>
    %48 = arith.truncf %47 : vector<200x4xf32> to vector<200x4xbf16>
    %c4 = arith.constant 4 : index
    %c0_29 = arith.constant 0 : index
    %c0_30 = arith.constant 0 : index
    %49 = vector.load %arg5[%c4, %c0_29, %c0_30] : memref<9x4x64xbf16, #tpu.memory_space<vmem>>, vector<1x4x64xbf16>
    %50 = vector.shape_cast %49 : vector<1x4x64xbf16> to vector<4x64xbf16>
    %cst_31 = arith.constant dense<0.000000e+00> : vector<200x64xf32>
    %51 = tpu.matmul %48, %50, %cst_31 {dimension_numbers = #tpu.dot_dimension_numbers<[1], [0], [0], [1], [0, 0, 1, 1], [], []>} : vector<200x4xbf16>, vector<4x64xbf16>, vector<200x64xf32> -> vector<200x64xf32>
    %52 = arith.addf %42, %51 : vector<200x64xf32>
    %c20_i32_32 = arith.constant 20 : i32
    %53 = arith.addi %3, %c20_i32_32 : i32
    %c2_i32_33 = arith.constant 2 : i32
    %54 = arith.addi %53, %c2_i32_33 : i32
    %c0_34 = arith.constant 0 : index
    %55 = arith.index_cast %54 : i32 to index
    %c0_35 = arith.constant 0 : index
    %56 = vector.load %arg2[%c0_34, %55, %c0_35] : memref<1x408x4xf32, #tpu.memory_space<vmem>>, vector<1x200x4xf32>
    %57 = vector.shape_cast %56 : vector<1x200x4xf32> to vector<200x4xf32>
    %58 = arith.truncf %57 : vector<200x4xf32> to vector<200x4xbf16>
    %c5 = arith.constant 5 : index
    %c0_36 = arith.constant 0 : index
    %c0_37 = arith.constant 0 : index
    %59 = vector.load %arg5[%c5, %c0_36, %c0_37] : memref<9x4x64xbf16, #tpu.memory_space<vmem>>, vector<1x4x64xbf16>
    %60 = vector.shape_cast %59 : vector<1x4x64xbf16> to vector<4x64xbf16>
    %cst_38 = arith.constant dense<0.000000e+00> : vector<200x64xf32>
    %61 = tpu.matmul %58, %60, %cst_38 {dimension_numbers = #tpu.dot_dimension_numbers<[1], [0], [0], [1], [0, 0, 1, 1], [], []>} : vector<200x4xbf16>, vector<4x64xbf16>, vector<200x64xf32> -> vector<200x64xf32>
    %62 = arith.addf %52, %61 : vector<200x64xf32>
    %c40_i32 = arith.constant 40 : i32
    %63 = arith.addi %3, %c40_i32 : i32
    %c0_i32_39 = arith.constant 0 : i32
    %64 = arith.addi %63, %c0_i32_39 : i32
    %c0_40 = arith.constant 0 : index
    %65 = arith.index_cast %64 : i32 to index
    %c0_41 = arith.constant 0 : index
    %66 = vector.load %arg2[%c0_40, %65, %c0_41] : memref<1x408x4xf32, #tpu.memory_space<vmem>>, vector<1x200x4xf32>
    %67 = vector.shape_cast %66 : vector<1x200x4xf32> to vector<200x4xf32>
    %68 = arith.truncf %67 : vector<200x4xf32> to vector<200x4xbf16>
    %c6 = arith.constant 6 : index
    %c0_42 = arith.constant 0 : index
    %c0_43 = arith.constant 0 : index
    %69 = vector.load %arg5[%c6, %c0_42, %c0_43] : memref<9x4x64xbf16, #tpu.memory_space<vmem>>, vector<1x4x64xbf16>
    %70 = vector.shape_cast %69 : vector<1x4x64xbf16> to vector<4x64xbf16>
    %cst_44 = arith.constant dense<0.000000e+00> : vector<200x64xf32>
    %71 = tpu.matmul %68, %70, %cst_44 {dimension_numbers = #tpu.dot_dimension_numbers<[1], [0], [0], [1], [0, 0, 1, 1], [], []>} : vector<200x4xbf16>, vector<4x64xbf16>, vector<200x64xf32> -> vector<200x64xf32>
    %72 = arith.addf %62, %71 : vector<200x64xf32>
    %c40_i32_45 = arith.constant 40 : i32
    %73 = arith.addi %3, %c40_i32_45 : i32
    %c1_i32_46 = arith.constant 1 : i32
    %74 = arith.addi %73, %c1_i32_46 : i32
    %c0_47 = arith.constant 0 : index
    %75 = arith.index_cast %74 : i32 to index
    %c0_48 = arith.constant 0 : index
    %76 = vector.load %arg2[%c0_47, %75, %c0_48] : memref<1x408x4xf32, #tpu.memory_space<vmem>>, vector<1x200x4xf32>
    %77 = vector.shape_cast %76 : vector<1x200x4xf32> to vector<200x4xf32>
    %78 = arith.truncf %77 : vector<200x4xf32> to vector<200x4xbf16>
    %c7 = arith.constant 7 : index
    %c0_49 = arith.constant 0 : index
    %c0_50 = arith.constant 0 : index
    %79 = vector.load %arg5[%c7, %c0_49, %c0_50] : memref<9x4x64xbf16, #tpu.memory_space<vmem>>, vector<1x4x64xbf16>
    %80 = vector.shape_cast %79 : vector<1x4x64xbf16> to vector<4x64xbf16>
    %cst_51 = arith.constant dense<0.000000e+00> : vector<200x64xf32>
    %81 = tpu.matmul %78, %80, %cst_51 {dimension_numbers = #tpu.dot_dimension_numbers<[1], [0], [0], [1], [0, 0, 1, 1], [], []>} : vector<200x4xbf16>, vector<4x64xbf16>, vector<200x64xf32> -> vector<200x64xf32>
    %82 = arith.addf %72, %81 : vector<200x64xf32>
    %c40_i32_52 = arith.constant 40 : i32
    %83 = arith.addi %3, %c40_i32_52 : i32
    %c2_i32_53 = arith.constant 2 : i32
    %84 = arith.addi %83, %c2_i32_53 : i32
    %c0_54 = arith.constant 0 : index
    %85 = arith.index_cast %84 : i32 to index
    %c0_55 = arith.constant 0 : index
    %86 = vector.load %arg2[%c0_54, %85, %c0_55] : memref<1x408x4xf32, #tpu.memory_space<vmem>>, vector<1x200x4xf32>
    %87 = vector.shape_cast %86 : vector<1x200x4xf32> to vector<200x4xf32>
    %88 = arith.truncf %87 : vector<200x4xf32> to vector<200x4xbf16>
    %c8 = arith.constant 8 : index
    %c0_56 = arith.constant 0 : index
    %c0_57 = arith.constant 0 : index
    %89 = vector.load %arg5[%c8, %c0_56, %c0_57] : memref<9x4x64xbf16, #tpu.memory_space<vmem>>, vector<1x4x64xbf16>
    %90 = vector.shape_cast %89 : vector<1x4x64xbf16> to vector<4x64xbf16>
    %cst_58 = arith.constant dense<0.000000e+00> : vector<200x64xf32>
    %91 = tpu.matmul %88, %90, %cst_58 {dimension_numbers = #tpu.dot_dimension_numbers<[1], [0], [0], [1], [0, 0, 1, 1], [], []>} : vector<200x4xbf16>, vector<4x64xbf16>, vector<200x64xf32> -> vector<200x64xf32>
    %92 = arith.addf %82, %91 : vector<200x64xf32>
    %c0_59 = arith.constant 0 : index
    %c0_60 = arith.constant 0 : index
    %93 = vector.load %arg6[%c0_59, %c0_60] : memref<1x64xf32, #tpu.memory_space<vmem>>, vector<1x64xf32>
    %94 = vector.broadcast %93 : vector<1x64xf32> to vector<200x64xf32>
    %95 = arith.addf %92, %94 : vector<200x64xf32>
    %cst_61 = arith.constant 0.000000e+00 : f32
    %96 = vector.broadcast %cst_61 : f32 to vector<200x64xf32>
    %97 = arith.maximumf %95, %96 : vector<200x64xf32>
    %c160_i32_62 = arith.constant 160 : i32
    %98 = arith.muli %arg1, %c160_i32_62 : i32
    %99 = arith.index_cast %98 : i32 to index
    %c0_63 = arith.constant 0 : index
    %100 = vector.load %arg3[%99, %c0_63] : memref<360x1xf32, #tpu.memory_space<vmem>>, vector<200x1xf32>
    %101 = vector.broadcast %100 : vector<200x1xf32> to vector<200x64xf32>
    %102 = arith.mulf %97, %101 : vector<200x64xf32>
    %c0_64 = arith.constant 0 : index
    %c0_65 = arith.constant 0 : index
    %103 = vector.load %arg11[%c0_64, %c0_65] : memref<208x64xf32, #tpu.memory_space<vmem>>, vector<200x64xf32>
    tpu.vector_store %arg11[%c0_64, %c0_65], %102 {strides = array<i32>} : memref<208x64xf32, #tpu.memory_space<vmem>>, vector<200x64xf32>,
    %cst_66 = arith.constant 0.000000e+00 : f32
    %104 = vector.broadcast %cst_66 : f32 to vector<8x64xf32>
    %c200 = arith.constant 200 : index
    %c0_67 = arith.constant 0 : index
    %105 = vector.load %arg11[%c200, %c0_67] : memref<208x64xf32, #tpu.memory_space<vmem>>, vector<8x64xf32>
    tpu.vector_store %arg11[%c200, %c0_67], %104 {strides = array<i32>} : memref<208x64xf32, #tpu.memory_space<vmem>>, vector<8x64xf32>,
    %c0_68 = arith.constant 0 : index
    %c0_69 = arith.constant 0 : index
    %106 = vector.load %arg11[%c0_68, %c0_69] : memref<208x64xf32, #tpu.memory_space<vmem>>, vector<160x64xf32>
    %107 = arith.truncf %106 : vector<160x64xf32> to vector<160x64xbf16>
    %c0_70 = arith.constant 0 : index
    %c0_71 = arith.constant 0 : index
    %c0_72 = arith.constant 0 : index
    %108 = vector.load %arg7[%c0_70, %c0_71, %c0_72] : memref<9x64x512xbf16, #tpu.memory_space<vmem>>, vector<1x64x512xbf16>
    %109 = vector.shape_cast %108 : vector<1x64x512xbf16> to vector<64x512xbf16>
    %cst_73 = arith.constant dense<0.000000e+00> : vector<160x512xf32>
    %110 = tpu.matmul %107, %109, %cst_73 {dimension_numbers = #tpu.dot_dimension_numbers<[1], [0], [0], [1], [0, 0, 1, 1], [], []>} : vector<160x64xbf16>, vector<64x512xbf16>, vector<160x512xf32> -> vector<160x512xf32>
    %c0_74 = arith.constant 0 : index
    %c0_75 = arith.constant 0 : index
    %111 = vector.load %arg12[%c0_74, %c0_75] : memref<160x512xf32, #tpu.memory_space<vmem>>, vector<160x512xf32>
    tpu.vector_store %arg12[%c0_74, %c0_75], %110 {strides = array<i32>} : memref<160x512xf32, #tpu.memory_space<vmem>>, vector<160x512xf32>,
    %c1_76 = arith.constant 1 : index
    %c0_77 = arith.constant 0 : index
    %112 = vector.load %arg11[%c1_76, %c0_77] : memref<208x64xf32, #tpu.memory_space<vmem>>, vector<160x64xf32>
    %113 = arith.truncf %112 : vector<160x64xf32> to vector<160x64xbf16>
    %c1_78 = arith.constant 1 : index
    %c0_79 = arith.constant 0 : index
    %c0_80 = arith.constant 0 : index
    %114 = vector.load %arg7[%c1_78, %c0_79, %c0_80] : memref<9x64x512xbf16, #tpu.memory_space<vmem>>, vector<1x64x512xbf16>
    %115 = vector.shape_cast %114 : vector<1x64x512xbf16> to vector<64x512xbf16>
    %cst_81 = arith.constant dense<0.000000e+00> : vector<160x512xf32>
    %116 = tpu.matmul %113, %115, %cst_81 {dimension_numbers = #tpu.dot_dimension_numbers<[1], [0], [0], [1], [0, 0, 1, 1], [], []>} : vector<160x64xbf16>, vector<64x512xbf16>, vector<160x512xf32> -> vector<160x512xf32>
    %c0_82 = arith.constant 0 : index
    %c0_83 = arith.constant 0 : index
    %117 = vector.load %arg12[%c0_82, %c0_83] : memref<160x512xf32, #tpu.memory_space<vmem>>, vector<160x512xf32>
    %118 = arith.addf %117, %116 : vector<160x512xf32>
    %c0_84 = arith.constant 0 : index
    %c0_85 = arith.constant 0 : index
    %119 = vector.load %arg12[%c0_84, %c0_85] : memref<160x512xf32, #tpu.memory_space<vmem>>, vector<160x512xf32>
    tpu.vector_store %arg12[%c0_84, %c0_85], %118 {strides = array<i32>} : memref<160x512xf32, #tpu.memory_space<vmem>>, vector<160x512xf32>,
    %c2_86 = arith.constant 2 : index
    %c0_87 = arith.constant 0 : index
    %120 = vector.load %arg11[%c2_86, %c0_87] : memref<208x64xf32, #tpu.memory_space<vmem>>, vector<160x64xf32>
    %121 = arith.truncf %120 : vector<160x64xf32> to vector<160x64xbf16>
    %c2_88 = arith.constant 2 : index
    %c0_89 = arith.constant 0 : index
    %c0_90 = arith.constant 0 : index
    %122 = vector.load %arg7[%c2_88, %c0_89, %c0_90] : memref<9x64x512xbf16, #tpu.memory_space<vmem>>, vector<1x64x512xbf16>
    %123 = vector.shape_cast %122 : vector<1x64x512xbf16> to vector<64x512xbf16>
    %cst_91 = arith.constant dense<0.000000e+00> : vector<160x512xf32>
    %124 = tpu.matmul %121, %123, %cst_91 {dimension_numbers = #tpu.dot_dimension_numbers<[1], [0], [0], [1], [0, 0, 1, 1], [], []>} : vector<160x64xbf16>, vector<64x512xbf16>, vector<160x512xf32> -> vector<160x512xf32>
    %c0_92 = arith.constant 0 : index
    %c0_93 = arith.constant 0 : index
    %125 = vector.load %arg12[%c0_92, %c0_93] : memref<160x512xf32, #tpu.memory_space<vmem>>, vector<160x512xf32>
    %126 = arith.addf %125, %124 : vector<160x512xf32>
    %c0_94 = arith.constant 0 : index
    %c0_95 = arith.constant 0 : index
    %127 = vector.load %arg12[%c0_94, %c0_95] : memref<160x512xf32, #tpu.memory_space<vmem>>, vector<160x512xf32>
    tpu.vector_store %arg12[%c0_94, %c0_95], %126 {strides = array<i32>} : memref<160x512xf32, #tpu.memory_space<vmem>>, vector<160x512xf32>,
    %c20 = arith.constant 20 : index
    %c0_96 = arith.constant 0 : index
    %128 = vector.load %arg11[%c20, %c0_96] : memref<208x64xf32, #tpu.memory_space<vmem>>, vector<160x64xf32>
    %129 = arith.truncf %128 : vector<160x64xf32> to vector<160x64xbf16>
    %c3_97 = arith.constant 3 : index
    %c0_98 = arith.constant 0 : index
    %c0_99 = arith.constant 0 : index
    %130 = vector.load %arg7[%c3_97, %c0_98, %c0_99] : memref<9x64x512xbf16, #tpu.memory_space<vmem>>, vector<1x64x512xbf16>
    %131 = vector.shape_cast %130 : vector<1x64x512xbf16> to vector<64x512xbf16>
    %cst_100 = arith.constant dense<0.000000e+00> : vector<160x512xf32>
    %132 = tpu.matmul %129, %131, %cst_100 {dimension_numbers = #tpu.dot_dimension_numbers<[1], [0], [0], [1], [0, 0, 1, 1], [], []>} : vector<160x64xbf16>, vector<64x512xbf16>, vector<160x512xf32> -> vector<160x512xf32>
    %c0_101 = arith.constant 0 : index
    %c0_102 = arith.constant 0 : index
    %133 = vector.load %arg12[%c0_101, %c0_102] : memref<160x512xf32, #tpu.memory_space<vmem>>, vector<160x512xf32>
    %134 = arith.addf %133, %132 : vector<160x512xf32>
    %c0_103 = arith.constant 0 : index
    %c0_104 = arith.constant 0 : index
    %135 = vector.load %arg12[%c0_103, %c0_104] : memref<160x512xf32, #tpu.memory_space<vmem>>, vector<160x512xf32>
    tpu.vector_store %arg12[%c0_103, %c0_104], %134 {strides = array<i32>} : memref<160x512xf32, #tpu.memory_space<vmem>>, vector<160x512xf32>,
    %c21 = arith.constant 21 : index
    %c0_105 = arith.constant 0 : index
    %136 = vector.load %arg11[%c21, %c0_105] : memref<208x64xf32, #tpu.memory_space<vmem>>, vector<160x64xf32>
    %137 = arith.truncf %136 : vector<160x64xf32> to vector<160x64xbf16>
    %c4_106 = arith.constant 4 : index
    %c0_107 = arith.constant 0 : index
    %c0_108 = arith.constant 0 : index
    %138 = vector.load %arg7[%c4_106, %c0_107, %c0_108] : memref<9x64x512xbf16, #tpu.memory_space<vmem>>, vector<1x64x512xbf16>
    %139 = vector.shape_cast %138 : vector<1x64x512xbf16> to vector<64x512xbf16>
    %cst_109 = arith.constant dense<0.000000e+00> : vector<160x512xf32>
    %140 = tpu.matmul %137, %139, %cst_109 {dimension_numbers = #tpu.dot_dimension_numbers<[1], [0], [0], [1], [0, 0, 1, 1], [], []>} : vector<160x64xbf16>, vector<64x512xbf16>, vector<160x512xf32> -> vector<160x512xf32>
    %c0_110 = arith.constant 0 : index
    %c0_111 = arith.constant 0 : index
    %141 = vector.load %arg12[%c0_110, %c0_111] : memref<160x512xf32, #tpu.memory_space<vmem>>, vector<160x512xf32>
    %142 = arith.addf %141, %140 : vector<160x512xf32>
    %c0_112 = arith.constant 0 : index
    %c0_113 = arith.constant 0 : index
    %143 = vector.load %arg12[%c0_112, %c0_113] : memref<160x512xf32, #tpu.memory_space<vmem>>, vector<160x512xf32>
    tpu.vector_store %arg12[%c0_112, %c0_113], %142 {strides = array<i32>} : memref<160x512xf32, #tpu.memory_space<vmem>>, vector<160x512xf32>,
    %c22 = arith.constant 22 : index
    %c0_114 = arith.constant 0 : index
    %144 = vector.load %arg11[%c22, %c0_114] : memref<208x64xf32, #tpu.memory_space<vmem>>, vector<160x64xf32>
    %145 = arith.truncf %144 : vector<160x64xf32> to vector<160x64xbf16>
    %c5_115 = arith.constant 5 : index
    %c0_116 = arith.constant 0 : index
    %c0_117 = arith.constant 0 : index
    %146 = vector.load %arg7[%c5_115, %c0_116, %c0_117] : memref<9x64x512xbf16, #tpu.memory_space<vmem>>, vector<1x64x512xbf16>
    %147 = vector.shape_cast %146 : vector<1x64x512xbf16> to vector<64x512xbf16>
    %cst_118 = arith.constant dense<0.000000e+00> : vector<160x512xf32>
    %148 = tpu.matmul %145, %147, %cst_118 {dimension_numbers = #tpu.dot_dimension_numbers<[1], [0], [0], [1], [0, 0, 1, 1], [], []>} : vector<160x64xbf16>, vector<64x512xbf16>, vector<160x512xf32> -> vector<160x512xf32>
    %c0_119 = arith.constant 0 : index
    %c0_120 = arith.constant 0 : index
    %149 = vector.load %arg12[%c0_119, %c0_120] : memref<160x512xf32, #tpu.memory_space<vmem>>, vector<160x512xf32>
    %150 = arith.addf %149, %148 : vector<160x512xf32>
    %c0_121 = arith.constant 0 : index
    %c0_122 = arith.constant 0 : index
    %151 = vector.load %arg12[%c0_121, %c0_122] : memref<160x512xf32, #tpu.memory_space<vmem>>, vector<160x512xf32>
    tpu.vector_store %arg12[%c0_121, %c0_122], %150 {strides = array<i32>} : memref<160x512xf32, #tpu.memory_space<vmem>>, vector<160x512xf32>,
    %c40 = arith.constant 40 : index
    %c0_123 = arith.constant 0 : index
    %152 = vector.load %arg11[%c40, %c0_123] : memref<208x64xf32, #tpu.memory_space<vmem>>, vector<160x64xf32>
    %153 = arith.truncf %152 : vector<160x64xf32> to vector<160x64xbf16>
    %c6_124 = arith.constant 6 : index
    %c0_125 = arith.constant 0 : index
    %c0_126 = arith.constant 0 : index
    %154 = vector.load %arg7[%c6_124, %c0_125, %c0_126] : memref<9x64x512xbf16, #tpu.memory_space<vmem>>, vector<1x64x512xbf16>
    %155 = vector.shape_cast %154 : vector<1x64x512xbf16> to vector<64x512xbf16>
    %cst_127 = arith.constant dense<0.000000e+00> : vector<160x512xf32>
    %156 = tpu.matmul %153, %155, %cst_127 {dimension_numbers = #tpu.dot_dimension_numbers<[1], [0], [0], [1], [0, 0, 1, 1], [], []>} : vector<160x64xbf16>, vector<64x512xbf16>, vector<160x512xf32> -> vector<160x512xf32>
    %c0_128 = arith.constant 0 : index
    %c0_129 = arith.constant 0 : index
    %157 = vector.load %arg12[%c0_128, %c0_129] : memref<160x512xf32, #tpu.memory_space<vmem>>, vector<160x512xf32>
    %158 = arith.addf %157, %156 : vector<160x512xf32>
    %c0_130 = arith.constant 0 : index
    %c0_131 = arith.constant 0 : index
    %159 = vector.load %arg12[%c0_130, %c0_131] : memref<160x512xf32, #tpu.memory_space<vmem>>, vector<160x512xf32>
    tpu.vector_store %arg12[%c0_130, %c0_131], %158 {strides = array<i32>} : memref<160x512xf32, #tpu.memory_space<vmem>>, vector<160x512xf32>,
    %c41 = arith.constant 41 : index
    %c0_132 = arith.constant 0 : index
    %160 = vector.load %arg11[%c41, %c0_132] : memref<208x64xf32, #tpu.memory_space<vmem>>, vector<160x64xf32>
    %161 = arith.truncf %160 : vector<160x64xf32> to vector<160x64xbf16>
    %c7_133 = arith.constant 7 : index
    %c0_134 = arith.constant 0 : index
    %c0_135 = arith.constant 0 : index
    %162 = vector.load %arg7[%c7_133, %c0_134, %c0_135] : memref<9x64x512xbf16, #tpu.memory_space<vmem>>, vector<1x64x512xbf16>
    %163 = vector.shape_cast %162 : vector<1x64x512xbf16> to vector<64x512xbf16>
    %cst_136 = arith.constant dense<0.000000e+00> : vector<160x512xf32>
    %164 = tpu.matmul %161, %163, %cst_136 {dimension_numbers = #tpu.dot_dimension_numbers<[1], [0], [0], [1], [0, 0, 1, 1], [], []>} : vector<160x64xbf16>, vector<64x512xbf16>, vector<160x512xf32> -> vector<160x512xf32>
    %c0_137 = arith.constant 0 : index
    %c0_138 = arith.constant 0 : index
    %165 = vector.load %arg12[%c0_137, %c0_138] : memref<160x512xf32, #tpu.memory_space<vmem>>, vector<160x512xf32>
    %166 = arith.addf %165, %164 : vector<160x512xf32>
    %c0_139 = arith.constant 0 : index
    %c0_140 = arith.constant 0 : index
    %167 = vector.load %arg12[%c0_139, %c0_140] : memref<160x512xf32, #tpu.memory_space<vmem>>, vector<160x512xf32>
    tpu.vector_store %arg12[%c0_139, %c0_140], %166 {strides = array<i32>} : memref<160x512xf32, #tpu.memory_space<vmem>>, vector<160x512xf32>,
    %c42 = arith.constant 42 : index
    %c0_141 = arith.constant 0 : index
    %168 = vector.load %arg11[%c42, %c0_141] : memref<208x64xf32, #tpu.memory_space<vmem>>, vector<160x64xf32>
    %169 = arith.truncf %168 : vector<160x64xf32> to vector<160x64xbf16>
    %c8_142 = arith.constant 8 : index
    %c0_143 = arith.constant 0 : index
    %c0_144 = arith.constant 0 : index
    %170 = vector.load %arg7[%c8_142, %c0_143, %c0_144] : memref<9x64x512xbf16, #tpu.memory_space<vmem>>, vector<1x64x512xbf16>
    %171 = vector.shape_cast %170 : vector<1x64x512xbf16> to vector<64x512xbf16>
    %cst_145 = arith.constant dense<0.000000e+00> : vector<160x512xf32>
    %172 = tpu.matmul %169, %171, %cst_145 {dimension_numbers = #tpu.dot_dimension_numbers<[1], [0], [0], [1], [0, 0, 1, 1], [], []>} : vector<160x64xbf16>, vector<64x512xbf16>, vector<160x512xf32> -> vector<160x512xf32>
    %c0_146 = arith.constant 0 : index
    %c0_147 = arith.constant 0 : index
    %173 = vector.load %arg12[%c0_146, %c0_147] : memref<160x512xf32, #tpu.memory_space<vmem>>, vector<160x512xf32>
    %174 = arith.addf %173, %172 : vector<160x512xf32>
    %c0_148 = arith.constant 0 : index
    %c0_149 = arith.constant 0 : index
    %175 = vector.load %arg12[%c0_148, %c0_149] : memref<160x512xf32, #tpu.memory_space<vmem>>, vector<160x512xf32>
    tpu.vector_store %arg12[%c0_148, %c0_149], %174 {strides = array<i32>} : memref<160x512xf32, #tpu.memory_space<vmem>>, vector<160x512xf32>,
    %c0_150 = arith.constant 0 : index
    %c0_151 = arith.constant 0 : index
    %176 = vector.load %arg12[%c0_150, %c0_151] : memref<160x512xf32, #tpu.memory_space<vmem>>, vector<160x512xf32>
    %c0_152 = arith.constant 0 : index
    %c0_153 = arith.constant 0 : index
    %177 = vector.load %arg8[%c0_152, %c0_153] : memref<1x512xf32, #tpu.memory_space<vmem>>, vector<1x512xf32>
    %178 = vector.broadcast %177 : vector<1x512xf32> to vector<160x512xf32>
    %179 = arith.addf %176, %178 : vector<160x512xf32>
    %cst_154 = arith.constant 0.000000e+00 : f32
    %180 = vector.broadcast %cst_154 : f32 to vector<160x512xf32>
    %181 = arith.maximumf %179, %180 : vector<160x512xf32>
    %c0_155 = arith.constant 0 : index
    %c0_156 = arith.constant 0 : index
    %182 = vector.load %arg4[%c0_155, %c0_156] : memref<160x1xf32, #tpu.memory_space<vmem>>, vector<160x1xf32>
    %183 = vector.broadcast %182 : vector<160x1xf32> to vector<160x512xf32>
    %184 = arith.mulf %181, %183 : vector<160x512xf32>
    %c0_157 = arith.constant 0 : index
    %c0_158 = arith.constant 0 : index
    %185 = vector.load %arg13[%c0_157, %c0_158] : memref<1x512xf32, #tpu.memory_space<vmem>>, vector<1x512xf32>
    %cst_159 = arith.constant dense<0xFF800000> : vector<512xf32>
    %186 = vector.multi_reduction <maximumf>, %184, %cst_159 [0] : vector<160x512xf32> to vector<512xf32>
    %187 = vector.shape_cast %186 : vector<512xf32> to vector<1x512xf32>
    %188 = arith.maximumf %185, %187 : vector<1x512xf32>
    %c0_160 = arith.constant 0 : index
    %c0_161 = arith.constant 0 : index
    %189 = vector.load %arg13[%c0_160, %c0_161] : memref<1x512xf32, #tpu.memory_space<vmem>>, vector<1x512xf32>
    tpu.vector_store %arg13[%c0_160, %c0_161], %188 {strides = array<i32>} : memref<1x512xf32, #tpu.memory_space<vmem>>, vector<1x512xf32>,
    %c1_i32_162 = arith.constant 1 : i32
    %190 = arith.cmpi eq, %arg1, %c1_i32_162 : i32
    %191 = arith.extui %190 : i1 to i32
    %c0_i32_163 = arith.constant 0 : i32
    %192 = arith.cmpi ne, %191, %c0_i32_163 : i32
    scf.if %192 {
      %c0_164 = arith.constant 0 : index
      %c0_165 = arith.constant 0 : index
      %193 = vector.load %arg13[%c0_164, %c0_165] : memref<1x512xf32, #tpu.memory_space<vmem>>, vector<1x512xf32>
      %194 = arith.mulf %193, %193 : vector<1x512xf32>
      %cst_166 = arith.constant dense<0.000000e+00> : vector<1xf32>
      %195 = vector.multi_reduction <add>, %194, %cst_166 [1] : vector<1x512xf32> to vector<1xf32>
      %196 = vector.shape_cast %195 : vector<1xf32> to vector<1x1xf32>
      %197 = math.sqrt %196 : vector<1x1xf32>
      %cst_167 = arith.constant 9.99999997E-7 : f32
      %198 = vector.broadcast %cst_167 : f32 to vector<1x1xf32>
      %199 = arith.addf %197, %198 : vector<1x1xf32>
      %200 = tpu.reciprocal %199 {approx = true} : vector<1x1xf32> -> vector<1x1xf32>
      %201 = vector.broadcast %200 : vector<1x1xf32> to vector<1x512xf32>
      %202 = arith.mulf %193, %201 : vector<1x512xf32>
      %c0_168 = arith.constant 0 : index
      %c0_169 = arith.constant 0 : index
      %203 = vector.load %arg9[%c0_168, %c0_169] : memref<512x10xf32, #tpu.memory_space<vmem>>, vector<512x10xf32>
      %cst_170 = arith.constant dense<0.000000e+00> : vector<1x10xf32>
      %204 = tpu.matmul %202, %203, %cst_170 {dimension_numbers = #tpu.dot_dimension_numbers<[1], [0], [0], [1], [0, 0, 1, 1], [], []>} : vector<1x512xf32>, vector<512x10xf32>, vector<1x10xf32> -> vector<1x10xf32>
      %205 = vector.shape_cast %204 : vector<1x10xf32> to vector<1x1x10xf32>
      %c0_171 = arith.constant 0 : index
      %c0_172 = arith.constant 0 : index
      %c0_173 = arith.constant 0 : index
      %206 = vector.load %arg10[%c0_171, %c0_172, %c0_173] : memref<1x1x10xf32, #tpu.memory_space<vmem>>, vector<1x1x10xf32>
      tpu.vector_store %arg10[%c0_171, %c0_172, %c0_173], %205 {strides = array<i32>} : memref<1x1x10xf32, #tpu.memory_space<vmem>>, vector<1x1x10xf32>,
    } else {
    }
    return
  }
  func.func @transform_0(%arg0: i32, %arg1: i32) -> (i32, i32, i32) {
    %c0_i32 = arith.constant 0 : i32
    %c0_i32_0 = arith.constant 0 : i32
    %c0_i32_1 = arith.constant 0 : i32
    return %arg0, %c0_i32, %c0_i32_0 : i32, i32, i32
  }
  func.func @transform_1(%arg0: i32, %arg1: i32) -> (i32, i32) {
    %c0_i32 = arith.constant 0 : i32
    %c0_i32_0 = arith.constant 0 : i32
    %c0_i32_1 = arith.constant 0 : i32
    return %c0_i32, %c0_i32_0 : i32, i32
  }
  func.func @transform_2(%arg0: i32, %arg1: i32) -> (i32, i32) {
    %c0_i32 = arith.constant 0 : i32
    %c0_i32_0 = arith.constant 0 : i32
    %c0_i32_1 = arith.constant 0 : i32
    return %c0_i32, %c0_i32_0 : i32, i32
  }
  func.func @transform_3(%arg0: i32, %arg1: i32) -> (i32, i32, i32) {
    %c0_i32 = arith.constant 0 : i32
    %c0_i32_0 = arith.constant 0 : i32
    %c0_i32_1 = arith.constant 0 : i32
    %c0_i32_2 = arith.constant 0 : i32
    return %c0_i32, %c0_i32_0, %c0_i32_1 : i32, i32, i32
  }
  func.func @transform_4(%arg0: i32, %arg1: i32) -> (i32, i32) {
    %c0_i32 = arith.constant 0 : i32
    %c0_i32_0 = arith.constant 0 : i32
    %c0_i32_1 = arith.constant 0 : i32
    return %c0_i32, %c0_i32_0 : i32, i32
  }
  func.func @transform_5(%arg0: i32, %arg1: i32) -> (i32, i32, i32) {
    %c0_i32 = arith.constant 0 : i32
    %c0_i32_0 = arith.constant 0 : i32
    %c0_i32_1 = arith.constant 0 : i32
    %c0_i32_2 = arith.constant 0 : i32
    return %c0_i32, %c0_i32_0, %c0_i32_1 : i32, i32, i32
  }
  func.func @transform_6(%arg0: i32, %arg1: i32) -> (i32, i32) {
    %c0_i32 = arith.constant 0 : i32
    %c0_i32_0 = arith.constant 0 : i32
    %c0_i32_1 = arith.constant 0 : i32
    return %c0_i32, %c0_i32_0 : i32, i32
  }
  func.func @transform_7(%arg0: i32, %arg1: i32) -> (i32, i32) {
    %c0_i32 = arith.constant 0 : i32
    %c0_i32_0 = arith.constant 0 : i32
    %c0_i32_1 = arith.constant 0 : i32
    return %c0_i32, %c0_i32_0 : i32, i32
  }
  func.func @transform_8(%arg0: i32, %arg1: i32) -> (i32, i32, i32) {
    %c0_i32 = arith.constant 0 : i32
    %c0_i32_0 = arith.constant 0 : i32
    %c0_i32_1 = arith.constant 0 : i32
    return %arg0, %c0_i32, %c0_i32_0 : i32, i32, i32
  }
}

</mosaic_0001>

<llo_original>
// kernel: camnet_forward.1
$region0: #{camnet_forward.1}
  #allocation0 [shape = 'u32[]', space=smem, size = 0x4, offset = 0x4, fixed_abs, tag = 'smem constant byte address 0x4 - core index']
  #allocation1 [shape = 'u32[144,128]{1,0:T(1,128)}', space=vmem, size = 0x12000, scoped, tag = 'internal scratch']
  #allocation2 [shape = 'f32[208,64]{1,0:T(8,128)}', space=vmem, size = 0x1a000, scoped, tag = 'scratch operand']
  #allocation3 [shape = 'f32[160,512]{1,0:T(8,128)}', space=vmem, size = 0x50000, scoped, tag = 'scratch operand']
  #allocation4 [shape = 'f32[1,512]{1,0:T(1,128)}', space=vmem, size = 0x800, scoped, tag = 'scratch operand']
  %s0 = inlined_call_operand.vmem [shape: f32[2,408,4], index: 0, kind: input, shape index: {}]
  %s1 = inlined_call_operand.vmem [shape: f32[360,1], index: 1, kind: input, shape index: {}]
  %s2 = inlined_call_operand.vmem [shape: f32[160,1], index: 2, kind: input, shape index: {}]
  %s3 = inlined_call_operand.vmem [shape: bf16[9,4,64], index: 3, kind: input, shape index: {}]
  %s4 = inlined_call_operand.vmem [shape: f32[1,64], index: 4, kind: input, shape index: {}]
  %s5 = inlined_call_operand.vmem [shape: bf16[9,64,512], index: 5, kind: input, shape index: {}]
  %s6 = inlined_call_operand.vmem [shape: f32[1,512], index: 6, kind: input, shape index: {}]
  %s7 = inlined_call_operand.vmem [shape: f32[512,10], index: 7, kind: input, shape index: {}]
  %s8 = inlined_call_operand.hbm [shape: f32[2,1,10], index: 8, kind: output, shape index: {}]
  %s9 = sld [smem:[#allocation0]]
  $region73: #{camnet_forward.1} parent=0
    _
  %s11 = ssub.s32 1, %s9
  %s12 = scalar_select 0, %s11, %s9
  $region1: #{camnet_forward.1} parent=0
    #allocation5 [shape = 'u8[1024]{0}', space=vmem, size = 0x400, scoped, tag = 'output window, operand 0']
    #allocation6 [shape = 's32[2]{0}', space=sflag, size = 0x8, scoped, tag = 'scoped memory for camnet_forward.1']
    %13 = vsyncpa [#allocation6], 0
    %s14 = scalar_lea.sflag [#allocation6], 1
    %15 = vsyncpa %s14, 0
    loop: start=0, step=1, limit=6
    $region2: #{camnet_forward.1} parent=1 // loop_pre_header
      _
    $region3: #{camnet_forward.1} parent=1 // loop_header
      %s17 = sphi 0, %s21
      %p18 = scmp.ge.s32.totalorder %s17, 6
      %s24 = sphi 0, %s36
      %s25 = sphi 0, %s32
      %s26 = sphi 0, %s24
      %s27 = sphi 0, %s25
      %s28 = sphi 0, %s26
      %s29 = sphi 0, %s27
      %s39 = sphi 0, %s41
      %s42 = sphi 0, %s39
      %s43 = sphi 0, %s42
      %s59 = sphi 0, %s43
      %s63 = sphi 0, %s63
      %s65 = sphi 0, %s63
      %s66 = sphi 0, %s65
      %s80 = sphi 0, %s66
      %s84 = sphi 0, %s84
      %s86 = sphi 0, %s84
      %s87 = sphi 0, %s86
      %s101 = sphi 0, %s87
      %s105 = sphi 0, %s105
      %s107 = sphi 0, %s105
      %s108 = sphi 0, %s107
      %s122 = sphi 0, %s108
      %s126 = sphi 0, %s126
      %s128 = sphi 0, %s126
      %s129 = sphi 0, %s128
      %s143 = sphi 0, %s129
      %s147 = sphi 0, %s147
      %s149 = sphi 0, %s147
      %s150 = sphi 0, %s149
      %s164 = sphi 0, %s150
      %s168 = sphi 0, %s168
      %s170 = sphi 0, %s168
      %s171 = sphi 0, %s170
      %s185 = sphi 0, %s171
      %s189 = sphi 0, %s189
      %s191 = sphi 0, %s189
      %s192 = sphi 0, %s191
      %s206 = sphi 0, %s192
      %s212 = sphi 0, %s214
      %s215 = sphi 0, %s212
      %s216 = sphi 0, %s215
      %s232 = sphi 0, %s216
    $region4: #{camnet_forward.1} parent=1 // loop_header_branch
      %20 = sbr.rel (%p18) target = $region8
    $region5: #{camnet_forward.1} parent=1 // loop_body
      %s22 = ssub.s32 %s17, 1
      %s23 = ssub.s32 %s17, 2
      %s30 = sadd.s32 1, %s25
      %p31 = scmp.ge.s32.totalorder %s30, 2
      %s32 = scalar_select %p31, 0, %s30
      %s33 = sadd.s32 1, %s24
      %s34 = scalar_select %p31, %s33, %s24
      %p35 = scmp.ge.s32.totalorder %s34, 2
      %s36 = scalar_select %p35, 0, %s34
      %s37 = ssub.s32 %s24, %s36
      %p38 = scmp.eq.s32.totalorder %s37, 0
      %s40 = sadd.s32 %s39, 1
      %s41 = scalar_select %p38, %s39, %s40
      %p44 = pneg %p38
      %p45 = scmp.eq.s32.totalorder %s17, 3
      %p46 = por %p44, %p45
      %p47 = scmp.ne.s32.totalorder %s39, %s42
      %p48 = scmp.eq.s32.totalorder %s17, 0
      %p49 = por %p47, %p48
      %p50 = scmp.ne.s32.totalorder %s39, %s42
      %p51 = scmp.eq.s32.totalorder %s22, 3
      %p52 = por %p50, %p51
      %p53 = scmp.ne.s32.totalorder %s42, %s43
      %p54 = scmp.eq.s32.totalorder %s22, 0
      %p55 = por %p53, %p54
      %p56 = scmp.ne.s32.totalorder %s42, %s43
      %p57 = scmp.eq.s32.totalorder %s23, 3
      %p58 = por %p56, %p57
      %p60 = scmp.ne.s32.totalorder %s43, %s59
      %p61 = scmp.eq.s32.totalorder %s23, 0
      %p62 = por %p60, %p61
      %s64 = sadd.s32 %s63, 1
      %p67 = scmp.eq.s32.totalorder %s17, 3
      %p68 = scmp.ne.s32.totalorder %s63, %s65
      %p69 = scmp.eq.s32.totalorder %s17, 0
      %p70 = por %p68, %p69
      %p71 = scmp.ne.s32.totalorder %s63, %s65
      %p72 = scmp.eq.s32.totalorder %s22, 3
      %p73 = por %p71, %p72
      %p74 = scmp.ne.s32.totalorder %s65, %s66
      %p75 = scmp.eq.s32.totalorder %s22, 0
      %p76 = por %p74, %p75
      %p77 = scmp.ne.s32.totalorder %s65, %s66
      %p78 = scmp.eq.s32.totalorder %s23, 3
      %p79 = por %p77, %p78
      %p81 = scmp.ne.s32.totalorder %s66, %s80
      %p82 = scmp.eq.s32.totalorder %s23, 0
      %p83 = por %p81, %p82
      %s85 = sadd.s32 %s84, 1
      %p88 = scmp.eq.s32.totalorder %s17, 3
      %p89 = scmp.ne.s32.totalorder %s84, %s86
      %p90 = scmp.eq.s32.totalorder %s17, 0
      %p91 = por %p89, %p90
      %p92 = scmp.ne.s32.totalorder %s84, %s86
      %p93 = scmp.eq.s32.totalorder %s22, 3
      %p94 = por %p92, %p93
      %p95 = scmp.ne.s32.totalorder %s86, %s87
      %p96 = scmp.eq.s32.totalorder %s22, 0
      %p97 = por %p95, %p96
      %p98 = scmp.ne.s32.totalorder %s86, %s87
      %p99 = scmp.eq.s32.totalorder %s23, 3
      %p100 = por %p98, %p99
      %p102 = scmp.ne.s32.totalorder %s87, %s101
      %p103 = scmp.eq.s32.totalorder %s23, 0
      %p104 = por %p102, %p103
      %s106 = sadd.s32 %s105, 1
      %p109 = scmp.eq.s32.totalorder %s17, 3
      %p110 = scmp.ne.s32.totalorder %s105, %s107
      %p111 = scmp.eq.s32.totalorder %s17, 0
      %p112 = por %p110, %p111
      %p113 = scmp.ne.s32.totalorder %s105, %s107
      %p114 = scmp.eq.s32.totalorder %s22, 3
      %p115 = por %p113, %p114
      %p116 = scmp.ne.s32.totalorder %s107, %s108
      %p117 = scmp.eq.s32.totalorder %s22, 0
      %p118 = por %p116, %p117
      %p119 = scmp.ne.s32.totalorder %s107, %s108
      %p120 = scmp.eq.s32.totalorder %s23, 3
      %p121 = por %p119, %p120
      %p123 = scmp.ne.s32.totalorder %s108, %s122
      %p124 = scmp.eq.s32.totalorder %s23, 0
      %p125 = por %p123, %p124
      %s127 = sadd.s32 %s126, 1
      %p130 = scmp.eq.s32.totalorder %s17, 3
      %p131 = scmp.ne.s32.totalorder %s126, %s128
      %p132 = scmp.eq.s32.totalorder %s17, 0
      %p133 = por %p131, %p132
      %p134 = scmp.ne.s32.totalorder %s126, %s128
      %p135 = scmp.eq.s32.totalorder %s22, 3
      %p136 = por %p134, %p135
      %p137 = scmp.ne.s32.totalorder %s128, %s129
      %p138 = scmp.eq.s32.totalorder %s22, 0
      %p139 = por %p137, %p138
      %p140 = scmp.ne.s32.totalorder %s128, %s129
      %p141 = scmp.eq.s32.totalorder %s23, 3
      %p142 = por %p140, %p141
      %p144 = scmp.ne.s32.totalorder %s129, %s143
      %p145 = scmp.eq.s32.totalorder %s23, 0
      %p146 = por %p144, %p145
      %s148 = sadd.s32 %s147, 1
      %p151 = scmp.eq.s32.totalorder %s17, 3
      %p152 = scmp.ne.s32.totalorder %s147, %s149
      %p153 = scmp.eq.s32.totalorder %s17, 0
      %p154 = por %p152, %p153
      %p155 = scmp.ne.s32.totalorder %s147, %s149
      %p156 = scmp.eq.s32.totalorder %s22, 3
      %p157 = por %p155, %p156
      %p158 = scmp.ne.s32.totalorder %s149, %s150
      %p159 = scmp.eq.s32.totalorder %s22, 0
      %p160 = por %p158, %p159
      %p161 = scmp.ne.s32.totalorder %s149, %s150
      %p162 = scmp.eq.s32.totalorder %s23, 3
      %p163 = por %p161, %p162
      %p165 = scmp.ne.s32.totalorder %s150, %s164
      %p166 = scmp.eq.s32.totalorder %s23, 0
      %p167 = por %p165, %p166
      %s169 = sadd.s32 %s168, 1
      %p172 = scmp.eq.s32.totalorder %s17, 3
      %p173 = scmp.ne.s32.totalorder %s168, %s170
      %p174 = scmp.eq.s32.totalorder %s17, 0
      %p175 = por %p173, %p174
      %p176 = scmp.ne.s32.totalorder %s168, %s170
      %p177 = scmp.eq.s32.totalorder %s22, 3
      %p178 = por %p176, %p177
      %p179 = scmp.ne.s32.totalorder %s170, %s171
      %p180 = scmp.eq.s32.totalorder %s22, 0
      %p181 = por %p179, %p180
      %p182 = scmp.ne.s32.totalorder %s170, %s171
      %p183 = scmp.eq.s32.totalorder %s23, 3
      %p184 = por %p182, %p183
      %p186 = scmp.ne.s32.totalorder %s171, %s185
      %p187 = scmp.eq.s32.totalorder %s23, 0
      %p188 = por %p186, %p187
      %s190 = sadd.s32 %s189, 1
      %p193 = scmp.eq.s32.totalorder %s17, 3
      %p194 = scmp.ne.s32.totalorder %s189, %s191
      %p195 = scmp.eq.s32.totalorder %s17, 0
      %p196 = por %p194, %p195
      %p197 = scmp.ne.s32.totalorder %s189, %s191
      %p198 = scmp.eq.s32.totalorder %s22, 3
      %p199 = por %p197, %p198
      %p200 = scmp.ne.s32.totalorder %s191, %s192
      %p201 = scmp.eq.s32.totalorder %s22, 0
      %p202 = por %p200, %p201
      %p203 = scmp.ne.s32.totalorder %s191, %s192
      %p204 = scmp.eq.s32.totalorder %s23, 3
      %p205 = por %p203, %p204
      %p207 = scmp.ne.s32.totalorder %s192, %s206
      %p208 = scmp.eq.s32.totalorder %s23, 0
      %p209 = por %p207, %p208
      %s210 = ssub.s32 %s24, %s36
      %p211 = scmp.eq.s32.totalorder %s210, 0
      %s213 = sadd.s32 %s212, 1
      %s214 = scalar_select %p211, %s212, %s213
      %p217 = pneg %p211
      %p218 = scmp.eq.s32.totalorder %s17, 3
      %p219 = por %p217, %p218
      %p220 = scmp.ne.s32.totalorder %s212, %s215
      %p221 = scmp.eq.s32.totalorder %s17, 0
      %p222 = por %p220, %p221
      %p223 = scmp.ne.s32.totalorder %s212, %s215
      %p224 = scmp.eq.s32.totalorder %s22, 3
      %p225 = por %p223, %p224
      %p226 = scmp.ne.s32.totalorder %s215, %s216
      %p227 = scmp.eq.s32.totalorder %s22, 0
      %p228 = por %p226, %p227
      %p229 = scmp.ne.s32.totalorder %s215, %s216
      %p230 = scmp.eq.s32.totalorder %s23, 3
      %p231 = por %p229, %p230
      %p233 = scmp.ne.s32.totalorder %s216, %s232
      %p234 = scmp.eq.s32.totalorder %s23, 0
      %p235 = por %p233, %p234
      %p236 = scmp.le.s32.totalorder 1, %s17
      %p237 = scmp.lt.s32.totalorder %s17, 5
      %p238 = pnand %p236, %p237
      %p239 = pneg %p238
      // Predicated region
      $region9: #{camnet_forward.1} parent=5 // pred_check
        _
      $region10: #{camnet_forward.1} parent=5 // pred_check_branch
        %241 = sbr.rel (%p238) target = $region12
      $region11: #{camnet_forward.1} parent=5 // pred_region
        %s242 = ssub.s32 %s17, 1
        // Predicated region
        $region13: #{camnet_forward.1} parent=11 // pred_check
          %p243 = pneg %p76
        $region14: #{camnet_forward.1} parent=11 // pred_check_branch
          %245 = sbr.rel (%p243) target = $region16
        $region15: #{camnet_forward.1} parent=11 // pred_region
          _
        $region16: #{camnet_forward.1} parent=11 // pred_fallthru
          _
        // Predicated region
        $region17: #{camnet_forward.1} parent=11 // pred_check
          %p246 = pneg %p97
        $region18: #{camnet_forward.1} parent=11 // pred_check_branch
          %248 = sbr.rel (%p246) target = $region20
        $region19: #{camnet_forward.1} parent=11 // pred_region
          _
        $region20: #{camnet_forward.1} parent=11 // pred_fallthru
          _
        // Predicated region
        $region21: #{camnet_forward.1} parent=11 // pred_check
          %p249 = pneg %p118
        $region22: #{camnet_forward.1} parent=11 // pred_check_branch
          %251 = sbr.rel (%p249) target = $region24
        $region23: #{camnet_forward.1} parent=11 // pred_region
          _
        $region24: #{camnet_forward.1} parent=11 // pred_fallthru
          _
        // Predicated region
        $region25: #{camnet_forward.1} parent=11 // pred_check
          %p252 = pneg %p139
        $region26: #{camnet_forward.1} parent=11 // pred_check_branch
          %254 = sbr.rel (%p252) target = $region28
        $region27: #{camnet_forward.1} parent=11 // pred_region
          _
        $region28: #{camnet_forward.1} parent=11 // pred_fallthru
          _
        // Predicated region
        $region29: #{camnet_forward.1} parent=11 // pred_check
          %p255 = pneg %p160
        $region30: #{camnet_forward.1} parent=11 // pred_check_branch
          %257 = sbr.rel (%p255) target = $region32
        $region31: #{camnet_forward.1} parent=11 // pred_region
          _
        $region32: #{camnet_forward.1} parent=11 // pred_fallthru
          _
        // Predicated region
        $region33: #{camnet_forward.1} parent=11 // pred_check
          %p258 = pneg %p181
        $region34: #{camnet_forward.1} parent=11 // pred_check_branch
          %260 = sbr.rel (%p258) target = $region36
        $region35: #{camnet_forward.1} parent=11 // pred_region
          _
        $region36: #{camnet_forward.1} parent=11 // pred_fallthru
          _
        // Predicated region
        $region37: #{camnet_forward.1} parent=11 // pred_check
          %p261 = pneg %p202
        $region38: #{camnet_forward.1} parent=11 // pred_check_branch
          %263 = sbr.rel (%p261) target = $region40
        $region39: #{camnet_forward.1} parent=11 // pred_region
          _
        $region40: #{camnet_forward.1} parent=11 // pred_fallthru
          _
      $region12: #{camnet_forward.1} parent=5 // pred_fallthru
        _
      %p264 = scmp.lt.s32.totalorder %s17, 4
      // Predicated region
      $region41: #{camnet_forward.1} parent=5 // pred_check
        %p265 = pneg %p264
      $region42: #{camnet_forward.1} parent=5 // pred_check_branch
        %267 = sbr.rel (%p265) target = $region44
      $region43: #{camnet_forward.1} parent=5 // pred_region
        // Predicated region
        $region45: #{camnet_forward.1} parent=43 // pred_check
          %p268 = pneg %p49
        $region46: #{camnet_forward.1} parent=43 // pred_check_branch
          %270 = sbr.rel (%p268) target = $region48
        $region47: #{camnet_forward.1} parent=43 // pred_region
          %p271 = scmp.lt.s32.totalorder %s24, 1
          %s272 = scalar_select %p271, %s24, 1
          %s273 = smul.addr %s272, 51
          %s274 = smul.addr %s273, 8
          %s275 = scalar_lea.vmem %s0, %s274
        $region48: #{camnet_forward.1} parent=43 // pred_fallthru
          _
      $region44: #{camnet_forward.1} parent=5 // pred_fallthru
        _
      %p276 = scmp.le.s32.totalorder 1, %s17
      %p277 = scmp.lt.s32.totalorder %s17, 5
      %p278 = pnand %p276, %p277
      %p279 = pneg %p278
      // Predicated region
      $region49: #{camnet_forward.1} parent=5 // pred_check
        _
      $region50: #{camnet_forward.1} parent=5 // pred_check_branch
        %281 = sbr.rel (%p278) target = $region52
      $region51: #{camnet_forward.1} parent=5 // pred_region
        %s282 = ssub.s32 %s17, 1
        %p283 = scmp.lt.s32.totalorder %s26, 1
        %s284 = scalar_select %p283, %s26, 1
        %s285 = smul.addr %s284, 51
        %s286 = smul.addr %s285, 8
        %s287 = scalar_lea.vmem %s0, %s286
        %p288 = pneg %p55
        %p289 = pneg %p52
        %p290 = pneg %p76
        %p291 = pneg %p73
        %p292 = pneg %p97
        %p293 = pneg %p94
        %p294 = pneg %p118
        %p295 = pneg %p115
        %p296 = pneg %p139
        %p297 = pneg %p136
        %p298 = pneg %p160
        %p299 = pneg %p157
        %p300 = pneg %p181
        %p301 = pneg %p178
        %p302 = pneg %p202
        %p303 = pneg %p199
        %p304 = pneg %p228
        %p305 = pneg %p225
        %s306 = sand.u32 %s215, 1
        %s307 = scalar_lea.sflag [#allocation6], %s306
        %s308 = sand.u32 %s215, 1
        %s309 = scalar_lea.vmem [#allocation5], %s308
        %p310 = scmp.lt.s32.totalorder %s26, 1
        %s311 = scalar_select %p310, %s26, 1
        %s312 = smul.addr %s311, 51
        %s313 = smul.addr %s312, 8
        %s314 = scalar_lea.vmem %s0, %s313
        %p316 = scmp.eq.s32.totalorder %s27, 0
        // Predicated region
        $region53: #{camnet_forward.1} parent=51 // pred_check
          %p317 = pneg %p316
        $region54: #{camnet_forward.1} parent=51 // pred_check_branch
          %319 = sbr.rel (%p317) target = $region56
        $region55: #{camnet_forward.1} parent=51 // pred_region
          %v320 = vlaneseq
          %vm321 = vcmp.ge.s32.totalorder %v320, 0
          %vm322 = vcmp.lt.s32.totalorder %v320, 512
          %vm323 = vmand %vm321, %vm322
          %324 = vst.msk [vmem:[#allocation4] sm:$0xf] %vm323, 0.0
        $region56: #{camnet_forward.1} parent=51 // pred_fallthru
          _
        %s325 = smul.u32 %s27, 160
        %s326 = scalar_lea.vmem %s314, %s325
        %v327 = vld [vmem:[%s326] sm:$0xff]
        %v328 = vld [vmem:[%s326 + $0x8] sm:$0xff]
        %v329 = vld [vmem:[%s326 + $0x10] sm:$0xff]
        %v330 = vld [vmem:[%s326 + $0x18] sm:$0xff]
        %v331 = vld [vmem:[%s326 + $0x20] sm:$0xff]
        %v332 = vld [vmem:[%s326 + $0x28] sm:$0xff]
        %v333 = vld [vmem:[%s326 + $0x30] sm:$0xff]
        %v334 = vld [vmem:[%s326 + $0x38] sm:$0xff]
        %v335 = vld [vmem:[%s326 + $0x40] sm:$0xff]
        %v336 = vld [vmem:[%s326 + $0x48] sm:$0xff]
        %v337 = vld [vmem:[%s326 + $0x50] sm:$0xff]
        %v338 = vld [vmem:[%s326 + $0x58] sm:$0xff]
        %v339 = vld [vmem:[%s326 + $0x60] sm:$0xff]
        %v340 = vld [vmem:[%s326 + $0x68] sm:$0xff]
        %v341 = vld [vmem:[%s326 + $0x70] sm:$0xff]
        %v342 = vld [vmem:[%s326 + $0x78] sm:$0xff]
        %v343 = vld [vmem:[%s326 + $0x80] sm:$0xff]
        %v344 = vld [vmem:[%s326 + $0x88] sm:$0xff]
        %v345 = vld [vmem:[%s326 + $0x90] sm:$0xff]
        %v346 = vld [vmem:[%s326 + $0x98] sm:$0xff]
        %v347 = vld [vmem:[%s326 + $0xa0] sm:$0xff]
        %v348 = vld [vmem:[%s326 + $0xa8] sm:$0xff]
        %v349 = vld [vmem:[%s326 + $0xb0] sm:$0xff]
        %v350 = vld [vmem:[%s326 + $0xb8] sm:$0xff]
        %v351 = vld [vmem:[%s326 + $0xc0] sm:$0xff]
        %v352 = vpack.c.bf16 %v328, %v327
        %v353 = vpack.c.bf16 %v330, %v329
        %v354 = vpack.c.bf16 %v332, %v331
        %v355 = vpack.c.bf16 %v334, %v333
        %v356 = vpack.c.bf16 %v336, %v335
        %v357 = vpack.c.bf16 %v338, %v337
        %v358 = vpack.c.bf16 %v340, %v339
        %v359 = vpack.c.bf16 %v342, %v341
        %v360 = vpack.c.bf16 %v344, %v343
        %v361 = vpack.c.bf16 %v346, %v345
        %v362 = vpack.c.bf16 %v348, %v347
        %v363 = vpack.c.bf16 %v350, %v349
        %v364 = vpack.c.bf16 %v351, %v351
        %v365 = vld [vmem:[%s3] sm:$0x3]
        %s366 = sadd.s32 %s325, 1
        %s367 = scalar_lea.vmem %s314, %s366
        %v368 = vld [vmem:[%s367] sm:$0xff]
        %v369 = vld [vmem:[%s367 + $0x8] sm:$0xff]
        %v370 = vld [vmem:[%s367 + $0x10] sm:$0xff]
        %v371 = vld [vmem:[%s367 + $0x18] sm:$0xff]
        %v372 = vld [vmem:[%s367 + $0x20] sm:$0xff]
        %v373 = vld [vmem:[%s367 + $0x28] sm:$0xff]
        %v374 = vld [vmem:[%s367 + $0x30] sm:$0xff]
        %v375 = vld [vmem:[%s367 + $0x38] sm:$0xff]
        %v376 = vld [vmem:[%s367 + $0x40] sm:$0xff]
        %v377 = vld [vmem:[%s367 + $0x48] sm:$0xff]
        %v378 = vld [vmem:[%s367 + $0x50] sm:$0xff]
        %v379 = vld [vmem:[%s367 + $0x58] sm:$0xff]
        %v380 = vld [vmem:[%s367 + $0x60] sm:$0xff]
        %v381 = vld [vmem:[%s367 + $0x68] sm:$0xff]
        %v382 = vld [vmem:[%s367 + $0x70] sm:$0xff]
        %v383 = vld [vmem:[%s367 + $0x78] sm:$0xff]
        %v384 = vld [vmem:[%s367 + $0x80] sm:$0xff]
        %v385 = vld [vmem:[%s367 + $0x88] sm:$0xff]
        %v386 = vld [vmem:[%s367 + $0x90] sm:$0xff]
        %v387 = vld [vmem:[%s367 + $0x98] sm:$0xff]
        %v388 = vld [vmem:[%s367 + $0xa0] sm:$0xff]
        %v389 = vld [vmem:[%s367 + $0xa8] sm:$0xff]
        %v390 = vld [vmem:[%s367 + $0xb0] sm:$0xff]
        %v391 = vld [vmem:[%s367 + $0xb8] sm:$0xff]
        %v392 = vld [vmem:[%s367 + $0xc0] sm:$0xff]
        %v393 = vpack.c.bf16 %v369, %v368
        %v394 = vpack.c.bf16 %v371, %v370
        %v395 = vpack.c.bf16 %v373, %v372
        %v396 = vpack.c.bf16 %v375, %v374
        %v397 = vpack.c.bf16 %v377, %v376
        %v398 = vpack.c.bf16 %v379, %v378
        %v399 = vpack.c.bf16 %v381, %v380
        %v400 = vpack.c.bf16 %v383, %v382
        %v401 = vpack.c.bf16 %v385, %v384
        %v402 = vpack.c.bf16 %v387, %v386
        %v403 = vpack.c.bf16 %v389, %v388
        %v404 = vpack.c.bf16 %v391, %v390
        %v405 = vpack.c.bf16 %v392, %v392
        %s406 = scalar_lea.vmem %s3, 2
        %v407 = vld [vmem:[%s406] sm:$0x3]
        %vm408 = vcmask 31744
        %v410 = vsel %vm408, %v393, 0
        %v413 = vsel %vm408, %v394, 0
        %v416 = vsel %vm408, %v395, 0
        %v419 = vsel %vm408, %v396, 0
        %v422 = vsel %vm408, %v397, 0
        %v425 = vsel %vm408, %v398, 0
        %v428 = vsel %vm408, %v399, 0
        %v431 = vsel %vm408, %v400, 0
        %v434 = vsel %vm408, %v401, 0
        %v437 = vsel %vm408, %v402, 0
        %v440 = vsel %vm408, %v403, 0
        %v443 = vsel %vm408, %v404, 0
        %v446 = vsel %vm408, %v405, 0
        %vm448 = vcmask 1041408
        %v450 = vsel %vm448, %v407, 0
        %452 = vmatprep.subr.bf16.mxu0 0
        %453 = vmatpush1.bf16.msra.mxu0 %v450
        %454 = vmatprep.subr.bf16.mxu0 0
        %455 = vmatpush1.bf16.msra.mxu0 0
        %456 = vmatprep.subr.bf16.mxu0 0
        %457 = vmatpush1.bf16.msra.mxu0 0
        %458 = vmatprep.subr.bf16.mxu0 0
        %459 = vmatpush1.bf16.msra.mxu0 0
        %460 = vmatprep.subr.bf16.mxu0 0
        %461 = vmatpush1.bf16.msra.mxu0 0
        %462 = vmatprep.subr.bf16.mxu0 0
        %463 = vmatpush1.bf16.msra.mxu0 0
        %464 = vmatprep.subr.bf16.mxu0 0
        %465 = vmatpush1.bf16.msra.mxu0 0
        %466 = vmatprep.subr.bf16.mxu0 0
        %467 = vmatpush1.bf16.msra.mxu0 0
        %468 = vmatprep.subr.bf16.mxu0 0
        %469 = vmatpush1.bf16.msra.mxu0 0
        %470 = vmatprep.subr.bf16.mxu0 0
        %471 = vmatpush1.bf16.msra.mxu0 0
        %472 = vmatprep.subr.bf16.mxu0 0
        %473 = vmatpush1.bf16.msra.mxu0 0
        %474 = vmatprep.subr.bf16.mxu0 0
        %475 = vmatpush1.bf16.msra.mxu0 0
        %476 = vmatprep.subr.bf16.mxu0 0
        %477 = vmatpush1.bf16.msra.mxu0 0
        %478 = vmatprep.subr.bf16.mxu0 0
        %479 = vmatpush1.bf16.msra.mxu0 0
        %480 = vmatprep.subr.bf16.mxu0 0
        %481 = vmatpush1.bf16.msra.mxu0 0
        %482 = vmatprep.subr.bf16.mxu0 0
        %483 = vmatpush1.bf16.msra.mxu0 0
        %484 = vmatprep.mubr.bf16.mxu0 0
        %485 = vmatmul.mubr.bf16.gmra.mrb[0].mxu0 %v410
        %v486 = vpop.f32.mrb[0].mxu0
        %v487 = vadd.f32 0.0, %v486
        %v488 = vpop.f32.mrb[0].mxu0
        %v489 = vpop.f32.mrb[0].mxu0
        %v490 = vadd.f32 0.0, %v489
        %v491 = vpop.f32.mrb[0].mxu0
        %492 = vmatprep.mubr.bf16.mxu0 0
        %493 = vmatmul.mubr.bf16.gmra.mrb[0].mxu0 %v413
        %v494 = vpop.f32.mrb[0].mxu0
        %v495 = vadd.f32 0.0, %v494
        %v496 = vpop.f32.mrb[0].mxu0
        %v497 = vpop.f32.mrb[0].mxu0
        %v498 = vadd.f32 0.0, %v497
        %v499 = vpop.f32.mrb[0].mxu0
        %500 = vmatprep.mubr.bf16.mxu0 0
        %501 = vmatmul.mubr.bf16.gmra.mrb[0].mxu0 %v416
        %v502 = vpop.f32.mrb[0].mxu0
        %v503 = vadd.f32 0.0, %v502
        %v504 = vpop.f32.mrb[0].mxu0
        %v505 = vpop.f32.mrb[0].mxu0
        %v506 = vadd.f32 0.0, %v505
        %v507 = vpop.f32.mrb[0].mxu0
        %508 = vmatprep.mubr.bf16.mxu0 0
        %509 = vmatmul.mubr.bf16.gmra.mrb[0].mxu0 %v419
        %v510 = vpop.f32.mrb[0].mxu0
        %v511 = vadd.f32 0.0, %v510
        %v512 = vpop.f32.mrb[0].mxu0
        %v513 = vpop.f32.mrb[0].mxu0
        %v514 = vadd.f32 0.0, %v513
        %v515 = vpop.f32.mrb[0].mxu0
        %516 = vmatprep.mubr.bf16.mxu0 0
        %517 = vmatmul.mubr.bf16.gmra.mrb[0].mxu0 %v422
        %v518 = vpop.f32.mrb[0].mxu0
        %v519 = vadd.f32 0.0, %v518
        %v520 = vpop.f32.mrb[0].mxu0
        %v521 = vpop.f32.mrb[0].mxu0
        %v522 = vadd.f32 0.0, %v521
        %v523 = vpop.f32.mrb[0].mxu0
        %524 = vmatprep.mubr.bf16.mxu0 0
        %525 = vmatmul.mubr.bf16.gmra.mrb[0].mxu0 %v425
        %v526 = vpop.f32.mrb[0].mxu0
        %v527 = vadd.f32 0.0, %v526
        %v528 = vpop.f32.mrb[0].mxu0
        %v529 = vpop.f32.mrb[0].mxu0
        %v530 = vadd.f32 0.0, %v529
        %v531 = vpop.f32.mrb[0].mxu0
        %532 = vmatprep.mubr.bf16.mxu0 0
        %533 = vmatmul.mubr.bf16.gmra.mrb[0].mxu0 %v428
        %v534 = vpop.f32.mrb[0].mxu0
        %v535 = vadd.f32 0.0, %v534
        %v536 = vpop.f32.mrb[0].mxu0
        %v537 = vpop.f32.mrb[0].mxu0
        %v538 = vadd.f32 0.0, %v537
        %v539 = vpop.f32.mrb[0].mxu0
        %540 = vmatprep.mubr.bf16.mxu0 0
        %541 = vmatmul.mubr.bf16.gmra.mrb[0].mxu0 %v431
        %v542 = vpop.f32.mrb[0].mxu0
        %v543 = vadd.f32 0.0, %v542
        %v544 = vpop.f32.mrb[0].mxu0
        %v545 = vpop.f32.mrb[0].mxu0
        %v546 = vadd.f32 0.0, %v545
        %v547 = vpop.f32.mrb[0].mxu0
        %548 = vmatprep.mubr.bf16.mxu0 0
        %549 = vmatmul.mubr.bf16.gmra.mrb[0].mxu0 %v434
        %v550 = vpop.f32.mrb[0].mxu0
        %v551 = vadd.f32 0.0, %v550
        %v552 = vpop.f32.mrb[0].mxu0
        %v553 = vpop.f32.mrb[0].mxu0
        %v554 = vadd.f32 0.0, %v553
        %v555 = vpop.f32.mrb[0].mxu0
        %556 = vmatprep.mubr.bf16.mxu0 0
        %557 = vmatmul.mubr.bf16.gmra.mrb[0].mxu0 %v437
        %v558 = vpop.f32.mrb[0].mxu0
        %v559 = vadd.f32 0.0, %v558
        %v560 = vpop.f32.mrb[0].mxu0
        %v561 = vpop.f32.mrb[0].mxu0
        %v562 = vadd.f32 0.0, %v561
        %v563 = vpop.f32.mrb[0].mxu0
        %564 = vmatprep.mubr.bf16.mxu0 0
        %565 = vmatmul.mubr.bf16.gmra.mrb[0].mxu0 %v440
        %v566 = vpop.f32.mrb[0].mxu0
        %v567 = vadd.f32 0.0, %v566
        %v568 = vpop.f32.mrb[0].mxu0
        %v569 = vpop.f32.mrb[0].mxu0
        %v570 = vadd.f32 0.0, %v569
        %v571 = vpop.f32.mrb[0].mxu0
        %572 = vmatprep.mubr.bf16.mxu0 0
        %573 = vmatmul.mubr.bf16.gmra.mrb[0].mxu0 %v443
        %v574 = vpop.f32.mrb[0].mxu0
        %v575 = vadd.f32 0.0, %v574
        %v576 = vpop.f32.mrb[0].mxu0
        %v577 = vpop.f32.mrb[0].mxu0
        %v578 = vadd.f32 0.0, %v577
        %v579 = vpop.f32.mrb[0].mxu0
        %580 = vmatprep.mubr.bf16.mxu0 0
        %581 = vmatmul.mubr.bf16.gmra.mrb[0].mxu0 %v446
        %v582 = vpop.f32.mrb[0].mxu0
        %v583 = vadd.f32 0.0, %v582
        %v584 = vpop.f32.mrb[0].mxu0
        %v585 = vpop.f32.mrb[0].mxu0
        %v586 = vpop.f32.mrb[0].mxu0
        %587 = vdwg.mxu0
        %v589 = vsel %vm408, %v352, 0
        %v592 = vsel %vm408, %v353, 0
        %v595 = vsel %vm408, %v354, 0
        %v598 = vsel %vm408, %v355, 0
        %v601 = vsel %vm408, %v356, 0
        %v604 = vsel %vm408, %v357, 0
        %v607 = vsel %vm408, %v358, 0
        %v610 = vsel %vm408, %v359, 0
        %v613 = vsel %vm408, %v360, 0
        %v616 = vsel %vm408, %v361, 0
        %v619 = vsel %vm408, %v362, 0
        %v622 = vsel %vm408, %v363, 0
        %v625 = vsel %vm408, %v364, 0
        %v628 = vsel %vm448, %v365, 0
        %630 = vmatprep.subr.bf16.mxu0 0
        %631 = vmatpush1.bf16.msra.mxu0 %v628
        %632 = vmatprep.subr.bf16.mxu0 0
        %633 = vmatpush1.bf16.msra.mxu0 0
        %634 = vmatprep.subr.bf16.mxu0 0
        %635 = vmatpush1.bf16.msra.mxu0 0
        %636 = vmatprep.subr.bf16.mxu0 0
        %637 = vmatpush1.bf16.msra.mxu0 0
        %638 = vmatprep.subr.bf16.mxu0 0
        %639 = vmatpush1.bf16.msra.mxu0 0
        %640 = vmatprep.subr.bf16.mxu0 0
        %641 = vmatpush1.bf16.msra.mxu0 0
        %642 = vmatprep.subr.bf16.mxu0 0
        %643 = vmatpush1.bf16.msra.mxu0 0
        %644 = vmatprep.subr.bf16.mxu0 0
        %645 = vmatpush1.bf16.msra.mxu0 0
        %646 = vmatprep.subr.bf16.mxu0 0
        %647 = vmatpush1.bf16.msra.mxu0 0
        %648 = vmatprep.subr.bf16.mxu0 0
        %649 = vmatpush1.bf16.msra.mxu0 0
        %650 = vmatprep.subr.bf16.mxu0 0
        %651 = vmatpush1.bf16.msra.mxu0 0
        %652 = vmatprep.subr.bf16.mxu0 0
        %653 = vmatpush1.bf16.msra.mxu0 0
        %654 = vmatprep.subr.bf16.mxu0 0
        %655 = vmatpush1.bf16.msra.mxu0 0
        %656 = vmatprep.subr.bf16.mxu0 0
        %657 = vmatpush1.bf16.msra.mxu0 0
        %658 = vmatprep.subr.bf16.mxu0 0
        %659 = vmatpush1.bf16.msra.mxu0 0
        %660 = vmatprep.subr.bf16.mxu0 0
        %661 = vmatpush1.bf16.msra.mxu0 0
        %662 = vmatprep.mubr.bf16.mxu0 0
        %663 = vmatmul.mubr.bf16.gmra.mrb[0].mxu0 %v589
        %v664 = vpop.f32.mrb[0].mxu0
        %v665 = vadd.f32 %v487, %v664
        %v666 = vpop.f32.mrb[0].mxu0
        %v667 = vpop.f32.mrb[0].mxu0
        %v668 = vadd.f32 %v490, %v667
        %v669 = vpop.f32.mrb[0].mxu0
        %670 = vmatprep.mubr.bf16.mxu0 0
        %671 = vmatmul.mubr.bf16.gmra.mrb[0].mxu0 %v592
        %v672 = vpop.f32.mrb[0].mxu0
        %v673 = vadd.f32 %v495, %v672
        %v674 = vpop.f32.mrb[0].mxu0
        %v675 = vpop.f32.mrb[0].mxu0
        %v676 = vadd.f32 %v498, %v675
        %v677 = vpop.f32.mrb[0].mxu0
        %678 = vmatprep.mubr.bf16.mxu0 0
        %679 = vmatmul.mubr.bf16.gmra.mrb[0].mxu0 %v595
        %v680 = vpop.f32.mrb[0].mxu0
        %v681 = vadd.f32 %v503, %v680
        %v682 = vpop.f32.mrb[0].mxu0
        %v683 = vpop.f32.mrb[0].mxu0
        %v684 = vadd.f32 %v506, %v683
        %v685 = vpop.f32.mrb[0].mxu0
        %686 = vmatprep.mubr.bf16.mxu0 0
        %687 = vmatmul.mubr.bf16.gmra.mrb[0].mxu0 %v598
        %v688 = vpop.f32.mrb[0].mxu0
        %v689 = vadd.f32 %v511, %v688
        %v690 = vpop.f32.mrb[0].mxu0
        %v691 = vpop.f32.mrb[0].mxu0
        %v692 = vadd.f32 %v514, %v691
        %v693 = vpop.f32.mrb[0].mxu0
        %694 = vmatprep.mubr.bf16.mxu0 0
        %695 = vmatmul.mubr.bf16.gmra.mrb[0].mxu0 %v601
        %v696 = vpop.f32.mrb[0].mxu0
        %v697 = vadd.f32 %v519, %v696
        %v698 = vpop.f32.mrb[0].mxu0
        %v699 = vpop.f32.mrb[0].mxu0
        %v700 = vadd.f32 %v522, %v699
        %v701 = vpop.f32.mrb[0].mxu0
        %702 = vmatprep.mubr.bf16.mxu0 0
        %703 = vmatmul.mubr.bf16.gmra.mrb[0].mxu0 %v604
        %v704 = vpop.f32.mrb[0].mxu0
        %v705 = vadd.f32 %v527, %v704
        %v706 = vpop.f32.mrb[0].mxu0
        %v707 = vpop.f32.mrb[0].mxu0
        %v708 = vadd.f32 %v530, %v707
        %v709 = vpop.f32.mrb[0].mxu0
        %710 = vmatprep.mubr.bf16.mxu0 0
        %711 = vmatmul.mubr.bf16.gmra.mrb[0].mxu0 %v607
        %v712 = vpop.f32.mrb[0].mxu0
        %v713 = vadd.f32 %v535, %v712
        %v714 = vpop.f32.mrb[0].mxu0
        %v715 = vpop.f32.mrb[0].mxu0
        %v716 = vadd.f32 %v538, %v715
        %v717 = vpop.f32.mrb[0].mxu0
        %718 = vmatprep.mubr.bf16.mxu0 0
        %719 = vmatmul.mubr.bf16.gmra.mrb[0].mxu0 %v610
        %v720 = vpop.f32.mrb[0].mxu0
        %v721 = vadd.f32 %v543, %v720
        %v722 = vpop.f32.mrb[0].mxu0
        %v723 = vpop.f32.mrb[0].mxu0
        %v724 = vadd.f32 %v546, %v723
        %v725 = vpop.f32.mrb[0].mxu0
        %726 = vmatprep.mubr.bf16.mxu0 0
        %727 = vmatmul.mubr.bf16.gmra.mrb[0].mxu0 %v613
        %v728 = vpop.f32.mrb[0].mxu0
        %v729 = vadd.f32 %v551, %v728
        %v730 = vpop.f32.mrb[0].mxu0
        %v731 = vpop.f32.mrb[0].mxu0
        %v732 = vadd.f32 %v554, %v731
        %v733 = vpop.f32.mrb[0].mxu0
        %734 = vmatprep.mubr.bf16.mxu0 0
        %735 = vmatmul.mubr.bf16.gmra.mrb[0].mxu0 %v616
        %v736 = vpop.f32.mrb[0].mxu0
        %v737 = vadd.f32 %v559, %v736
        %v738 = vpop.f32.mrb[0].mxu0
        %v739 = vpop.f32.mrb[0].mxu0
        %v740 = vadd.f32 %v562, %v739
        %v741 = vpop.f32.mrb[0].mxu0
        %742 = vmatprep.mubr.bf16.mxu0 0
        %743 = vmatmul.mubr.bf16.gmra.mrb[0].mxu0 %v619
        %v744 = vpop.f32.mrb[0].mxu0
        %v745 = vadd.f32 %v567, %v744
        %v746 = vpop.f32.mrb[0].mxu0
        %v747 = vpop.f32.mrb[0].mxu0
        %v748 = vadd.f32 %v570, %v747
        %v749 = vpop.f32.mrb[0].mxu0
        %750 = vmatprep.mubr.bf16.mxu0 0
        %751 = vmatmul.mubr.bf16.gmra.mrb[0].mxu0 %v622
        %v752 = vpop.f32.mrb[0].mxu0
        %v753 = vadd.f32 %v575, %v752
        %v754 = vpop.f32.mrb[0].mxu0
        %v755 = vpop.f32.mrb[0].mxu0
        %v756 = vadd.f32 %v578, %v755
        %v757 = vpop.f32.mrb[0].mxu0
        %758 = vmatprep.mubr.bf16.mxu0 0
        %759 = vmatmul.mubr.bf16.gmra.mrb[0].mxu0 %v625
        %v760 = vpop.f32.mrb[0].mxu0
        %v761 = vadd.f32 %v583, %v760
        %v762 = vpop.f32.mrb[0].mxu0
        %v763 = vpop.f32.mrb[0].mxu0
        %v764 = vpop.f32.mrb[0].mxu0
        %765 = vdwg.mxu0
        %s766 = sadd.s32 %s325, 2
        %s767 = scalar_lea.vmem %s314, %s766
        %v768 = vld [vmem:[%s767] sm:$0xff]
        %v769 = vld [vmem:[%s767 + $0x8] sm:$0xff]
        %v770 = vld [vmem:[%s767 + $0x10] sm:$0xff]
        %v771 = vld [vmem:[%s767 + $0x18] sm:$0xff]
        %v772 = vld [vmem:[%s767 + $0x20] sm:$0xff]
        %v773 = vld [vmem:[%s767 + $0x28] sm:$0xff]
        %v774 = vld [vmem:[%s767 + $0x30] sm:$0xff]
        %v775 = vld [vmem:[%s767 + $0x38] sm:$0xff]
        %v776 = vld [vmem:[%s767 + $0x40] sm:$0xff]
        %v777 = vld [vmem:[%s767 + $0x48] sm:$0xff]
        %v778 = vld [vmem:[%s767 + $0x50] sm:$0xff]
        %v779 = vld [vmem:[%s767 + $0x58] sm:$0xff]
        %v780 = vld [vmem:[%s767 + $0x60] sm:$0xff]
        %v781 = vld [vmem:[%s767 + $0x68] sm:$0xff]
        %v782 = vld [vmem:[%s767 + $0x70] sm:$0xff]
        %v783 = vld [vmem:[%s767 + $0x78] sm:$0xff]
        %v784 = vld [vmem:[%s767 + $0x80] sm:$0xff]
        %v785 = vld [vmem:[%s767 + $0x88] sm:$0xff]
        %v786 = vld [vmem:[%s767 + $0x90] sm:$0xff]
        %v787 = vld [vmem:[%s767 + $0x98] sm:$0xff]
        %v788 = vld [vmem:[%s767 + $0xa0] sm:$0xff]
        %v789 = vld [vmem:[%s767 + $0xa8] sm:$0xff]
        %v790 = vld [vmem:[%s767 + $0xb0] sm:$0xff]
        %v791 = vld [vmem:[%s767 + $0xb8] sm:$0xff]
        %v792 = vld [vmem:[%s767 + $0xc0] sm:$0xff]
        %v793 = vpack.c.bf16 %v769, %v768
        %v794 = vpack.c.bf16 %v771, %v770
        %v795 = vpack.c.bf16 %v773, %v772
        %v796 = vpack.c.bf16 %v775, %v774
        %v797 = vpack.c.bf16 %v777, %v776
        %v798 = vpack.c.bf16 %v779, %v778
        %v799 = vpack.c.bf16 %v781, %v780
        %v800 = vpack.c.bf16 %v783, %v782
        %v801 = vpack.c.bf16 %v785, %v784
        %v802 = vpack.c.bf16 %v787, %v786
        %v803 = vpack.c.bf16 %v789, %v788
        %v804 = vpack.c.bf16 %v791, %v790
        %v805 = vpack.c.bf16 %v792, %v792
        %s806 = scalar_lea.vmem %s3, 4
        %v807 = vld [vmem:[%s806] sm:$0x3]
        %v809 = vsel %vm408, %v793, 0
        %v812 = vsel %vm408, %v794, 0
        %v815 = vsel %vm408, %v795, 0
        %v818 = vsel %vm408, %v796, 0
        %v821 = vsel %vm408, %v797, 0
        %v824 = vsel %vm408, %v798, 0
        %v827 = vsel %vm408, %v799, 0
        %v830 = vsel %vm408, %v800, 0
        %v833 = vsel %vm408, %v801, 0
        %v836 = vsel %vm408, %v802, 0
        %v839 = vsel %vm408, %v803, 0
        %v842 = vsel %vm408, %v804, 0
        %v845 = vsel %vm408, %v805, 0
        %v848 = vsel %vm448, %v807, 0
        %850 = vmatprep.subr.bf16.mxu0 0
        %851 = vmatpush1.bf16.msra.mxu0 %v848
        %852 = vmatprep.subr.bf16.mxu0 0
        %853 = vmatpush1.bf16.msra.mxu0 0
        %854 = vmatprep.subr.bf16.mxu0 0
        %855 = vmatpush1.bf16.msra.mxu0 0
        %856 = vmatprep.subr.bf16.mxu0 0
        %857 = vmatpush1.bf16.msra.mxu0 0
        %858 = vmatprep.subr.bf16.mxu0 0
        %859 = vmatpush1.bf16.msra.mxu0 0
        %860 = vmatprep.subr.bf16.mxu0 0
        %861 = vmatpush1.bf16.msra.mxu0 0
        %862 = vmatprep.subr.bf16.mxu0 0
        %863 = vmatpush1.bf16.msra.mxu0 0
        %864 = vmatprep.subr.bf16.mxu0 0
        %865 = vmatpush1.bf16.msra.mxu0 0
        %866 = vmatprep.subr.bf16.mxu0 0
        %867 = vmatpush1.bf16.msra.mxu0 0
        %868 = vmatprep.subr.bf16.mxu0 0
        %869 = vmatpush1.bf16.msra.mxu0 0
        %870 = vmatprep.subr.bf16.mxu0 0
        %871 = vmatpush1.bf16.msra.mxu0 0
        %872 = vmatprep.subr.bf16.mxu0 0
        %873 = vmatpush1.bf16.msra.mxu0 0
        %874 = vmatprep.subr.bf16.mxu0 0
        %875 = vmatpush1.bf16.msra.mxu0 0
        %876 = vmatprep.subr.bf16.mxu0 0
        %877 = vmatpush1.bf16.msra.mxu0 0
        %878 = vmatprep.subr.bf16.mxu0 0
        %879 = vmatpush1.bf16.msra.mxu0 0
        %880 = vmatprep.subr.bf16.mxu0 0
        %881 = vmatpush1.bf16.msra.mxu0 0
        %882 = vmatprep.mubr.bf16.mxu0 0
        %883 = vmatmul.mubr.bf16.gmra.mrb[0].mxu0 %v809
        %v884 = vpop.f32.mrb[0].mxu0
        %v885 = vadd.f32 0.0, %v884
        %v886 = vpop.f32.mrb[0].mxu0
        %v887 = vpop.f32.mrb[0].mxu0
        %v888 = vadd.f32 0.0, %v887
        %v889 = vpop.f32.mrb[0].mxu0
        %890 = vmatprep.mubr.bf16.mxu0 0
        %891 = vmatmul.mubr.bf16.gmra.mrb[0].mxu0 %v812
        %v892 = vpop.f32.mrb[0].mxu0
        %v893 = vadd.f32 0.0, %v892
        %v894 = vpop.f32.mrb[0].mxu0
        %v895 = vpop.f32.mrb[0].mxu0
        %v896 = vadd.f32 0.0, %v895
        %v897 = vpop.f32.mrb[0].mxu0
        %898 = vmatprep.mubr.bf16.mxu0 0
        %899 = vmatmul.mubr.bf16.gmra.mrb[0].mxu0 %v815
        %v900 = vpop.f32.mrb[0].mxu0
        %v901 = vadd.f32 0.0, %v900
        %v902 = vpop.f32.mrb[0].mxu0
        %v903 = vpop.f32.mrb[0].mxu0
        %v904 = vadd.f32 0.0, %v903
        %v905 = vpop.f32.mrb[0].mxu0
        %906 = vmatprep.mubr.bf16.mxu0 0
        %907 = vmatmul.mubr.bf16.gmra.mrb[0].mxu0 %v818
        %v908 = vpop.f32.mrb[0].mxu0
        %v909 = vadd.f32 0.0, %v908
        %v910 = vpop.f32.mrb[0].mxu0
        %v911 = vpop.f32.mrb[0].mxu0
        %v912 = vadd.f32 0.0, %v911
        %v913 = vpop.f32.mrb[0].mxu0
        %914 = vmatprep.mubr.bf16.mxu0 0
        %915 = vmatmul.mubr.bf16.gmra.mrb[0].mxu0 %v821
        %v916 = vpop.f32.mrb[0].mxu0
        %v917 = vadd.f32 0.0, %v916
        %v918 = vpop.f32.mrb[0].mxu0
        %v919 = vpop.f32.mrb[0].mxu0
        %v920 = vadd.f32 0.0, %v919
        %v921 = vpop.f32.mrb[0].mxu0
        %922 = vmatprep.mubr.bf16.mxu0 0
        %923 = vmatmul.mubr.bf16.gmra.mrb[0].mxu0 %v824
        %v924 = vpop.f32.mrb[0].mxu0
        %v925 = vadd.f32 0.0, %v924
        %v926 = vpop.f32.mrb[0].mxu0
        %v927 = vpop.f32.mrb[0].mxu0
        %v928 = vadd.f32 0.0, %v927
        %v929 = vpop.f32.mrb[0].mxu0
        %930 = vmatprep.mubr.bf16.mxu0 0
        %931 = vmatmul.mubr.bf16.gmra.mrb[0].mxu0 %v827
        %v932 = vpop.f32.mrb[0].mxu0
        %v933 = vadd.f32 0.0, %v932
        %v934 = vpop.f32.mrb[0].mxu0
        %v935 = vpop.f32.mrb[0].mxu0
        %v936 = vadd.f32 0.0, %v935
        %v937 = vpop.f32.mrb[0].mxu0
        %938 = vmatprep.mubr.bf16.mxu0 0
        %939 = vmatmul.mubr.bf16.gmra.mrb[0].mxu0 %v830
        %v940 = vpop.f32.mrb[0].mxu0
        %v941 = vadd.f32 0.0, %v940
        %v942 = vpop.f32.mrb[0].mxu0
        %v943 = vpop.f32.mrb[0].mxu0
        %v944 = vadd.f32 0.0, %v943
        %v945 = vpop.f32.mrb[0].mxu0
        %946 = vmatprep.mubr.bf16.mxu0 0
        %947 = vmatmul.mubr.bf16.gmra.mrb[0].mxu0 %v833
        %v948 = vpop.f32.mrb[0].mxu0
        %v949 = vadd.f32 0.0, %v948
        %v950 = vpop.f32.mrb[0].mxu0
        %v951 = vpop.f32.mrb[0].mxu0
        %v952 = vadd.f32 0.0, %v951
        %v953 = vpop.f32.mrb[0].mxu0
        %954 = vmatprep.mubr.bf16.mxu0 0
        %955 = vmatmul.mubr.bf16.gmra.mrb[0].mxu0 %v836
        %v956 = vpop.f32.mrb[0].mxu0
        %v957 = vadd.f32 0.0, %v956
        %v958 = vpop.f32.mrb[0].mxu0
        %v959 = vpop.f32.mrb[0].mxu0
        %v960 = vadd.f32 0.0, %v959
        %v961 = vpop.f32.mrb[0].mxu0
        %962 = vmatprep.mubr.bf16.mxu0 0
        %963 = vmatmul.mubr.bf16.gmra.mrb[0].mxu0 %v839
        %v964 = vpop.f32.mrb[0].mxu0
        %v965 = vadd.f32 0.0, %v964
        %v966 = vpop.f32.mrb[0].mxu0
        %v967 = vpop.f32.mrb[0].mxu0
        %v968 = vadd.f32 0.0, %v967
        %v969 = vpop.f32.mrb[0].mxu0
        %970 = vmatprep.mubr.bf16.mxu0 0
        %971 = vmatmul.mubr.bf16.gmra.mrb[0].mxu0 %v842
        %v972 = vpop.f32.mrb[0].mxu0
        %v973 = vadd.f32 0.0, %v972
        %v974 = vpop.f32.mrb[0].mxu0
        %v975 = vpop.f32.mrb[0].mxu0
        %v976 = vadd.f32 0.0, %v975
        %v977 = vpop.f32.mrb[0].mxu0
        %978 = vmatprep.mubr.bf16.mxu0 0
        %979 = vmatmul.mubr.bf16.gmra.mrb[0].mxu0 %v845
        %v980 = vpop.f32.mrb[0].mxu0
        %v981 = vadd.f32 0.0, %v980
        %v982 = vpop.f32.mrb[0].mxu0
        %v983 = vpop.f32.mrb[0].mxu0
        %v984 = vpop.f32.mrb[0].mxu0
        %985 = vdwg.mxu0
        %v986 = vadd.f32 %v665, %v885
        %v987 = vadd.f32 %v668, %v888
        %v988 = vadd.f32 %v673, %v893
        %v989 = vadd.f32 %v676, %v896
        %v990 = vadd.f32 %v681, %v901
        %v991 = vadd.f32 %v684, %v904
        %v992 = vadd.f32 %v689, %v909
        %v993 = vadd.f32 %v692, %v912
        %v994 = vadd.f32 %v697, %v917
        %v995 = vadd.f32 %v700, %v920
        %v996 = vadd.f32 %v705, %v925
        %v997 = vadd.f32 %v708, %v928
        %v998 = vadd.f32 %v713, %v933
        %v999 = vadd.f32 %v716, %v936
        %v1000 = vadd.f32 %v721, %v941
        %v1001 = vadd.f32 %v724, %v944
        %v1002 = vadd.f32 %v729, %v949
        %v1003 = vadd.f32 %v732, %v952
        %v1004 = vadd.f32 %v737, %v957
        %v1005 = vadd.f32 %v740, %v960
        %v1006 = vadd.f32 %v745, %v965
        %v1007 = vadd.f32 %v748, %v968
        %v1008 = vadd.f32 %v753, %v973
        %v1009 = vadd.f32 %v756, %v976
        %v1010 = vadd.f32 %v761, %v981
        %s1011 = sadd.s32 %s325, 20
        %s1012 = scalar_lea.vmem %s314, %s1011
        %v1013 = vld [vmem:[%s1012] sm:$0xff]
        %v1014 = vld [vmem:[%s1012 + $0x8] sm:$0xff]
        %v1015 = vld [vmem:[%s1012 + $0x10] sm:$0xff]
        %v1016 = vld [vmem:[%s1012 + $0x18] sm:$0xff]
        %v1017 = vld [vmem:[%s1012 + $0x20] sm:$0xff]
        %v1018 = vld [vmem:[%s1012 + $0x28] sm:$0xff]
        %v1019 = vld [vmem:[%s1012 + $0x30] sm:$0xff]
        %v1020 = vld [vmem:[%s1012 + $0x38] sm:$0xff]
        %v1021 = vld [vmem:[%s1012 + $0x40] sm:$0xff]
        %v1022 = vld [vmem:[%s1012 + $0x48] sm:$0xff]
        %v1023 = vld [vmem:[%s1012 + $0x50] sm:$0xff]
        %v1024 = vld [vmem:[%s1012 + $0x58] sm:$0xff]
        %v1025 = vld [vmem:[%s1012 + $0x60] sm:$0xff]
        %v1026 = vld [vmem:[%s1012 + $0x68] sm:$0xff]
        %v1027 = vld [vmem:[%s1012 + $0x70] sm:$0xff]
        %v1028 = vld [vmem:[%s1012 + $0x78] sm:$0xff]
        %v1029 = vld [vmem:[%s1012 + $0x80] sm:$0xff]
        %v1030 = vld [vmem:[%s1012 + $0x88] sm:$0xff]
        %v1031 = vld [vmem:[%s1012 + $0x90] sm:$0xff]
        %v1032 = vld [vmem:[%s1012 + $0x98] sm:$0xff]
        %v1033 = vld [vmem:[%s1012 + $0xa0] sm:$0xff]
        %v1034 = vld [vmem:[%s1012 + $0xa8] sm:$0xff]
        %v1035 = vld [vmem:[%s1012 + $0xb0] sm:$0xff]
        %v1036 = vld [vmem:[%s1012 + $0xb8] sm:$0xff]
        %v1037 = vld [vmem:[%s1012 + $0xc0] sm:$0xff]
        %v1038 = vpack.c.bf16 %v1014, %v1013
        %v1039 = vpack.c.bf16 %v1016, %v1015
        %v1040 = vpack.c.bf16 %v1018, %v1017
        %v1041 = vpack.c.bf16 %v1020, %v1019
        %v1042 = vpack.c.bf16 %v1022, %v1021
        %v1043 = vpack.c.bf16 %v1024, %v1023
        %v1044 = vpack.c.bf16 %v1026, %v1025
        %v1045 = vpack.c.bf16 %v1028, %v1027
        %v1046 = vpack.c.bf16 %v1030, %v1029
        %v1047 = vpack.c.bf16 %v1032, %v1031
        %v1048 = vpack.c.bf16 %v1034, %v1033
        %v1049 = vpack.c.bf16 %v1036, %v1035
        %v1050 = vpack.c.bf16 %v1037, %v1037
        %s1051 = scalar_lea.vmem %s3, 6
        %v1052 = vld [vmem:[%s1051] sm:$0x3]
        %v1054 = vsel %vm408, %v1038, 0
        %v1057 = vsel %vm408, %v1039, 0
        %v1060 = vsel %vm408, %v1040, 0
        %v1063 = vsel %vm408, %v1041, 0
        %v1066 = vsel %vm408, %v1042, 0
        %v1069 = vsel %vm408, %v1043, 0
        %v1072 = vsel %vm408, %v1044, 0
        %v1075 = vsel %vm408, %v1045, 0
        %v1078 = vsel %vm408, %v1046, 0
        %v1081 = vsel %vm408, %v1047, 0
        %v1084 = vsel %vm408, %v1048, 0
        %v1087 = vsel %vm408, %v1049, 0
        %v1090 = vsel %vm408, %v1050, 0
        %v1093 = vsel %vm448, %v1052, 0
        %1095 = vmatprep.subr.bf16.mxu0 0
        %1096 = vmatpush1.bf16.msra.mxu0 %v1093
        %1097 = vmatprep.subr.bf16.mxu0 0
        %1098 = vmatpush1.bf16.msra.mxu0 0
        %1099 = vmatprep.subr.bf16.mxu0 0
        %1100 = vmatpush1.bf16.msra.mxu0 0
        %1101 = vmatprep.subr.bf16.mxu0 0
        %1102 = vmatpush1.bf16.msra.mxu0 0
        %1103 = vmatprep.subr.bf16.mxu0 0
        %1104 = vmatpush1.bf16.msra.mxu0 0
        %1105 = vmatprep.subr.bf16.mxu0 0
        %1106 = vmatpush1.bf16.msra.mxu0 0
        %1107 = vmatprep.subr.bf16.mxu0 0
        %1108 = vmatpush1.bf16.msra.mxu0 0
        %1109 = vmatprep.subr.bf16.mxu0 0
        %1110 = vmatpush1.bf16.msra.mxu0 0
        %1111 = vmatprep.subr.bf16.mxu0 0
        %1112 = vmatpush1.bf16.msra.mxu0 0
        %1113 = vmatprep.subr.bf16.mxu0 0
        %1114 = vmatpush1.bf16.msra.mxu0 0
        %1115 = vmatprep.subr.bf16.mxu0 0
        %1116 = vmatpush1.bf16.msra.mxu0 0
        %1117 = vmatprep.subr.bf16.mxu0 0
        %1118 = vmatpush1.bf16.msra.mxu0 0
        %1119 = vmatprep.subr.bf16.mxu0 0
        %1120 = vmatpush1.bf16.msra.mxu0 0
        %1121 = vmatprep.subr.bf16.mxu0 0
        %1122 = vmatpush1.bf16.msra.mxu0 0
        %1123 = vmatprep.subr.bf16.mxu0 0
        %1124 = vmatpush1.bf16.msra.mxu0 0
        %1125 = vmatprep.subr.bf16.mxu0 0
        %1126 = vmatpush1.bf16.msra.mxu0 0
        %1127 = vmatprep.mubr.bf16.mxu0 0
        %1128 = vmatmul.mubr.bf16.gmra.mrb[0].mxu0 %v1054
        %v1129 = vpop.f32.mrb[0].mxu0
        %v1130 = vadd.f32 0.0, %v1129
        %v1131 = vpop.f32.mrb[0].mxu0
        %v1132 = vpop.f32.mrb[0].mxu0
        %v1133 = vadd.f32 0.0, %v1132
        %v1134 = vpop.f32.mrb[0].mxu0
        %1135 = vmatprep.mubr.bf16.mxu0 0
        %1136 = vmatmul.mubr.bf16.gmra.mrb[0].mxu0 %v1057
        %v1137 = vpop.f32.mrb[0].mxu0
        %v1138 = vadd.f32 0.0, %v1137
        %v1139 = vpop.f32.mrb[0].mxu0
        %v1140 = vpop.f32.mrb[0].mxu0
        %v1141 = vadd.f32 0.0, %v1140
        %v1142 = vpop.f32.mrb[0].mxu0
        %1143 = vmatprep.mubr.bf16.mxu0 0
        %1144 = vmatmul.mubr.bf16.gmra.mrb[0].mxu0 %v1060
        %v1145 = vpop.f32.mrb[0].mxu0
        %v1146 = vadd.f32 0.0, %v1145
        %v1147 = vpop.f32.mrb[0].mxu0
        %v1148 = vpop.f32.mrb[0].mxu0
        %v1149 = vadd.f32 0.0, %v1148
        %v1150 = vpop.f32.mrb[0].mxu0
        %1151 = vmatprep.mubr.bf16.mxu0 0
        %1152 = vmatmul.mubr.bf16.gmra.mrb[0].mxu0 %v1063
        %v1153 = vpop.f32.mrb[0].mxu0
        %v1154 = vadd.f32 0.0, %v1153
        %v1155 = vpop.f32.mrb[0].mxu0
        %v1156 = vpop.f32.mrb[0].mxu0
        %v1157 = vadd.f32 0.0, %v1156
        %v1158 = vpop.f32.mrb[0].mxu0
        %1159 = vmatprep.mubr.bf16.mxu0 0
        %1160 = vmatmul.mubr.bf16.gmra.mrb[0].mxu0 %v1066
        %v1161 = vpop.f32.mrb[0].mxu0
        %v1162 = vadd.f32 0.0, %v1161
        %v1163 = vpop.f32.mrb[0].mxu0
        %v1164 = vpop.f32.mrb[0].mxu0
        %v1165 = vadd.f32 0.0, %v1164
        %v1166 = vpop.f32.mrb[0].mxu0
        %1167 = vmatprep.mubr.bf16.mxu0 0
        %1168 = vmatmul.mubr.bf16.gmra.mrb[0].mxu0 %v1069
        %v1169 = vpop.f32.mrb[0].mxu0
        %v1170 = vadd.f32 0.0, %v1169
        %v1171 = vpop.f32.mrb[0].mxu0
        %v1172 = vpop.f32.mrb[0].mxu0
        %v1173 = vadd.f32 0.0, %v1172
        %v1174 = vpop.f32.mrb[0].mxu0
        %1175 = vmatprep.mubr.bf16.mxu0 0
        %1176 = vmatmul.mubr.bf16.gmra.mrb[0].mxu0 %v1072
        %v1177 = vpop.f32.mrb[0].mxu0
        %v1178 = vadd.f32 0.0, %v1177
        %v1179 = vpop.f32.mrb[0].mxu0
        %v1180 = vpop.f32.mrb[0].mxu0
        %v1181 = vadd.f32 0.0, %v1180
        %v1182 = vpop.f32.mrb[0].mxu0
        %1183 = vmatprep.mubr.bf16.mxu0 0
        %1184 = vmatmul.mubr.bf16.gmra.mrb[0].mxu0 %v1075
        %v1185 = vpop.f32.mrb[0].mxu0
        %v1186 = vadd.f32 0.0, %v1185
        %v1187 = vpop.f32.mrb[0].mxu0
        %v1188 = vpop.f32.mrb[0].mxu0
        %v1189 = vadd.f32 0.0, %v1188
        %v1190 = vpop.f32.mrb[0].mxu0
        %1191 = vmatprep.mubr.bf16.mxu0 0
        %1192 = vmatmul.mubr.bf16.gmra.mrb[0].mxu0 %v1078
        %v1193 = vpop.f32.mrb[0].mxu0
        %v1194 = vadd.f32 0.0, %v1193
        %v1195 = vpop.f32.mrb[0].mxu0
        %v1196 = vpop.f32.mrb[0].mxu0
        %v1197 = vadd.f32 0.0, %v1196
        %v1198 = vpop.f32.mrb[0].mxu0
        %1199 = vmatprep.mubr.bf16.mxu0 0
        %1200 = vmatmul.mubr.bf16.gmra.mrb[0].mxu0 %v1081
        %v1201 = vpop.f32.mrb[0].mxu0
        %v1202 = vadd.f32 0.0, %v1201
        %v1203 = vpop.f32.mrb[0].mxu0
        %v1204 = vpop.f32.mrb[0].mxu0
        %v1205 = vadd.f32 0.0, %v1204
        %v1206 = vpop.f32.mrb[0].mxu0
        %1207 = vmatprep.mubr.bf16.mxu0 0
        %1208 = vmatmul.mubr.bf16.gmra.mrb[0].mxu0 %v1084
        %v1209 = vpop.f32.mrb[0].mxu0
        %v1210 = vadd.f32 0.0, %v1209
        %v1211 = vpop.f32.mrb[0].mxu0
        %v1212 = vpop.f32.mrb[0].mxu0
        %v1213 = vadd.f32 0.0, %v1212
        %v1214 = vpop.f32.mrb[0].mxu0
        %1215 = vmatprep.mubr.bf16.mxu0 0
        %1216 = vmatmul.mubr.bf16.gmra.mrb[0].mxu0 %v1087
        %v1217 = vpop.f32.mrb[0].mxu0
        %v1218 = vadd.f32 0.0, %v1217
        %v1219 = vpop.f32.mrb[0].mxu0
        %v1220 = vpop.f32.mrb[0].mxu0
        %v1221 = vadd.f32 0.0, %v1220
        %v1222 = vpop.f32.mrb[0].mxu0
        %1223 = vmatprep.mubr.bf16.mxu0 0
        %1224 = vmatmul.mubr.bf16.gmra.mrb[0].mxu0 %v1090
        %v1225 = vpop.f32.mrb[0].mxu0
        %v1226 = vadd.f32 0.0, %v1225
        %v1227 = vpop.f32.mrb[0].mxu0
        %v1228 = vpop.f32.mrb[0].mxu0
        %v1229 = vpop.f32.mrb[0].mxu0
        %1230 = vdwg.mxu0
        %v1231 = vadd.f32 %v986, %v1130
        %v1232 = vadd.f32 %v987, %v1133
        %v1233 = vadd.f32 %v988, %v1138
        %v1234 = vadd.f32 %v989, %v1141
        %v1235 = vadd.f32 %v990, %v1146
        %v1236 = vadd.f32 %v991, %v1149
        %v1237 = vadd.f32 %v992, %v1154
        %v1238 = vadd.f32 %v993, %v1157
        %v1239 = vadd.f32 %v994, %v1162
        %v1240 = vadd.f32 %v995, %v1165
        %v1241 = vadd.f32 %v996, %v1170
        %v1242 = vadd.f32 %v997, %v1173
        %v1243 = vadd.f32 %v998, %v1178
        %v1244 = vadd.f32 %v999, %v1181
        %v1245 = vadd.f32 %v1000, %v1186
        %v1246 = vadd.f32 %v1001, %v1189
        %v1247 = vadd.f32 %v1002, %v1194
        %v1248 = vadd.f32 %v1003, %v1197
        %v1249 = vadd.f32 %v1004, %v1202
        %v1250 = vadd.f32 %v1005, %v1205
        %v1251 = vadd.f32 %v1006, %v1210
        %v1252 = vadd.f32 %v1007, %v1213
        %v1253 = vadd.f32 %v1008, %v1218
        %v1254 = vadd.f32 %v1009, %v1221
        %v1255 = vadd.f32 %v1010, %v1226
        %s1256 = sadd.s32 %s325, 21
        %s1257 = scalar_lea.vmem %s314, %s1256
        %v1258 = vld [vmem:[%s1257] sm:$0xff]
        %v1259 = vld [vmem:[%s1257 + $0x8] sm:$0xff]
        %v1260 = vld [vmem:[%s1257 + $0x10] sm:$0xff]
        %v1261 = vld [vmem:[%s1257 + $0x18] sm:$0xff]
        %v1262 = vld [vmem:[%s1257 + $0x20] sm:$0xff]
        %v1263 = vld [vmem:[%s1257 + $0x28] sm:$0xff]
        %v1264 = vld [vmem:[%s1257 + $0x30] sm:$0xff]
        %v1265 = vld [vmem:[%s1257 + $0x38] sm:$0xff]
        %v1266 = vld [vmem:[%s1257 + $0x40] sm:$0xff]
        %v1267 = vld [vmem:[%s1257 + $0x48] sm:$0xff]
        %v1268 = vld [vmem:[%s1257 + $0x50] sm:$0xff]
        %v1269 = vld [vmem:[%s1257 + $0x58] sm:$0xff]
        %v1270 = vld [vmem:[%s1257 + $0x60] sm:$0xff]
        %v1271 = vld [vmem:[%s1257 + $0x68] sm:$0xff]
        %v1272 = vld [vmem:[%s1257 + $0x70] sm:$0xff]
        %v1273 = vld [vmem:[%s1257 + $0x78] sm:$0xff]
        %v1274 = vld [vmem:[%s1257 + $0x80] sm:$0xff]
        %v1275 = vld [vmem:[%s1257 + $0x88] sm:$0xff]
        %v1276 = vld [vmem:[%s1257 + $0x90] sm:$0xff]
        %v1277 = vld [vmem:[%s1257 + $0x98] sm:$0xff]
        %v1278 = vld [vmem:[%s1257 + $0xa0] sm:$0xff]
        %v1279 = vld [vmem:[%s1257 + $0xa8] sm:$0xff]
        %v1280 = vld [vmem:[%s1257 + $0xb0] sm:$0xff]
        %v1281 = vld [vmem:[%s1257 + $0xb8] sm:$0xff]
        %v1282 = vld [vmem:[%s1257 + $0xc0] sm:$0xff]
        %v1283 = vpack.c.bf16 %v1259, %v1258
        %v1284 = vpack.c.bf16 %v1261, %v1260
        %v1285 = vpack.c.bf16 %v1263, %v1262
        %v1286 = vpack.c.bf16 %v1265, %v1264
        %v1287 = vpack.c.bf16 %v1267, %v1266
        %v1288 = vpack.c.bf16 %v1269, %v1268
        %v1289 = vpack.c.bf16 %v1271, %v1270
        %v1290 = vpack.c.bf16 %v1273, %v1272
        %v1291 = vpack.c.bf16 %v1275, %v1274
        %v1292 = vpack.c.bf16 %v1277, %v1276
        %v1293 = vpack.c.bf16 %v1279, %v1278
        %v1294 = vpack.c.bf16 %v1281, %v1280
        %v1295 = vpack.c.bf16 %v1282, %v1282
        %s1296 = scalar_lea.vmem %s3, 8
        %v1297 = vld [vmem:[%s1296] sm:$0x3]
        %v1299 = vsel %vm408, %v1283, 0
        %v1302 = vsel %vm408, %v1284, 0
        %v1305 = vsel %vm408, %v1285, 0
        %v1308 = vsel %vm408, %v1286, 0
        %v1311 = vsel %vm408, %v1287, 0
        %v1314 = vsel %vm408, %v1288, 0
        %v1317 = vsel %vm408, %v1289, 0
        %v1320 = vsel %vm408, %v1290, 0
        %v1323 = vsel %vm408, %v1291, 0
        %v1326 = vsel %vm408, %v1292, 0
        %v1329 = vsel %vm408, %v1293, 0
        %v1332 = vsel %vm408, %v1294, 0
        %v1335 = vsel %vm408, %v1295, 0
        %v1338 = vsel %vm448, %v1297, 0
        %1340 = vmatprep.subr.bf16.mxu0 0
        %1341 = vmatpush1.bf16.msra.mxu0 %v1338
        %1342 = vmatprep.subr.bf16.mxu0 0
        %1343 = vmatpush1.bf16.msra.mxu0 0
        %1344 = vmatprep.subr.bf16.mxu0 0
        %1345 = vmatpush1.bf16.msra.mxu0 0
        %1346 = vmatprep.subr.bf16.mxu0 0
        %1347 = vmatpush1.bf16.msra.mxu0 0
        %1348 = vmatprep.subr.bf16.mxu0 0
        %1349 = vmatpush1.bf16.msra.mxu0 0
        %1350 = vmatprep.subr.bf16.mxu0 0
        %1351 = vmatpush1.bf16.msra.mxu0 0
        %1352 = vmatprep.subr.bf16.mxu0 0
        %1353 = vmatpush1.bf16.msra.mxu0 0
        %1354 = vmatprep.subr.bf16.mxu0 0
        %1355 = vmatpush1.bf16.msra.mxu0 0
        %1356 = vmatprep.subr.bf16.mxu0 0
        %1357 = vmatpush1.bf16.msra.mxu0 0
        %1358 = vmatprep.subr.bf16.mxu0 0
        %1359 = vmatpush1.bf16.msra.mxu0 0
        %1360 = vmatprep.subr.bf16.mxu0 0
        %1361 = vmatpush1.bf16.msra.mxu0 0
        %1362 = vmatprep.subr.bf16.mxu0 0
        %1363 = vmatpush1.bf16.msra.mxu0 0
        %1364 = vmatprep.subr.bf16.mxu0 0
        %1365 = vmatpush1.bf16.msra.mxu0 0
        %1366 = vmatprep.subr.bf16.mxu0 0
        %1367 = vmatpush1.bf16.msra.mxu0 0
        %1368 = vmatprep.subr.bf16.mxu0 0
        %1369 = vmatpush1.bf16.msra.mxu0 0
        %1370 = vmatprep.subr.bf16.mxu0 0
        %1371 = vmatpush1.bf16.msra.mxu0 0
        %1372 = vmatprep.mubr.bf16.mxu0 0
        %1373 = vmatmul.mubr.bf16.gmra.mrb[0].mxu0 %v1299
        %v1374 = vpop.f32.mrb[0].mxu0
        %v1375 = vadd.f32 0.0, %v1374
        %v1376 = vpop.f32.mrb[0].mxu0
        %v1377 = vpop.f32.mrb[0].mxu0
        %v1378 = vadd.f32 0.0, %v1377
        %v1379 = vpop.f32.mrb[0].mxu0
        %1380 = vmatprep.mubr.bf16.mxu0 0
        %1381 = vmatmul.mubr.bf16.gmra.mrb[0].mxu0 %v1302
        %v1382 = vpop.f32.mrb[0].mxu0
        %v1383 = vadd.f32 0.0, %v1382
        %v1384 = vpop.f32.mrb[0].mxu0
        %v1385 = vpop.f32.mrb[0].mxu0
        %v1386 = vadd.f32 0.0, %v1385
        %v1387 = vpop.f32.mrb[0].mxu0
        %1388 = vmatprep.mubr.bf16.mxu0 0
        %1389 = vmatmul.mubr.bf16.gmra.mrb[0].mxu0 %v1305
        %v1390 = vpop.f32.mrb[0].mxu0
        %v1391 = vadd.f32 0.0, %v1390
        %v1392 = vpop.f32.mrb[0].mxu0
        %v1393 = vpop.f32.mrb[0].mxu0
        %v1394 = vadd.f32 0.0, %v1393
        %v1395 = vpop.f32.mrb[0].mxu0
        %1396 = vmatprep.mubr.bf16.mxu0 0
        %1397 = vmatmul.mubr.bf16.gmra.mrb[0].mxu0 %v1308
        %v1398 = vpop.f32.mrb[0].mxu0
        %v1399 = vadd.f32 0.0, %v1398
        %v1400 = vpop.f32.mrb[0].mxu0
        %v1401 = vpop.f32.mrb[0].mxu0
        %v1402 = vadd.f32 0.0, %v1401
        %v1403 = vpop.f32.mrb[0].mxu0
        %1404 = vmatprep.mubr.bf16.mxu0 0
        %1405 = vmatmul.mubr.bf16.gmra.mrb[0].mxu0 %v1311
        %v1406 = vpop.f32.mrb[0].mxu0
        %v1407 = vadd.f32 0.0, %v1406
        %v1408 = vpop.f32.mrb[0].mxu0
        %v1409 = vpop.f32.mrb[0].mxu0
        %v1410 = vadd.f32 0.0, %v1409
        %v1411 = vpop.f32.mrb[0].mxu0
        %1412 = vmatprep.mubr.bf16.mxu0 0
        %1413 = vmatmul.mubr.bf16.gmra.mrb[0].mxu0 %v1314
        %v1414 = vpop.f32.mrb[0].mxu0
        %v1415 = vadd.f32 0.0, %v1414
        %v1416 = vpop.f32.mrb[0].mxu0
        %v1417 = vpop.f32.mrb[0].mxu0
        %v1418 = vadd.f32 0.0, %v1417
        %v1419 = vpop.f32.mrb[0].mxu0
        %1420 = vmatprep.mubr.bf16.mxu0 0
        %1421 = vmatmul.mubr.bf16.gmra.mrb[0].mxu0 %v1317
        %v1422 = vpop.f32.mrb[0].mxu0
        %v1423 = vadd.f32 0.0, %v1422
        %v1424 = vpop.f32.mrb[0].mxu0
        %v1425 = vpop.f32.mrb[0].mxu0
        %v1426 = vadd.f32 0.0, %v1425
        %v1427 = vpop.f32.mrb[0].mxu0
        %1428 = vmatprep.mubr.bf16.mxu0 0
        %1429 = vmatmul.mubr.bf16.gmra.mrb[0].mxu0 %v1320
        %v1430 = vpop.f32.mrb[0].mxu0
        %v1431 = vadd.f32 0.0, %v1430
        %v1432 = vpop.f32.mrb[0].mxu0
        %v1433 = vpop.f32.mrb[0].mxu0
        %v1434 = vadd.f32 0.0, %v1433
        %v1435 = vpop.f32.mrb[0].mxu0
        %1436 = vmatprep.mubr.bf16.mxu0 0
        %1437 = vmatmul.mubr.bf16.gmra.mrb[0].mxu0 %v1323
        %v1438 = vpop.f32.mrb[0].mxu0
        %v1439 = vadd.f32 0.0, %v1438
        %v1440 = vpop.f32.mrb[0].mxu0
        %v1441 = vpop.f32.mrb[0].mxu0
        %v1442 = vadd.f32 0.0, %v1441
        %v1443 = vpop.f32.mrb[0].mxu0
        %1444 = vmatprep.mubr.bf16.mxu0 0
        %1445 = vmatmul.mubr.bf16.gmra.mrb[0].mxu0 %v1326
        %v1446 = vpop.f32.mrb[0].mxu0
        %v1447 = vadd.f32 0.0, %v1446
        %v1448 = vpop.f32.mrb[0].mxu0
        %v1449 = vpop.f32.mrb[0].mxu0
        %v1450 = vadd.f32 0.0, %v1449
        %v1451 = vpop.f32.mrb[0].mxu0
        %1452 = vmatprep.mubr.bf16.mxu0 0
        %1453 = vmatmul.mubr.bf16.gmra.mrb[0].mxu0 %v1329
        %v1454 = vpop.f32.mrb[0].mxu0
        %v1455 = vadd.f32 0.0, %v1454
        %v1456 = vpop.f32.mrb[0].mxu0
        %v1457 = vpop.f32.mrb[0].mxu0
        %v1458 = vadd.f32 0.0, %v1457
        %v1459 = vpop.f32.mrb[0].mxu0
        %1460 = vmatprep.mubr.bf16.mxu0 0
        %1461 = vmatmul.mubr.bf16.gmra.mrb[0].mxu0 %v1332
        %v1462 = vpop.f32.mrb[0].mxu0
        %v1463 = vadd.f32 0.0, %v1462
        %v1464 = vpop.f32.mrb[0].mxu0
        %v1465 = vpop.f32.mrb[0].mxu0
        %v1466 = vadd.f32 0.0, %v1465
        %v1467 = vpop.f32.mrb[0].mxu0
        %1468 = vmatprep.mubr.bf16.mxu0 0
        %1469 = vmatmul.mubr.bf16.gmra.mrb[0].mxu0 %v1335
        %v1470 = vpop.f32.mrb[0].mxu0
        %v1471 = vadd.f32 0.0, %v1470
        %v1472 = vpop.f32.mrb[0].mxu0
        %v1473 = vpop.f32.mrb[0].mxu0
        %v1474 = vpop.f32.mrb[0].mxu0
        %1475 = vdwg.mxu0
        %v1476 = vadd.f32 %v1231, %v1375
        %v1477 = vadd.f32 %v1232, %v1378
        %v1478 = vadd.f32 %v1233, %v1383
        %v1479 = vadd.f32 %v1234, %v1386
        %v1480 = vadd.f32 %v1235, %v1391
        %v1481 = vadd.f32 %v1236, %v1394
        %v1482 = vadd.f32 %v1237, %v1399
        %v1483 = vadd.f32 %v1238, %v1402
        %v1484 = vadd.f32 %v1239, %v1407
        %v1485 = vadd.f32 %v1240, %v1410
        %v1486 = vadd.f32 %v1241, %v1415
        %v1487 = vadd.f32 %v1242, %v1418
        %v1488 = vadd.f32 %v1243, %v1423
        %v1489 = vadd.f32 %v1244, %v1426
        %v1490 = vadd.f32 %v1245, %v1431
        %v1491 = vadd.f32 %v1246, %v1434
        %v1492 = vadd.f32 %v1247, %v1439
        %v1493 = vadd.f32 %v1248, %v1442
        %v1494 = vadd.f32 %v1249, %v1447
        %v1495 = vadd.f32 %v1250, %v1450
        %v1496 = vadd.f32 %v1251, %v1455
        %v1497 = vadd.f32 %v1252, %v1458
        %v1498 = vadd.f32 %v1253, %v1463
        %v1499 = vadd.f32 %v1254, %v1466
        %v1500 = vadd.f32 %v1255, %v1471
        %s1501 = sadd.s32 %s325, 22
        %s1502 = scalar_lea.vmem %s314, %s1501
        %v1503 = vld [vmem:[%s1502] sm:$0xff]
        %v1504 = vld [vmem:[%s1502 + $0x8] sm:$0xff]
        %v1505 = vld [vmem:[%s1502 + $0x10] sm:$0xff]
        %v1506 = vld [vmem:[%s1502 + $0x18] sm:$0xff]
        %v1507 = vld [vmem:[%s1502 + $0x20] sm:$0xff]
        %v1508 = vld [vmem:[%s1502 + $0x28] sm:$0xff]
        %v1509 = vld [vmem:[%s1502 + $0x30] sm:$0xff]
        %v1510 = vld [vmem:[%s1502 + $0x38] sm:$0xff]
        %v1511 = vld [vmem:[%s1502 + $0x40] sm:$0xff]
        %v1512 = vld [vmem:[%s1502 + $0x48] sm:$0xff]
        %v1513 = vld [vmem:[%s1502 + $0x50] sm:$0xff]
        %v1514 = vld [vmem:[%s1502 + $0x58] sm:$0xff]
        %v1515 = vld [vmem:[%s1502 + $0x60] sm:$0xff]
        %v1516 = vld [vmem:[%s1502 + $0x68] sm:$0xff]
        %v1517 = vld [vmem:[%s1502 + $0x70] sm:$0xff]
        %v1518 = vld [vmem:[%s1502 + $0x78] sm:$0xff]
        %v1519 = vld [vmem:[%s1502 + $0x80] sm:$0xff]
        %v1520 = vld [vmem:[%s1502 + $0x88] sm:$0xff]
        %v1521 = vld [vmem:[%s1502 + $0x90] sm:$0xff]
        %v1522 = vld [vmem:[%s1502 + $0x98] sm:$0xff]
        %v1523 = vld [vmem:[%s1502 + $0xa0] sm:$0xff]
        %v1524 = vld [vmem:[%s1502 + $0xa8] sm:$0xff]
        %v1525 = vld [vmem:[%s1502 + $0xb0] sm:$0xff]
        %v1526 = vld [vmem:[%s1502 + $0xb8] sm:$0xff]
        %v1527 = vld [vmem:[%s1502 + $0xc0] sm:$0xff]
        %v1528 = vpack.c.bf16 %v1504, %v1503
        %v1529 = vpack.c.bf16 %v1506, %v1505
        %v1530 = vpack.c.bf16 %v1508, %v1507
        %v1531 = vpack.c.bf16 %v1510, %v1509
        %v1532 = vpack.c.bf16 %v1512, %v1511
        %v1533 = vpack.c.bf16 %v1514, %v1513
        %v1534 = vpack.c.bf16 %v1516, %v1515
        %v1535 = vpack.c.bf16 %v1518, %v1517
        %v1536 = vpack.c.bf16 %v1520, %v1519
        %v1537 = vpack.c.bf16 %v1522, %v1521
        %v1538 = vpack.c.bf16 %v1524, %v1523
        %v1539 = vpack.c.bf16 %v1526, %v1525
        %v1540 = vpack.c.bf16 %v1527, %v1527
        %s1541 = scalar_lea.vmem %s3, 10
        %v1542 = vld [vmem:[%s1541] sm:$0x3]
        %v1544 = vsel %vm408, %v1528, 0
        %v1547 = vsel %vm408, %v1529, 0
        %v1550 = vsel %vm408, %v1530, 0
        %v1553 = vsel %vm408, %v1531, 0
        %v1556 = vsel %vm408, %v1532, 0
        %v1559 = vsel %vm408, %v1533, 0
        %v1562 = vsel %vm408, %v1534, 0
        %v1565 = vsel %vm408, %v1535, 0
        %v1568 = vsel %vm408, %v1536, 0
        %v1571 = vsel %vm408, %v1537, 0
        %v1574 = vsel %vm408, %v1538, 0
        %v1577 = vsel %vm408, %v1539, 0
        %v1580 = vsel %vm408, %v1540, 0
        %v1583 = vsel %vm448, %v1542, 0
        %1585 = vmatprep.subr.bf16.mxu0 0
        %1586 = vmatpush1.bf16.msra.mxu0 %v1583
        %1587 = vmatprep.subr.bf16.mxu0 0
        %1588 = vmatpush1.bf16.msra.mxu0 0
        %1589 = vmatprep.subr.bf16.mxu0 0
        %1590 = vmatpush1.bf16.msra.mxu0 0
        %1591 = vmatprep.subr.bf16.mxu0 0
        %1592 = vmatpush1.bf16.msra.mxu0 0
        %1593 = vmatprep.subr.bf16.mxu0 0
        %1594 = vmatpush1.bf16.msra.mxu0 0
        %1595 = vmatprep.subr.bf16.mxu0 0
        %1596 = vmatpush1.bf16.msra.mxu0 0
        %1597 = vmatprep.subr.bf16.mxu0 0
        %1598 = vmatpush1.bf16.msra.mxu0 0
        %1599 = vmatprep.subr.bf16.mxu0 0
        %1600 = vmatpush1.bf16.msra.mxu0 0
        %1601 = vmatprep.subr.bf16.mxu0 0
        %1602 = vmatpush1.bf16.msra.mxu0 0
        %1603 = vmatprep.subr.bf16.mxu0 0
        %1604 = vmatpush1.bf16.msra.mxu0 0
        %1605 = vmatprep.subr.bf16.mxu0 0
        %1606 = vmatpush1.bf16.msra.mxu0 0
        %1607 = vmatprep.subr.bf16.mxu0 0
        %1608 = vmatpush1.bf16.msra.mxu0 0
        %1609 = vmatprep.subr.bf16.mxu0 0
        %1610 = vmatpush1.bf16.msra.mxu0 0
        %1611 = vmatprep.subr.bf16.mxu0 0
        %1612 = vmatpush1.bf16.msra.mxu0 0
        %1613 = vmatprep.subr.bf16.mxu0 0
        %1614 = vmatpush1.bf16.msra.mxu0 0
        %1615 = vmatprep.subr.bf16.mxu0 0
        %1616 = vmatpush1.bf16.msra.mxu0 0
        %1617 = vmatprep.mubr.bf16.mxu0 0
        %1618 = vmatmul.mubr.bf16.gmra.mrb[0].mxu0 %v1544
        %v1619 = vpop.f32.mrb[0].mxu0
        %v1620 = vadd.f32 0.0, %v1619
        %v1621 = vpop.f32.mrb[0].mxu0
        %v1622 = vpop.f32.mrb[0].mxu0
        %v1623 = vadd.f32 0.0, %v1622
        %v1624 = vpop.f32.mrb[0].mxu0
        %1625 = vmatprep.mubr.bf16.mxu0 0
        %1626 = vmatmul.mubr.bf16.gmra.mrb[0].mxu0 %v1547
        %v1627 = vpop.f32.mrb[0].mxu0
        %v1628 = vadd.f32 0.0, %v1627
        %v1629 = vpop.f32.mrb[0].mxu0
        %v1630 = vpop.f32.mrb[0].mxu0
        %v1631 = vadd.f32 0.0, %v1630
        %v1632 = vpop.f32.mrb[0].mxu0
        %1633 = vmatprep.mubr.bf16.mxu0 0
        %1634 = vmatmul.mubr.bf16.gmra.mrb[0].mxu0 %v1550
        %v1635 = vpop.f32.mrb[0].mxu0
        %v1636 = vadd.f32 0.0, %v1635
        %v1637 = vpop.f32.mrb[0].mxu0
        %v1638 = vpop.f32.mrb[0].mxu0
        %v1639 = vadd.f32 0.0, %v1638
        %v1640 = vpop.f32.mrb[0].mxu0
        %1641 = vmatprep.mubr.bf16.mxu0 0
        %1642 = vmatmul.mubr.bf16.gmra.mrb[0].mxu0 %v1553
        %v1643 = vpop.f32.mrb[0].mxu0
        %v1644 = vadd.f32 0.0, %v1643
        %v1645 = vpop.f32.mrb[0].mxu0
        %v1646 = vpop.f32.mrb[0].mxu0
        %v1647 = vadd.f32 0.0, %v1646
        %v1648 = vpop.f32.mrb[0].mxu0
        %1649 = vmatprep.mubr.bf16.mxu0 0
        %1650 = vmatmul.mubr.bf16.gmra.mrb[0].mxu0 %v1556
        %v1651 = vpop.f32.mrb[0].mxu0
        %v1652 = vadd.f32 0.0, %v1651
        %v1653 = vpop.f32.mrb[0].mxu0
        %v1654 = vpop.f32.mrb[0].mxu0
        %v1655 = vadd.f32 0.0, %v1654
        %v1656 = vpop.f32.mrb[0].mxu0
        %1657 = vmatprep.mubr.bf16.mxu0 0
        %1658 = vmatmul.mubr.bf16.gmra.mrb[0].mxu0 %v1559
        %v1659 = vpop.f32.mrb[0].mxu0
        %v1660 = vadd.f32 0.0, %v1659
        %v1661 = vpop.f32.mrb[0].mxu0
        %v1662 = vpop.f32.mrb[0].mxu0
        %v1663 = vadd.f32 0.0, %v1662
        %v1664 = vpop.f32.mrb[0].mxu0
        %1665 = vmatprep.mubr.bf16.mxu0 0
        %1666 = vmatmul.mubr.bf16.gmra.mrb[0].mxu0 %v1562
        %v1667 = vpop.f32.mrb[0].mxu0
        %v1668 = vadd.f32 0.0, %v1667
        %v1669 = vpop.f32.mrb[0].mxu0
        %v1670 = vpop.f32.mrb[0].mxu0
        %v1671 = vadd.f32 0.0, %v1670
        %v1672 = vpop.f32.mrb[0].mxu0
        %1673 = vmatprep.mubr.bf16.mxu0 0
        %1674 = vmatmul.mubr.bf16.gmra.mrb[0].mxu0 %v1565
        %v1675 = vpop.f32.mrb[0].mxu0
        %v1676 = vadd.f32 0.0, %v1675
        %v1677 = vpop.f32.mrb[0].mxu0
        %v1678 = vpop.f32.mrb[0].mxu0
        %v1679 = vadd.f32 0.0, %v1678
        %v1680 = vpop.f32.mrb[0].mxu0
        %1681 = vmatprep.mubr.bf16.mxu0 0
        %1682 = vmatmul.mubr.bf16.gmra.mrb[0].mxu0 %v1568
        %v1683 = vpop.f32.mrb[0].mxu0
        %v1684 = vadd.f32 0.0, %v1683
        %v1685 = vpop.f32.mrb[0].mxu0
        %v1686 = vpop.f32.mrb[0].mxu0
        %v1687 = vadd.f32 0.0, %v1686
        %v1688 = vpop.f32.mrb[0].mxu0
        %1689 = vmatprep.mubr.bf16.mxu0 0
        %1690 = vmatmul.mubr.bf16.gmra.mrb[0].mxu0 %v1571
        %v1691 = vpop.f32.mrb[0].mxu0
        %v1692 = vadd.f32 0.0, %v1691
        %v1693 = vpop.f32.mrb[0].mxu0
        %v1694 = vpop.f32.mrb[0].mxu0
        %v1695 = vadd.f32 0.0, %v1694
        %v1696 = vpop.f32.mrb[0].mxu0
        %1697 = vmatprep.mubr.bf16.mxu0 0
        %1698 = vmatmul.mubr.bf16.gmra.mrb[0].mxu0 %v1574
        %v1699 = vpop.f32.mrb[0].mxu0
        %v1700 = vadd.f32 0.0, %v1699
        %v1701 = vpop.f32.mrb[0].mxu0
        %v1702 = vpop.f32.mrb[0].mxu0
        %v1703 = vadd.f32 0.0, %v1702
        %v1704 = vpop.f32.mrb[0].mxu0
        %1705 = vmatprep.mubr.bf16.mxu0 0
        %1706 = vmatmul.mubr.bf16.gmra.mrb[0].mxu0 %v1577
        %v1707 = vpop.f32.mrb[0].mxu0
        %v1708 = vadd.f32 0.0, %v1707
        %v1709 = vpop.f32.mrb[0].mxu0
        %v1710 = vpop.f32.mrb[0].mxu0
        %v1711 = vadd.f32 0.0, %v1710
        %v1712 = vpop.f32.mrb[0].mxu0
        %1713 = vmatprep.mubr.bf16.mxu0 0
        %1714 = vmatmul.mubr.bf16.gmra.mrb[0].mxu0 %v1580
        %v1715 = vpop.f32.mrb[0].mxu0
        %v1716 = vadd.f32 0.0, %v1715
        %v1717 = vpop.f32.mrb[0].mxu0
        %v1718 = vpop.f32.mrb[0].mxu0
        %v1719 = vpop.f32.mrb[0].mxu0
        %1720 = vdwg.mxu0
        %v1721 = vadd.f32 %v1476, %v1620
        %v1722 = vadd.f32 %v1477, %v1623
        %v1723 = vadd.f32 %v1478, %v1628
        %v1724 = vadd.f32 %v1479, %v1631
        %v1725 = vadd.f32 %v1480, %v1636
        %v1726 = vadd.f32 %v1481, %v1639
        %v1727 = vadd.f32 %v1482, %v1644
        %v1728 = vadd.f32 %v1483, %v1647
        %v1729 = vadd.f32 %v1484, %v1652
        %v1730 = vadd.f32 %v1485, %v1655
        %v1731 = vadd.f32 %v1486, %v1660
        %v1732 = vadd.f32 %v1487, %v1663
        %v1733 = vadd.f32 %v1488, %v1668
        %v1734 = vadd.f32 %v1489, %v1671
        %v1735 = vadd.f32 %v1490, %v1676
        %v1736 = vadd.f32 %v1491, %v1679
        %v1737 = vadd.f32 %v1492, %v1684
        %v1738 = vadd.f32 %v1493, %v1687
        %v1739 = vadd.f32 %v1494, %v1692
        %v1740 = vadd.f32 %v1495, %v1695
        %v1741 = vadd.f32 %v1496, %v1700
        %v1742 = vadd.f32 %v1497, %v1703
        %v1743 = vadd.f32 %v1498, %v1708
        %v1744 = vadd.f32 %v1499, %v1711
        %v1745 = vadd.f32 %v1500, %v1716
        %s1746 = sadd.s32 %s325, 40
        %s1747 = scalar_lea.vmem %s314, %s1746
        %v1748 = vld [vmem:[%s1747] sm:$0xff]
        %v1749 = vld [vmem:[%s1747 + $0x8] sm:$0xff]
        %v1750 = vld [vmem:[%s1747 + $0x10] sm:$0xff]
        %v1751 = vld [vmem:[%s1747 + $0x18] sm:$0xff]
        %v1752 = vld [vmem:[%s1747 + $0x20] sm:$0xff]
        %v1753 = vld [vmem:[%s1747 + $0x28] sm:$0xff]
        %v1754 = vld [vmem:[%s1747 + $0x30] sm:$0xff]
        %v1755 = vld [vmem:[%s1747 + $0x38] sm:$0xff]
        %v1756 = vld [vmem:[%s1747 + $0x40] sm:$0xff]
        %v1757 = vld [vmem:[%s1747 + $0x48] sm:$0xff]
        %v1758 = vld [vmem:[%s1747 + $0x50] sm:$0xff]
        %v1759 = vld [vmem:[%s1747 + $0x58] sm:$0xff]
        %v1760 = vld [vmem:[%s1747 + $0x60] sm:$0xff]
        %v1761 = vld [vmem:[%s1747 + $0x68] sm:$0xff]
        %v1762 = vld [vmem:[%s1747 + $0x70] sm:$0xff]
        %v1763 = vld [vmem:[%s1747 + $0x78] sm:$0xff]
        %v1764 = vld [vmem:[%s1747 + $0x80] sm:$0xff]
        %v1765 = vld [vmem:[%s1747 + $0x88] sm:$0xff]
        %v1766 = vld [vmem:[%s1747 + $0x90] sm:$0xff]
        %v1767 = vld [vmem:[%s1747 + $0x98] sm:$0xff]
        %v1768 = vld [vmem:[%s1747 + $0xa0] sm:$0xff]
        %v1769 = vld [vmem:[%s1747 + $0xa8] sm:$0xff]
        %v1770 = vld [vmem:[%s1747 + $0xb0] sm:$0xff]
        %v1771 = vld [vmem:[%s1747 + $0xb8] sm:$0xff]
        %v1772 = vld [vmem:[%s1747 + $0xc0] sm:$0xff]
        %v1773 = vpack.c.bf16 %v1749, %v1748
        %v1774 = vpack.c.bf16 %v1751, %v1750
        %v1775 = vpack.c.bf16 %v1753, %v1752
        %v1776 = vpack.c.bf16 %v1755, %v1754
        %v1777 = vpack.c.bf16 %v1757, %v1756
        %v1778 = vpack.c.bf16 %v1759, %v1758
        %v1779 = vpack.c.bf16 %v1761, %v1760
        %v1780 = vpack.c.bf16 %v1763, %v1762
        %v1781 = vpack.c.bf16 %v1765, %v1764
        %v1782 = vpack.c.bf16 %v1767, %v1766
        %v1783 = vpack.c.bf16 %v1769, %v1768
        %v1784 = vpack.c.bf16 %v1771, %v1770
        %v1785 = vpack.c.bf16 %v1772, %v1772
        %s1786 = scalar_lea.vmem %s3, 12
        %v1787 = vld [vmem:[%s1786] sm:$0x3]
        %v1789 = vsel %vm408, %v1773, 0
        %v1792 = vsel %vm408, %v1774, 0
        %v1795 = vsel %vm408, %v1775, 0
        %v1798 = vsel %vm408, %v1776, 0
        %v1801 = vsel %vm408, %v1777, 0
        %v1804 = vsel %vm408, %v1778, 0
        %v1807 = vsel %vm408, %v1779, 0
        %v1810 = vsel %vm408, %v1780, 0
        %v1813 = vsel %vm408, %v1781, 0
        %v1816 = vsel %vm408, %v1782, 0
        %v1819 = vsel %vm408, %v1783, 0
        %v1822 = vsel %vm408, %v1784, 0
        %v1825 = vsel %vm408, %v1785, 0
        %v1828 = vsel %vm448, %v1787, 0
        %1830 = vmatprep.subr.bf16.mxu0 0
        %1831 = vmatpush1.bf16.msra.mxu0 %v1828
        %1832 = vmatprep.subr.bf16.mxu0 0
        %1833 = vmatpush1.bf16.msra.mxu0 0
        %1834 = vmatprep.subr.bf16.mxu0 0
        %1835 = vmatpush1.bf16.msra.mxu0 0
        %1836 = vmatprep.subr.bf16.mxu0 0
        %1837 = vmatpush1.bf16.msra.mxu0 0
        %1838 = vmatprep.subr.bf16.mxu0 0
        %1839 = vmatpush1.bf16.msra.mxu0 0
        %1840 = vmatprep.subr.bf16.mxu0 0
        %1841 = vmatpush1.bf16.msra.mxu0 0
        %1842 = vmatprep.subr.bf16.mxu0 0
        %1843 = vmatpush1.bf16.msra.mxu0 0
        %1844 = vmatprep.subr.bf16.mxu0 0
        %1845 = vmatpush1.bf16.msra.mxu0 0
        %1846 = vmatprep.subr.bf16.mxu0 0
        %1847 = vmatpush1.bf16.msra.mxu0 0
        %1848 = vmatprep.subr.bf16.mxu0 0
        %1849 = vmatpush1.bf16.msra.mxu0 0
        %1850 = vmatprep.subr.bf16.mxu0 0
        %1851 = vmatpush1.bf16.msra.mxu0 0
        %1852 = vmatprep.subr.bf16.mxu0 0
        %1853 = vmatpush1.bf16.msra.mxu0 0
        %1854 = vmatprep.subr.bf16.mxu0 0
        %1855 = vmatpush1.bf16.msra.mxu0 0
        %1856 = vmatprep.subr.bf16.mxu0 0
        %1857 = vmatpush1.bf16.msra.mxu0 0
        %1858 = vmatprep.subr.bf16.mxu0 0
        %1859 = vmatpush1.bf16.msra.mxu0 0
        %1860 = vmatprep.subr.bf16.mxu0 0
        %1861 = vmatpush1.bf16.msra.mxu0 0
        %1862 = vmatprep.mubr.bf16.mxu0 0
        %1863 = vmatmul.mubr.bf16.gmra.mrb[0].mxu0 %v1789
        %v1864 = vpop.f32.mrb[0].mxu0
        %v1865 = vadd.f32 0.0, %v1864
        %v1866 = vpop.f32.mrb[0].mxu0
        %v1867 = vpop.f32.mrb[0].mxu0
        %v1868 = vadd.f32 0.0, %v1867
        %v1869 = vpop.f32.mrb[0].mxu0
        %1870 = vmatprep.mubr.bf16.mxu0 0
        %1871 = vmatmul.mubr.bf16.gmra.mrb[0].mxu0 %v1792
        %v1872 = vpop.f32.mrb[0].mxu0
        %v1873 = vadd.f32 0.0, %v1872
        %v1874 = vpop.f32.mrb[0].mxu0
        %v1875 = vpop.f32.mrb[0].mxu0
        %v1876 = vadd.f32 0.0, %v1875
        %v1877 = vpop.f32.mrb[0].mxu0
        %1878 = vmatprep.mubr.bf16.mxu0 0
        %1879 = vmatmul.mubr.bf16.gmra.mrb[0].mxu0 %v1795
        %v1880 = vpop.f32.mrb[0].mxu0
        %v1881 = vadd.f32 0.0, %v1880
        %v1882 = vpop.f32.mrb[0].mxu0
        %v1883 = vpop.f32.mrb[0].mxu0
        %v1884 = vadd.f32 0.0, %v1883
        %v1885 = vpop.f32.mrb[0].mxu0
        %1886 = vmatprep.mubr.bf16.mxu0 0
        %1887 = vmatmul.mubr.bf16.gmra.mrb[0].mxu0 %v1798
        %v1888 = vpop.f32.mrb[0].mxu0
        %v1889 = vadd.f32 0.0, %v1888
        %v1890 = vpop.f32.mrb[0].mxu0
        %v1891 = vpop.f32.mrb[0].mxu0
        %v1892 = vadd.f32 0.0, %v1891
        %v1893 = vpop.f32.mrb[0].mxu0
        %1894 = vmatprep.mubr.bf16.mxu0 0
        %1895 = vmatmul.mubr.bf16.gmra.mrb[0].mxu0 %v1801
        %v1896 = vpop.f32.mrb[0].mxu0
        %v1897 = vadd.f32 0.0, %v1896
        %v1898 = vpop.f32.mrb[0].mxu0
        %v1899 = vpop.f32.mrb[0].mxu0
        %v1900 = vadd.f32 0.0, %v1899
        %v1901 = vpop.f32.mrb[0].mxu0
        %1902 = vmatprep.mubr.bf16.mxu0 0
        %1903 = vmatmul.mubr.bf16.gmra.mrb[0].mxu0 %v1804
        %v1904 = vpop.f32.mrb[0].mxu0
        %v1905 = vadd.f32 0.0, %v1904
        %v1906 = vpop.f32.mrb[0].mxu0
        %v1907 = vpop.f32.mrb[0].mxu0
        %v1908 = vadd.f32 0.0, %v1907
        %v1909 = vpop.f32.mrb[0].mxu0
        %1910 = vmatprep.mubr.bf16.mxu0 0
        %1911 = vmatmul.mubr.bf16.gmra.mrb[0].mxu0 %v1807
        %v1912 = vpop.f32.mrb[0].mxu0
        %v1913 = vadd.f32 0.0, %v1912
        %v1914 = vpop.f32.mrb[0].mxu0
        %v1915 = vpop.f32.mrb[0].mxu0
        %v1916 = vadd.f32 0.0, %v1915
        %v1917 = vpop.f32.mrb[0].mxu0
        %1918 = vmatprep.mubr.bf16.mxu0 0
        %1919 = vmatmul.mubr.bf16.gmra.mrb[0].mxu0 %v1810
        %v1920 = vpop.f32.mrb[0].mxu0
        %v1921 = vadd.f32 0.0, %v1920
        %v1922 = vpop.f32.mrb[0].mxu0
        %v1923 = vpop.f32.mrb[0].mxu0
        %v1924 = vadd.f32 0.0, %v1923
        %v1925 = vpop.f32.mrb[0].mxu0
        %1926 = vmatprep.mubr.bf16.mxu0 0
        %1927 = vmatmul.mubr.bf16.gmra.mrb[0].mxu0 %v1813
        %v1928 = vpop.f32.mrb[0].mxu0
        %v1929 = vadd.f32 0.0, %v1928
        %v1930 = vpop.f32.mrb[0].mxu0
        %v1931 = vpop.f32.mrb[0].mxu0
        %v1932 = vadd.f32 0.0, %v1931
        %v1933 = vpop.f32.mrb[0].mxu0
        %1934 = vmatprep.mubr.bf16.mxu0 0
        %1935 = vmatmul.mubr.bf16.gmra.mrb[0].mxu0 %v1816
        %v1936 = vpop.f32.mrb[0].mxu0
        %v1937 = vadd.f32 0.0, %v1936
        %v1938 = vpop.f32.mrb[0].mxu0
        %v1939 = vpop.f32.mrb[0].mxu0
        %v1940 = vadd.f32 0.0, %v1939
        %v1941 = vpop.f32.mrb[0].mxu0
        %1942 = vmatprep.mubr.bf16.mxu0 0
        %1943 = vmatmul.mubr.bf16.gmra.mrb[0].mxu0 %v1819
        %v1944 = vpop.f32.mrb[0].mxu0
        %v1945 = vadd.f32 0.0, %v1944
        %v1946 = vpop.f32.mrb[0].mxu0
        %v1947 = vpop.f32.mrb[0].mxu0
        %v1948 = vadd.f32 0.0, %v1947
        %v1949 = vpop.f32.mrb[0].mxu0
        %1950 = vmatprep.mubr.bf16.mxu0 0
        %1951 = vmatmul.mubr.bf16.gmra.mrb[0].mxu0 %v1822
        %v1952 = vpop.f32.mrb[0].mxu0
        %v1953 = vadd.f32 0.0, %v1952
        %v1954 = vpop.f32.mrb[0].mxu0
        %v1955 = vpop.f32.mrb[0].mxu0
        %v1956 = vadd.f32 0.0, %v1955
        %v1957 = vpop.f32.mrb[0].mxu0
        %1958 = vmatprep.mubr.bf16.mxu0 0
        %1959 = vmatmul.mubr.bf16.gmra.mrb[0].mxu0 %v1825
        %v1960 = vpop.f32.mrb[0].mxu0
        %v1961 = vadd.f32 0.0, %v1960
        %v1962 = vpop.f32.mrb[0].mxu0
        %v1963 = vpop.f32.mrb[0].mxu0
        %v1964 = vpop.f32.mrb[0].mxu0
        %1965 = vdwg.mxu0
        %v1966 = vadd.f32 %v1721, %v1865
        %v1967 = vadd.f32 %v1722, %v1868
        %v1968 = vadd.f32 %v1723, %v1873
        %v1969 = vadd.f32 %v1724, %v1876
        %v1970 = vadd.f32 %v1725, %v1881
        %v1971 = vadd.f32 %v1726, %v1884
        %v1972 = vadd.f32 %v1727, %v1889
        %v1973 = vadd.f32 %v1728, %v1892
        %v1974 = vadd.f32 %v1729, %v1897
        %v1975 = vadd.f32 %v1730, %v1900
        %v1976 = vadd.f32 %v1731, %v1905
        %v1977 = vadd.f32 %v1732, %v1908
        %v1978 = vadd.f32 %v1733, %v1913
        %v1979 = vadd.f32 %v1734, %v1916
        %v1980 = vadd.f32 %v1735, %v1921
        %v1981 = vadd.f32 %v1736, %v1924
        %v1982 = vadd.f32 %v1737, %v1929
        %v1983 = vadd.f32 %v1738, %v1932
        %v1984 = vadd.f32 %v1739, %v1937
        %v1985 = vadd.f32 %v1740, %v1940
        %v1986 = vadd.f32 %v1741, %v1945
        %v1987 = vadd.f32 %v1742, %v1948
        %v1988 = vadd.f32 %v1743, %v1953
        %v1989 = vadd.f32 %v1744, %v1956
        %v1990 = vadd.f32 %v1745, %v1961
        %s1991 = sadd.s32 %s325, 41
        %s1992 = scalar_lea.vmem %s314, %s1991
        %v1993 = vld [vmem:[%s1992] sm:$0xff]
        %v1994 = vld [vmem:[%s1992 + $0x8] sm:$0xff]
        %v1995 = vld [vmem:[%s1992 + $0x10] sm:$0xff]
        %v1996 = vld [vmem:[%s1992 + $0x18] sm:$0xff]
        %v1997 = vld [vmem:[%s1992 + $0x20] sm:$0xff]
        %v1998 = vld [vmem:[%s1992 + $0x28] sm:$0xff]
        %v1999 = vld [vmem:[%s1992 + $0x30] sm:$0xff]
        %v2000 = vld [vmem:[%s1992 + $0x38] sm:$0xff]
        %v2001 = vld [vmem:[%s1992 + $0x40] sm:$0xff]
        %v2002 = vld [vmem:[%s1992 + $0x48] sm:$0xff]
        %v2003 = vld [vmem:[%s1992 + $0x50] sm:$0xff]
        %v2004 = vld [vmem:[%s1992 + $0x58] sm:$0xff]
        %v2005 = vld [vmem:[%s1992 + $0x60] sm:$0xff]
        %v2006 = vld [vmem:[%s1992 + $0x68] sm:$0xff]
        %v2007 = vld [vmem:[%s1992 + $0x70] sm:$0xff]
        %v2008 = vld [vmem:[%s1992 + $0x78] sm:$0xff]
        %v2009 = vld [vmem:[%s1992 + $0x80] sm:$0xff]
        %v2010 = vld [vmem:[%s1992 + $0x88] sm:$0xff]
        %v2011 = vld [vmem:[%s1992 + $0x90] sm:$0xff]
        %v2012 = vld [vmem:[%s1992 + $0x98] sm:$0xff]
        %v2013 = vld [vmem:[%s1992 + $0xa0] sm:$0xff]
        %v2014 = vld [vmem:[%s1992 + $0xa8] sm:$0xff]
        %v2015 = vld [vmem:[%s1992 + $0xb0] sm:$0xff]
        %v2016 = vld [vmem:[%s1992 + $0xb8] sm:$0xff]
        %v2017 = vld [vmem:[%s1992 + $0xc0] sm:$0xff]
        %v2018 = vpack.c.bf16 %v1994, %v1993
        %v2019 = vpack.c.bf16 %v1996, %v1995
        %v2020 = vpack.c.bf16 %v1998, %v1997
        %v2021 = vpack.c.bf16 %v2000, %v1999
        %v2022 = vpack.c.bf16 %v2002, %v2001
        %v2023 = vpack.c.bf16 %v2004, %v2003
        %v2024 = vpack.c.bf16 %v2006, %v2005
        %v2025 = vpack.c.bf16 %v2008, %v2007
        %v2026 = vpack.c.bf16 %v2010, %v2009
        %v2027 = vpack.c.bf16 %v2012, %v2011
        %v2028 = vpack.c.bf16 %v2014, %v2013
        %v2029 = vpack.c.bf16 %v2016, %v2015
        %v2030 = vpack.c.bf16 %v2017, %v2017
        %s2031 = scalar_lea.vmem %s3, 14
        %v2032 = vld [vmem:[%s2031] sm:$0x3]
        %v2034 = vsel %vm408, %v2018, 0
        %v2037 = vsel %vm408, %v2019, 0
        %v2040 = vsel %vm408, %v2020, 0
        %v2043 = vsel %vm408, %v2021, 0
        %v2046 = vsel %vm408, %v2022, 0
        %v2049 = vsel %vm408, %v2023, 0
        %v2052 = vsel %vm408, %v2024, 0
        %v2055 = vsel %vm408, %v2025, 0
        %v2058 = vsel %vm408, %v2026, 0
        %v2061 = vsel %vm408, %v2027, 0
        %v2064 = vsel %vm408, %v2028, 0
        %v2067 = vsel %vm408, %v2029, 0
        %v2070 = vsel %vm408, %v2030, 0
        %v2073 = vsel %vm448, %v2032, 0
        %2075 = vmatprep.subr.bf16.mxu0 0
        %2076 = vmatpush1.bf16.msra.mxu0 %v2073
        %2077 = vmatprep.subr.bf16.mxu0 0
        %2078 = vmatpush1.bf16.msra.mxu0 0
        %2079 = vmatprep.subr.bf16.mxu0 0
        %2080 = vmatpush1.bf16.msra.mxu0 0
        %2081 = vmatprep.subr.bf16.mxu0 0
        %2082 = vmatpush1.bf16.msra.mxu0 0
        %2083 = vmatprep.subr.bf16.mxu0 0
        %2084 = vmatpush1.bf16.msra.mxu0 0
        %2085 = vmatprep.subr.bf16.mxu0 0
        %2086 = vmatpush1.bf16.msra.mxu0 0
        %2087 = vmatprep.subr.bf16.mxu0 0
        %2088 = vmatpush1.bf16.msra.mxu0 0
        %2089 = vmatprep.subr.bf16.mxu0 0
        %2090 = vmatpush1.bf16.msra.mxu0 0
        %2091 = vmatprep.subr.bf16.mxu0 0
        %2092 = vmatpush1.bf16.msra.mxu0 0
        %2093 = vmatprep.subr.bf16.mxu0 0
        %2094 = vmatpush1.bf16.msra.mxu0 0
        %2095 = vmatprep.subr.bf16.mxu0 0
        %2096 = vmatpush1.bf16.msra.mxu0 0
        %2097 = vmatprep.subr.bf16.mxu0 0
        %2098 = vmatpush1.bf16.msra.mxu0 0
        %2099 = vmatprep.subr.bf16.mxu0 0
        %2100 = vmatpush1.bf16.msra.mxu0 0
        %2101 = vmatprep.subr.bf16.mxu0 0
        %2102 = vmatpush1.bf16.msra.mxu0 0
        %2103 = vmatprep.subr.bf16.mxu0 0
        %2104 = vmatpush1.bf16.msra.mxu0 0
        %2105 = vmatprep.subr.bf16.mxu0 0
        %2106 = vmatpush1.bf16.msra.mxu0 0
        %2107 = vmatprep.mubr.bf16.mxu0 0
        %2108 = vmatmul.mubr.bf16.gmra.mrb[0].mxu0 %v2034
        %v2109 = vpop.f32.mrb[0].mxu0
        %v2110 = vadd.f32 0.0, %v2109
        %v2111 = vpop.f32.mrb[0].mxu0
        %v2112 = vpop.f32.mrb[0].mxu0
        %v2113 = vadd.f32 0.0, %v2112
        %v2114 = vpop.f32.mrb[0].mxu0
        %2115 = vmatprep.mubr.bf16.mxu0 0
        %2116 = vmatmul.mubr.bf16.gmra.mrb[0].mxu0 %v2037
        %v2117 = vpop.f32.mrb[0].mxu0
        %v2118 = vadd.f32 0.0, %v2117
        %v2119 = vpop.f32.mrb[0].mxu0
        %v2120 = vpop.f32.mrb[0].mxu0
        %v2121 = vadd.f32 0.0, %v2120
        %v2122 = vpop.f32.mrb[0].mxu0
        %2123 = vmatprep.mubr.bf16.mxu0 0
        %2124 = vmatmul.mubr.bf16.gmra.mrb[0].mxu0 %v2040
        %v2125 = vpop.f32.mrb[0].mxu0
        %v2126 = vadd.f32 0.0, %v2125
        %v2127 = vpop.f32.mrb[0].mxu0
        %v2128 = vpop.f32.mrb[0].mxu0
        %v2129 = vadd.f32 0.0, %v2128
        %v2130 = vpop.f32.mrb[0].mxu0
        %2131 = vmatprep.mubr.bf16.mxu0 0
        %2132 = vmatmul.mubr.bf16.gmra.mrb[0].mxu0 %v2043
        %v2133 = vpop.f32.mrb[0].mxu0
        %v2134 = vadd.f32 0.0, %v2133
        %v2135 = vpop.f32.mrb[0].mxu0
        %v2136 = vpop.f32.mrb[0].mxu0
        %v2137 = vadd.f32 0.0, %v2136
        %v2138 = vpop.f32.mrb[0].mxu0
        %2139 = vmatprep.mubr.bf16.mxu0 0
        %2140 = vmatmul.mubr.bf16.gmra.mrb[0].mxu0 %v2046
        %v2141 = vpop.f32.mrb[0].mxu0
        %v2142 = vadd.f32 0.0, %v2141
        %v2143 = vpop.f32.mrb[0].mxu0
        %v2144 = vpop.f32.mrb[0].mxu0
        %v2145 = vadd.f32 0.0, %v2144
        %v2146 = vpop.f32.mrb[0].mxu0
        %2147 = vmatprep.mubr.bf16.mxu0 0
        %2148 = vmatmul.mubr.bf16.gmra.mrb[0].mxu0 %v2049
        %v2149 = vpop.f32.mrb[0].mxu0
        %v2150 = vadd.f32 0.0, %v2149
        %v2151 = vpop.f32.mrb[0].mxu0
        %v2152 = vpop.f32.mrb[0].mxu0
        %v2153 = vadd.f32 0.0, %v2152
        %v2154 = vpop.f32.mrb[0].mxu0
        %2155 = vmatprep.mubr.bf16.mxu0 0
        %2156 = vmatmul.mubr.bf16.gmra.mrb[0].mxu0 %v2052
        %v2157 = vpop.f32.mrb[0].mxu0
        %v2158 = vadd.f32 0.0, %v2157
        %v2159 = vpop.f32.mrb[0].mxu0
        %v2160 = vpop.f32.mrb[0].mxu0
        %v2161 = vadd.f32 0.0, %v2160
        %v2162 = vpop.f32.mrb[0].mxu0
        %2163 = vmatprep.mubr.bf16.mxu0 0
        %2164 = vmatmul.mubr.bf16.gmra.mrb[0].mxu0 %v2055
        %v2165 = vpop.f32.mrb[0].mxu0
        %v2166 = vadd.f32 0.0, %v2165
        %v2167 = vpop.f32.mrb[0].mxu0
        %v2168 = vpop.f32.mrb[0].mxu0
        %v2169 = vadd.f32 0.0, %v2168
        %v2170 = vpop.f32.mrb[0].mxu0
        %2171 = vmatprep.mubr.bf16.mxu0 0
        %2172 = vmatmul.mubr.bf16.gmra.mrb[0].mxu0 %v2058
        %v2173 = vpop.f32.mrb[0].mxu0
        %v2174 = vadd.f32 0.0, %v2173
        %v2175 = vpop.f32.mrb[0].mxu0
        %v2176 = vpop.f32.mrb[0].mxu0
        %v2177 = vadd.f32 0.0, %v2176
        %v2178 = vpop.f32.mrb[0].mxu0
        %2179 = vmatprep.mubr.bf16.mxu0 0
        %2180 = vmatmul.mubr.bf16.gmra.mrb[0].mxu0 %v2061
        %v2181 = vpop.f32.mrb[0].mxu0
        %v2182 = vadd.f32 0.0, %v2181
        %v2183 = vpop.f32.mrb[0].mxu0
        %v2184 = vpop.f32.mrb[0].mxu0
        %v2185 = vadd.f32 0.0, %v2184
        %v2186 = vpop.f32.mrb[0].mxu0
        %2187 = vmatprep.mubr.bf16.mxu0 0
        %2188 = vmatmul.mubr.bf16.gmra.mrb[0].mxu0 %v2064
        %v2189 = vpop.f32.mrb[0].mxu0
        %v2190 = vadd.f32 0.0, %v2189
        %v2191 = vpop.f32.mrb[0].mxu0
        %v2192 = vpop.f32.mrb[0].mxu0
        %v2193 = vadd.f32 0.0, %v2192
        %v2194 = vpop.f32.mrb[0].mxu0
        %2195 = vmatprep.mubr.bf16.mxu0 0
        %2196 = vmatmul.mubr.bf16.gmra.mrb[0].mxu0 %v2067
        %v2197 = vpop.f32.mrb[0].mxu0
        %v2198 = vadd.f32 0.0, %v2197
        %v2199 = vpop.f32.mrb[0].mxu0
        %v2200 = vpop.f32.mrb[0].mxu0
        %v2201 = vadd.f32 0.0, %v2200
        %v2202 = vpop.f32.mrb[0].mxu0
        %2203 = vmatprep.mubr.bf16.mxu0 0
        %2204 = vmatmul.mubr.bf16.gmra.mrb[0].mxu0 %v2070
        %v2205 = vpop.f32.mrb[0].mxu0
        %v2206 = vadd.f32 0.0, %v2205
        %v2207 = vpop.f32.mrb[0].mxu0
        %v2208 = vpop.f32.mrb[0].mxu0
        %v2209 = vpop.f32.mrb[0].mxu0
        %2210 = vdwg.mxu0
        %v2211 = vadd.f32 %v1966, %v2110
        %v2212 = vadd.f32 %v1967, %v2113
        %v2213 = vadd.f32 %v1968, %v2118
        %v2214 = vadd.f32 %v1969, %v2121
        %v2215 = vadd.f32 %v1970, %v2126
        %v2216 = vadd.f32 %v1971, %v2129
        %v2217 = vadd.f32 %v1972, %v2134
        %v2218 = vadd.f32 %v1973, %v2137
        %v2219 = vadd.f32 %v1974, %v2142
        %v2220 = vadd.f32 %v1975, %v2145
        %v2221 = vadd.f32 %v1976, %v2150
        %v2222 = vadd.f32 %v1977, %v2153
        %v2223 = vadd.f32 %v1978, %v2158
        %v2224 = vadd.f32 %v1979, %v2161
        %v2225 = vadd.f32 %v1980, %v2166
        %v2226 = vadd.f32 %v1981, %v2169
        %v2227 = vadd.f32 %v1982, %v2174
        %v2228 = vadd.f32 %v1983, %v2177
        %v2229 = vadd.f32 %v1984, %v2182
        %v2230 = vadd.f32 %v1985, %v2185
        %v2231 = vadd.f32 %v1986, %v2190
        %v2232 = vadd.f32 %v1987, %v2193
        %v2233 = vadd.f32 %v1988, %v2198
        %v2234 = vadd.f32 %v1989, %v2201
        %v2235 = vadd.f32 %v1990, %v2206
        %s2236 = sadd.s32 %s325, 42
        %s2237 = scalar_lea.vmem %s314, %s2236
        %v2238 = vld [vmem:[%s2237] sm:$0xff]
        %v2239 = vld [vmem:[%s2237 + $0x8] sm:$0xff]
        %v2240 = vld [vmem:[%s2237 + $0x10] sm:$0xff]
        %v2241 = vld [vmem:[%s2237 + $0x18] sm:$0xff]
        %v2242 = vld [vmem:[%s2237 + $0x20] sm:$0xff]
        %v2243 = vld [vmem:[%s2237 + $0x28] sm:$0xff]
        %v2244 = vld [vmem:[%s2237 + $0x30] sm:$0xff]
        %v2245 = vld [vmem:[%s2237 + $0x38] sm:$0xff]
        %v2246 = vld [vmem:[%s2237 + $0x40] sm:$0xff]
        %v2247 = vld [vmem:[%s2237 + $0x48] sm:$0xff]
        %v2248 = vld [vmem:[%s2237 + $0x50] sm:$0xff]
        %v2249 = vld [vmem:[%s2237 + $0x58] sm:$0xff]
        %v2250 = vld [vmem:[%s2237 + $0x60] sm:$0xff]
        %v2251 = vld [vmem:[%s2237 + $0x68] sm:$0xff]
        %v2252 = vld [vmem:[%s2237 + $0x70] sm:$0xff]
        %v2253 = vld [vmem:[%s2237 + $0x78] sm:$0xff]
        %v2254 = vld [vmem:[%s2237 + $0x80] sm:$0xff]
        %v2255 = vld [vmem:[%s2237 + $0x88] sm:$0xff]
        %v2256 = vld [vmem:[%s2237 + $0x90] sm:$0xff]
        %v2257 = vld [vmem:[%s2237 + $0x98] sm:$0xff]
        %v2258 = vld [vmem:[%s2237 + $0xa0] sm:$0xff]
        %v2259 = vld [vmem:[%s2237 + $0xa8] sm:$0xff]
        %v2260 = vld [vmem:[%s2237 + $0xb0] sm:$0xff]
        %v2261 = vld [vmem:[%s2237 + $0xb8] sm:$0xff]
        %v2262 = vld [vmem:[%s2237 + $0xc0] sm:$0xff]
        %v2263 = vpack.c.bf16 %v2239, %v2238
        %v2264 = vpack.c.bf16 %v2241, %v2240
        %v2265 = vpack.c.bf16 %v2243, %v2242
        %v2266 = vpack.c.bf16 %v2245, %v2244
        %v2267 = vpack.c.bf16 %v2247, %v2246
        %v2268 = vpack.c.bf16 %v2249, %v2248
        %v2269 = vpack.c.bf16 %v2251, %v2250
        %v2270 = vpack.c.bf16 %v2253, %v2252
        %v2271 = vpack.c.bf16 %v2255, %v2254
        %v2272 = vpack.c.bf16 %v2257, %v2256
        %v2273 = vpack.c.bf16 %v2259, %v2258
        %v2274 = vpack.c.bf16 %v2261, %v2260
        %v2275 = vpack.c.bf16 %v2262, %v2262
        %s2276 = scalar_lea.vmem %s3, 16
        %v2277 = vld [vmem:[%s2276] sm:$0x3]
        %v2279 = vsel %vm408, %v2263, 0
        %v2282 = vsel %vm408, %v2264, 0
        %v2285 = vsel %vm408, %v2265, 0
        %v2288 = vsel %vm408, %v2266, 0
        %v2291 = vsel %vm408, %v2267, 0
        %v2294 = vsel %vm408, %v2268, 0
        %v2297 = vsel %vm408, %v2269, 0
        %v2300 = vsel %vm408, %v2270, 0
        %v2303 = vsel %vm408, %v2271, 0
        %v2306 = vsel %vm408, %v2272, 0
        %v2309 = vsel %vm408, %v2273, 0
        %v2312 = vsel %vm408, %v2274, 0
        %v2315 = vsel %vm408, %v2275, 0
        %v2318 = vsel %vm448, %v2277, 0
        %2320 = vmatprep.subr.bf16.mxu0 0
        %2321 = vmatpush1.bf16.msra.mxu0 %v2318
        %2322 = vmatprep.subr.bf16.mxu0 0
        %2323 = vmatpush1.bf16.msra.mxu0 0
        %2324 = vmatprep.subr.bf16.mxu0 0
        %2325 = vmatpush1.bf16.msra.mxu0 0
        %2326 = vmatprep.subr.bf16.mxu0 0
        %2327 = vmatpush1.bf16.msra.mxu0 0
        %2328 = vmatprep.subr.bf16.mxu0 0
        %2329 = vmatpush1.bf16.msra.mxu0 0
        %2330 = vmatprep.subr.bf16.mxu0 0
        %2331 = vmatpush1.bf16.msra.mxu0 0
        %2332 = vmatprep.subr.bf16.mxu0 0
        %2333 = vmatpush1.bf16.msra.mxu0 0
        %2334 = vmatprep.subr.bf16.mxu0 0
        %2335 = vmatpush1.bf16.msra.mxu0 0
        %2336 = vmatprep.subr.bf16.mxu0 0
        %2337 = vmatpush1.bf16.msra.mxu0 0
        %2338 = vmatprep.subr.bf16.mxu0 0
        %2339 = vmatpush1.bf16.msra.mxu0 0
        %2340 = vmatprep.subr.bf16.mxu0 0
        %2341 = vmatpush1.bf16.msra.mxu0 0
        %2342 = vmatprep.subr.bf16.mxu0 0
        %2343 = vmatpush1.bf16.msra.mxu0 0
        %2344 = vmatprep.subr.bf16.mxu0 0
        %2345 = vmatpush1.bf16.msra.mxu0 0
        %2346 = vmatprep.subr.bf16.mxu0 0
        %2347 = vmatpush1.bf16.msra.mxu0 0
        %2348 = vmatprep.subr.bf16.mxu0 0
        %2349 = vmatpush1.bf16.msra.mxu0 0
        %2350 = vmatprep.subr.bf16.mxu0 0
        %2351 = vmatpush1.bf16.msra.mxu0 0
        %2352 = vmatprep.mubr.bf16.mxu0 0
        %2353 = vmatmul.mubr.bf16.gmra.mrb[0].mxu0 %v2279
        %v2354 = vpop.f32.mrb[0].mxu0
        %v2355 = vadd.f32 0.0, %v2354
        %v2356 = vpop.f32.mrb[0].mxu0
        %v2357 = vpop.f32.mrb[0].mxu0
        %v2358 = vadd.f32 0.0, %v2357
        %v2359 = vpop.f32.mrb[0].mxu0
        %2360 = vmatprep.mubr.bf16.mxu0 0
        %2361 = vmatmul.mubr.bf16.gmra.mrb[0].mxu0 %v2282
        %v2362 = vpop.f32.mrb[0].mxu0
        %v2363 = vadd.f32 0.0, %v2362
        %v2364 = vpop.f32.mrb[0].mxu0
        %v2365 = vpop.f32.mrb[0].mxu0
        %v2366 = vadd.f32 0.0, %v2365
        %v2367 = vpop.f32.mrb[0].mxu0
        %2368 = vmatprep.mubr.bf16.mxu0 0
        %2369 = vmatmul.mubr.bf16.gmra.mrb[0].mxu0 %v2285
        %v2370 = vpop.f32.mrb[0].mxu0
        %v2371 = vadd.f32 0.0, %v2370
        %v2372 = vpop.f32.mrb[0].mxu0
        %v2373 = vpop.f32.mrb[0].mxu0
        %v2374 = vadd.f32 0.0, %v2373
        %v2375 = vpop.f32.mrb[0].mxu0
        %2376 = vmatprep.mubr.bf16.mxu0 0
        %2377 = vmatmul.mubr.bf16.gmra.mrb[0].mxu0 %v2288
        %v2378 = vpop.f32.mrb[0].mxu0
        %v2379 = vadd.f32 0.0, %v2378
        %v2380 = vpop.f32.mrb[0].mxu0
        %v2381 = vpop.f32.mrb[0].mxu0
        %v2382 = vadd.f32 0.0, %v2381
        %v2383 = vpop.f32.mrb[0].mxu0
        %2384 = vmatprep.mubr.bf16.mxu0 0
        %2385 = vmatmul.mubr.bf16.gmra.mrb[0].mxu0 %v2291
        %v2386 = vpop.f32.mrb[0].mxu0
        %v2387 = vadd.f32 0.0, %v2386
        %v2388 = vpop.f32.mrb[0].mxu0
        %v2389 = vpop.f32.mrb[0].mxu0
        %v2390 = vadd.f32 0.0, %v2389
        %v2391 = vpop.f32.mrb[0].mxu0
        %2392 = vmatprep.mubr.bf16.mxu0 0
        %2393 = vmatmul.mubr.bf16.gmra.mrb[0].mxu0 %v2294
        %v2394 = vpop.f32.mrb[0].mxu0
        %v2395 = vadd.f32 0.0, %v2394
        %v2396 = vpop.f32.mrb[0].mxu0
        %v2397 = vpop.f32.mrb[0].mxu0
        %v2398 = vadd.f32 0.0, %v2397
        %v2399 = vpop.f32.mrb[0].mxu0
        %2400 = vmatprep.mubr.bf16.mxu0 0
        %2401 = vmatmul.mubr.bf16.gmra.mrb[0].mxu0 %v2297
        %v2402 = vpop.f32.mrb[0].mxu0
        %v2403 = vadd.f32 0.0, %v2402
        %v2404 = vpop.f32.mrb[0].mxu0
        %v2405 = vpop.f32.mrb[0].mxu0
        %v2406 = vadd.f32 0.0, %v2405
        %v2407 = vpop.f32.mrb[0].mxu0
        %2408 = vmatprep.mubr.bf16.mxu0 0
        %2409 = vmatmul.mubr.bf16.gmra.mrb[0].mxu0 %v2300
        %v2410 = vpop.f32.mrb[0].mxu0
        %v2411 = vadd.f32 0.0, %v2410
        %v2412 = vpop.f32.mrb[0].mxu0
        %v2413 = vpop.f32.mrb[0].mxu0
        %v2414 = vadd.f32 0.0, %v2413
        %v2415 = vpop.f32.mrb[0].mxu0
        %2416 = vmatprep.mubr.bf16.mxu0 0
        %2417 = vmatmul.mubr.bf16.gmra.mrb[0].mxu0 %v2303
        %v2418 = vpop.f32.mrb[0].mxu0
        %v2419 = vadd.f32 0.0, %v2418
        %v2420 = vpop.f32.mrb[0].mxu0
        %v2421 = vpop.f32.mrb[0].mxu0
        %v2422 = vadd.f32 0.0, %v2421
        %v2423 = vpop.f32.mrb[0].mxu0
        %2424 = vmatprep.mubr.bf16.mxu0 0
        %2425 = vmatmul.mubr.bf16.gmra.mrb[0].mxu0 %v2306
        %v2426 = vpop.f32.mrb[0].mxu0
        %v2427 = vadd.f32 0.0, %v2426
        %v2428 = vpop.f32.mrb[0].mxu0
        %v2429 = vpop.f32.mrb[0].mxu0
        %v2430 = vadd.f32 0.0, %v2429
        %v2431 = vpop.f32.mrb[0].mxu0
        %2432 = vmatprep.mubr.bf16.mxu0 0
        %2433 = vmatmul.mubr.bf16.gmra.mrb[0].mxu0 %v2309
        %v2434 = vpop.f32.mrb[0].mxu0
        %v2435 = vadd.f32 0.0, %v2434
        %v2436 = vpop.f32.mrb[0].mxu0
        %v2437 = vpop.f32.mrb[0].mxu0
        %v2438 = vadd.f32 0.0, %v2437
        %v2439 = vpop.f32.mrb[0].mxu0
        %2440 = vmatprep.mubr.bf16.mxu0 0
        %2441 = vmatmul.mubr.bf16.gmra.mrb[0].mxu0 %v2312
        %v2442 = vpop.f32.mrb[0].mxu0
        %v2443 = vadd.f32 0.0, %v2442
        %v2444 = vpop.f32.mrb[0].mxu0
        %v2445 = vpop.f32.mrb[0].mxu0
        %v2446 = vadd.f32 0.0, %v2445
        %v2447 = vpop.f32.mrb[0].mxu0
        %2448 = vmatprep.mubr.bf16.mxu0 0
        %2449 = vmatmul.mubr.bf16.gmra.mrb[0].mxu0 %v2315
        %v2450 = vpop.f32.mrb[0].mxu0
        %v2451 = vadd.f32 0.0, %v2450
        %v2452 = vpop.f32.mrb[0].mxu0
        %v2453 = vpop.f32.mrb[0].mxu0
        %v2454 = vpop.f32.mrb[0].mxu0
        %2455 = vdwg.mxu0
        %v2456 = vadd.f32 %v2211, %v2355
        %v2457 = vadd.f32 %v2212, %v2358
        %v2458 = vadd.f32 %v2213, %v2363
        %v2459 = vadd.f32 %v2214, %v2366
        %v2460 = vadd.f32 %v2215, %v2371
        %v2461 = vadd.f32 %v2216, %v2374
        %v2462 = vadd.f32 %v2217, %v2379
        %v2463 = vadd.f32 %v2218, %v2382
        %v2464 = vadd.f32 %v2219, %v2387
        %v2465 = vadd.f32 %v2220, %v2390
        %v2466 = vadd.f32 %v2221, %v2395
        %v2467 = vadd.f32 %v2222, %v2398
        %v2468 = vadd.f32 %v2223, %v2403
        %v2469 = vadd.f32 %v2224, %v2406
        %v2470 = vadd.f32 %v2225, %v2411
        %v2471 = vadd.f32 %v2226, %v2414
        %v2472 = vadd.f32 %v2227, %v2419
        %v2473 = vadd.f32 %v2228, %v2422
        %v2474 = vadd.f32 %v2229, %v2427
        %v2475 = vadd.f32 %v2230, %v2430
        %v2476 = vadd.f32 %v2231, %v2435
        %v2477 = vadd.f32 %v2232, %v2438
        %v2478 = vadd.f32 %v2233, %v2443
        %v2479 = vadd.f32 %v2234, %v2446
        %v2480 = vadd.f32 %v2235, %v2451
        %v2481 = vld [vmem:[%s4] sm:$0x1]
        %v2483 = vlaneseq
        %v2484 = vshrl.u32 %v2483, 7
        %v2485 = vsub.s32 0, %v2484
        %v2486 = vrot.slane %v2481, %v2485
        %v2488 = vadd.f32 %v2456, %v2486
        %v2489 = vadd.f32 %v2457, %v2486
        %v2490 = vadd.f32 %v2458, %v2486
        %v2491 = vadd.f32 %v2459, %v2486
        %v2492 = vadd.f32 %v2460, %v2486
        %v2493 = vadd.f32 %v2461, %v2486
        %v2494 = vadd.f32 %v2462, %v2486
        %v2495 = vadd.f32 %v2463, %v2486
        %v2496 = vadd.f32 %v2464, %v2486
        %v2497 = vadd.f32 %v2465, %v2486
        %v2498 = vadd.f32 %v2466, %v2486
        %v2499 = vadd.f32 %v2467, %v2486
        %v2500 = vadd.f32 %v2468, %v2486
        %v2501 = vadd.f32 %v2469, %v2486
        %v2502 = vadd.f32 %v2470, %v2486
        %v2503 = vadd.f32 %v2471, %v2486
        %v2504 = vadd.f32 %v2472, %v2486
        %v2505 = vadd.f32 %v2473, %v2486
        %v2506 = vadd.f32 %v2474, %v2486
        %v2507 = vadd.f32 %v2475, %v2486
        %v2508 = vadd.f32 %v2476, %v2486
        %v2509 = vadd.f32 %v2477, %v2486
        %v2510 = vadd.f32 %v2478, %v2486
        %v2511 = vadd.f32 %v2479, %v2486
        %v2512 = vadd.f32 %v2480, %v2486
        %v2513 = vmax.f32 %v2488, 0.0
        %v2514 = vmax.f32 %v2489, 0.0
        %v2515 = vmax.f32 %v2490, 0.0
        %v2516 = vmax.f32 %v2491, 0.0
        %v2517 = vmax.f32 %v2492, 0.0
        %v2518 = vmax.f32 %v2493, 0.0
        %v2519 = vmax.f32 %v2494, 0.0
        %v2520 = vmax.f32 %v2495, 0.0
        %v2521 = vmax.f32 %v2496, 0.0
        %v2522 = vmax.f32 %v2497, 0.0
        %v2523 = vmax.f32 %v2498, 0.0
        %v2524 = vmax.f32 %v2499, 0.0
        %v2525 = vmax.f32 %v2500, 0.0
        %v2526 = vmax.f32 %v2501, 0.0
        %v2527 = vmax.f32 %v2502, 0.0
        %v2528 = vmax.f32 %v2503, 0.0
        %v2529 = vmax.f32 %v2504, 0.0
        %v2530 = vmax.f32 %v2505, 0.0
        %v2531 = vmax.f32 %v2506, 0.0
        %v2532 = vmax.f32 %v2507, 0.0
        %v2533 = vmax.f32 %v2508, 0.0
        %v2534 = vmax.f32 %v2509, 0.0
        %v2535 = vmax.f32 %v2510, 0.0
        %v2536 = vmax.f32 %v2511, 0.0
        %v2537 = vmax.f32 %v2512, 0.0
        %s2538 = scalar_lea.vmem %s1, %s325
        %v2539 = vld [vmem:[%s2538] sm:$0xff]
        %v2540 = vld [vmem:[%s2538 + $0x8] sm:$0xff]
        %v2541 = vld [vmem:[%s2538 + $0x10] sm:$0xff]
        %v2542 = vld [vmem:[%s2538 + $0x18] sm:$0xff]
        %v2543 = vld [vmem:[%s2538 + $0x20] sm:$0xff]
        %v2544 = vld [vmem:[%s2538 + $0x28] sm:$0xff]
        %v2545 = vld [vmem:[%s2538 + $0x30] sm:$0xff]
        %v2546 = vld [vmem:[%s2538 + $0x38] sm:$0xff]
        %v2547 = vld [vmem:[%s2538 + $0x40] sm:$0xff]
        %v2548 = vld [vmem:[%s2538 + $0x48] sm:$0xff]
        %v2549 = vld [vmem:[%s2538 + $0x50] sm:$0xff]
        %v2550 = vld [vmem:[%s2538 + $0x58] sm:$0xff]
        %v2551 = vld [vmem:[%s2538 + $0x60] sm:$0xff]
        %v2552 = vld [vmem:[%s2538 + $0x68] sm:$0xff]
        %v2553 = vld [vmem:[%s2538 + $0x70] sm:$0xff]
        %v2554 = vld [vmem:[%s2538 + $0x78] sm:$0xff]
        %v2555 = vld [vmem:[%s2538 + $0x80] sm:$0xff]
        %v2556 = vld [vmem:[%s2538 + $0x88] sm:$0xff]
        %v2557 = vld [vmem:[%s2538 + $0x90] sm:$0xff]
        %v2558 = vld [vmem:[%s2538 + $0x98] sm:$0xff]
        %v2559 = vld [vmem:[%s2538 + $0xa0] sm:$0xff]
        %v2560 = vld [vmem:[%s2538 + $0xa8] sm:$0xff]
        %v2561 = vld [vmem:[%s2538 + $0xb0] sm:$0xff]
        %v2562 = vld [vmem:[%s2538 + $0xb8] sm:$0xff]
        %v2563 = vld [vmem:[%s2538 + $0xc0] sm:$0xff]
        %2565 = vset.pattern.permute.xlu0 0
        %2566 = vperm.xlu0 %2565, %v2539
        %v2567 = vpop.permute.xlu0 %2566
        %2570 = vset.pattern.permute.xlu0 0
        %2571 = vperm.xlu0 %2570, %v2540
        %v2572 = vpop.permute.xlu0 %2571
        %2575 = vset.pattern.permute.xlu0 0
        %2576 = vperm.xlu0 %2575, %v2541
        %v2577 = vpop.permute.xlu0 %2576
        %2580 = vset.pattern.permute.xlu0 0
        %2581 = vperm.xlu0 %2580, %v2542
        %v2582 = vpop.permute.xlu0 %2581
        %2585 = vset.pattern.permute.xlu0 0
        %2586 = vperm.xlu0 %2585, %v2543
        %v2587 = vpop.permute.xlu0 %2586
        %2590 = vset.pattern.permute.xlu0 0
        %2591 = vperm.xlu0 %2590, %v2544
        %v2592 = vpop.permute.xlu0 %2591
        %2595 = vset.pattern.permute.xlu0 0
        %2596 = vperm.xlu0 %2595, %v2545
        %v2597 = vpop.permute.xlu0 %2596
        %2600 = vset.pattern.permute.xlu0 0
        %2601 = vperm.xlu0 %2600, %v2546
        %v2602 = vpop.permute.xlu0 %2601
        %2605 = vset.pattern.permute.xlu0 0
        %2606 = vperm.xlu0 %2605, %v2547
        %v2607 = vpop.permute.xlu0 %2606
        %2610 = vset.pattern.permute.xlu0 0
        %2611 = vperm.xlu0 %2610, %v2548
        %v2612 = vpop.permute.xlu0 %2611
        %2615 = vset.pattern.permute.xlu0 0
        %2616 = vperm.xlu0 %2615, %v2549
        %v2617 = vpop.permute.xlu0 %2616
        %2620 = vset.pattern.permute.xlu0 0
        %2621 = vperm.xlu0 %2620, %v2550
        %v2622 = vpop.permute.xlu0 %2621
        %2625 = vset.pattern.permute.xlu0 0
        %2626 = vperm.xlu0 %2625, %v2551
        %v2627 = vpop.permute.xlu0 %2626
        %2630 = vset.pattern.permute.xlu0 0
        %2631 = vperm.xlu0 %2630, %v2552
        %v2632 = vpop.permute.xlu0 %2631
        %2635 = vset.pattern.permute.xlu0 0
        %2636 = vperm.xlu0 %2635, %v2553
        %v2637 = vpop.permute.xlu0 %2636
        %2640 = vset.pattern.permute.xlu0 0
        %2641 = vperm.xlu0 %2640, %v2554
        %v2642 = vpop.permute.xlu0 %2641
        %2645 = vset.pattern.permute.xlu0 0
        %2646 = vperm.xlu0 %2645, %v2555
        %v2647 = vpop.permute.xlu0 %2646
        %2650 = vset.pattern.permute.xlu0 0
        %2651 = vperm.xlu0 %2650, %v2556
        %v2652 = vpop.permute.xlu0 %2651
        %2655 = vset.pattern.permute.xlu0 0
        %2656 = vperm.xlu0 %2655, %v2557
        %v2657 = vpop.permute.xlu0 %2656
        %2660 = vset.pattern.permute.xlu0 0
        %2661 = vperm.xlu0 %2660, %v2558
        %v2662 = vpop.permute.xlu0 %2661
        %2665 = vset.pattern.permute.xlu0 0
        %2666 = vperm.xlu0 %2665, %v2559
        %v2667 = vpop.permute.xlu0 %2666
        %2670 = vset.pattern.permute.xlu0 0
        %2671 = vperm.xlu0 %2670, %v2560
        %v2672 = vpop.permute.xlu0 %2671
        %2675 = vset.pattern.permute.xlu0 0
        %2676 = vperm.xlu0 %2675, %v2561
        %v2677 = vpop.permute.xlu0 %2676
        %2680 = vset.pattern.permute.xlu0 0
        %2681 = vperm.xlu0 %2680, %v2562
        %v2682 = vpop.permute.xlu0 %2681
        %2685 = vset.pattern.permute.xlu0 0
        %2686 = vperm.xlu0 %2685, %v2563
        %v2687 = vpop.permute.xlu0 %2686
        %v2689 = vmul.f32 %v2513, %v2567
        %v2690 = vmul.f32 %v2514, %v2572
        %v2691 = vmul.f32 %v2515, %v2577
        %v2692 = vmul.f32 %v2516, %v2582
        %v2693 = vmul.f32 %v2517, %v2587
        %v2694 = vmul.f32 %v2518, %v2592
        %v2695 = vmul.f32 %v2519, %v2597
        %v2696 = vmul.f32 %v2520, %v2602
        %v2697 = vmul.f32 %v2521, %v2607
        %v2698 = vmul.f32 %v2522, %v2612
        %v2699 = vmul.f32 %v2523, %v2617
        %v2700 = vmul.f32 %v2524, %v2622
        %v2701 = vmul.f32 %v2525, %v2627
        %v2702 = vmul.f32 %v2526, %v2632
        %v2703 = vmul.f32 %v2527, %v2637
        %v2704 = vmul.f32 %v2528, %v2642
        %v2705 = vmul.f32 %v2529, %v2647
        %v2706 = vmul.f32 %v2530, %v2652
        %v2707 = vmul.f32 %v2531, %v2657
        %v2708 = vmul.f32 %v2532, %v2662
        %v2709 = vmul.f32 %v2533, %v2667
        %v2710 = vmul.f32 %v2534, %v2672
        %v2711 = vmul.f32 %v2535, %v2677
        %v2712 = vmul.f32 %v2536, %v2682
        %v2713 = vmul.f32 %v2537, %v2687
        %vm2714 = vcmask 523264
        %2715 = vst.msk [vmem:[#allocation2] sm:$0xff] %vm2714, %v2689
        %2716 = vst.msk [vmem:[#allocation2 + $0x8] sm:$0xff] %vm2714, %v2690
        %2717 = vst.msk [vmem:[#allocation2 + $0x10] sm:$0xff] %vm2714, %v2691
        %2718 = vst.msk [vmem:[#allocation2 + $0x18] sm:$0xff] %vm2714, %v2692
        %2719 = vst.msk [vmem:[#allocation2 + $0x20] sm:$0xff] %vm2714, %v2693
        %2720 = vst.msk [vmem:[#allocation2 + $0x28] sm:$0xff] %vm2714, %v2694
        %2721 = vst.msk [vmem:[#allocation2 + $0x30] sm:$0xff] %vm2714, %v2695
        %2722 = vst.msk [vmem:[#allocation2 + $0x38] sm:$0xff] %vm2714, %v2696
        %2723 = vst.msk [vmem:[#allocation2 + $0x40] sm:$0xff] %vm2714, %v2697
        %2724 = vst.msk [vmem:[#allocation2 + $0x48] sm:$0xff] %vm2714, %v2698
        %2725 = vst.msk [vmem:[#allocation2 + $0x50] sm:$0xff] %vm2714, %v2699
        %2726 = vst.msk [vmem:[#allocation2 + $0x58] sm:$0xff] %vm2714, %v2700
        %2727 = vst.msk [vmem:[#allocation2 + $0x60] sm:$0xff] %vm2714, %v2701
        %2728 = vst.msk [vmem:[#allocation2 + $0x68] sm:$0xff] %vm2714, %v2702
        %2729 = vst.msk [vmem:[#allocation2 + $0x70] sm:$0xff] %vm2714, %v2703
        %2730 = vst.msk [vmem:[#allocation2 + $0x78] sm:$0xff] %vm2714, %v2704
        %2731 = vst.msk [vmem:[#allocation2 + $0x80] sm:$0xff] %vm2714, %v2705
        %2732 = vst.msk [vmem:[#allocation2 + $0x88] sm:$0xff] %vm2714, %v2706
        %2733 = vst.msk [vmem:[#allocation2 + $0x90] sm:$0xff] %vm2714, %v2707
        %2734 = vst.msk [vmem:[#allocation2 + $0x98] sm:$0xff] %vm2714, %v2708
        %2735 = vst.msk [vmem:[#allocation2 + $0xa0] sm:$0xff] %vm2714, %v2709
        %2736 = vst.msk [vmem:[#allocation2 + $0xa8] sm:$0xff] %vm2714, %v2710
        %2737 = vst.msk [vmem:[#allocation2 + $0xb0] sm:$0xff] %vm2714, %v2711
        %2738 = vst.msk [vmem:[#allocation2 + $0xb8] sm:$0xff] %vm2714, %v2712
        %2739 = vst.msk [vmem:[#allocation2 + $0xc0] sm:$0xff] %vm2714, %v2713
        %2740 = vst.msk [vmem:[#allocation2 + $0xc8] sm:$0xff] %vm2714, 0.0
        %v2741 = vld [vmem:[#allocation2] sm:$0xff]
        %v2742 = vld [vmem:[#allocation2 + $0x8] sm:$0xff]
        %v2743 = vld [vmem:[#allocation2 + $0x10] sm:$0xff]
        %v2744 = vld [vmem:[#allocation2 + $0x18] sm:$0xff]
        %v2745 = vld [vmem:[#allocation2 + $0x20] sm:$0xff]
        %v2746 = vld [vmem:[#allocation2 + $0x28] sm:$0xff]
        %v2747 = vld [vmem:[#allocation2 + $0x30] sm:$0xff]
        %v2748 = vld [vmem:[#allocation2 + $0x38] sm:$0xff]
        %v2749 = vld [vmem:[#allocation2 + $0x40] sm:$0xff]
        %v2750 = vld [vmem:[#allocation2 + $0x48] sm:$0xff]
        %v2751 = vld [vmem:[#allocation2 + $0x50] sm:$0xff]
        %v2752 = vld [vmem:[#allocation2 + $0x58] sm:$0xff]
        %v2753 = vld [vmem:[#allocation2 + $0x60] sm:$0xff]
        %v2754 = vld [vmem:[#allocation2 + $0x68] sm:$0xff]
        %v2755 = vld [vmem:[#allocation2 + $0x70] sm:$0xff]
        %v2756 = vld [vmem:[#allocation2 + $0x78] sm:$0xff]
        %v2757 = vld [vmem:[#allocation2 + $0x80] sm:$0xff]
        %v2758 = vld [vmem:[#allocation2 + $0x88] sm:$0xff]
        %v2759 = vld [vmem:[#allocation2 + $0x90] sm:$0xff]
        %v2760 = vld [vmem:[#allocation2 + $0x98] sm:$0xff]
        %v2761 = vpack.c.bf16 %v2742, %v2741
        %v2762 = vpack.c.bf16 %v2744, %v2743
        %v2763 = vpack.c.bf16 %v2746, %v2745
        %v2764 = vpack.c.bf16 %v2748, %v2747
        %v2765 = vpack.c.bf16 %v2750, %v2749
        %v2766 = vpack.c.bf16 %v2752, %v2751
        %v2767 = vpack.c.bf16 %v2754, %v2753
        %v2768 = vpack.c.bf16 %v2756, %v2755
        %v2769 = vpack.c.bf16 %v2758, %v2757
        %v2770 = vpack.c.bf16 %v2760, %v2759
        %v2771 = vld [vmem:[%s5] sm:$0xff]
        %v2772 = vld [vmem:[%s5 + $0x8] sm:$0xff]
        %v2773 = vld [vmem:[%s5 + $0x10] sm:$0xff]
        %v2774 = vld [vmem:[%s5 + $0x18] sm:$0xff]
        %v2775 = vld [vmem:[%s5 + $0x20] sm:$0xff]
        %v2776 = vld [vmem:[%s5 + $0x28] sm:$0xff]
        %v2777 = vld [vmem:[%s5 + $0x30] sm:$0xff]
        %v2778 = vld [vmem:[%s5 + $0x38] sm:$0xff]
        %v2779 = vld [vmem:[%s5 + $0x40] sm:$0xff]
        %v2780 = vld [vmem:[%s5 + $0x48] sm:$0xff]
        %v2781 = vld [vmem:[%s5 + $0x50] sm:$0xff]
        %v2782 = vld [vmem:[%s5 + $0x58] sm:$0xff]
        %v2783 = vld [vmem:[%s5 + $0x60] sm:$0xff]
        %v2784 = vld [vmem:[%s5 + $0x68] sm:$0xff]
        %v2785 = vld [vmem:[%s5 + $0x70] sm:$0xff]
        %v2786 = vld [vmem:[%s5 + $0x78] sm:$0xff]
        %v2803 = vunpack.c.l.b16 %v2771
        %v2804 = vunpack.c.h.b16 %v2771
        %v2805 = vunpack.c.l.b16 %v2772
        %v2806 = vunpack.c.h.b16 %v2772
        %v2807 = vunpack.c.l.b16 %v2773
        %v2808 = vunpack.c.h.b16 %v2773
        %v2809 = vunpack.c.l.b16 %v2774
        %v2810 = vunpack.c.h.b16 %v2774
        %v2811 = vunpack.c.l.b16 %v2775
        %v2812 = vunpack.c.h.b16 %v2775
        %v2813 = vunpack.c.l.b16 %v2776
        %v2814 = vunpack.c.h.b16 %v2776
        %v2815 = vunpack.c.l.b16 %v2777
        %v2816 = vunpack.c.h.b16 %v2777
        %v2817 = vunpack.c.l.b16 %v2778
        %v2818 = vunpack.c.h.b16 %v2778
        %v2819 = vunpack.c.l.b16 %v2779
        %v2820 = vunpack.c.h.b16 %v2779
        %v2821 = vunpack.c.l.b16 %v2780
        %v2822 = vunpack.c.h.b16 %v2780
        %v2823 = vunpack.c.l.b16 %v2781
        %v2824 = vunpack.c.h.b16 %v2781
        %v2825 = vunpack.c.l.b16 %v2782
        %v2826 = vunpack.c.h.b16 %v2782
        %v2827 = vunpack.c.l.b16 %v2783
        %v2828 = vunpack.c.h.b16 %v2783
        %v2829 = vunpack.c.l.b16 %v2784
        %v2830 = vunpack.c.h.b16 %v2784
        %v2831 = vunpack.c.l.b16 %v2785
        %v2832 = vunpack.c.h.b16 %v2785
        %v2833 = vunpack.c.l.b16 %v2786
        %v2834 = vunpack.c.h.b16 %v2786
        %v2835 = vpack.c.b16 %v2807, %v2803
        %v2836 = vpack.c.b16 %v2808, %v2804
        %v2837 = vpack.c.b16 %v2809, %v2805
        %v2838 = vpack.c.b16 %v2810, %v2806
        %v2839 = vpack.c.b16 %v2815, %v2811
        %v2840 = vpack.c.b16 %v2816, %v2812
        %v2841 = vpack.c.b16 %v2817, %v2813
        %v2842 = vpack.c.b16 %v2818, %v2814
        %v2843 = vpack.c.b16 %v2823, %v2819
        %v2844 = vpack.c.b16 %v2824, %v2820
        %v2845 = vpack.c.b16 %v2825, %v2821
        %v2846 = vpack.c.b16 %v2826, %v2822
        %v2847 = vpack.c.b16 %v2831, %v2827
        %v2848 = vpack.c.b16 %v2832, %v2828
        %v2849 = vpack.c.b16 %v2833, %v2829
        %v2850 = vpack.c.b16 %v2834, %v2830
        %v2868 = vsel %vm2714, %v2761, 0
        %v2871 = vsel %vm2714, %v2762, 0
        %v2874 = vsel %vm2714, %v2763, 0
        %v2877 = vsel %vm2714, %v2764, 0
        %v2880 = vsel %vm2714, %v2765, 0
        %v2883 = vsel %vm2714, %v2766, 0
        %v2886 = vsel %vm2714, %v2767, 0
        %v2889 = vsel %vm2714, %v2768, 0
        %v2892 = vsel %vm2714, %v2769, 0
        %v2895 = vsel %vm2714, %v2770, 0
        %2897 = vmatprep.subr.bf16.mxu0 %v2836
        %2898 = vmatpush1.bf16.msra.mxu0 %v2835
        %2899 = vmatprep.subr.bf16.mxu0 %v2840
        %2900 = vmatpush1.bf16.msra.mxu0 %v2839
        %2901 = vmatprep.subr.bf16.mxu0 %v2844
        %2902 = vmatpush1.bf16.msra.mxu0 %v2843
        %2903 = vmatprep.subr.bf16.mxu0 %v2848
        %2904 = vmatpush1.bf16.msra.mxu0 %v2847
        %2905 = vmatprep.subr.bf16.mxu0 0
        %2906 = vmatpush1.bf16.msra.mxu0 0
        %2907 = vmatprep.subr.bf16.mxu0 0
        %2908 = vmatpush1.bf16.msra.mxu0 0
        %2909 = vmatprep.subr.bf16.mxu0 0
        %2910 = vmatpush1.bf16.msra.mxu0 0
        %2911 = vmatprep.subr.bf16.mxu0 0
        %2912 = vmatpush1.bf16.msra.mxu0 0
        %2913 = vmatprep.subr.bf16.mxu0 0
        %2914 = vmatpush1.bf16.msra.mxu0 0
        %2915 = vmatprep.subr.bf16.mxu0 0
        %2916 = vmatpush1.bf16.msra.mxu0 0
        %2917 = vmatprep.subr.bf16.mxu0 0
        %2918 = vmatpush1.bf16.msra.mxu0 0
        %2919 = vmatprep.subr.bf16.mxu0 0
        %2920 = vmatpush1.bf16.msra.mxu0 0
        %2921 = vmatprep.subr.bf16.mxu0 0
        %2922 = vmatpush1.bf16.msra.mxu0 0
        %2923 = vmatprep.subr.bf16.mxu0 0
        %2924 = vmatpush1.bf16.msra.mxu0 0
        %2925 = vmatprep.subr.bf16.mxu0 0
        %2926 = vmatpush1.bf16.msra.mxu0 0
        %2927 = vmatprep.subr.bf16.mxu0 0
        %2928 = vmatpush1.bf16.msra.mxu0 0
        %2929 = vmatprep.mubr.bf16.mxu0 0
        %2930 = vmatmul.mubr.bf16.gmra.mrb[0].mxu0 %v2868
        %v2931 = vpop.f32.mrb[0].mxu0
        %v2932 = vadd.f32 0.0, %v2931
        %v2933 = vpop.f32.mrb[0].mxu0
        %v2934 = vadd.f32 0.0, %v2933
        %v2935 = vpop.f32.mrb[0].mxu0
        %v2936 = vadd.f32 0.0, %v2935
        %v2937 = vpop.f32.mrb[0].mxu0
        %v2938 = vadd.f32 0.0, %v2937
        %2939 = vmatprep.mubr.bf16.mxu0 0
        %2940 = vmatmul.mubr.bf16.gmra.mrb[0].mxu0 %v2871
        %v2941 = vpop.f32.mrb[0].mxu0
        %v2942 = vadd.f32 0.0, %v2941
        %v2943 = vpop.f32.mrb[0].mxu0
        %v2944 = vadd.f32 0.0, %v2943
        %v2945 = vpop.f32.mrb[0].mxu0
        %v2946 = vadd.f32 0.0, %v2945
        %v2947 = vpop.f32.mrb[0].mxu0
        %v2948 = vadd.f32 0.0, %v2947
        %2949 = vmatprep.mubr.bf16.mxu0 0
        %2950 = vmatmul.mubr.bf16.gmra.mrb[0].mxu0 %v2874
        %v2951 = vpop.f32.mrb[0].mxu0
        %v2952 = vadd.f32 0.0, %v2951
        %v2953 = vpop.f32.mrb[0].mxu0
        %v2954 = vadd.f32 0.0, %v2953
        %v2955 = vpop.f32.mrb[0].mxu0
        %v2956 = vadd.f32 0.0, %v2955
        %v2957 = vpop.f32.mrb[0].mxu0
        %v2958 = vadd.f32 0.0, %v2957
        %2959 = vmatprep.mubr.bf16.mxu0 0
        %2960 = vmatmul.mubr.bf16.gmra.mrb[0].mxu0 %v2877
        %v2961 = vpop.f32.mrb[0].mxu0
        %v2962 = vadd.f32 0.0, %v2961
        %v2963 = vpop.f32.mrb[0].mxu0
        %v2964 = vadd.f32 0.0, %v2963
        %v2965 = vpop.f32.mrb[0].mxu0
        %v2966 = vadd.f32 0.0, %v2965
        %v2967 = vpop.f32.mrb[0].mxu0
        %v2968 = vadd.f32 0.0, %v2967
        %2969 = vmatprep.mubr.bf16.mxu0 0
        %2970 = vmatmul.mubr.bf16.gmra.mrb[0].mxu0 %v2880
        %v2971 = vpop.f32.mrb[0].mxu0
        %v2972 = vadd.f32 0.0, %v2971
        %v2973 = vpop.f32.mrb[0].mxu0
        %v2974 = vadd.f32 0.0, %v2973
        %v2975 = vpop.f32.mrb[0].mxu0
        %v2976 = vadd.f32 0.0, %v2975
        %v2977 = vpop.f32.mrb[0].mxu0
        %v2978 = vadd.f32 0.0, %v2977
        %2979 = vmatprep.mubr.bf16.mxu0 0
        %2980 = vmatmul.mubr.bf16.gmra.mrb[0].mxu0 %v2883
        %v2981 = vpop.f32.mrb[0].mxu0
        %v2982 = vadd.f32 0.0, %v2981
        %v2983 = vpop.f32.mrb[0].mxu0
        %v2984 = vadd.f32 0.0, %v2983
        %v2985 = vpop.f32.mrb[0].mxu0
        %v2986 = vadd.f32 0.0, %v2985
        %v2987 = vpop.f32.mrb[0].mxu0
        %v2988 = vadd.f32 0.0, %v2987
        %2989 = vmatprep.mubr.bf16.mxu0 0
        %2990 = vmatmul.mubr.bf16.gmra.mrb[0].mxu0 %v2886
        %v2991 = vpop.f32.mrb[0].mxu0
        %v2992 = vadd.f32 0.0, %v2991
        %v2993 = vpop.f32.mrb[0].mxu0
        %v2994 = vadd.f32 0.0, %v2993
        %v2995 = vpop.f32.mrb[0].mxu0
        %v2996 = vadd.f32 0.0, %v2995
        %v2997 = vpop.f32.mrb[0].mxu0
        %v2998 = vadd.f32 0.0, %v2997
        %2999 = vmatprep.mubr.bf16.mxu0 0
        %3000 = vmatmul.mubr.bf16.gmra.mrb[0].mxu0 %v2889
        %v3001 = vpop.f32.mrb[0].mxu0
        %v3002 = vadd.f32 0.0, %v3001
        %v3003 = vpop.f32.mrb[0].mxu0
        %v3004 = vadd.f32 0.0, %v3003
        %v3005 = vpop.f32.mrb[0].mxu0
        %v3006 = vadd.f32 0.0, %v3005
        %v3007 = vpop.f32.mrb[0].mxu0
        %v3008 = vadd.f32 0.0, %v3007
        %3009 = vmatprep.mubr.bf16.mxu0 0
        %3010 = vmatmul.mubr.bf16.gmra.mrb[0].mxu0 %v2892
        %v3011 = vpop.f32.mrb[0].mxu0
        %v3012 = vadd.f32 0.0, %v3011
        %v3013 = vpop.f32.mrb[0].mxu0
        %v3014 = vadd.f32 0.0, %v3013
        %v3015 = vpop.f32.mrb[0].mxu0
        %v3016 = vadd.f32 0.0, %v3015
        %v3017 = vpop.f32.mrb[0].mxu0
        %v3018 = vadd.f32 0.0, %v3017
        %3019 = vmatprep.mubr.bf16.mxu0 0
        %3020 = vmatmul.mubr.bf16.gmra.mrb[0].mxu0 %v2895
        %v3021 = vpop.f32.mrb[0].mxu0
        %v3022 = vadd.f32 0.0, %v3021
        %v3023 = vpop.f32.mrb[0].mxu0
        %v3024 = vadd.f32 0.0, %v3023
        %v3025 = vpop.f32.mrb[0].mxu0
        %v3026 = vadd.f32 0.0, %v3025
        %v3027 = vpop.f32.mrb[0].mxu0
        %v3028 = vadd.f32 0.0, %v3027
        %3029 = vdwg.mxu0
        %3030 = vmatprep.subr.bf16.mxu0 %v2838
        %3031 = vmatpush1.bf16.msra.mxu0 %v2837
        %3032 = vmatprep.subr.bf16.mxu0 %v2842
        %3033 = vmatpush1.bf16.msra.mxu0 %v2841
        %3034 = vmatprep.subr.bf16.mxu0 %v2846
        %3035 = vmatpush1.bf16.msra.mxu0 %v2845
        %3036 = vmatprep.subr.bf16.mxu0 %v2850
        %3037 = vmatpush1.bf16.msra.mxu0 %v2849
        %3038 = vmatprep.subr.bf16.mxu0 0
        %3039 = vmatpush1.bf16.msra.mxu0 0
        %3040 = vmatprep.subr.bf16.mxu0 0
        %3041 = vmatpush1.bf16.msra.mxu0 0
        %3042 = vmatprep.subr.bf16.mxu0 0
        %3043 = vmatpush1.bf16.msra.mxu0 0
        %3044 = vmatprep.subr.bf16.mxu0 0
        %3045 = vmatpush1.bf16.msra.mxu0 0
        %3046 = vmatprep.subr.bf16.mxu0 0
        %3047 = vmatpush1.bf16.msra.mxu0 0
        %3048 = vmatprep.subr.bf16.mxu0 0
        %3049 = vmatpush1.bf16.msra.mxu0 0
        %3050 = vmatprep.subr.bf16.mxu0 0
        %3051 = vmatpush1.bf16.msra.mxu0 0
        %3052 = vmatprep.subr.bf16.mxu0 0
        %3053 = vmatpush1.bf16.msra.mxu0 0
        %3054 = vmatprep.subr.bf16.mxu0 0
        %3055 = vmatpush1.bf16.msra.mxu0 0
        %3056 = vmatprep.subr.bf16.mxu0 0
        %3057 = vmatpush1.bf16.msra.mxu0 0
        %3058 = vmatprep.subr.bf16.mxu0 0
        %3059 = vmatpush1.bf16.msra.mxu0 0
        %3060 = vmatprep.subr.bf16.mxu0 0
        %3061 = vmatpush1.bf16.msra.mxu0 0
        %3062 = vmatprep.mubr.bf16.mxu0 0
        %3063 = vmatmul.mubr.bf16.gmra.mrb[0].mxu0 %v2868
        %v3064 = vpop.f32.mrb[0].mxu0
        %v3065 = vadd.f32 0.0, %v3064
        %v3066 = vpop.f32.mrb[0].mxu0
        %v3067 = vadd.f32 0.0, %v3066
        %v3068 = vpop.f32.mrb[0].mxu0
        %v3069 = vadd.f32 0.0, %v3068
        %v3070 = vpop.f32.mrb[0].mxu0
        %v3071 = vadd.f32 0.0, %v3070
        %3072 = vmatprep.mubr.bf16.mxu0 0
        %3073 = vmatmul.mubr.bf16.gmra.mrb[0].mxu0 %v2871
        %v3074 = vpop.f32.mrb[0].mxu0
        %v3075 = vadd.f32 0.0, %v3074
        %v3076 = vpop.f32.mrb[0].mxu0
        %v3077 = vadd.f32 0.0, %v3076
        %v3078 = vpop.f32.mrb[0].mxu0
        %v3079 = vadd.f32 0.0, %v3078
        %v3080 = vpop.f32.mrb[0].mxu0
        %v3081 = vadd.f32 0.0, %v3080
        %3082 = vmatprep.mubr.bf16.mxu0 0
        %3083 = vmatmul.mubr.bf16.gmra.mrb[0].mxu0 %v2874
        %v3084 = vpop.f32.mrb[0].mxu0
        %v3085 = vadd.f32 0.0, %v3084
        %v3086 = vpop.f32.mrb[0].mxu0
        %v3087 = vadd.f32 0.0, %v3086
        %v3088 = vpop.f32.mrb[0].mxu0
        %v3089 = vadd.f32 0.0, %v3088
        %v3090 = vpop.f32.mrb[0].mxu0
        %v3091 = vadd.f32 0.0, %v3090
        %3092 = vmatprep.mubr.bf16.mxu0 0
        %3093 = vmatmul.mubr.bf16.gmra.mrb[0].mxu0 %v2877
        %v3094 = vpop.f32.mrb[0].mxu0
        %v3095 = vadd.f32 0.0, %v3094
        %v3096 = vpop.f32.mrb[0].mxu0
        %v3097 = vadd.f32 0.0, %v3096
        %v3098 = vpop.f32.mrb[0].mxu0
        %v3099 = vadd.f32 0.0, %v3098
        %v3100 = vpop.f32.mrb[0].mxu0
        %v3101 = vadd.f32 0.0, %v3100
        %3102 = vmatprep.mubr.bf16.mxu0 0
        %3103 = vmatmul.mubr.bf16.gmra.mrb[0].mxu0 %v2880
        %v3104 = vpop.f32.mrb[0].mxu0
        %v3105 = vadd.f32 0.0, %v3104
        %v3106 = vpop.f32.mrb[0].mxu0
        %v3107 = vadd.f32 0.0, %v3106
        %v3108 = vpop.f32.mrb[0].mxu0
        %v3109 = vadd.f32 0.0, %v3108
        %v3110 = vpop.f32.mrb[0].mxu0
        %v3111 = vadd.f32 0.0, %v3110
        %3112 = vmatprep.mubr.bf16.mxu0 0
        %3113 = vmatmul.mubr.bf16.gmra.mrb[0].mxu0 %v2883
        %v3114 = vpop.f32.mrb[0].mxu0
        %v3115 = vadd.f32 0.0, %v3114
        %v3116 = vpop.f32.mrb[0].mxu0
        %v3117 = vadd.f32 0.0, %v3116
        %v3118 = vpop.f32.mrb[0].mxu0
        %v3119 = vadd.f32 0.0, %v3118
        %v3120 = vpop.f32.mrb[0].mxu0
        %v3121 = vadd.f32 0.0, %v3120
        %3122 = vmatprep.mubr.bf16.mxu0 0
        %3123 = vmatmul.mubr.bf16.gmra.mrb[0].mxu0 %v2886
        %v3124 = vpop.f32.mrb[0].mxu0
        %v3125 = vadd.f32 0.0, %v3124
        %v3126 = vpop.f32.mrb[0].mxu0
        %v3127 = vadd.f32 0.0, %v3126
        %v3128 = vpop.f32.mrb[0].mxu0
        %v3129 = vadd.f32 0.0, %v3128
        %v3130 = vpop.f32.mrb[0].mxu0
        %v3131 = vadd.f32 0.0, %v3130
        %3132 = vmatprep.mubr.bf16.mxu0 0
        %3133 = vmatmul.mubr.bf16.gmra.mrb[0].mxu0 %v2889
        %v3134 = vpop.f32.mrb[0].mxu0
        %v3135 = vadd.f32 0.0, %v3134
        %v3136 = vpop.f32.mrb[0].mxu0
        %v3137 = vadd.f32 0.0, %v3136
        %v3138 = vpop.f32.mrb[0].mxu0
        %v3139 = vadd.f32 0.0, %v3138
        %v3140 = vpop.f32.mrb[0].mxu0
        %v3141 = vadd.f32 0.0, %v3140
        %3142 = vmatprep.mubr.bf16.mxu0 0
        %3143 = vmatmul.mubr.bf16.gmra.mrb[0].mxu0 %v2892
        %v3144 = vpop.f32.mrb[0].mxu0
        %v3145 = vadd.f32 0.0, %v3144
        %v3146 = vpop.f32.mrb[0].mxu0
        %v3147 = vadd.f32 0.0, %v3146
        %v3148 = vpop.f32.mrb[0].mxu0
        %v3149 = vadd.f32 0.0, %v3148
        %v3150 = vpop.f32.mrb[0].mxu0
        %v3151 = vadd.f32 0.0, %v3150
        %3152 = vmatprep.mubr.bf16.mxu0 0
        %3153 = vmatmul.mubr.bf16.gmra.mrb[0].mxu0 %v2895
        %v3154 = vpop.f32.mrb[0].mxu0
        %v3155 = vadd.f32 0.0, %v3154
        %v3156 = vpop.f32.mrb[0].mxu0
        %v3157 = vadd.f32 0.0, %v3156
        %v3158 = vpop.f32.mrb[0].mxu0
        %v3159 = vadd.f32 0.0, %v3158
        %v3160 = vpop.f32.mrb[0].mxu0
        %v3161 = vadd.f32 0.0, %v3160
        %3162 = vdwg.mxu0
        %3163 = vst [vmem:[#allocation3] sm:$0xff] %v2932
        %3164 = vst [vmem:[#allocation3 + $0x8] sm:$0xff] %v2934
        %3165 = vst [vmem:[#allocation3 + $0x10] sm:$0xff] %v3065
        %3166 = vst [vmem:[#allocation3 + $0x18] sm:$0xff] %v3067
        %3167 = vst [vmem:[#allocation3 + $0x20] sm:$0xff] %v2936
        %3168 = vst [vmem:[#allocation3 + $0x28] sm:$0xff] %v2938
        %3169 = vst [vmem:[#allocation3 + $0x30] sm:$0xff] %v3069
        %3170 = vst [vmem:[#allocation3 + $0x38] sm:$0xff] %v3071
        %3171 = vst [vmem:[#allocation3 + $0x40] sm:$0xff] %v2942
        %3172 = vst [vmem:[#allocation3 + $0x48] sm:$0xff] %v2944
        %3173 = vst [vmem:[#allocation3 + $0x50] sm:$0xff] %v3075
        %3174 = vst [vmem:[#allocation3 + $0x58] sm:$0xff] %v3077
        %3175 = vst [vmem:[#allocation3 + $0x60] sm:$0xff] %v2946
        %3176 = vst [vmem:[#allocation3 + $0x68] sm:$0xff] %v2948
        %3177 = vst [vmem:[#allocation3 + $0x70] sm:$0xff] %v3079
        %3178 = vst [vmem:[#allocation3 + $0x78] sm:$0xff] %v3081
        %3179 = vst [vmem:[#allocation3 + $0x80] sm:$0xff] %v2952
        %3180 = vst [vmem:[#allocation3 + $0x88] sm:$0xff] %v2954
        %3181 = vst [vmem:[#allocation3 + $0x90] sm:$0xff] %v3085
        %3182 = vst [vmem:[#allocation3 + $0x98] sm:$0xff] %v3087
        %3183 = vst [vmem:[#allocation3 + $0xa0] sm:$0xff] %v2956
        %3184 = vst [vmem:[#allocation3 + $0xa8] sm:$0xff] %v2958
        %3185 = vst [vmem:[#allocation3 + $0xb0] sm:$0xff] %v3089
        %3186 = vst [vmem:[#allocation3 + $0xb8] sm:$0xff] %v3091
        %3187 = vst [vmem:[#allocation3 + $0xc0] sm:$0xff] %v2962
        %3188 = vst [vmem:[#allocation3 + $0xc8] sm:$0xff] %v2964
        %3189 = vst [vmem:[#allocation3 + $0xd0] sm:$0xff] %v3095
        %3190 = vst [vmem:[#allocation3 + $0xd8] sm:$0xff] %v3097
        %3191 = vst [vmem:[#allocation3 + $0xe0] sm:$0xff] %v2966
        %3192 = vst [vmem:[#allocation3 + $0xe8] sm:$0xff] %v2968
        %3193 = vst [vmem:[#allocation3 + $0xf0] sm:$0xff] %v3099
        %3194 = vst [vmem:[#allocation3 + $0xf8] sm:$0xff] %v3101
        %3195 = vst [vmem:[#allocation3 + $0x100] sm:$0xff] %v2972
        %3196 = vst [vmem:[#allocation3 + $0x108] sm:$0xff] %v2974
        %3197 = vst [vmem:[#allocation3 + $0x110] sm:$0xff] %v3105
        %3198 = vst [vmem:[#allocation3 + $0x118] sm:$0xff] %v3107
        %3199 = vst [vmem:[#allocation3 + $0x120] sm:$0xff] %v2976
        %3200 = vst [vmem:[#allocation3 + $0x128] sm:$0xff] %v2978
        %3201 = vst [vmem:[#allocation3 + $0x130] sm:$0xff] %v3109
        %3202 = vst [vmem:[#allocation3 + $0x138] sm:$0xff] %v3111
        %3203 = vst [vmem:[#allocation3 + $0x140] sm:$0xff] %v2982
        %3204 = vst [vmem:[#allocation3 + $0x148] sm:$0xff] %v2984
        %3205 = vst [vmem:[#allocation3 + $0x150] sm:$0xff] %v3115
        %3206 = vst [vmem:[#allocation3 + $0x158] sm:$0xff] %v3117
        %3207 = vst [vmem:[#allocation3 + $0x160] sm:$0xff] %v2986
        %3208 = vst [vmem:[#allocation3 + $0x168] sm:$0xff] %v2988
        %3209 = vst [vmem:[#allocation3 + $0x170] sm:$0xff] %v3119
        %3210 = vst [vmem:[#allocation3 + $0x178] sm:$0xff] %v3121
        %3211 = vst [vmem:[#allocation3 + $0x180] sm:$0xff] %v2992
        %3212 = vst [vmem:[#allocation3 + $0x188] sm:$0xff] %v2994
        %3213 = vst [vmem:[#allocation3 + $0x190] sm:$0xff] %v3125
        %3214 = vst [vmem:[#allocation3 + $0x198] sm:$0xff] %v3127
        %3215 = vst [vmem:[#allocation3 + $0x1a0] sm:$0xff] %v2996
        %3216 = vst [vmem:[#allocation3 + $0x1a8] sm:$0xff] %v2998
        %3217 = vst [vmem:[#allocation3 + $0x1b0] sm:$0xff] %v3129
        %3218 = vst [vmem:[#allocation3 + $0x1b8] sm:$0xff] %v3131
        %3219 = vst [vmem:[#allocation3 + $0x1c0] sm:$0xff] %v3002
        %3220 = vst [vmem:[#allocation3 + $0x1c8] sm:$0xff] %v3004
        %3221 = vst [vmem:[#allocation3 + $0x1d0] sm:$0xff] %v3135
        %3222 = vst [vmem:[#allocation3 + $0x1d8] sm:$0xff] %v3137
        %3223 = vst [vmem:[#allocation3 + $0x1e0] sm:$0xff] %v3006
        %3224 = vst [vmem:[#allocation3 + $0x1e8] sm:$0xff] %v3008
        %3225 = vst [vmem:[#allocation3 + $0x1f0] sm:$0xff] %v3139
        %3226 = vst [vmem:[#allocation3 + $0x1f8] sm:$0xff] %v3141
        %3227 = vst [vmem:[#allocation3 + $0x200] sm:$0xff] %v3012
        %3228 = vst [vmem:[#allocation3 + $0x208] sm:$0xff] %v3014
        %3229 = vst [vmem:[#allocation3 + $0x210] sm:$0xff] %v3145
        %3230 = vst [vmem:[#allocation3 + $0x218] sm:$0xff] %v3147
        %3231 = vst [vmem:[#allocation3 + $0x220] sm:$0xff] %v3016
        %3232 = vst [vmem:[#allocation3 + $0x228] sm:$0xff] %v3018
        %3233 = vst [vmem:[#allocation3 + $0x230] sm:$0xff] %v3149
        %3234 = vst [vmem:[#allocation3 + $0x238] sm:$0xff] %v3151
        %3235 = vst [vmem:[#allocation3 + $0x240] sm:$0xff] %v3022
        %3236 = vst [vmem:[#allocation3 + $0x248] sm:$0xff] %v3024
        %3237 = vst [vmem:[#allocation3 + $0x250] sm:$0xff] %v3155
        %3238 = vst [vmem:[#allocation3 + $0x258] sm:$0xff] %v3157
        %3239 = vst [vmem:[#allocation3 + $0x260] sm:$0xff] %v3026
        %3240 = vst [vmem:[#allocation3 + $0x268] sm:$0xff] %v3028
        %3241 = vst [vmem:[#allocation3 + $0x270] sm:$0xff] %v3159
        %3242 = vst [vmem:[#allocation3 + $0x278] sm:$0xff] %v3161
        %v3243 = vld [vmem:[#allocation2 + $0x1] sm:$0xff]
        %v3244 = vld [vmem:[#allocation2 + $0x9] sm:$0xff]
        %v3245 = vld [vmem:[#allocation2 + $0x11] sm:$0xff]
        %v3246 = vld [vmem:[#allocation2 + $0x19] sm:$0xff]
        %v3247 = vld [vmem:[#allocation2 + $0x21] sm:$0xff]
        %v3248 = vld [vmem:[#allocation2 + $0x29] sm:$0xff]
        %v3249 = vld [vmem:[#allocation2 + $0x31] sm:$0xff]
        %v3250 = vld [vmem:[#allocation2 + $0x39] sm:$0xff]
        %v3251 = vld [vmem:[#allocation2 + $0x41] sm:$0xff]
        %v3252 = vld [vmem:[#allocation2 + $0x49] sm:$0xff]
        %v3253 = vld [vmem:[#allocation2 + $0x51] sm:$0xff]
        %v3254 = vld [vmem:[#allocation2 + $0x59] sm:$0xff]
        %v3255 = vld [vmem:[#allocation2 + $0x61] sm:$0xff]
        %v3256 = vld [vmem:[#allocation2 + $0x69] sm:$0xff]
        %v3257 = vld [vmem:[#allocation2 + $0x71] sm:$0xff]
        %v3258 = vld [vmem:[#allocation2 + $0x79] sm:$0xff]
        %v3259 = vld [vmem:[#allocation2 + $0x81] sm:$0xff]
        %v3260 = vld [vmem:[#allocation2 + $0x89] sm:$0xff]
        %v3261 = vld [vmem:[#allocation2 + $0x91] sm:$0xff]
        %v3262 = vld [vmem:[#allocation2 + $0x99] sm:$0xff]
        %v3263 = vpack.c.bf16 %v3244, %v3243
        %v3264 = vpack.c.bf16 %v3246, %v3245
        %v3265 = vpack.c.bf16 %v3248, %v3247
        %v3266 = vpack.c.bf16 %v3250, %v3249
        %v3267 = vpack.c.bf16 %v3252, %v3251
        %v3268 = vpack.c.bf16 %v3254, %v3253
        %v3269 = vpack.c.bf16 %v3256, %v3255
        %v3270 = vpack.c.bf16 %v3258, %v3257
        %v3271 = vpack.c.bf16 %v3260, %v3259
        %v3272 = vpack.c.bf16 %v3262, %v3261
        %s3273 = scalar_lea.vmem %s5, 128
        %v3274 = vld [vmem:[%s3273] sm:$0xff]
        %v3275 = vld [vmem:[%s3273 + $0x8] sm:$0xff]
        %v3276 = vld [vmem:[%s3273 + $0x10] sm:$0xff]
        %v3277 = vld [vmem:[%s3273 + $0x18] sm:$0xff]
        %v3278 = vld [vmem:[%s3273 + $0x20] sm:$0xff]
        %v3279 = vld [vmem:[%s3273 + $0x28] sm:$0xff]
        %v3280 = vld [vmem:[%s3273 + $0x30] sm:$0xff]
        %v3281 = vld [vmem:[%s3273 + $0x38] sm:$0xff]
        %v3282 = vld [vmem:[%s3273 + $0x40] sm:$0xff]
        %v3283 = vld [vmem:[%s3273 + $0x48] sm:$0xff]
        %v3284 = vld [vmem:[%s3273 + $0x50] sm:$0xff]
        %v3285 = vld [vmem:[%s3273 + $0x58] sm:$0xff]
        %v3286 = vld [vmem:[%s3273 + $0x60] sm:$0xff]
        %v3287 = vld [vmem:[%s3273 + $0x68] sm:$0xff]
        %v3288 = vld [vmem:[%s3273 + $0x70] sm:$0xff]
        %v3289 = vld [vmem:[%s3273 + $0x78] sm:$0xff]
        %v3306 = vunpack.c.l.b16 %v3274
        %v3307 = vunpack.c.h.b16 %v3274
        %v3308 = vunpack.c.l.b16 %v3275
        %v3309 = vunpack.c.h.b16 %v3275
        %v3310 = vunpack.c.l.b16 %v3276
        %v3311 = vunpack.c.h.b16 %v3276
        %v3312 = vunpack.c.l.b16 %v3277
        %v3313 = vunpack.c.h.b16 %v3277
        %v3314 = vunpack.c.l.b16 %v3278
        %v3315 = vunpack.c.h.b16 %v3278
        %v3316 = vunpack.c.l.b16 %v3279
        %v3317 = vunpack.c.h.b16 %v3279
        %v3318 = vunpack.c.l.b16 %v3280
        %v3319 = vunpack.c.h.b16 %v3280
        %v3320 = vunpack.c.l.b16 %v3281
        %v3321 = vunpack.c.h.b16 %v3281
        %v3322 = vunpack.c.l.b16 %v3282
        %v3323 = vunpack.c.h.b16 %v3282
        %v3324 = vunpack.c.l.b16 %v3283
        %v3325 = vunpack.c.h.b16 %v3283
        %v3326 = vunpack.c.l.b16 %v3284
        %v3327 = vunpack.c.h.b16 %v3284
        %v3328 = vunpack.c.l.b16 %v3285
        %v3329 = vunpack.c.h.b16 %v3285
        %v3330 = vunpack.c.l.b16 %v3286
        %v3331 = vunpack.c.h.b16 %v3286
        %v3332 = vunpack.c.l.b16 %v3287
        %v3333 = vunpack.c.h.b16 %v3287
        %v3334 = vunpack.c.l.b16 %v3288
        %v3335 = vunpack.c.h.b16 %v3288
        %v3336 = vunpack.c.l.b16 %v3289
        %v3337 = vunpack.c.h.b16 %v3289
        %v3338 = vpack.c.b16 %v3310, %v3306
        %v3339 = vpack.c.b16 %v3311, %v3307
        %v3340 = vpack.c.b16 %v3312, %v3308
        %v3341 = vpack.c.b16 %v3313, %v3309
        %v3342 = vpack.c.b16 %v3318, %v3314
        %v3343 = vpack.c.b16 %v3319, %v3315
        %v3344 = vpack.c.b16 %v3320, %v3316
        %v3345 = vpack.c.b16 %v3321, %v3317
        %v3346 = vpack.c.b16 %v3326, %v3322
        %v3347 = vpack.c.b16 %v3327, %v3323
        %v3348 = vpack.c.b16 %v3328, %v3324
        %v3349 = vpack.c.b16 %v3329, %v3325
        %v3350 = vpack.c.b16 %v3334, %v3330
        %v3351 = vpack.c.b16 %v3335, %v3331
        %v3352 = vpack.c.b16 %v3336, %v3332
        %v3353 = vpack.c.b16 %v3337, %v3333
        %v3371 = vsel %vm2714, %v3263, 0
        %v3374 = vsel %vm2714, %v3264, 0
        %v3377 = vsel %vm2714, %v3265, 0
        %v3380 = vsel %vm2714, %v3266, 0
        %v3383 = vsel %vm2714, %v3267, 0
        %v3386 = vsel %vm2714, %v3268, 0
        %v3389 = vsel %vm2714, %v3269, 0
        %v3392 = vsel %vm2714, %v3270, 0
        %v3395 = vsel %vm2714, %v3271, 0
        %v3398 = vsel %vm2714, %v3272, 0
        %3400 = vmatprep.subr.bf16.mxu0 %v3339
        %3401 = vmatpush1.bf16.msra.mxu0 %v3338
        %3402 = vmatprep.subr.bf16.mxu0 %v3343
        %3403 = vmatpush1.bf16.msra.mxu0 %v3342
        %3404 = vmatprep.subr.bf16.mxu0 %v3347
        %3405 = vmatpush1.bf16.msra.mxu0 %v3346
        %3406 = vmatprep.subr.bf16.mxu0 %v3351
        %3407 = vmatpush1.bf16.msra.mxu0 %v3350
        %3408 = vmatprep.subr.bf16.mxu0 0
        %3409 = vmatpush1.bf16.msra.mxu0 0
        %3410 = vmatprep.subr.bf16.mxu0 0
        %3411 = vmatpush1.bf16.msra.mxu0 0
        %3412 = vmatprep.subr.bf16.mxu0 0
        %3413 = vmatpush1.bf16.msra.mxu0 0
        %3414 = vmatprep.subr.bf16.mxu0 0
        %3415 = vmatpush1.bf16.msra.mxu0 0
        %3416 = vmatprep.subr.bf16.mxu0 0
        %3417 = vmatpush1.bf16.msra.mxu0 0
        %3418 = vmatprep.subr.bf16.mxu0 0
        %3419 = vmatpush1.bf16.msra.mxu0 0
        %3420 = vmatprep.subr.bf16.mxu0 0
        %3421 = vmatpush1.bf16.msra.mxu0 0
        %3422 = vmatprep.subr.bf16.mxu0 0
        %3423 = vmatpush1.bf16.msra.mxu0 0
        %3424 = vmatprep.subr.bf16.mxu0 0
        %3425 = vmatpush1.bf16.msra.mxu0 0
        %3426 = vmatprep.subr.bf16.mxu0 0
        %3427 = vmatpush1.bf16.msra.mxu0 0
        %3428 = vmatprep.subr.bf16.mxu0 0
        %3429 = vmatpush1.bf16.msra.mxu0 0
        %3430 = vmatprep.subr.bf16.mxu0 0
        %3431 = vmatpush1.bf16.msra.mxu0 0
        %3432 = vmatprep.mubr.bf16.mxu0 0
        %3433 = vmatmul.mubr.bf16.gmra.mrb[0].mxu0 %v3371
        %v3434 = vpop.f32.mrb[0].mxu0
        %v3435 = vadd.f32 0.0, %v3434
        %v3436 = vpop.f32.mrb[0].mxu0
        %v3437 = vadd.f32 0.0, %v3436
        %v3438 = vpop.f32.mrb[0].mxu0
        %v3439 = vadd.f32 0.0, %v3438
        %v3440 = vpop.f32.mrb[0].mxu0
        %v3441 = vadd.f32 0.0, %v3440
        %3442 = vmatprep.mubr.bf16.mxu0 0
        %3443 = vmatmul.mubr.bf16.gmra.mrb[0].mxu0 %v3374
        %v3444 = vpop.f32.mrb[0].mxu0
        %v3445 = vadd.f32 0.0, %v3444
        %v3446 = vpop.f32.mrb[0].mxu0
        %v3447 = vadd.f32 0.0, %v3446
        %v3448 = vpop.f32.mrb[0].mxu0
        %v3449 = vadd.f32 0.0, %v3448
        %v3450 = vpop.f32.mrb[0].mxu0
        %v3451 = vadd.f32 0.0, %v3450
        %3452 = vmatprep.mubr.bf16.mxu0 0
        %3453 = vmatmul.mubr.bf16.gmra.mrb[0].mxu0 %v3377
        %v3454 = vpop.f32.mrb[0].mxu0
        %v3455 = vadd.f32 0.0, %v3454
        %v3456 = vpop.f32.mrb[0].mxu0
        %v3457 = vadd.f32 0.0, %v3456
        %v3458 = vpop.f32.mrb[0].mxu0
        %v3459 = vadd.f32 0.0, %v3458
        %v3460 = vpop.f32.mrb[0].mxu0
        %v3461 = vadd.f32 0.0, %v3460
        %3462 = vmatprep.mubr.bf16.mxu0 0
        %3463 = vmatmul.mubr.bf16.gmra.mrb[0].mxu0 %v3380
        %v3464 = vpop.f32.mrb[0].mxu0
        %v3465 = vadd.f32 0.0, %v3464
        %v3466 = vpop.f32.mrb[0].mxu0
        %v3467 = vadd.f32 0.0, %v3466
        %v3468 = vpop.f32.mrb[0].mxu0
        %v3469 = vadd.f32 0.0, %v3468
        %v3470 = vpop.f32.mrb[0].mxu0
        %v3471 = vadd.f32 0.0, %v3470
        %3472 = vmatprep.mubr.bf16.mxu0 0
        %3473 = vmatmul.mubr.bf16.gmra.mrb[0].mxu0 %v3383
        %v3474 = vpop.f32.mrb[0].mxu0
        %v3475 = vadd.f32 0.0, %v3474
        %v3476 = vpop.f32.mrb[0].mxu0
        %v3477 = vadd.f32 0.0, %v3476
        %v3478 = vpop.f32.mrb[0].mxu0
        %v3479 = vadd.f32 0.0, %v3478
        %v3480 = vpop.f32.mrb[0].mxu0
        %v3481 = vadd.f32 0.0, %v3480
        %3482 = vmatprep.mubr.bf16.mxu0 0
        %3483 = vmatmul.mubr.bf16.gmra.mrb[0].mxu0 %v3386
        %v3484 = vpop.f32.mrb[0].mxu0
        %v3485 = vadd.f32 0.0, %v3484
        %v3486 = vpop.f32.mrb[0].mxu0
        %v3487 = vadd.f32 0.0, %v3486
        %v3488 = vpop.f32.mrb[0].mxu0
        %v3489 = vadd.f32 0.0, %v3488
        %v3490 = vpop.f32.mrb[0].mxu0
        %v3491 = vadd.f32 0.0, %v3490
        %3492 = vmatprep.mubr.bf16.mxu0 0
        %3493 = vmatmul.mubr.bf16.gmra.mrb[0].mxu0 %v3389
        %v3494 = vpop.f32.mrb[0].mxu0
        %v3495 = vadd.f32 0.0, %v3494
        %v3496 = vpop.f32.mrb[0].mxu0
        %v3497 = vadd.f32 0.0, %v3496
        %v3498 = vpop.f32.mrb[0].mxu0
        %v3499 = vadd.f32 0.0, %v3498
        %v3500 = vpop.f32.mrb[0].mxu0
        %v3501 = vadd.f32 0.0, %v3500
        %3502 = vmatprep.mubr.bf16.mxu0 0
        %3503 = vmatmul.mubr.bf16.gmra.mrb[0].mxu0 %v3392
        %v3504 = vpop.f32.mrb[0].mxu0
        %v3505 = vadd.f32 0.0, %v3504
        %v3506 = vpop.f32.mrb[0].mxu0
        %v3507 = vadd.f32 0.0, %v3506
        %v3508 = vpop.f32.mrb[0].mxu0
        %v3509 = vadd.f32 0.0, %v3508
        %v3510 = vpop.f32.mrb[0].mxu0
        %v3511 = vadd.f32 0.0, %v3510
        %3512 = vmatprep.mubr.bf16.mxu0 0
        %3513 = vmatmul.mubr.bf16.gmra.mrb[0].mxu0 %v3395
        %v3514 = vpop.f32.mrb[0].mxu0
        %v3515 = vadd.f32 0.0, %v3514
        %v3516 = vpop.f32.mrb[0].mxu0
        %v3517 = vadd.f32 0.0, %v3516
        %v3518 = vpop.f32.mrb[0].mxu0
        %v3519 = vadd.f32 0.0, %v3518
        %v3520 = vpop.f32.mrb[0].mxu0
        %v3521 = vadd.f32 0.0, %v3520
        %3522 = vmatprep.mubr.bf16.mxu0 0
        %3523 = vmatmul.mubr.bf16.gmra.mrb[0].mxu0 %v3398
        %v3524 = vpop.f32.mrb[0].mxu0
        %v3525 = vadd.f32 0.0, %v3524
        %v3526 = vpop.f32.mrb[0].mxu0
        %v3527 = vadd.f32 0.0, %v3526
        %v3528 = vpop.f32.mrb[0].mxu0
        %v3529 = vadd.f32 0.0, %v3528
        %v3530 = vpop.f32.mrb[0].mxu0
        %v3531 = vadd.f32 0.0, %v3530
        %3532 = vdwg.mxu0
        %3533 = vmatprep.subr.bf16.mxu0 %v3341
        %3534 = vmatpush1.bf16.msra.mxu0 %v3340
        %3535 = vmatprep.subr.bf16.mxu0 %v3345
        %3536 = vmatpush1.bf16.msra.mxu0 %v3344
        %3537 = vmatprep.subr.bf16.mxu0 %v3349
        %3538 = vmatpush1.bf16.msra.mxu0 %v3348
        %3539 = vmatprep.subr.bf16.mxu0 %v3353
        %3540 = vmatpush1.bf16.msra.mxu0 %v3352
        %3541 = vmatprep.subr.bf16.mxu0 0
        %3542 = vmatpush1.bf16.msra.mxu0 0
        %3543 = vmatprep.subr.bf16.mxu0 0
        %3544 = vmatpush1.bf16.msra.mxu0 0
        %3545 = vmatprep.subr.bf16.mxu0 0
        %3546 = vmatpush1.bf16.msra.mxu0 0
        %3547 = vmatprep.subr.bf16.mxu0 0
        %3548 = vmatpush1.bf16.msra.mxu0 0
        %3549 = vmatprep.subr.bf16.mxu0 0
        %3550 = vmatpush1.bf16.msra.mxu0 0
        %3551 = vmatprep.subr.bf16.mxu0 0
        %3552 = vmatpush1.bf16.msra.mxu0 0
        %3553 = vmatprep.subr.bf16.mxu0 0
        %3554 = vmatpush1.bf16.msra.mxu0 0
        %3555 = vmatprep.subr.bf16.mxu0 0
        %3556 = vmatpush1.bf16.msra.mxu0 0
        %3557 = vmatprep.subr.bf16.mxu0 0
        %3558 = vmatpush1.bf16.msra.mxu0 0
        %3559 = vmatprep.subr.bf16.mxu0 0
        %3560 = vmatpush1.bf16.msra.mxu0 0
        %3561 = vmatprep.subr.bf16.mxu0 0
        %3562 = vmatpush1.bf16.msra.mxu0 0
        %3563 = vmatprep.subr.bf16.mxu0 0
        %3564 = vmatpush1.bf16.msra.mxu0 0
        %3565 = vmatprep.mubr.bf16.mxu0 0
        %3566 = vmatmul.mubr.bf16.gmra.mrb[0].mxu0 %v3371
        %v3567 = vpop.f32.mrb[0].mxu0
        %v3568 = vadd.f32 0.0, %v3567
        %v3569 = vpop.f32.mrb[0].mxu0
        %v3570 = vadd.f32 0.0, %v3569
        %v3571 = vpop.f32.mrb[0].mxu0
        %v3572 = vadd.f32 0.0, %v3571
        %v3573 = vpop.f32.mrb[0].mxu0
        %v3574 = vadd.f32 0.0, %v3573
        %3575 = vmatprep.mubr.bf16.mxu0 0
        %3576 = vmatmul.mubr.bf16.gmra.mrb[0].mxu0 %v3374
        %v3577 = vpop.f32.mrb[0].mxu0
        %v3578 = vadd.f32 0.0, %v3577
        %v3579 = vpop.f32.mrb[0].mxu0
        %v3580 = vadd.f32 0.0, %v3579
        %v3581 = vpop.f32.mrb[0].mxu0
        %v3582 = vadd.f32 0.0, %v3581
        %v3583 = vpop.f32.mrb[0].mxu0
        %v3584 = vadd.f32 0.0, %v3583
        %3585 = vmatprep.mubr.bf16.mxu0 0
        %3586 = vmatmul.mubr.bf16.gmra.mrb[0].mxu0 %v3377
        %v3587 = vpop.f32.mrb[0].mxu0
        %v3588 = vadd.f32 0.0, %v3587
        %v3589 = vpop.f32.mrb[0].mxu0
        %v3590 = vadd.f32 0.0, %v3589
        %v3591 = vpop.f32.mrb[0].mxu0
        %v3592 = vadd.f32 0.0, %v3591
        %v3593 = vpop.f32.mrb[0].mxu0
        %v3594 = vadd.f32 0.0, %v3593
        %3595 = vmatprep.mubr.bf16.mxu0 0
        %3596 = vmatmul.mubr.bf16.gmra.mrb[0].mxu0 %v3380
        %v3597 = vpop.f32.mrb[0].mxu0
        %v3598 = vadd.f32 0.0, %v3597
        %v3599 = vpop.f32.mrb[0].mxu0
        %v3600 = vadd.f32 0.0, %v3599
        %v3601 = vpop.f32.mrb[0].mxu0
        %v3602 = vadd.f32 0.0, %v3601
        %v3603 = vpop.f32.mrb[0].mxu0
        %v3604 = vadd.f32 0.0, %v3603
        %3605 = vmatprep.mubr.bf16.mxu0 0
        %3606 = vmatmul.mubr.bf16.gmra.mrb[0].mxu0 %v3383
        %v3607 = vpop.f32.mrb[0].mxu0
        %v3608 = vadd.f32 0.0, %v3607
        %v3609 = vpop.f32.mrb[0].mxu0
        %v3610 = vadd.f32 0.0, %v3609
        %v3611 = vpop.f32.mrb[0].mxu0
        %v3612 = vadd.f32 0.0, %v3611
        %v3613 = vpop.f32.mrb[0].mxu0
        %v3614 = vadd.f32 0.0, %v3613
        %3615 = vmatprep.mubr.bf16.mxu0 0
        %3616 = vmatmul.mubr.bf16.gmra.mrb[0].mxu0 %v3386
        %v3617 = vpop.f32.mrb[0].mxu0
        %v3618 = vadd.f32 0.0, %v3617
        %v3619 = vpop.f32.mrb[0].mxu0
        %v3620 = vadd.f32 0.0, %v3619
        %v3621 = vpop.f32.mrb[0].mxu0
        %v3622 = vadd.f32 0.0, %v3621
        %v3623 = vpop.f32.mrb[0].mxu0
        %v3624 = vadd.f32 0.0, %v3623
        %3625 = vmatprep.mubr.bf16.mxu0 0
        %3626 = vmatmul.mubr.bf16.gmra.mrb[0].mxu0 %v3389
        %v3627 = vpop.f32.mrb[0].mxu0
        %v3628 = vadd.f32 0.0, %v3627
        %v3629 = vpop.f32.mrb[0].mxu0
        %v3630 = vadd.f32 0.0, %v3629
        %v3631 = vpop.f32.mrb[0].mxu0
        %v3632 = vadd.f32 0.0, %v3631
        %v3633 = vpop.f32.mrb[0].mxu0
        %v3634 = vadd.f32 0.0, %v3633
        %3635 = vmatprep.mubr.bf16.mxu0 0
        %3636 = vmatmul.mubr.bf16.gmra.mrb[0].mxu0 %v3392
        %v3637 = vpop.f32.mrb[0].mxu0
        %v3638 = vadd.f32 0.0, %v3637
        %v3639 = vpop.f32.mrb[0].mxu0
        %v3640 = vadd.f32 0.0, %v3639
        %v3641 = vpop.f32.mrb[0].mxu0
        %v3642 = vadd.f32 0.0, %v3641
        %v3643 = vpop.f32.mrb[0].mxu0
        %v3644 = vadd.f32 0.0, %v3643
        %3645 = vmatprep.mubr.bf16.mxu0 0
        %3646 = vmatmul.mubr.bf16.gmra.mrb[0].mxu0 %v3395
        %v3647 = vpop.f32.mrb[0].mxu0
        %v3648 = vadd.f32 0.0, %v3647
        %v3649 = vpop.f32.mrb[0].mxu0
        %v3650 = vadd.f32 0.0, %v3649
        %v3651 = vpop.f32.mrb[0].mxu0
        %v3652 = vadd.f32 0.0, %v3651
        %v3653 = vpop.f32.mrb[0].mxu0
        %v3654 = vadd.f32 0.0, %v3653
        %3655 = vmatprep.mubr.bf16.mxu0 0
        %3656 = vmatmul.mubr.bf16.gmra.mrb[0].mxu0 %v3398
        %v3657 = vpop.f32.mrb[0].mxu0
        %v3658 = vadd.f32 0.0, %v3657
        %v3659 = vpop.f32.mrb[0].mxu0
        %v3660 = vadd.f32 0.0, %v3659
        %v3661 = vpop.f32.mrb[0].mxu0
        %v3662 = vadd.f32 0.0, %v3661
        %v3663 = vpop.f32.mrb[0].mxu0
        %v3664 = vadd.f32 0.0, %v3663
        %3665 = vdwg.mxu0
        %v3666 = vld [vmem:[#allocation3] sm:$0xff]
        %v3667 = vld [vmem:[#allocation3 + $0x8] sm:$0xff]
        %v3668 = vld [vmem:[#allocation3 + $0x10] sm:$0xff]
        %v3669 = vld [vmem:[#allocation3 + $0x18] sm:$0xff]
        %v3670 = vld [vmem:[#allocation3 + $0x20] sm:$0xff]
        %v3671 = vld [vmem:[#allocation3 + $0x28] sm:$0xff]
        %v3672 = vld [vmem:[#allocation3 + $0x30] sm:$0xff]
        %v3673 = vld [vmem:[#allocation3 + $0x38] sm:$0xff]
        %v3674 = vld [vmem:[#allocation3 + $0x40] sm:$0xff]
        %v3675 = vld [vmem:[#allocation3 + $0x48] sm:$0xff]
        %v3676 = vld [vmem:[#allocation3 + $0x50] sm:$0xff]
        %v3677 = vld [vmem:[#allocation3 + $0x58] sm:$0xff]
        %v3678 = vld [vmem:[#allocation3 + $0x60] sm:$0xff]
        %v3679 = vld [vmem:[#allocation3 + $0x68] sm:$0xff]
        %v3680 = vld [vmem:[#allocation3 + $0x70] sm:$0xff]
        %v3681 = vld [vmem:[#allocation3 + $0x78] sm:$0xff]
        %v3682 = vld [vmem:[#allocation3 + $0x80] sm:$0xff]
        %v3683 = vld [vmem:[#allocation3 + $0x88] sm:$0xff]
        %v3684 = vld [vmem:[#allocation3 + $0x90] sm:$0xff]
        %v3685 = vld [vmem:[#allocation3 + $0x98] sm:$0xff]
        %v3686 = vld [vmem:[#allocation3 + $0xa0] sm:$0xff]
        %v3687 = vld [vmem:[#allocation3 + $0xa8] sm:$0xff]
        %v3688 = vld [vmem:[#allocation3 + $0xb0] sm:$0xff]
        %v3689 = vld [vmem:[#allocation3 + $0xb8] sm:$0xff]
        %v3690 = vld [vmem:[#allocation3 + $0xc0] sm:$0xff]
        %v3691 = vld [vmem:[#allocation3 + $0xc8] sm:$0xff]
        %v3692 = vld [vmem:[#allocation3 + $0xd0] sm:$0xff]
        %v3693 = vld [vmem:[#allocation3 + $0xd8] sm:$0xff]
        %v3694 = vld [vmem:[#allocation3 + $0xe0] sm:$0xff]
        %v3695 = vld [vmem:[#allocation3 + $0xe8] sm:$0xff]
        %v3696 = vld [vmem:[#allocation3 + $0xf0] sm:$0xff]
        %v3697 = vld [vmem:[#allocation3 + $0xf8] sm:$0xff]
        %v3698 = vld [vmem:[#allocation3 + $0x100] sm:$0xff]
        %v3699 = vld [vmem:[#allocation3 + $0x108] sm:$0xff]
        %v3700 = vld [vmem:[#allocation3 + $0x110] sm:$0xff]
        %v3701 = vld [vmem:[#allocation3 + $0x118] sm:$0xff]
        %v3702 = vld [vmem:[#allocation3 + $0x120] sm:$0xff]
        %v3703 = vld [vmem:[#allocation3 + $0x128] sm:$0xff]
        %v3704 = vld [vmem:[#allocation3 + $0x130] sm:$0xff]
        %v3705 = vld [vmem:[#allocation3 + $0x138] sm:$0xff]
        %v3706 = vld [vmem:[#allocation3 + $0x140] sm:$0xff]
        %v3707 = vld [vmem:[#allocation3 + $0x148] sm:$0xff]
        %v3708 = vld [vmem:[#allocation3 + $0x150] sm:$0xff]
        %v3709 = vld [vmem:[#allocation3 + $0x158] sm:$0xff]
        %v3710 = vld [vmem:[#allocation3 + $0x160] sm:$0xff]
        %v3711 = vld [vmem:[#allocation3 + $0x168] sm:$0xff]
        %v3712 = vld [vmem:[#allocation3 + $0x170] sm:$0xff]
        %v3713 = vld [vmem:[#allocation3 + $0x178] sm:$0xff]
        %v3714 = vld [vmem:[#allocation3 + $0x180] sm:$0xff]
        %v3715 = vld [vmem:[#allocation3 + $0x188] sm:$0xff]
        %v3716 = vld [vmem:[#allocation3 + $0x190] sm:$0xff]
        %v3717 = vld [vmem:[#allocation3 + $0x198] sm:$0xff]
        %v3718 = vld [vmem:[#allocation3 + $0x1a0] sm:$0xff]
        %v3719 = vld [vmem:[#allocation3 + $0x1a8] sm:$0xff]
        %v3720 = vld [vmem:[#allocation3 + $0x1b0] sm:$0xff]
        %v3721 = vld [vmem:[#allocation3 + $0x1b8] sm:$0xff]
        %v3722 = vld [vmem:[#allocation3 + $0x1c0] sm:$0xff]
        %v3723 = vld [vmem:[#allocation3 + $0x1c8] sm:$0xff]
        %v3724 = vld [vmem:[#allocation3 + $0x1d0] sm:$0xff]
        %v3725 = vld [vmem:[#allocation3 + $0x1d8] sm:$0xff]
        %v3726 = vld [vmem:[#allocation3 + $0x1e0] sm:$0xff]
        %v3727 = vld [vmem:[#allocation3 + $0x1e8] sm:$0xff]
        %v3728 = vld [vmem:[#allocation3 + $0x1f0] sm:$0xff]
        %v3729 = vld [vmem:[#allocation3 + $0x1f8] sm:$0xff]
        %v3730 = vld [vmem:[#allocation3 + $0x200] sm:$0xff]
        %v3731 = vld [vmem:[#allocation3 + $0x208] sm:$0xff]
        %v3732 = vld [vmem:[#allocation3 + $0x210] sm:$0xff]
        %v3733 = vld [vmem:[#allocation3 + $0x218] sm:$0xff]
        %v3734 = vld [vmem:[#allocation3 + $0x220] sm:$0xff]
        %v3735 = vld [vmem:[#allocation3 + $0x228] sm:$0xff]
        %v3736 = vld [vmem:[#allocation3 + $0x230] sm:$0xff]
        %v3737 = vld [vmem:[#allocation3 + $0x238] sm:$0xff]
        %v3738 = vld [vmem:[#allocation3 + $0x240] sm:$0xff]
        %v3739 = vld [vmem:[#allocation3 + $0x248] sm:$0xff]
        %v3740 = vld [vmem:[#allocation3 + $0x250] sm:$0xff]
        %v3741 = vld [vmem:[#allocation3 + $0x258] sm:$0xff]
        %v3742 = vld [vmem:[#allocation3 + $0x260] sm:$0xff]
        %v3743 = vld [vmem:[#allocation3 + $0x268] sm:$0xff]
        %v3744 = vld [vmem:[#allocation3 + $0x270] sm:$0xff]
        %v3745 = vld [vmem:[#allocation3 + $0x278] sm:$0xff]
        %v3746 = vadd.f32 %v3666, %v3435
        %v3747 = vadd.f32 %v3667, %v3437
        %v3748 = vadd.f32 %v3668, %v3568
        %v3749 = vadd.f32 %v3669, %v3570
        %v3750 = vadd.f32 %v3670, %v3439
        %v3751 = vadd.f32 %v3671, %v3441
        %v3752 = vadd.f32 %v3672, %v3572
        %v3753 = vadd.f32 %v3673, %v3574
        %v3754 = vadd.f32 %v3674, %v3445
        %v3755 = vadd.f32 %v3675, %v3447
        %v3756 = vadd.f32 %v3676, %v3578
        %v3757 = vadd.f32 %v3677, %v3580
        %v3758 = vadd.f32 %v3678, %v3449
        %v3759 = vadd.f32 %v3679, %v3451
        %v3760 = vadd.f32 %v3680, %v3582
        %v3761 = vadd.f32 %v3681, %v3584
        %v3762 = vadd.f32 %v3682, %v3455
        %v3763 = vadd.f32 %v3683, %v3457
        %v3764 = vadd.f32 %v3684, %v3588
        %v3765 = vadd.f32 %v3685, %v3590
        %v3766 = vadd.f32 %v3686, %v3459
        %v3767 = vadd.f32 %v3687, %v3461
        %v3768 = vadd.f32 %v3688, %v3592
        %v3769 = vadd.f32 %v3689, %v3594
        %v3770 = vadd.f32 %v3690, %v3465
        %v3771 = vadd.f32 %v3691, %v3467
        %v3772 = vadd.f32 %v3692, %v3598
        %v3773 = vadd.f32 %v3693, %v3600
        %v3774 = vadd.f32 %v3694, %v3469
        %v3775 = vadd.f32 %v3695, %v3471
        %v3776 = vadd.f32 %v3696, %v3602
        %v3777 = vadd.f32 %v3697, %v3604
        %v3778 = vadd.f32 %v3698, %v3475
        %v3779 = vadd.f32 %v3699, %v3477
        %v3780 = vadd.f32 %v3700, %v3608
        %v3781 = vadd.f32 %v3701, %v3610
        %v3782 = vadd.f32 %v3702, %v3479
        %v3783 = vadd.f32 %v3703, %v3481
        %v3784 = vadd.f32 %v3704, %v3612
        %v3785 = vadd.f32 %v3705, %v3614
        %v3786 = vadd.f32 %v3706, %v3485
        %v3787 = vadd.f32 %v3707, %v3487
        %v3788 = vadd.f32 %v3708, %v3618
        %v3789 = vadd.f32 %v3709, %v3620
        %v3790 = vadd.f32 %v3710, %v3489
        %v3791 = vadd.f32 %v3711, %v3491
        %v3792 = vadd.f32 %v3712, %v3622
        %v3793 = vadd.f32 %v3713, %v3624
        %v3794 = vadd.f32 %v3714, %v3495
        %v3795 = vadd.f32 %v3715, %v3497
        %v3796 = vadd.f32 %v3716, %v3628
        %v3797 = vadd.f32 %v3717, %v3630
        %v3798 = vadd.f32 %v3718, %v3499
        %v3799 = vadd.f32 %v3719, %v3501
        %v3800 = vadd.f32 %v3720, %v3632
        %v3801 = vadd.f32 %v3721, %v3634
        %v3802 = vadd.f32 %v3722, %v3505
        %v3803 = vadd.f32 %v3723, %v3507
        %v3804 = vadd.f32 %v3724, %v3638
        %v3805 = vadd.f32 %v3725, %v3640
        %v3806 = vadd.f32 %v3726, %v3509
        %v3807 = vadd.f32 %v3727, %v3511
        %v3808 = vadd.f32 %v3728, %v3642
        %v3809 = vadd.f32 %v3729, %v3644
        %v3810 = vadd.f32 %v3730, %v3515
        %v3811 = vadd.f32 %v3731, %v3517
        %v3812 = vadd.f32 %v3732, %v3648
        %v3813 = vadd.f32 %v3733, %v3650
        %v3814 = vadd.f32 %v3734, %v3519
        %v3815 = vadd.f32 %v3735, %v3521
        %v3816 = vadd.f32 %v3736, %v3652
        %v3817 = vadd.f32 %v3737, %v3654
        %v3818 = vadd.f32 %v3738, %v3525
        %v3819 = vadd.f32 %v3739, %v3527
        %v3820 = vadd.f32 %v3740, %v3658
        %v3821 = vadd.f32 %v3741, %v3660
        %v3822 = vadd.f32 %v3742, %v3529
        %v3823 = vadd.f32 %v3743, %v3531
        %v3824 = vadd.f32 %v3744, %v3662
        %v3825 = vadd.f32 %v3745, %v3664
        %3826 = vst [vmem:[#allocation3] sm:$0xff] %v3746
        %3827 = vst [vmem:[#allocation3 + $0x8] sm:$0xff] %v3747
        %3828 = vst [vmem:[#allocation3 + $0x10] sm:$0xff] %v3748
        %3829 = vst [vmem:[#allocation3 + $0x18] sm:$0xff] %v3749
        %3830 = vst [vmem:[#allocation3 + $0x20] sm:$0xff] %v3750
        %3831 = vst [vmem:[#allocation3 + $0x28] sm:$0xff] %v3751
        %3832 = vst [vmem:[#allocation3 + $0x30] sm:$0xff] %v3752
        %3833 = vst [vmem:[#allocation3 + $0x38] sm:$0xff] %v3753
        %3834 = vst [vmem:[#allocation3 + $0x40] sm:$0xff] %v3754
        %3835 = vst [vmem:[#allocation3 + $0x48] sm:$0xff] %v3755
        %3836 = vst [vmem:[#allocation3 + $0x50] sm:$0xff] %v3756
        %3837 = vst [vmem:[#allocation3 + $0x58] sm:$0xff] %v3757
        %3838 = vst [vmem:[#allocation3 + $0x60] sm:$0xff] %v3758
        %3839 = vst [vmem:[#allocation3 + $0x68] sm:$0xff] %v3759
        %3840 = vst [vmem:[#allocation3 + $0x70] sm:$0xff] %v3760
        %3841 = vst [vmem:[#allocation3 + $0x78] sm:$0xff] %v3761
        %3842 = vst [vmem:[#allocation3 + $0x80] sm:$0xff] %v3762
        %3843 = vst [vmem:[#allocation3 + $0x88] sm:$0xff] %v3763
        %3844 = vst [vmem:[#allocation3 + $0x90] sm:$0xff] %v3764
        %3845 = vst [vmem:[#allocation3 + $0x98] sm:$0xff] %v3765
        %3846 = vst [vmem:[#allocation3 + $0xa0] sm:$0xff] %v3766
        %3847 = vst [vmem:[#allocation3 + $0xa8] sm:$0xff] %v3767
        %3848 = vst [vmem:[#allocation3 + $0xb0] sm:$0xff] %v3768
        %3849 = vst [vmem:[#allocation3 + $0xb8] sm:$0xff] %v3769
        %3850 = vst [vmem:[#allocation3 + $0xc0] sm:$0xff] %v3770
        %3851 = vst [vmem:[#allocation3 + $0xc8] sm:$0xff] %v3771
        %3852 = vst [vmem:[#allocation3 + $0xd0] sm:$0xff] %v3772
        %3853 = vst [vmem:[#allocation3 + $0xd8] sm:$0xff] %v3773
        %3854 = vst [vmem:[#allocation3 + $0xe0] sm:$0xff] %v3774
        %3855 = vst [vmem:[#allocation3 + $0xe8] sm:$0xff] %v3775
        %3856 = vst [vmem:[#allocation3 + $0xf0] sm:$0xff] %v3776
        %3857 = vst [vmem:[#allocation3 + $0xf8] sm:$0xff] %v3777
        %3858 = vst [vmem:[#allocation3 + $0x100] sm:$0xff] %v3778
        %3859 = vst [vmem:[#allocation3 + $0x108] sm:$0xff] %v3779
        %3860 = vst [vmem:[#allocation3 + $0x110] sm:$0xff] %v3780
        %3861 = vst [vmem:[#allocation3 + $0x118] sm:$0xff] %v3781
        %3862 = vst [vmem:[#allocation3 + $0x120] sm:$0xff] %v3782
        %3863 = vst [vmem:[#allocation3 + $0x128] sm:$0xff] %v3783
        %3864 = vst [vmem:[#allocation3 + $0x130] sm:$0xff] %v3784
        %3865 = vst [vmem:[#allocation3 + $0x138] sm:$0xff] %v3785
        %3866 = vst [vmem:[#allocation3 + $0x140] sm:$0xff] %v3786
        %3867 = vst [vmem:[#allocation3 + $0x148] sm:$0xff] %v3787
        %3868 = vst [vmem:[#allocation3 + $0x150] sm:$0xff] %v3788
        %3869 = vst [vmem:[#allocation3 + $0x158] sm:$0xff] %v3789
        %3870 = vst [vmem:[#allocation3 + $0x160] sm:$0xff] %v3790
        %3871 = vst [vmem:[#allocation3 + $0x168] sm:$0xff] %v3791
        %3872 = vst [vmem:[#allocation3 + $0x170] sm:$0xff] %v3792
        %3873 = vst [vmem:[#allocation3 + $0x178] sm:$0xff] %v3793
        %3874 = vst [vmem:[#allocation3 + $0x180] sm:$0xff] %v3794
        %3875 = vst [vmem:[#allocation3 + $0x188] sm:$0xff] %v3795
        %3876 = vst [vmem:[#allocation3 + $0x190] sm:$0xff] %v3796
        %3877 = vst [vmem:[#allocation3 + $0x198] sm:$0xff] %v3797
        %3878 = vst [vmem:[#allocation3 + $0x1a0] sm:$0xff] %v3798
        %3879 = vst [vmem:[#allocation3 + $0x1a8] sm:$0xff] %v3799
        %3880 = vst [vmem:[#allocation3 + $0x1b0] sm:$0xff] %v3800
        %3881 = vst [vmem:[#allocation3 + $0x1b8] sm:$0xff] %v3801
        %3882 = vst [vmem:[#allocation3 + $0x1c0] sm:$0xff] %v3802
        %3883 = vst [vmem:[#allocation3 + $0x1c8] sm:$0xff] %v3803
        %3884 = vst [vmem:[#allocation3 + $0x1d0] sm:$0xff] %v3804
        %3885 = vst [vmem:[#allocation3 + $0x1d8] sm:$0xff] %v3805
        %3886 = vst [vmem:[#allocation3 + $0x1e0] sm:$0xff] %v3806
        %3887 = vst [vmem:[#allocation3 + $0x1e8] sm:$0xff] %v3807
        %3888 = vst [vmem:[#allocation3 + $0x1f0] sm:$0xff] %v3808
        %3889 = vst [vmem:[#allocation3 + $0x1f8] sm:$0xff] %v3809
        %3890 = vst [vmem:[#allocation3 + $0x200] sm:$0xff] %v3810
        %3891 = vst [vmem:[#allocation3 + $0x208] sm:$0xff] %v3811
        %3892 = vst [vmem:[#allocation3 + $0x210] sm:$0xff] %v3812
        %3893 = vst [vmem:[#allocation3 + $0x218] sm:$0xff] %v3813
        %3894 = vst [vmem:[#allocation3 + $0x220] sm:$0xff] %v3814
        %3895 = vst [vmem:[#allocation3 + $0x228] sm:$0xff] %v3815
        %3896 = vst [vmem:[#allocation3 + $0x230] sm:$0xff] %v3816
        %3897 = vst [vmem:[#allocation3 + $0x238] sm:$0xff] %v3817
        %3898 = vst [vmem:[#allocation3 + $0x240] sm:$0xff] %v3818
        %3899 = vst [vmem:[#allocation3 + $0x248] sm:$0xff] %v3819
        %3900 = vst [vmem:[#allocation3 + $0x250] sm:$0xff] %v3820
        %3901 = vst [vmem:[#allocation3 + $0x258] sm:$0xff] %v3821
        %3902 = vst [vmem:[#allocation3 + $0x260] sm:$0xff] %v3822
        %3903 = vst [vmem:[#allocation3 + $0x268] sm:$0xff] %v3823
        %3904 = vst [vmem:[#allocation3 + $0x270] sm:$0xff] %v3824
        %3905 = vst [vmem:[#allocation3 + $0x278] sm:$0xff] %v3825
        %v3906 = vld [vmem:[#allocation2 + $0x2] sm:$0xff]
        %v3907 = vld [vmem:[#allocation2 + $0xa] sm:$0xff]
        %v3908 = vld [vmem:[#allocation2 + $0x12] sm:$0xff]
        %v3909 = vld [vmem:[#allocation2 + $0x1a] sm:$0xff]
        %v3910 = vld [vmem:[#allocation2 + $0x22] sm:$0xff]
        %v3911 = vld [vmem:[#allocation2 + $0x2a] sm:$0xff]
        %v3912 = vld [vmem:[#allocation2 + $0x32] sm:$0xff]
        %v3913 = vld [vmem:[#allocation2 + $0x3a] sm:$0xff]
        %v3914 = vld [vmem:[#allocation2 + $0x42] sm:$0xff]
        %v3915 = vld [vmem:[#allocation2 + $0x4a] sm:$0xff]
        %v3916 = vld [vmem:[#allocation2 + $0x52] sm:$0xff]
        %v3917 = vld [vmem:[#allocation2 + $0x5a] sm:$0xff]
        %v3918 = vld [vmem:[#allocation2 + $0x62] sm:$0xff]
        %v3919 = vld [vmem:[#allocation2 + $0x6a] sm:$0xff]
        %v3920 = vld [vmem:[#allocation2 + $0x72] sm:$0xff]
        %v3921 = vld [vmem:[#allocation2 + $0x7a] sm:$0xff]
        %v3922 = vld [vmem:[#allocation2 + $0x82] sm:$0xff]
        %v3923 = vld [vmem:[#allocation2 + $0x8a] sm:$0xff]
        %v3924 = vld [vmem:[#allocation2 + $0x92] sm:$0xff]
        %v3925 = vld [vmem:[#allocation2 + $0x9a] sm:$0xff]
        %v3926 = vpack.c.bf16 %v3907, %v3906
        %v3927 = vpack.c.bf16 %v3909, %v3908
        %v3928 = vpack.c.bf16 %v3911, %v3910
        %v3929 = vpack.c.bf16 %v3913, %v3912
        %v3930 = vpack.c.bf16 %v3915, %v3914
        %v3931 = vpack.c.bf16 %v3917, %v3916
        %v3932 = vpack.c.bf16 %v3919, %v3918
        %v3933 = vpack.c.bf16 %v3921, %v3920
        %v3934 = vpack.c.bf16 %v3923, %v3922
        %v3935 = vpack.c.bf16 %v3925, %v3924
        %s3936 = scalar_lea.vmem %s5, 256
        %v3937 = vld [vmem:[%s3936] sm:$0xff]
        %v3938 = vld [vmem:[%s3936 + $0x8] sm:$0xff]
        %v3939 = vld [vmem:[%s3936 + $0x10] sm:$0xff]
        %v3940 = vld [vmem:[%s3936 + $0x18] sm:$0xff]
        %v3941 = vld [vmem:[%s3936 + $0x20] sm:$0xff]
        %v3942 = vld [vmem:[%s3936 + $0x28] sm:$0xff]
        %v3943 = vld [vmem:[%s3936 + $0x30] sm:$0xff]
        %v3944 = vld [vmem:[%s3936 + $0x38] sm:$0xff]
        %v3945 = vld [vmem:[%s3936 + $0x40] sm:$0xff]
        %v3946 = vld [vmem:[%s3936 + $0x48] sm:$0xff]
        %v3947 = vld [vmem:[%s3936 + $0x50] sm:$0xff]
        %v3948 = vld [vmem:[%s3936 + $0x58] sm:$0xff]
        %v3949 = vld [vmem:[%s3936 + $0x60] sm:$0xff]
        %v3950 = vld [vmem:[%s3936 + $0x68] sm:$0xff]
        %v3951 = vld [vmem:[%s3936 + $0x70] sm:$0xff]
        %v3952 = vld [vmem:[%s3936 + $0x78] sm:$0xff]
        %v3969 = vunpack.c.l.b16 %v3937
        %v3970 = vunpack.c.h.b16 %v3937
        %v3971 = vunpack.c.l.b16 %v3938
        %v3972 = vunpack.c.h.b16 %v3938
        %v3973 = vunpack.c.l.b16 %v3939
        %v3974 = vunpack.c.h.b16 %v3939
        %v3975 = vunpack.c.l.b16 %v3940
        %v3976 = vunpack.c.h.b16 %v3940
        %v3977 = vunpack.c.l.b16 %v3941
        %v3978 = vunpack.c.h.b16 %v3941
        %v3979 = vunpack.c.l.b16 %v3942
        %v3980 = vunpack.c.h.b16 %v3942
        %v3981 = vunpack.c.l.b16 %v3943
        %v3982 = vunpack.c.h.b16 %v3943
        %v3983 = vunpack.c.l.b16 %v3944
        %v3984 = vunpack.c.h.b16 %v3944
        %v3985 = vunpack.c.l.b16 %v3945
        %v3986 = vunpack.c.h.b16 %v3945
        %v3987 = vunpack.c.l.b16 %v3946
        %v3988 = vunpack.c.h.b16 %v3946
        %v3989 = vunpack.c.l.b16 %v3947
        %v3990 = vunpack.c.h.b16 %v3947
        %v3991 = vunpack.c.l.b16 %v3948
        %v3992 = vunpack.c.h.b16 %v3948
        %v3993 = vunpack.c.l.b16 %v3949
        %v3994 = vunpack.c.h.b16 %v3949
        %v3995 = vunpack.c.l.b16 %v3950
        %v3996 = vunpack.c.h.b16 %v3950
        %v3997 = vunpack.c.l.b16 %v3951
        %v3998 = vunpack.c.h.b16 %v3951
        %v3999 = vunpack.c.l.b16 %v3952
        %v4000 = vunpack.c.h.b16 %v3952
        %v4001 = vpack.c.b16 %v3973, %v3969
        %v4002 = vpack.c.b16 %v3974, %v3970
        %v4003 = vpack.c.b16 %v3975, %v3971
        %v4004 = vpack.c.b16 %v3976, %v3972
        %v4005 = vpack.c.b16 %v3981, %v3977
        %v4006 = vpack.c.b16 %v3982, %v3978
        %v4007 = vpack.c.b16 %v3983, %v3979
        %v4008 = vpack.c.b16 %v3984, %v3980
        %v4009 = vpack.c.b16 %v3989, %v3985
        %v4010 = vpack.c.b16 %v3990, %v3986
        %v4011 = vpack.c.b16 %v3991, %v3987
        %v4012 = vpack.c.b16 %v3992, %v3988
        %v4013 = vpack.c.b16 %v3997, %v3993
        %v4014 = vpack.c.b16 %v3998, %v3994
        %v4015 = vpack.c.b16 %v3999, %v3995
        %v4016 = vpack.c.b16 %v4000, %v3996
        %v4034 = vsel %vm2714, %v3926, 0
        %v4037 = vsel %vm2714, %v3927, 0
        %v4040 = vsel %vm2714, %v3928, 0
        %v4043 = vsel %vm2714, %v3929, 0
        %v4046 = vsel %vm2714, %v3930, 0
        %v4049 = vsel %vm2714, %v3931, 0
        %v4052 = vsel %vm2714, %v3932, 0
        %v4055 = vsel %vm2714, %v3933, 0
        %v4058 = vsel %vm2714, %v3934, 0
        %v4061 = vsel %vm2714, %v3935, 0
        %4063 = vmatprep.subr.bf16.mxu0 %v4002
        %4064 = vmatpush1.bf16.msra.mxu0 %v4001
        %4065 = vmatprep.subr.bf16.mxu0 %v4006
        %4066 = vmatpush1.bf16.msra.mxu0 %v4005
        %4067 = vmatprep.subr.bf16.mxu0 %v4010
        %4068 = vmatpush1.bf16.msra.mxu0 %v4009
        %4069 = vmatprep.subr.bf16.mxu0 %v4014
        %4070 = vmatpush1.bf16.msra.mxu0 %v4013
        %4071 = vmatprep.subr.bf16.mxu0 0
        %4072 = vmatpush1.bf16.msra.mxu0 0
        %4073 = vmatprep.subr.bf16.mxu0 0
        %4074 = vmatpush1.bf16.msra.mxu0 0
        %4075 = vmatprep.subr.bf16.mxu0 0
        %4076 = vmatpush1.bf16.msra.mxu0 0
        %4077 = vmatprep.subr.bf16.mxu0 0
        %4078 = vmatpush1.bf16.msra.mxu0 0
        %4079 = vmatprep.subr.bf16.mxu0 0
        %4080 = vmatpush1.bf16.msra.mxu0 0
        %4081 = vmatprep.subr.bf16.mxu0 0
        %4082 = vmatpush1.bf16.msra.mxu0 0
        %4083 = vmatprep.subr.bf16.mxu0 0
        %4084 = vmatpush1.bf16.msra.mxu0 0
        %4085 = vmatprep.subr.bf16.mxu0 0
        %4086 = vmatpush1.bf16.msra.mxu0 0
        %4087 = vmatprep.subr.bf16.mxu0 0
        %4088 = vmatpush1.bf16.msra.mxu0 0
        %4089 = vmatprep.subr.bf16.mxu0 0
        %4090 = vmatpush1.bf16.msra.mxu0 0
        %4091 = vmatprep.subr.bf16.mxu0 0
        %4092 = vmatpush1.bf16.msra.mxu0 0
        %4093 = vmatprep.subr.bf16.mxu0 0
        %4094 = vmatpush1.bf16.msra.mxu0 0
        %4095 = vmatprep.mubr.bf16.mxu0 0
        %4096 = vmatmul.mubr.bf16.gmra.mrb[0].mxu0 %v4034
        %v4097 = vpop.f32.mrb[0].mxu0
        %v4098 = vadd.f32 0.0, %v4097
        %v4099 = vpop.f32.mrb[0].mxu0
        %v4100 = vadd.f32 0.0, %v4099
        %v4101 = vpop.f32.mrb[0].mxu0
        %v4102 = vadd.f32 0.0, %v4101
        %v4103 = vpop.f32.mrb[0].mxu0
        %v4104 = vadd.f32 0.0, %v4103
        %4105 = vmatprep.mubr.bf16.mxu0 0
        %4106 = vmatmul.mubr.bf16.gmra.mrb[0].mxu0 %v4037
        %v4107 = vpop.f32.mrb[0].mxu0
        %v4108 = vadd.f32 0.0, %v4107
        %v4109 = vpop.f32.mrb[0].mxu0
        %v4110 = vadd.f32 0.0, %v4109
        %v4111 = vpop.f32.mrb[0].mxu0
        %v4112 = vadd.f32 0.0, %v4111
        %v4113 = vpop.f32.mrb[0].mxu0
        %v4114 = vadd.f32 0.0, %v4113
        %4115 = vmatprep.mubr.bf16.mxu0 0
        %4116 = vmatmul.mubr.bf16.gmra.mrb[0].mxu0 %v4040
        %v4117 = vpop.f32.mrb[0].mxu0
        %v4118 = vadd.f32 0.0, %v4117
        %v4119 = vpop.f32.mrb[0].mxu0
        %v4120 = vadd.f32 0.0, %v4119
        %v4121 = vpop.f32.mrb[0].mxu0
        %v4122 = vadd.f32 0.0, %v4121
        %v4123 = vpop.f32.mrb[0].mxu0
        %v4124 = vadd.f32 0.0, %v4123
        %4125 = vmatprep.mubr.bf16.mxu0 0
        %4126 = vmatmul.mubr.bf16.gmra.mrb[0].mxu0 %v4043
        %v4127 = vpop.f32.mrb[0].mxu0
        %v4128 = vadd.f32 0.0, %v4127
        %v4129 = vpop.f32.mrb[0].mxu0
        %v4130 = vadd.f32 0.0, %v4129
        %v4131 = vpop.f32.mrb[0].mxu0
        %v4132 = vadd.f32 0.0, %v4131
        %v4133 = vpop.f32.mrb[0].mxu0
        %v4134 = vadd.f32 0.0, %v4133
        %4135 = vmatprep.mubr.bf16.mxu0 0
        %4136 = vmatmul.mubr.bf16.gmra.mrb[0].mxu0 %v4046
        %v4137 = vpop.f32.mrb[0].mxu0
        %v4138 = vadd.f32 0.0, %v4137
        %v4139 = vpop.f32.mrb[0].mxu0
        %v4140 = vadd.f32 0.0, %v4139
        %v4141 = vpop.f32.mrb[0].mxu0
        %v4142 = vadd.f32 0.0, %v4141
        %v4143 = vpop.f32.mrb[0].mxu0
        %v4144 = vadd.f32 0.0, %v4143
        %4145 = vmatprep.mubr.bf16.mxu0 0
        %4146 = vmatmul.mubr.bf16.gmra.mrb[0].mxu0 %v4049
        %v4147 = vpop.f32.mrb[0].mxu0
        %v4148 = vadd.f32 0.0, %v4147
        %v4149 = vpop.f32.mrb[0].mxu0
        %v4150 = vadd.f32 0.0, %v4149
        %v4151 = vpop.f32.mrb[0].mxu0
        %v4152 = vadd.f32 0.0, %v4151
        %v4153 = vpop.f32.mrb[0].mxu0
        %v4154 = vadd.f32 0.0, %v4153
        %4155 = vmatprep.mubr.bf16.mxu0 0
        %4156 = vmatmul.mubr.bf16.gmra.mrb[0].mxu0 %v4052
        %v4157 = vpop.f32.mrb[0].mxu0
        %v4158 = vadd.f32 0.0, %v4157
        %v4159 = vpop.f32.mrb[0].mxu0
        %v4160 = vadd.f32 0.0, %v4159
        %v4161 = vpop.f32.mrb[0].mxu0
        %v4162 = vadd.f32 0.0, %v4161
        %v4163 = vpop.f32.mrb[0].mxu0
        %v4164 = vadd.f32 0.0, %v4163
        %4165 = vmatprep.mubr.bf16.mxu0 0
        %4166 = vmatmul.mubr.bf16.gmra.mrb[0].mxu0 %v4055
        %v4167 = vpop.f32.mrb[0].mxu0
        %v4168 = vadd.f32 0.0, %v4167
        %v4169 = vpop.f32.mrb[0].mxu0
        %v4170 = vadd.f32 0.0, %v4169
        %v4171 = vpop.f32.mrb[0].mxu0
        %v4172 = vadd.f32 0.0, %v4171
        %v4173 = vpop.f32.mrb[0].mxu0
        %v4174 = vadd.f32 0.0, %v4173
        %4175 = vmatprep.mubr.bf16.mxu0 0
        %4176 = vmatmul.mubr.bf16.gmra.mrb[0].mxu0 %v4058
        %v4177 = vpop.f32.mrb[0].mxu0
        %v4178 = vadd.f32 0.0, %v4177
        %v4179 = vpop.f32.mrb[0].mxu0
        %v4180 = vadd.f32 0.0, %v4179
        %v4181 = vpop.f32.mrb[0].mxu0
        %v4182 = vadd.f32 0.0, %v4181
        %v4183 = vpop.f32.mrb[0].mxu0
        %v4184 = vadd.f32 0.0, %v4183
        %4185 = vmatprep.mubr.bf16.mxu0 0
        %4186 = vmatmul.mubr.bf16.gmra.mrb[0].mxu0 %v4061
        %v4187 = vpop.f32.mrb[0].mxu0
        %v4188 = vadd.f32 0.0, %v4187
        %v4189 = vpop.f32.mrb[0].mxu0
        %v4190 = vadd.f32 0.0, %v4189
        %v4191 = vpop.f32.mrb[0].mxu0
        %v4192 = vadd.f32 0.0, %v4191
        %v4193 = vpop.f32.mrb[0].mxu0
        %v4194 = vadd.f32 0.0, %v4193
        %4195 = vdwg.mxu0
        %4196 = vmatprep.subr.bf16.mxu0 %v4004
        %4197 = vmatpush1.bf16.msra.mxu0 %v4003
        %4198 = vmatprep.subr.bf16.mxu0 %v4008
        %4199 = vmatpush1.bf16.msra.mxu0 %v4007
        %4200 = vmatprep.subr.bf16.mxu0 %v4012
        %4201 = vmatpush1.bf16.msra.mxu0 %v4011
        %4202 = vmatprep.subr.bf16.mxu0 %v4016
        %4203 = vmatpush1.bf16.msra.mxu0 %v4015
        %4204 = vmatprep.subr.bf16.mxu0 0
        %4205 = vmatpush1.bf16.msra.mxu0 0
        %4206 = vmatprep.subr.bf16.mxu0 0
        %4207 = vmatpush1.bf16.msra.mxu0 0
        %4208 = vmatprep.subr.bf16.mxu0 0
        %4209 = vmatpush1.bf16.msra.mxu0 0
        %4210 = vmatprep.subr.bf16.mxu0 0
        %4211 = vmatpush1.bf16.msra.mxu0 0
        %4212 = vmatprep.subr.bf16.mxu0 0
        %4213 = vmatpush1.bf16.msra.mxu0 0
        %4214 = vmatprep.subr.bf16.mxu0 0
        %4215 = vmatpush1.bf16.msra.mxu0 0
        %4216 = vmatprep.subr.bf16.mxu0 0
        %4217 = vmatpush1.bf16.msra.mxu0 0
        %4218 = vmatprep.subr.bf16.mxu0 0
        %4219 = vmatpush1.bf16.msra.mxu0 0
        %4220 = vmatprep.subr.bf16.mxu0 0
        %4221 = vmatpush1.bf16.msra.mxu0 0
        %4222 = vmatprep.subr.bf16.mxu0 0
        %4223 = vmatpush1.bf16.msra.mxu0 0
        %4224 = vmatprep.subr.bf16.mxu0 0
        %4225 = vmatpush1.bf16.msra.mxu0 0
        %4226 = vmatprep.subr.bf16.mxu0 0
        %4227 = vmatpush1.bf16.msra.mxu0 0
        %4228 = vmatprep.mubr.bf16.mxu0 0
        %4229 = vmatmul.mubr.bf16.gmra.mrb[0].mxu0 %v4034
        %v4230 = vpop.f32.mrb[0].mxu0
        %v4231 = vadd.f32 0.0, %v4230
        %v4232 = vpop.f32.mrb[0].mxu0
        %v4233 = vadd.f32 0.0, %v4232
        %v4234 = vpop.f32.mrb[0].mxu0
        %v4235 = vadd.f32 0.0, %v4234
        %v4236 = vpop.f32.mrb[0].mxu0
        %v4237 = vadd.f32 0.0, %v4236
        %4238 = vmatprep.mubr.bf16.mxu0 0
        %4239 = vmatmul.mubr.bf16.gmra.mrb[0].mxu0 %v4037
        %v4240 = vpop.f32.mrb[0].mxu0
        %v4241 = vadd.f32 0.0, %v4240
        %v4242 = vpop.f32.mrb[0].mxu0
        %v4243 = vadd.f32 0.0, %v4242
        %v4244 = vpop.f32.mrb[0].mxu0
        %v4245 = vadd.f32 0.0, %v4244
        %v4246 = vpop.f32.mrb[0].mxu0
        %v4247 = vadd.f32 0.0, %v4246
        %4248 = vmatprep.mubr.bf16.mxu0 0
        %4249 = vmatmul.mubr.bf16.gmra.mrb[0].mxu0 %v4040
        %v4250 = vpop.f32.mrb[0].mxu0
        %v4251 = vadd.f32 0.0, %v4250
        %v4252 = vpop.f32.mrb[0].mxu0
        %v4253 = vadd.f32 0.0, %v4252
        %v4254 = vpop.f32.mrb[0].mxu0
        %v4255 = vadd.f32 0.0, %v4254
        %v4256 = vpop.f32.mrb[0].mxu0
        %v4257 = vadd.f32 0.0, %v4256
        %4258 = vmatprep.mubr.bf16.mxu0 0
        %4259 = vmatmul.mubr.bf16.gmra.mrb[0].mxu0 %v4043
        %v4260 = vpop.f32.mrb[0].mxu0
        %v4261 = vadd.f32 0.0, %v4260
        %v4262 = vpop.f32.mrb[0].mxu0
        %v4263 = vadd.f32 0.0, %v4262
        %v4264 = vpop.f32.mrb[0].mxu0
        %v4265 = vadd.f32 0.0, %v4264
        %v4266 = vpop.f32.mrb[0].mxu0
        %v4267 = vadd.f32 0.0, %v4266
        %4268 = vmatprep.mubr.bf16.mxu0 0
        %4269 = vmatmul.mubr.bf16.gmra.mrb[0].mxu0 %v4046
        %v4270 = vpop.f32.mrb[0].mxu0
        %v4271 = vadd.f32 0.0, %v4270
        %v4272 = vpop.f32.mrb[0].mxu0
        %v4273 = vadd.f32 0.0, %v4272
        %v4274 = vpop.f32.mrb[0].mxu0
        %v4275 = vadd.f32 0.0, %v4274
        %v4276 = vpop.f32.mrb[0].mxu0
        %v4277 = vadd.f32 0.0, %v4276
        %4278 = vmatprep.mubr.bf16.mxu0 0
        %4279 = vmatmul.mubr.bf16.gmra.mrb[0].mxu0 %v4049
        %v4280 = vpop.f32.mrb[0].mxu0
        %v4281 = vadd.f32 0.0, %v4280
        %v4282 = vpop.f32.mrb[0].mxu0
        %v4283 = vadd.f32 0.0, %v4282
        %v4284 = vpop.f32.mrb[0].mxu0
        %v4285 = vadd.f32 0.0, %v4284
        %v4286 = vpop.f32.mrb[0].mxu0
        %v4287 = vadd.f32 0.0, %v4286
        %4288 = vmatprep.mubr.bf16.mxu0 0
        %4289 = vmatmul.mubr.bf16.gmra.mrb[0].mxu0 %v4052
        %v4290 = vpop.f32.mrb[0].mxu0
        %v4291 = vadd.f32 0.0, %v4290
        %v4292 = vpop.f32.mrb[0].mxu0
        %v4293 = vadd.f32 0.0, %v4292
        %v4294 = vpop.f32.mrb[0].mxu0
        %v4295 = vadd.f32 0.0, %v4294
        %v4296 = vpop.f32.mrb[0].mxu0
        %v4297 = vadd.f32 0.0, %v4296
        %4298 = vmatprep.mubr.bf16.mxu0 0
        %4299 = vmatmul.mubr.bf16.gmra.mrb[0].mxu0 %v4055
        %v4300 = vpop.f32.mrb[0].mxu0
        %v4301 = vadd.f32 0.0, %v4300
        %v4302 = vpop.f32.mrb[0].mxu0
        %v4303 = vadd.f32 0.0, %v4302
        %v4304 = vpop.f32.mrb[0].mxu0
        %v4305 = vadd.f32 0.0, %v4304
        %v4306 = vpop.f32.mrb[0].mxu0
        %v4307 = vadd.f32 0.0, %v4306
        %4308 = vmatprep.mubr.bf16.mxu0 0
        %4309 = vmatmul.mubr.bf16.gmra.mrb[0].mxu0 %v4058
        %v4310 = vpop.f32.mrb[0].mxu0
        %v4311 = vadd.f32 0.0, %v4310
        %v4312 = vpop.f32.mrb[0].mxu0
        %v4313 = vadd.f32 0.0, %v4312
        %v4314 = vpop.f32.mrb[0].mxu0
        %v4315 = vadd.f32 0.0, %v4314
        %v4316 = vpop.f32.mrb[0].mxu0
        %v4317 = vadd.f32 0.0, %v4316
        %4318 = vmatprep.mubr.bf16.mxu0 0
        %4319 = vmatmul.mubr.bf16.gmra.mrb[0].mxu0 %v4061
        %v4320 = vpop.f32.mrb[0].mxu0
        %v4321 = vadd.f32 0.0, %v4320
        %v4322 = vpop.f32.mrb[0].mxu0
        %v4323 = vadd.f32 0.0, %v4322
        %v4324 = vpop.f32.mrb[0].mxu0
        %v4325 = vadd.f32 0.0, %v4324
        %v4326 = vpop.f32.mrb[0].mxu0
        %v4327 = vadd.f32 0.0, %v4326
        %4328 = vdwg.mxu0
        %v4329 = vld [vmem:[#allocation3] sm:$0xff]
        %v4330 = vld [vmem:[#allocation3 + $0x8] sm:$0xff]
        %v4331 = vld [vmem:[#allocation3 + $0x10] sm:$0xff]
        %v4332 = vld [vmem:[#allocation3 + $0x18] sm:$0xff]
        %v4333 = vld [vmem:[#allocation3 + $0x20] sm:$0xff]
        %v4334 = vld [vmem:[#allocation3 + $0x28] sm:$0xff]
        %v4335 = vld [vmem:[#allocation3 + $0x30] sm:$0xff]
        %v4336 = vld [vmem:[#allocation3 + $0x38] sm:$0xff]
        %v4337 = vld [vmem:[#allocation3 + $0x40] sm:$0xff]
        %v4338 = vld [vmem:[#allocation3 + $0x48] sm:$0xff]
        %v4339 = vld [vmem:[#allocation3 + $0x50] sm:$0xff]
        %v4340 = vld [vmem:[#allocation3 + $0x58] sm:$0xff]
        %v4341 = vld [vmem:[#allocation3 + $0x60] sm:$0xff]
        %v4342 = vld [vmem:[#allocation3 + $0x68] sm:$0xff]
        %v4343 = vld [vmem:[#allocation3 + $0x70] sm:$0xff]
        %v4344 = vld [vmem:[#allocation3 + $0x78] sm:$0xff]
        %v4345 = vld [vmem:[#allocation3 + $0x80] sm:$0xff]
        %v4346 = vld [vmem:[#allocation3 + $0x88] sm:$0xff]
        %v4347 = vld [vmem:[#allocation3 + $0x90] sm:$0xff]
        %v4348 = vld [vmem:[#allocation3 + $0x98] sm:$0xff]
        %v4349 = vld [vmem:[#allocation3 + $0xa0] sm:$0xff]
        %v4350 = vld [vmem:[#allocation3 + $0xa8] sm:$0xff]
        %v4351 = vld [vmem:[#allocation3 + $0xb0] sm:$0xff]
        %v4352 = vld [vmem:[#allocation3 + $0xb8] sm:$0xff]
        %v4353 = vld [vmem:[#allocation3 + $0xc0] sm:$0xff]
        %v4354 = vld [vmem:[#allocation3 + $0xc8] sm:$0xff]
        %v4355 = vld [vmem:[#allocation3 + $0xd0] sm:$0xff]
        %v4356 = vld [vmem:[#allocation3 + $0xd8] sm:$0xff]
        %v4357 = vld [vmem:[#allocation3 + $0xe0] sm:$0xff]
        %v4358 = vld [vmem:[#allocation3 + $0xe8] sm:$0xff]
        %v4359 = vld [vmem:[#allocation3 + $0xf0] sm:$0xff]
        %v4360 = vld [vmem:[#allocation3 + $0xf8] sm:$0xff]
        %v4361 = vld [vmem:[#allocation3 + $0x100] sm:$0xff]
        %v4362 = vld [vmem:[#allocation3 + $0x108] sm:$0xff]
        %v4363 = vld [vmem:[#allocation3 + $0x110] sm:$0xff]
        %v4364 = vld [vmem:[#allocation3 + $0x118] sm:$0xff]
        %v4365 = vld [vmem:[#allocation3 + $0x120] sm:$0xff]
        %v4366 = vld [vmem:[#allocation3 + $0x128] sm:$0xff]
        %v4367 = vld [vmem:[#allocation3 + $0x130] sm:$0xff]
        %v4368 = vld [vmem:[#allocation3 + $0x138] sm:$0xff]
        %v4369 = vld [vmem:[#allocation3 + $0x140] sm:$0xff]
        %v4370 = vld [vmem:[#allocation3 + $0x148] sm:$0xff]
        %v4371 = vld [vmem:[#allocation3 + $0x150] sm:$0xff]
        %v4372 = vld [vmem:[#allocation3 + $0x158] sm:$0xff]
        %v4373 = vld [vmem:[#allocation3 + $0x160] sm:$0xff]
        %v4374 = vld [vmem:[#allocation3 + $0x168] sm:$0xff]
        %v4375 = vld [vmem:[#allocation3 + $0x170] sm:$0xff]
        %v4376 = vld [vmem:[#allocation3 + $0x178] sm:$0xff]
        %v4377 = vld [vmem:[#allocation3 + $0x180] sm:$0xff]
        %v4378 = vld [vmem:[#allocation3 + $0x188] sm:$0xff]
        %v4379 = vld [vmem:[#allocation3 + $0x190] sm:$0xff]
        %v4380 = vld [vmem:[#allocation3 + $0x198] sm:$0xff]
        %v4381 = vld [vmem:[#allocation3 + $0x1a0] sm:$0xff]
        %v4382 = vld [vmem:[#allocation3 + $0x1a8] sm:$0xff]
        %v4383 = vld [vmem:[#allocation3 + $0x1b0] sm:$0xff]
        %v4384 = vld [vmem:[#allocation3 + $0x1b8] sm:$0xff]
        %v4385 = vld [vmem:[#allocation3 + $0x1c0] sm:$0xff]
        %v4386 = vld [vmem:[#allocation3 + $0x1c8] sm:$0xff]
        %v4387 = vld [vmem:[#allocation3 + $0x1d0] sm:$0xff]
        %v4388 = vld [vmem:[#allocation3 + $0x1d8] sm:$0xff]
        %v4389 = vld [vmem:[#allocation3 + $0x1e0] sm:$0xff]
        %v4390 = vld [vmem:[#allocation3 + $0x1e8] sm:$0xff]
        %v4391 = vld [vmem:[#allocation3 + $0x1f0] sm:$0xff]
        %v4392 = vld [vmem:[#allocation3 + $0x1f8] sm:$0xff]
        %v4393 = vld [vmem:[#allocation3 + $0x200] sm:$0xff]
        %v4394 = vld [vmem:[#allocation3 + $0x208] sm:$0xff]
        %v4395 = vld [vmem:[#allocation3 + $0x210] sm:$0xff]
        %v4396 = vld [vmem:[#allocation3 + $0x218] sm:$0xff]
        %v4397 = vld [vmem:[#allocation3 + $0x220] sm:$0xff]
        %v4398 = vld [vmem:[#allocation3 + $0x228] sm:$0xff]
        %v4399 = vld [vmem:[#allocation3 + $0x230] sm:$0xff]
        %v4400 = vld [vmem:[#allocation3 + $0x238] sm:$0xff]
        %v4401 = vld [vmem:[#allocation3 + $0x240] sm:$0xff]
        %v4402 = vld [vmem:[#allocation3 + $0x248] sm:$0xff]
        %v4403 = vld [vmem:[#allocation3 + $0x250] sm:$0xff]
        %v4404 = vld [vmem:[#allocation3 + $0x258] sm:$0xff]
        %v4405 = vld [vmem:[#allocation3 + $0x260] sm:$0xff]
        %v4406 = vld [vmem:[#allocation3 + $0x268] sm:$0xff]
        %v4407 = vld [vmem:[#allocation3 + $0x270] sm:$0xff]
        %v4408 = vld [vmem:[#allocation3 + $0x278] sm:$0xff]
        %v4409 = vadd.f32 %v4329, %v4098
        %v4410 = vadd.f32 %v4330, %v4100
        %v4411 = vadd.f32 %v4331, %v4231
        %v4412 = vadd.f32 %v4332, %v4233
        %v4413 = vadd.f32 %v4333, %v4102
        %v4414 = vadd.f32 %v4334, %v4104
        %v4415 = vadd.f32 %v4335, %v4235
        %v4416 = vadd.f32 %v4336, %v4237
        %v4417 = vadd.f32 %v4337, %v4108
        %v4418 = vadd.f32 %v4338, %v4110
        %v4419 = vadd.f32 %v4339, %v4241
        %v4420 = vadd.f32 %v4340, %v4243
        %v4421 = vadd.f32 %v4341, %v4112
        %v4422 = vadd.f32 %v4342, %v4114
        %v4423 = vadd.f32 %v4343, %v4245
        %v4424 = vadd.f32 %v4344, %v4247
        %v4425 = vadd.f32 %v4345, %v4118
        %v4426 = vadd.f32 %v4346, %v4120
        %v4427 = vadd.f32 %v4347, %v4251
        %v4428 = vadd.f32 %v4348, %v4253
        %v4429 = vadd.f32 %v4349, %v4122
        %v4430 = vadd.f32 %v4350, %v4124
        %v4431 = vadd.f32 %v4351, %v4255
        %v4432 = vadd.f32 %v4352, %v4257
        %v4433 = vadd.f32 %v4353, %v4128
        %v4434 = vadd.f32 %v4354, %v4130
        %v4435 = vadd.f32 %v4355, %v4261
        %v4436 = vadd.f32 %v4356, %v4263
        %v4437 = vadd.f32 %v4357, %v4132
        %v4438 = vadd.f32 %v4358, %v4134
        %v4439 = vadd.f32 %v4359, %v4265
        %v4440 = vadd.f32 %v4360, %v4267
        %v4441 = vadd.f32 %v4361, %v4138
        %v4442 = vadd.f32 %v4362, %v4140
        %v4443 = vadd.f32 %v4363, %v4271
        %v4444 = vadd.f32 %v4364, %v4273
        %v4445 = vadd.f32 %v4365, %v4142
        %v4446 = vadd.f32 %v4366, %v4144
        %v4447 = vadd.f32 %v4367, %v4275
        %v4448 = vadd.f32 %v4368, %v4277
        %v4449 = vadd.f32 %v4369, %v4148
        %v4450 = vadd.f32 %v4370, %v4150
        %v4451 = vadd.f32 %v4371, %v4281
        %v4452 = vadd.f32 %v4372, %v4283
        %v4453 = vadd.f32 %v4373, %v4152
        %v4454 = vadd.f32 %v4374, %v4154
        %v4455 = vadd.f32 %v4375, %v4285
        %v4456 = vadd.f32 %v4376, %v4287
        %v4457 = vadd.f32 %v4377, %v4158
        %v4458 = vadd.f32 %v4378, %v4160
        %v4459 = vadd.f32 %v4379, %v4291
        %v4460 = vadd.f32 %v4380, %v4293
        %v4461 = vadd.f32 %v4381, %v4162
        %v4462 = vadd.f32 %v4382, %v4164
        %v4463 = vadd.f32 %v4383, %v4295
        %v4464 = vadd.f32 %v4384, %v4297
        %v4465 = vadd.f32 %v4385, %v4168
        %v4466 = vadd.f32 %v4386, %v4170
        %v4467 = vadd.f32 %v4387, %v4301
        %v4468 = vadd.f32 %v4388, %v4303
        %v4469 = vadd.f32 %v4389, %v4172
        %v4470 = vadd.f32 %v4390, %v4174
        %v4471 = vadd.f32 %v4391, %v4305
        %v4472 = vadd.f32 %v4392, %v4307
        %v4473 = vadd.f32 %v4393, %v4178
        %v4474 = vadd.f32 %v4394, %v4180
        %v4475 = vadd.f32 %v4395, %v4311
        %v4476 = vadd.f32 %v4396, %v4313
        %v4477 = vadd.f32 %v4397, %v4182
        %v4478 = vadd.f32 %v4398, %v4184
        %v4479 = vadd.f32 %v4399, %v4315
        %v4480 = vadd.f32 %v4400, %v4317
        %v4481 = vadd.f32 %v4401, %v4188
        %v4482 = vadd.f32 %v4402, %v4190
        %v4483 = vadd.f32 %v4403, %v4321
        %v4484 = vadd.f32 %v4404, %v4323
        %v4485 = vadd.f32 %v4405, %v4192
        %v4486 = vadd.f32 %v4406, %v4194
        %v4487 = vadd.f32 %v4407, %v4325
        %v4488 = vadd.f32 %v4408, %v4327
        %4489 = vst [vmem:[#allocation3] sm:$0xff] %v4409
        %4490 = vst [vmem:[#allocation3 + $0x8] sm:$0xff] %v4410
        %4491 = vst [vmem:[#allocation3 + $0x10] sm:$0xff] %v4411
        %4492 = vst [vmem:[#allocation3 + $0x18] sm:$0xff] %v4412
        %4493 = vst [vmem:[#allocation3 + $0x20] sm:$0xff] %v4413
        %4494 = vst [vmem:[#allocation3 + $0x28] sm:$0xff] %v4414
        %4495 = vst [vmem:[#allocation3 + $0x30] sm:$0xff] %v4415
        %4496 = vst [vmem:[#allocation3 + $0x38] sm:$0xff] %v4416
        %4497 = vst [vmem:[#allocation3 + $0x40] sm:$0xff] %v4417
        %4498 = vst [vmem:[#allocation3 + $0x48] sm:$0xff] %v4418
        %4499 = vst [vmem:[#allocation3 + $0x50] sm:$0xff] %v4419
        %4500 = vst [vmem:[#allocation3 + $0x58] sm:$0xff] %v4420
        %4501 = vst [vmem:[#allocation3 + $0x60] sm:$0xff] %v4421
        %4502 = vst [vmem:[#allocation3 + $0x68] sm:$0xff] %v4422
        %4503 = vst [vmem:[#allocation3 + $0x70] sm:$0xff] %v4423
        %4504 = vst [vmem:[#allocation3 + $0x78] sm:$0xff] %v4424
        %4505 = vst [vmem:[#allocation3 + $0x80] sm:$0xff] %v4425
        %4506 = vst [vmem:[#allocation3 + $0x88] sm:$0xff] %v4426
        %4507 = vst [vmem:[#allocation3 + $0x90] sm:$0xff] %v4427
        %4508 = vst [vmem:[#allocation3 + $0x98] sm:$0xff] %v4428
        %4509 = vst [vmem:[#allocation3 + $0xa0] sm:$0xff] %v4429
        %4510 = vst [vmem:[#allocation3 + $0xa8] sm:$0xff] %v4430
        %4511 = vst [vmem:[#allocation3 + $0xb0] sm:$0xff] %v4431
        %4512 = vst [vmem:[#allocation3 + $0xb8] sm:$0xff] %v4432
        %4513 = vst [vmem:[#allocation3 + $0xc0] sm:$0xff] %v4433
        %4514 = vst [vmem:[#allocation3 + $0xc8] sm:$0xff] %v4434
        %4515 = vst [vmem:[#allocation3 + $0xd0] sm:$0xff] %v4435
        %4516 = vst [vmem:[#allocation3 + $0xd8] sm:$0xff] %v4436
        %4517 = vst [vmem:[#allocation3 + $0xe0] sm:$0xff] %v4437
        %4518 = vst [vmem:[#allocation3 + $0xe8] sm:$0xff] %v4438
        %4519 = vst [vmem:[#allocation3 + $0xf0] sm:$0xff] %v4439
        %4520 = vst [vmem:[#allocation3 + $0xf8] sm:$0xff] %v4440
        %4521 = vst [vmem:[#allocation3 + $0x100] sm:$0xff] %v4441
        %4522 = vst [vmem:[#allocation3 + $0x108] sm:$0xff] %v4442
        %4523 = vst [vmem:[#allocation3 + $0x110] sm:$0xff] %v4443
        %4524 = vst [vmem:[#allocation3 + $0x118] sm:$0xff] %v4444
        %4525 = vst [vmem:[#allocation3 + $0x120] sm:$0xff] %v4445
        %4526 = vst [vmem:[#allocation3 + $0x128] sm:$0xff] %v4446
        %4527 = vst [vmem:[#allocation3 + $0x130] sm:$0xff] %v4447
        %4528 = vst [vmem:[#allocation3 + $0x138] sm:$0xff] %v4448
        %4529 = vst [vmem:[#allocation3 + $0x140] sm:$0xff] %v4449
        %4530 = vst [vmem:[#allocation3 + $0x148] sm:$0xff] %v4450
        %4531 = vst [vmem:[#allocation3 + $0x150] sm:$0xff] %v4451
        %4532 = vst [vmem:[#allocation3 + $0x158] sm:$0xff] %v4452
        %4533 = vst [vmem:[#allocation3 + $0x160] sm:$0xff] %v4453
        %4534 = vst [vmem:[#allocation3 + $0x168] sm:$0xff] %v4454
        %4535 = vst [vmem:[#allocation3 + $0x170] sm:$0xff] %v4455
        %4536 = vst [vmem:[#allocation3 + $0x178] sm:$0xff] %v4456
        %4537 = vst [vmem:[#allocation3 + $0x180] sm:$0xff] %v4457
        %4538 = vst [vmem:[#allocation3 + $0x188] sm:$0xff] %v4458
        %4539 = vst [vmem:[#allocation3 + $0x190] sm:$0xff] %v4459
        %4540 = vst [vmem:[#allocation3 + $0x198] sm:$0xff] %v4460
        %4541 = vst [vmem:[#allocation3 + $0x1a0] sm:$0xff] %v4461
        %4542 = vst [vmem:[#allocation3 + $0x1a8] sm:$0xff] %v4462
        %4543 = vst [vmem:[#allocation3 + $0x1b0] sm:$0xff] %v4463
        %4544 = vst [vmem:[#allocation3 + $0x1b8] sm:$0xff] %v4464
        %4545 = vst [vmem:[#allocation3 + $0x1c0] sm:$0xff] %v4465
        %4546 = vst [vmem:[#allocation3 + $0x1c8] sm:$0xff] %v4466
        %4547 = vst [vmem:[#allocation3 + $0x1d0] sm:$0xff] %v4467
        %4548 = vst [vmem:[#allocation3 + $0x1d8] sm:$0xff] %v4468
        %4549 = vst [vmem:[#allocation3 + $0x1e0] sm:$0xff] %v4469
        %4550 = vst [vmem:[#allocation3 + $0x1e8] sm:$0xff] %v4470
        %4551 = vst [vmem:[#allocation3 + $0x1f0] sm:$0xff] %v4471
        %4552 = vst [vmem:[#allocation3 + $0x1f8] sm:$0xff] %v4472
        %4553 = vst [vmem:[#allocation3 + $0x200] sm:$0xff] %v4473
        %4554 = vst [vmem:[#allocation3 + $0x208] sm:$0xff] %v4474
        %4555 = vst [vmem:[#allocation3 + $0x210] sm:$0xff] %v4475
        %4556 = vst [vmem:[#allocation3 + $0x218] sm:$0xff] %v4476
        %4557 = vst [vmem:[#allocation3 + $0x220] sm:$0xff] %v4477
        %4558 = vst [vmem:[#allocation3 + $0x228] sm:$0xff] %v4478
        %4559 = vst [vmem:[#allocation3 + $0x230] sm:$0xff] %v4479
        %4560 = vst [vmem:[#allocation3 + $0x238] sm:$0xff] %v4480
        %4561 = vst [vmem:[#allocation3 + $0x240] sm:$0xff] %v4481
        %4562 = vst [vmem:[#allocation3 + $0x248] sm:$0xff] %v4482
        %4563 = vst [vmem:[#allocation3 + $0x250] sm:$0xff] %v4483
        %4564 = vst [vmem:[#allocation3 + $0x258] sm:$0xff] %v4484
        %4565 = vst [vmem:[#allocation3 + $0x260] sm:$0xff] %v4485
        %4566 = vst [vmem:[#allocation3 + $0x268] sm:$0xff] %v4486
        %4567 = vst [vmem:[#allocation3 + $0x270] sm:$0xff] %v4487
        %4568 = vst [vmem:[#allocation3 + $0x278] sm:$0xff] %v4488
        %v4569 = vld [vmem:[#allocation2 + $0x14] sm:$0xff]
        %v4570 = vld [vmem:[#allocation2 + $0x1c] sm:$0xff]
        %v4571 = vld [vmem:[#allocation2 + $0x24] sm:$0xff]
        %v4572 = vld [vmem:[#allocation2 + $0x2c] sm:$0xff]
        %v4573 = vld [vmem:[#allocation2 + $0x34] sm:$0xff]
        %v4574 = vld [vmem:[#allocation2 + $0x3c] sm:$0xff]
        %v4575 = vld [vmem:[#allocation2 + $0x44] sm:$0xff]
        %v4576 = vld [vmem:[#allocation2 + $0x4c] sm:$0xff]
        %v4577 = vld [vmem:[#allocation2 + $0x54] sm:$0xff]
        %v4578 = vld [vmem:[#allocation2 + $0x5c] sm:$0xff]
        %v4579 = vld [vmem:[#allocation2 + $0x64] sm:$0xff]
        %v4580 = vld [vmem:[#allocation2 + $0x6c] sm:$0xff]
        %v4581 = vld [vmem:[#allocation2 + $0x74] sm:$0xff]
        %v4582 = vld [vmem:[#allocation2 + $0x7c] sm:$0xff]
        %v4583 = vld [vmem:[#allocation2 + $0x84] sm:$0xff]
        %v4584 = vld [vmem:[#allocation2 + $0x8c] sm:$0xff]
        %v4585 = vld [vmem:[#allocation2 + $0x94] sm:$0xff]
        %v4586 = vld [vmem:[#allocation2 + $0x9c] sm:$0xff]
        %v4587 = vld [vmem:[#allocation2 + $0xa4] sm:$0xff]
        %v4588 = vld [vmem:[#allocation2 + $0xac] sm:$0xff]
        %v4589 = vpack.c.bf16 %v4570, %v4569
        %v4590 = vpack.c.bf16 %v4572, %v4571
        %v4591 = vpack.c.bf16 %v4574, %v4573
        %v4592 = vpack.c.bf16 %v4576, %v4575
        %v4593 = vpack.c.bf16 %v4578, %v4577
        %v4594 = vpack.c.bf16 %v4580, %v4579
        %v4595 = vpack.c.bf16 %v4582, %v4581
        %v4596 = vpack.c.bf16 %v4584, %v4583
        %v4597 = vpack.c.bf16 %v4586, %v4585
        %v4598 = vpack.c.bf16 %v4588, %v4587
        %s4599 = scalar_lea.vmem %s5, 384
        %v4600 = vld [vmem:[%s4599] sm:$0xff]
        %v4601 = vld [vmem:[%s4599 + $0x8] sm:$0xff]
        %v4602 = vld [vmem:[%s4599 + $0x10] sm:$0xff]
        %v4603 = vld [vmem:[%s4599 + $0x18] sm:$0xff]
        %v4604 = vld [vmem:[%s4599 + $0x20] sm:$0xff]
        %v4605 = vld [vmem:[%s4599 + $0x28] sm:$0xff]
        %v4606 = vld [vmem:[%s4599 + $0x30] sm:$0xff]
        %v4607 = vld [vmem:[%s4599 + $0x38] sm:$0xff]
        %v4608 = vld [vmem:[%s4599 + $0x40] sm:$0xff]
        %v4609 = vld [vmem:[%s4599 + $0x48] sm:$0xff]
        %v4610 = vld [vmem:[%s4599 + $0x50] sm:$0xff]
        %v4611 = vld [vmem:[%s4599 + $0x58] sm:$0xff]
        %v4612 = vld [vmem:[%s4599 + $0x60] sm:$0xff]
        %v4613 = vld [vmem:[%s4599 + $0x68] sm:$0xff]
        %v4614 = vld [vmem:[%s4599 + $0x70] sm:$0xff]
        %v4615 = vld [vmem:[%s4599 + $0x78] sm:$0xff]
        %v4632 = vunpack.c.l.b16 %v4600
        %v4633 = vunpack.c.h.b16 %v4600
        %v4634 = vunpack.c.l.b16 %v4601
        %v4635 = vunpack.c.h.b16 %v4601
        %v4636 = vunpack.c.l.b16 %v4602
        %v4637 = vunpack.c.h.b16 %v4602
        %v4638 = vunpack.c.l.b16 %v4603
        %v4639 = vunpack.c.h.b16 %v4603
        %v4640 = vunpack.c.l.b16 %v4604
        %v4641 = vunpack.c.h.b16 %v4604
        %v4642 = vunpack.c.l.b16 %v4605
        %v4643 = vunpack.c.h.b16 %v4605
        %v4644 = vunpack.c.l.b16 %v4606
        %v4645 = vunpack.c.h.b16 %v4606
        %v4646 = vunpack.c.l.b16 %v4607
        %v4647 = vunpack.c.h.b16 %v4607
        %v4648 = vunpack.c.l.b16 %v4608
        %v4649 = vunpack.c.h.b16 %v4608
        %v4650 = vunpack.c.l.b16 %v4609
        %v4651 = vunpack.c.h.b16 %v4609
        %v4652 = vunpack.c.l.b16 %v4610
        %v4653 = vunpack.c.h.b16 %v4610
        %v4654 = vunpack.c.l.b16 %v4611
        %v4655 = vunpack.c.h.b16 %v4611
        %v4656 = vunpack.c.l.b16 %v4612
        %v4657 = vunpack.c.h.b16 %v4612
        %v4658 = vunpack.c.l.b16 %v4613
        %v4659 = vunpack.c.h.b16 %v4613
        %v4660 = vunpack.c.l.b16 %v4614
        %v4661 = vunpack.c.h.b16 %v4614
        %v4662 = vunpack.c.l.b16 %v4615
        %v4663 = vunpack.c.h.b16 %v4615
        %v4664 = vpack.c.b16 %v4636, %v4632
        %v4665 = vpack.c.b16 %v4637, %v4633
        %v4666 = vpack.c.b16 %v4638, %v4634
        %v4667 = vpack.c.b16 %v4639, %v4635
        %v4668 = vpack.c.b16 %v4644, %v4640
        %v4669 = vpack.c.b16 %v4645, %v4641
        %v4670 = vpack.c.b16 %v4646, %v4642
        %v4671 = vpack.c.b16 %v4647, %v4643
        %v4672 = vpack.c.b16 %v4652, %v4648
        %v4673 = vpack.c.b16 %v4653, %v4649
        %v4674 = vpack.c.b16 %v4654, %v4650
        %v4675 = vpack.c.b16 %v4655, %v4651
        %v4676 = vpack.c.b16 %v4660, %v4656
        %v4677 = vpack.c.b16 %v4661, %v4657
        %v4678 = vpack.c.b16 %v4662, %v4658
        %v4679 = vpack.c.b16 %v4663, %v4659
        %v4697 = vsel %vm2714, %v4589, 0
        %v4700 = vsel %vm2714, %v4590, 0
        %v4703 = vsel %vm2714, %v4591, 0
        %v4706 = vsel %vm2714, %v4592, 0
        %v4709 = vsel %vm2714, %v4593, 0
        %v4712 = vsel %vm2714, %v4594, 0
        %v4715 = vsel %vm2714, %v4595, 0
        %v4718 = vsel %vm2714, %v4596, 0
        %v4721 = vsel %vm2714, %v4597, 0
        %v4724 = vsel %vm2714, %v4598, 0
        %4726 = vmatprep.subr.bf16.mxu0 %v4665
        %4727 = vmatpush1.bf16.msra.mxu0 %v4664
        %4728 = vmatprep.subr.bf16.mxu0 %v4669
        %4729 = vmatpush1.bf16.msra.mxu0 %v4668
        %4730 = vmatprep.subr.bf16.mxu0 %v4673
        %4731 = vmatpush1.bf16.msra.mxu0 %v4672
        %4732 = vmatprep.subr.bf16.mxu0 %v4677
        %4733 = vmatpush1.bf16.msra.mxu0 %v4676
        %4734 = vmatprep.subr.bf16.mxu0 0
        %4735 = vmatpush1.bf16.msra.mxu0 0
        %4736 = vmatprep.subr.bf16.mxu0 0
        %4737 = vmatpush1.bf16.msra.mxu0 0
        %4738 = vmatprep.subr.bf16.mxu0 0
        %4739 = vmatpush1.bf16.msra.mxu0 0
        %4740 = vmatprep.subr.bf16.mxu0 0
        %4741 = vmatpush1.bf16.msra.mxu0 0
        %4742 = vmatprep.subr.bf16.mxu0 0
        %4743 = vmatpush1.bf16.msra.mxu0 0
        %4744 = vmatprep.subr.bf16.mxu0 0
        %4745 = vmatpush1.bf16.msra.mxu0 0
        %4746 = vmatprep.subr.bf16.mxu0 0
        %4747 = vmatpush1.bf16.msra.mxu0 0
        %4748 = vmatprep.subr.bf16.mxu0 0
        %4749 = vmatpush1.bf16.msra.mxu0 0
        %4750 = vmatprep.subr.bf16.mxu0 0
        %4751 = vmatpush1.bf16.msra.mxu0 0
        %4752 = vmatprep.subr.bf16.mxu0 0
        %4753 = vmatpush1.bf16.msra.mxu0 0
        %4754 = vmatprep.subr.bf16.mxu0 0
        %4755 = vmatpush1.bf16.msra.mxu0 0
        %4756 = vmatprep.subr.bf16.mxu0 0
        %4757 = vmatpush1.bf16.msra.mxu0 0
        %4758 = vmatprep.mubr.bf16.mxu0 0
        %4759 = vmatmul.mubr.bf16.gmra.mrb[0].mxu0 %v4697
        %v4760 = vpop.f32.mrb[0].mxu0
        %v4761 = vadd.f32 0.0, %v4760
        %v4762 = vpop.f32.mrb[0].mxu0
        %v4763 = vadd.f32 0.0, %v4762
        %v4764 = vpop.f32.mrb[0].mxu0
        %v4765 = vadd.f32 0.0, %v4764
        %v4766 = vpop.f32.mrb[0].mxu0
        %v4767 = vadd.f32 0.0, %v4766
        %4768 = vmatprep.mubr.bf16.mxu0 0
        %4769 = vmatmul.mubr.bf16.gmra.mrb[0].mxu0 %v4700
        %v4770 = vpop.f32.mrb[0].mxu0
        %v4771 = vadd.f32 0.0, %v4770
        %v4772 = vpop.f32.mrb[0].mxu0
        %v4773 = vadd.f32 0.0, %v4772
        %v4774 = vpop.f32.mrb[0].mxu0
        %v4775 = vadd.f32 0.0, %v4774
        %v4776 = vpop.f32.mrb[0].mxu0
        %v4777 = vadd.f32 0.0, %v4776
        %4778 = vmatprep.mubr.bf16.mxu0 0
        %4779 = vmatmul.mubr.bf16.gmra.mrb[0].mxu0 %v4703
        %v4780 = vpop.f32.mrb[0].mxu0
        %v4781 = vadd.f32 0.0, %v4780
        %v4782 = vpop.f32.mrb[0].mxu0
        %v4783 = vadd.f32 0.0, %v4782
        %v4784 = vpop.f32.mrb[0].mxu0
        %v4785 = vadd.f32 0.0, %v4784
        %v4786 = vpop.f32.mrb[0].mxu0
        %v4787 = vadd.f32 0.0, %v4786
        %4788 = vmatprep.mubr.bf16.mxu0 0
        %4789 = vmatmul.mubr.bf16.gmra.mrb[0].mxu0 %v4706
        %v4790 = vpop.f32.mrb[0].mxu0
        %v4791 = vadd.f32 0.0, %v4790
        %v4792 = vpop.f32.mrb[0].mxu0
        %v4793 = vadd.f32 0.0, %v4792
        %v4794 = vpop.f32.mrb[0].mxu0
        %v4795 = vadd.f32 0.0, %v4794
        %v4796 = vpop.f32.mrb[0].mxu0
        %v4797 = vadd.f32 0.0, %v4796
        %4798 = vmatprep.mubr.bf16.mxu0 0
        %4799 = vmatmul.mubr.bf16.gmra.mrb[0].mxu0 %v4709
        %v4800 = vpop.f32.mrb[0].mxu0
        %v4801 = vadd.f32 0.0, %v4800
        %v4802 = vpop.f32.mrb[0].mxu0
        %v4803 = vadd.f32 0.0, %v4802
        %v4804 = vpop.f32.mrb[0].mxu0
        %v4805 = vadd.f32 0.0, %v4804
        %v4806 = vpop.f32.mrb[0].mxu0
        %v4807 = vadd.f32 0.0, %v4806
        %4808 = vmatprep.mubr.bf16.mxu0 0
        %4809 = vmatmul.mubr.bf16.gmra.mrb[0].mxu0 %v4712
        %v4810 = vpop.f32.mrb[0].mxu0
        %v4811 = vadd.f32 0.0, %v4810
        %v4812 = vpop.f32.mrb[0].mxu0
        %v4813 = vadd.f32 0.0, %v4812
        %v4814 = vpop.f32.mrb[0].mxu0
        %v4815 = vadd.f32 0.0, %v4814
        %v4816 = vpop.f32.mrb[0].mxu0
        %v4817 = vadd.f32 0.0, %v4816
        %4818 = vmatprep.mubr.bf16.mxu0 0
        %4819 = vmatmul.mubr.bf16.gmra.mrb[0].mxu0 %v4715
        %v4820 = vpop.f32.mrb[0].mxu0
        %v4821 = vadd.f32 0.0, %v4820
        %v4822 = vpop.f32.mrb[0].mxu0
        %v4823 = vadd.f32 0.0, %v4822
        %v4824 = vpop.f32.mrb[0].mxu0
        %v4825 = vadd.f32 0.0, %v4824
        %v4826 = vpop.f32.mrb[0].mxu0
        %v4827 = vadd.f32 0.0, %v4826
        %4828 = vmatprep.mubr.bf16.mxu0 0
        %4829 = vmatmul.mubr.bf16.gmra.mrb[0].mxu0 %v4718
        %v4830 = vpop.f32.mrb[0].mxu0
        %v4831 = vadd.f32 0.0, %v4830
        %v4832 = vpop.f32.mrb[0].mxu0
        %v4833 = vadd.f32 0.0, %v4832
        %v4834 = vpop.f32.mrb[0].mxu0
        %v4835 = vadd.f32 0.0, %v4834
        %v4836 = vpop.f32.mrb[0].mxu0
        %v4837 = vadd.f32 0.0, %v4836
        %4838 = vmatprep.mubr.bf16.mxu0 0
        %4839 = vmatmul.mubr.bf16.gmra.mrb[0].mxu0 %v4721
        %v4840 = vpop.f32.mrb[0].mxu0
        %v4841 = vadd.f32 0.0, %v4840
        %v4842 = vpop.f32.mrb[0].mxu0
        %v4843 = vadd.f32 0.0, %v4842
        %v4844 = vpop.f32.mrb[0].mxu0
        %v4845 = vadd.f32 0.0, %v4844
        %v4846 = vpop.f32.mrb[0].mxu0
        %v4847 = vadd.f32 0.0, %v4846
        %4848 = vmatprep.mubr.bf16.mxu0 0
        %4849 = vmatmul.mubr.bf16.gmra.mrb[0].mxu0 %v4724
        %v4850 = vpop.f32.mrb[0].mxu0
        %v4851 = vadd.f32 0.0, %v4850
        %v4852 = vpop.f32.mrb[0].mxu0
        %v4853 = vadd.f32 0.0, %v4852
        %v4854 = vpop.f32.mrb[0].mxu0
        %v4855 = vadd.f32 0.0, %v4854
        %v4856 = vpop.f32.mrb[0].mxu0
        %v4857 = vadd.f32 0.0, %v4856
        %4858 = vdwg.mxu0
        %4859 = vmatprep.subr.bf16.mxu0 %v4667
        %4860 = vmatpush1.bf16.msra.mxu0 %v4666
        %4861 = vmatprep.subr.bf16.mxu0 %v4671
        %4862 = vmatpush1.bf16.msra.mxu0 %v4670
        %4863 = vmatprep.subr.bf16.mxu0 %v4675
        %4864 = vmatpush1.bf16.msra.mxu0 %v4674
        %4865 = vmatprep.subr.bf16.mxu0 %v4679
        %4866 = vmatpush1.bf16.msra.mxu0 %v4678
        %4867 = vmatprep.subr.bf16.mxu0 0
        %4868 = vmatpush1.bf16.msra.mxu0 0
        %4869 = vmatprep.subr.bf16.mxu0 0
        %4870 = vmatpush1.bf16.msra.mxu0 0
        %4871 = vmatprep.subr.bf16.mxu0 0
        %4872 = vmatpush1.bf16.msra.mxu0 0
        %4873 = vmatprep.subr.bf16.mxu0 0
        %4874 = vmatpush1.bf16.msra.mxu0 0
        %4875 = vmatprep.subr.bf16.mxu0 0
        %4876 = vmatpush1.bf16.msra.mxu0 0
        %4877 = vmatprep.subr.bf16.mxu0 0
        %4878 = vmatpush1.bf16.msra.mxu0 0
        %4879 = vmatprep.subr.bf16.mxu0 0
        %4880 = vmatpush1.bf16.msra.mxu0 0
        %4881 = vmatprep.subr.bf16.mxu0 0
        %4882 = vmatpush1.bf16.msra.mxu0 0
        %4883 = vmatprep.subr.bf16.mxu0 0
        %4884 = vmatpush1.bf16.msra.mxu0 0
        %4885 = vmatprep.subr.bf16.mxu0 0
        %4886 = vmatpush1.bf16.msra.mxu0 0
        %4887 = vmatprep.subr.bf16.mxu0 0
        %4888 = vmatpush1.bf16.msra.mxu0 0
        %4889 = vmatprep.subr.bf16.mxu0 0
        %4890 = vmatpush1.bf16.msra.mxu0 0
        %4891 = vmatprep.mubr.bf16.mxu0 0
        %4892 = vmatmul.mubr.bf16.gmra.mrb[0].mxu0 %v4697
        %v4893 = vpop.f32.mrb[0].mxu0
        %v4894 = vadd.f32 0.0, %v4893
        %v4895 = vpop.f32.mrb[0].mxu0
        %v4896 = vadd.f32 0.0, %v4895
        %v4897 = vpop.f32.mrb[0].mxu0
        %v4898 = vadd.f32 0.0, %v4897
        %v4899 = vpop.f32.mrb[0].mxu0
        %v4900 = vadd.f32 0.0, %v4899
        %4901 = vmatprep.mubr.bf16.mxu0 0
        %4902 = vmatmul.mubr.bf16.gmra.mrb[0].mxu0 %v4700
        %v4903 = vpop.f32.mrb[0].mxu0
        %v4904 = vadd.f32 0.0, %v4903
        %v4905 = vpop.f32.mrb[0].mxu0
        %v4906 = vadd.f32 0.0, %v4905
        %v4907 = vpop.f32.mrb[0].mxu0
        %v4908 = vadd.f32 0.0, %v4907
        %v4909 = vpop.f32.mrb[0].mxu0
        %v4910 = vadd.f32 0.0, %v4909
        %4911 = vmatprep.mubr.bf16.mxu0 0
        %4912 = vmatmul.mubr.bf16.gmra.mrb[0].mxu0 %v4703
        %v4913 = vpop.f32.mrb[0].mxu0
        %v4914 = vadd.f32 0.0, %v4913
        %v4915 = vpop.f32.mrb[0].mxu0
        %v4916 = vadd.f32 0.0, %v4915
        %v4917 = vpop.f32.mrb[0].mxu0
        %v4918 = vadd.f32 0.0, %v4917
        %v4919 = vpop.f32.mrb[0].mxu0
        %v4920 = vadd.f32 0.0, %v4919
        %4921 = vmatprep.mubr.bf16.mxu0 0
        %4922 = vmatmul.mubr.bf16.gmra.mrb[0].mxu0 %v4706
        %v4923 = vpop.f32.mrb[0].mxu0
        %v4924 = vadd.f32 0.0, %v4923
        %v4925 = vpop.f32.mrb[0].mxu0
        %v4926 = vadd.f32 0.0, %v4925
        %v4927 = vpop.f32.mrb[0].mxu0
        %v4928 = vadd.f32 0.0, %v4927
        %v4929 = vpop.f32.mrb[0].mxu0
        %v4930 = vadd.f32 0.0, %v4929
        %4931 = vmatprep.mubr.bf16.mxu0 0
        %4932 = vmatmul.mubr.bf16.gmra.mrb[0].mxu0 %v4709
        %v4933 = vpop.f32.mrb[0].mxu0
        %v4934 = vadd.f32 0.0, %v4933
        %v4935 = vpop.f32.mrb[0].mxu0
        %v4936 = vadd.f32 0.0, %v4935
        %v4937 = vpop.f32.mrb[0].mxu0
        %v4938 = vadd.f32 0.0, %v4937
        %v4939 = vpop.f32.mrb[0].mxu0
        %v4940 = vadd.f32 0.0, %v4939
        %4941 = vmatprep.mubr.bf16.mxu0 0
        %4942 = vmatmul.mubr.bf16.gmra.mrb[0].mxu0 %v4712
        %v4943 = vpop.f32.mrb[0].mxu0
        %v4944 = vadd.f32 0.0, %v4943
        %v4945 = vpop.f32.mrb[0].mxu0
        %v4946 = vadd.f32 0.0, %v4945
        %v4947 = vpop.f32.mrb[0].mxu0
        %v4948 = vadd.f32 0.0, %v4947
        %v4949 = vpop.f32.mrb[0].mxu0
        %v4950 = vadd.f32 0.0, %v4949
        %4951 = vmatprep.mubr.bf16.mxu0 0
        %4952 = vmatmul.mubr.bf16.gmra.mrb[0].mxu0 %v4715
        %v4953 = vpop.f32.mrb[0].mxu0
        %v4954 = vadd.f32 0.0, %v4953
        %v4955 = vpop.f32.mrb[0].mxu0
        %v4956 = vadd.f32 0.0, %v4955
        %v4957 = vpop.f32.mrb[0].mxu0
        %v4958 = vadd.f32 0.0, %v4957
        %v4959 = vpop.f32.mrb[0].mxu0
        %v4960 = vadd.f32 0.0, %v4959
        %4961 = vmatprep.mubr.bf16.mxu0 0
        %4962 = vmatmul.mubr.bf16.gmra.mrb[0].mxu0 %v4718
        %v4963 = vpop.f32.mrb[0].mxu0
        %v4964 = vadd.f32 0.0, %v4963
        %v4965 = vpop.f32.mrb[0].mxu0
        %v4966 = vadd.f32 0.0, %v4965
        %v4967 = vpop.f32.mrb[0].mxu0
        %v4968 = vadd.f32 0.0, %v4967
        %v4969 = vpop.f32.mrb[0].mxu0
        %v4970 = vadd.f32 0.0, %v4969
        %4971 = vmatprep.mubr.bf16.mxu0 0
        %4972 = vmatmul.mubr.bf16.gmra.mrb[0].mxu0 %v4721
        %v4973 = vpop.f32.mrb[0].mxu0
        %v4974 = vadd.f32 0.0, %v4973
        %v4975 = vpop.f32.mrb[0].mxu0
        %v4976 = vadd.f32 0.0, %v4975
        %v4977 = vpop.f32.mrb[0].mxu0
        %v4978 = vadd.f32 0.0, %v4977
        %v4979 = vpop.f32.mrb[0].mxu0
        %v4980 = vadd.f32 0.0, %v4979
        %4981 = vmatprep.mubr.bf16.mxu0 0
        %4982 = vmatmul.mubr.bf16.gmra.mrb[0].mxu0 %v4724
        %v4983 = vpop.f32.mrb[0].mxu0
        %v4984 = vadd.f32 0.0, %v4983
        %v4985 = vpop.f32.mrb[0].mxu0
        %v4986 = vadd.f32 0.0, %v4985
        %v4987 = vpop.f32.mrb[0].mxu0
        %v4988 = vadd.f32 0.0, %v4987
        %v4989 = vpop.f32.mrb[0].mxu0
        %v4990 = vadd.f32 0.0, %v4989
        %4991 = vdwg.mxu0
        %v4992 = vld [vmem:[#allocation3] sm:$0xff]
        %v4993 = vld [vmem:[#allocation3 + $0x8] sm:$0xff]
        %v4994 = vld [vmem:[#allocation3 + $0x10] sm:$0xff]
        %v4995 = vld [vmem:[#allocation3 + $0x18] sm:$0xff]
        %v4996 = vld [vmem:[#allocation3 + $0x20] sm:$0xff]
        %v4997 = vld [vmem:[#allocation3 + $0x28] sm:$0xff]
        %v4998 = vld [vmem:[#allocation3 + $0x30] sm:$0xff]
        %v4999 = vld [vmem:[#allocation3 + $0x38] sm:$0xff]
        %v5000 = vld [vmem:[#allocation3 + $0x40] sm:$0xff]
        %v5001 = vld [vmem:[#allocation3 + $0x48] sm:$0xff]
        %v5002 = vld [vmem:[#allocation3 + $0x50] sm:$0xff]
        %v5003 = vld [vmem:[#allocation3 + $0x58] sm:$0xff]
        %v5004 = vld [vmem:[#allocation3 + $0x60] sm:$0xff]
        %v5005 = vld [vmem:[#allocation3 + $0x68] sm:$0xff]
        %v5006 = vld [vmem:[#allocation3 + $0x70] sm:$0xff]
        %v5007 = vld [vmem:[#allocation3 + $0x78] sm:$0xff]
        %v5008 = vld [vmem:[#allocation3 + $0x80] sm:$0xff]
        %v5009 = vld [vmem:[#allocation3 + $0x88] sm:$0xff]
        %v5010 = vld [vmem:[#allocation3 + $0x90] sm:$0xff]
        %v5011 = vld [vmem:[#allocation3 + $0x98] sm:$0xff]
        %v5012 = vld [vmem:[#allocation3 + $0xa0] sm:$0xff]
        %v5013 = vld [vmem:[#allocation3 + $0xa8] sm:$0xff]
        %v5014 = vld [vmem:[#allocation3 + $0xb0] sm:$0xff]
        %v5015 = vld [vmem:[#allocation3 + $0xb8] sm:$0xff]
        %v5016 = vld [vmem:[#allocation3 + $0xc0] sm:$0xff]
        %v5017 = vld [vmem:[#allocation3 + $0xc8] sm:$0xff]
        %v5018 = vld [vmem:[#allocation3 + $0xd0] sm:$0xff]
        %v5019 = vld [vmem:[#allocation3 + $0xd8] sm:$0xff]
        %v5020 = vld [vmem:[#allocation3 + $0xe0] sm:$0xff]
        %v5021 = vld [vmem:[#allocation3 + $0xe8] sm:$0xff]
        %v5022 = vld [vmem:[#allocation3 + $0xf0] sm:$0xff]
        %v5023 = vld [vmem:[#allocation3 + $0xf8] sm:$0xff]
        %v5024 = vld [vmem:[#allocation3 + $0x100] sm:$0xff]
        %v5025 = vld [vmem:[#allocation3 + $0x108] sm:$0xff]
        %v5026 = vld [vmem:[#allocation3 + $0x110] sm:$0xff]
        %v5027 = vld [vmem:[#allocation3 + $0x118] sm:$0xff]
        %v5028 = vld [vmem:[#allocation3 + $0x120] sm:$0xff]
        %v5029 = vld [vmem:[#allocation3 + $0x128] sm:$0xff]
        %v5030 = vld [vmem:[#allocation3 + $0x130] sm:$0xff]
        %v5031 = vld [vmem:[#allocation3 + $0x138] sm:$0xff]
        %v5032 = vld [vmem:[#allocation3 + $0x140] sm:$0xff]
        %v5033 = vld [vmem:[#allocation3 + $0x148] sm:$0xff]
        %v5034 = vld [vmem:[#allocation3 + $0x150] sm:$0xff]
        %v5035 = vld [vmem:[#allocation3 + $0x158] sm:$0xff]
        %v5036 = vld [vmem:[#allocation3 + $0x160] sm:$0xff]
        %v5037 = vld [vmem:[#allocation3 + $0x168] sm:$0xff]
        %v5038 = vld [vmem:[#allocation3 + $0x170] sm:$0xff]
        %v5039 = vld [vmem:[#allocation3 + $0x178] sm:$0xff]
        %v5040 = vld [vmem:[#allocation3 + $0x180] sm:$0xff]
        %v5041 = vld [vmem:[#allocation3 + $0x188] sm:$0xff]
        %v5042 = vld [vmem:[#allocation3 + $0x190] sm:$0xff]
        %v5043 = vld [vmem:[#allocation3 + $0x198] sm:$0xff]
        %v5044 = vld [vmem:[#allocation3 + $0x1a0] sm:$0xff]
        %v5045 = vld [vmem:[#allocation3 + $0x1a8] sm:$0xff]
        %v5046 = vld [vmem:[#allocation3 + $0x1b0] sm:$0xff]
        %v5047 = vld [vmem:[#allocation3 + $0x1b8] sm:$0xff]
        %v5048 = vld [vmem:[#allocation3 + $0x1c0] sm:$0xff]
        %v5049 = vld [vmem:[#allocation3 + $0x1c8] sm:$0xff]
        %v5050 = vld [vmem:[#allocation3 + $0x1d0] sm:$0xff]
        %v5051 = vld [vmem:[#allocation3 + $0x1d8] sm:$0xff]
        %v5052 = vld [vmem:[#allocation3 + $0x1e0] sm:$0xff]
        %v5053 = vld [vmem:[#allocation3 + $0x1e8] sm:$0xff]
        %v5054 = vld [vmem:[#allocation3 + $0x1f0] sm:$0xff]
        %v5055 = vld [vmem:[#allocation3 + $0x1f8] sm:$0xff]
        %v5056 = vld [vmem:[#allocation3 + $0x200] sm:$0xff]
        %v5057 = vld [vmem:[#allocation3 + $0x208] sm:$0xff]
        %v5058 = vld [vmem:[#allocation3 + $0x210] sm:$0xff]
        %v5059 = vld [vmem:[#allocation3 + $0x218] sm:$0xff]
        %v5060 = vld [vmem:[#allocation3 + $0x220] sm:$0xff]
        %v5061 = vld [vmem:[#allocation3 + $0x228] sm:$0xff]
        %v5062 = vld [vmem:[#allocation3 + $0x230] sm:$0xff]
        %v5063 = vld [vmem:[#allocation3 + $0x238] sm:$0xff]
        %v5064 = vld [vmem:[#allocation3 + $0x240] sm:$0xff]
        %v5065 = vld [vmem:[#allocation3 + $0x248] sm:$0xff]
        %v5066 = vld [vmem:[#allocation3 + $0x250] sm:$0xff]
        %v5067 = vld [vmem:[#allocation3 + $0x258] sm:$0xff]
        %v5068 = vld [vmem:[#allocation3 + $0x260] sm:$0xff]
        %v5069 = vld [vmem:[#allocation3 + $0x268] sm:$0xff]
        %v5070 = vld [vmem:[#allocation3 + $0x270] sm:$0xff]
        %v5071 = vld [vmem:[#allocation3 + $0x278] sm:$0xff]
        %v5072 = vadd.f32 %v4992, %v4761
        %v5073 = vadd.f32 %v4993, %v4763
        %v5074 = vadd.f32 %v4994, %v4894
        %v5075 = vadd.f32 %v4995, %v4896
        %v5076 = vadd.f32 %v4996, %v4765
        %v5077 = vadd.f32 %v4997, %v4767
        %v5078 = vadd.f32 %v4998, %v4898
        %v5079 = vadd.f32 %v4999, %v4900
        %v5080 = vadd.f32 %v5000, %v4771
        %v5081 = vadd.f32 %v5001, %v4773
        %v5082 = vadd.f32 %v5002, %v4904
        %v5083 = vadd.f32 %v5003, %v4906
        %v5084 = vadd.f32 %v5004, %v4775
        %v5085 = vadd.f32 %v5005, %v4777
        %v5086 = vadd.f32 %v5006, %v4908
        %v5087 = vadd.f32 %v5007, %v4910
        %v5088 = vadd.f32 %v5008, %v4781
        %v5089 = vadd.f32 %v5009, %v4783
        %v5090 = vadd.f32 %v5010, %v4914
        %v5091 = vadd.f32 %v5011, %v4916
        %v5092 = vadd.f32 %v5012, %v4785
        %v5093 = vadd.f32 %v5013, %v4787
        %v5094 = vadd.f32 %v5014, %v4918
        %v5095 = vadd.f32 %v5015, %v4920
        %v5096 = vadd.f32 %v5016, %v4791
        %v5097 = vadd.f32 %v5017, %v4793
        %v5098 = vadd.f32 %v5018, %v4924
        %v5099 = vadd.f32 %v5019, %v4926
        %v5100 = vadd.f32 %v5020, %v4795
        %v5101 = vadd.f32 %v5021, %v4797
        %v5102 = vadd.f32 %v5022, %v4928
        %v5103 = vadd.f32 %v5023, %v4930
        %v5104 = vadd.f32 %v5024, %v4801
        %v5105 = vadd.f32 %v5025, %v4803
        %v5106 = vadd.f32 %v5026, %v4934
        %v5107 = vadd.f32 %v5027, %v4936
        %v5108 = vadd.f32 %v5028, %v4805
        %v5109 = vadd.f32 %v5029, %v4807
        %v5110 = vadd.f32 %v5030, %v4938
        %v5111 = vadd.f32 %v5031, %v4940
        %v5112 = vadd.f32 %v5032, %v4811
        %v5113 = vadd.f32 %v5033, %v4813
        %v5114 = vadd.f32 %v5034, %v4944
        %v5115 = vadd.f32 %v5035, %v4946
        %v5116 = vadd.f32 %v5036, %v4815
        %v5117 = vadd.f32 %v5037, %v4817
        %v5118 = vadd.f32 %v5038, %v4948
        %v5119 = vadd.f32 %v5039, %v4950
        %v5120 = vadd.f32 %v5040, %v4821
        %v5121 = vadd.f32 %v5041, %v4823
        %v5122 = vadd.f32 %v5042, %v4954
        %v5123 = vadd.f32 %v5043, %v4956
        %v5124 = vadd.f32 %v5044, %v4825
        %v5125 = vadd.f32 %v5045, %v4827
        %v5126 = vadd.f32 %v5046, %v4958
        %v5127 = vadd.f32 %v5047, %v4960
        %v5128 = vadd.f32 %v5048, %v4831
        %v5129 = vadd.f32 %v5049, %v4833
        %v5130 = vadd.f32 %v5050, %v4964
        %v5131 = vadd.f32 %v5051, %v4966
        %v5132 = vadd.f32 %v5052, %v4835
        %v5133 = vadd.f32 %v5053, %v4837
        %v5134 = vadd.f32 %v5054, %v4968
        %v5135 = vadd.f32 %v5055, %v4970
        %v5136 = vadd.f32 %v5056, %v4841
        %v5137 = vadd.f32 %v5057, %v4843
        %v5138 = vadd.f32 %v5058, %v4974
        %v5139 = vadd.f32 %v5059, %v4976
        %v5140 = vadd.f32 %v5060, %v4845
        %v5141 = vadd.f32 %v5061, %v4847
        %v5142 = vadd.f32 %v5062, %v4978
        %v5143 = vadd.f32 %v5063, %v4980
        %v5144 = vadd.f32 %v5064, %v4851
        %v5145 = vadd.f32 %v5065, %v4853
        %v5146 = vadd.f32 %v5066, %v4984
        %v5147 = vadd.f32 %v5067, %v4986
        %v5148 = vadd.f32 %v5068, %v4855
        %v5149 = vadd.f32 %v5069, %v4857
        %v5150 = vadd.f32 %v5070, %v4988
        %v5151 = vadd.f32 %v5071, %v4990
        %5152 = vst [vmem:[#allocation3] sm:$0xff] %v5072
        %5153 = vst [vmem:[#allocation3 + $0x8] sm:$0xff] %v5073
        %5154 = vst [vmem:[#allocation3 + $0x10] sm:$0xff] %v5074
        %5155 = vst [vmem:[#allocation3 + $0x18] sm:$0xff] %v5075
        %5156 = vst [vmem:[#allocation3 + $0x20] sm:$0xff] %v5076
        %5157 = vst [vmem:[#allocation3 + $0x28] sm:$0xff] %v5077
        %5158 = vst [vmem:[#allocation3 + $0x30] sm:$0xff] %v5078
        %5159 = vst [vmem:[#allocation3 + $0x38] sm:$0xff] %v5079
        %5160 = vst [vmem:[#allocation3 + $0x40] sm:$0xff] %v5080
        %5161 = vst [vmem:[#allocation3 + $0x48] sm:$0xff] %v5081
        %5162 = vst [vmem:[#allocation3 + $0x50] sm:$0xff] %v5082
        %5163 = vst [vmem:[#allocation3 + $0x58] sm:$0xff] %v5083
        %5164 = vst [vmem:[#allocation3 + $0x60] sm:$0xff] %v5084
        %5165 = vst [vmem:[#allocation3 + $0x68] sm:$0xff] %v5085
        %5166 = vst [vmem:[#allocation3 + $0x70] sm:$0xff] %v5086
        %5167 = vst [vmem:[#allocation3 + $0x78] sm:$0xff] %v5087
        %5168 = vst [vmem:[#allocation3 + $0x80] sm:$0xff] %v5088
        %5169 = vst [vmem:[#allocation3 + $0x88] sm:$0xff] %v5089
        %5170 = vst [vmem:[#allocation3 + $0x90] sm:$0xff] %v5090
        %5171 = vst [vmem:[#allocation3 + $0x98] sm:$0xff] %v5091
        %5172 = vst [vmem:[#allocation3 + $0xa0] sm:$0xff] %v5092
        %5173 = vst [vmem:[#allocation3 + $0xa8] sm:$0xff] %v5093
        %5174 = vst [vmem:[#allocation3 + $0xb0] sm:$0xff] %v5094
        %5175 = vst [vmem:[#allocation3 + $0xb8] sm:$0xff] %v5095
        %5176 = vst [vmem:[#allocation3 + $0xc0] sm:$0xff] %v5096
        %5177 = vst [vmem:[#allocation3 + $0xc8] sm:$0xff] %v5097
        %5178 = vst [vmem:[#allocation3 + $0xd0] sm:$0xff] %v5098
        %5179 = vst [vmem:[#allocation3 + $0xd8] sm:$0xff] %v5099
        %5180 = vst [vmem:[#allocation3 + $0xe0] sm:$0xff] %v5100
        %5181 = vst [vmem:[#allocation3 + $0xe8] sm:$0xff] %v5101
        %5182 = vst [vmem:[#allocation3 + $0xf0] sm:$0xff] %v5102
        %5183 = vst [vmem:[#allocation3 + $0xf8] sm:$0xff] %v5103
        %5184 = vst [vmem:[#allocation3 + $0x100] sm:$0xff] %v5104
        %5185 = vst [vmem:[#allocation3 + $0x108] sm:$0xff] %v5105
        %5186 = vst [vmem:[#allocation3 + $0x110] sm:$0xff] %v5106
        %5187 = vst [vmem:[#allocation3 + $0x118] sm:$0xff] %v5107
        %5188 = vst [vmem:[#allocation3 + $0x120] sm:$0xff] %v5108
        %5189 = vst [vmem:[#allocation3 + $0x128] sm:$0xff] %v5109
        %5190 = vst [vmem:[#allocation3 + $0x130] sm:$0xff] %v5110
        %5191 = vst [vmem:[#allocation3 + $0x138] sm:$0xff] %v5111
        %5192 = vst [vmem:[#allocation3 + $0x140] sm:$0xff] %v5112
        %5193 = vst [vmem:[#allocation3 + $0x148] sm:$0xff] %v5113
        %5194 = vst [vmem:[#allocation3 + $0x150] sm:$0xff] %v5114
        %5195 = vst [vmem:[#allocation3 + $0x158] sm:$0xff] %v5115
        %5196 = vst [vmem:[#allocation3 + $0x160] sm:$0xff] %v5116
        %5197 = vst [vmem:[#allocation3 + $0x168] sm:$0xff] %v5117
        %5198 = vst [vmem:[#allocation3 + $0x170] sm:$0xff] %v5118
        %5199 = vst [vmem:[#allocation3 + $0x178] sm:$0xff] %v5119
        %5200 = vst [vmem:[#allocation3 + $0x180] sm:$0xff] %v5120
        %5201 = vst [vmem:[#allocation3 + $0x188] sm:$0xff] %v5121
        %5202 = vst [vmem:[#allocation3 + $0x190] sm:$0xff] %v5122
        %5203 = vst [vmem:[#allocation3 + $0x198] sm:$0xff] %v5123
        %5204 = vst [vmem:[#allocation3 + $0x1a0] sm:$0xff] %v5124
        %5205 = vst [vmem:[#allocation3 + $0x1a8] sm:$0xff] %v5125
        %5206 = vst [vmem:[#allocation3 + $0x1b0] sm:$0xff] %v5126
        %5207 = vst [vmem:[#allocation3 + $0x1b8] sm:$0xff] %v5127
        %5208 = vst [vmem:[#allocation3 + $0x1c0] sm:$0xff] %v5128
        %5209 = vst [vmem:[#allocation3 + $0x1c8] sm:$0xff] %v5129
        %5210 = vst [vmem:[#allocation3 + $0x1d0] sm:$0xff] %v5130
        %5211 = vst [vmem:[#allocation3 + $0x1d8] sm:$0xff] %v5131
        %5212 = vst [vmem:[#allocation3 + $0x1e0] sm:$0xff] %v5132
        %5213 = vst [vmem:[#allocation3 + $0x1e8] sm:$0xff] %v5133
        %5214 = vst [vmem:[#allocation3 + $0x1f0] sm:$0xff] %v5134
        %5215 = vst [vmem:[#allocation3 + $0x1f8] sm:$0xff] %v5135
        %5216 = vst [vmem:[#allocation3 + $0x200] sm:$0xff] %v5136
        %5217 = vst [vmem:[#allocation3 + $0x208] sm:$0xff] %v5137
        %5218 = vst [vmem:[#allocation3 + $0x210] sm:$0xff] %v5138
        %5219 = vst [vmem:[#allocation3 + $0x218] sm:$0xff] %v5139
        %5220 = vst [vmem:[#allocation3 + $0x220] sm:$0xff] %v5140
        %5221 = vst [vmem:[#allocation3 + $0x228] sm:$0xff] %v5141
        %5222 = vst [vmem:[#allocation3 + $0x230] sm:$0xff] %v5142
        %5223 = vst [vmem:[#allocation3 + $0x238] sm:$0xff] %v5143
        %5224 = vst [vmem:[#allocation3 + $0x240] sm:$0xff] %v5144
        %5225 = vst [vmem:[#allocation3 + $0x248] sm:$0xff] %v5145
        %5226 = vst [vmem:[#allocation3 + $0x250] sm:$0xff] %v5146
        %5227 = vst [vmem:[#allocation3 + $0x258] sm:$0xff] %v5147
        %5228 = vst [vmem:[#allocation3 + $0x260] sm:$0xff] %v5148
        %5229 = vst [vmem:[#allocation3 + $0x268] sm:$0xff] %v5149
        %5230 = vst [vmem:[#allocation3 + $0x270] sm:$0xff] %v5150
        %5231 = vst [vmem:[#allocation3 + $0x278] sm:$0xff] %v5151
        %v5232 = vld [vmem:[#allocation2 + $0x15] sm:$0xff]
        %v5233 = vld [vmem:[#allocation2 + $0x1d] sm:$0xff]
        %v5234 = vld [vmem:[#allocation2 + $0x25] sm:$0xff]
        %v5235 = vld [vmem:[#allocation2 + $0x2d] sm:$0xff]
        %v5236 = vld [vmem:[#allocation2 + $0x35] sm:$0xff]
        %v5237 = vld [vmem:[#allocation2 + $0x3d] sm:$0xff]
        %v5238 = vld [vmem:[#allocation2 + $0x45] sm:$0xff]
        %v5239 = vld [vmem:[#allocation2 + $0x4d] sm:$0xff]
        %v5240 = vld [vmem:[#allocation2 + $0x55] sm:$0xff]
        %v5241 = vld [vmem:[#allocation2 + $0x5d] sm:$0xff]
        %v5242 = vld [vmem:[#allocation2 + $0x65] sm:$0xff]
        %v5243 = vld [vmem:[#allocation2 + $0x6d] sm:$0xff]
        %v5244 = vld [vmem:[#allocation2 + $0x75] sm:$0xff]
        %v5245 = vld [vmem:[#allocation2 + $0x7d] sm:$0xff]
        %v5246 = vld [vmem:[#allocation2 + $0x85] sm:$0xff]
        %v5247 = vld [vmem:[#allocation2 + $0x8d] sm:$0xff]
        %v5248 = vld [vmem:[#allocation2 + $0x95] sm:$0xff]
        %v5249 = vld [vmem:[#allocation2 + $0x9d] sm:$0xff]
        %v5250 = vld [vmem:[#allocation2 + $0xa5] sm:$0xff]
        %v5251 = vld [vmem:[#allocation2 + $0xad] sm:$0xff]
        %v5252 = vpack.c.bf16 %v5233, %v5232
        %v5253 = vpack.c.bf16 %v5235, %v5234
        %v5254 = vpack.c.bf16 %v5237, %v5236
        %v5255 = vpack.c.bf16 %v5239, %v5238
        %v5256 = vpack.c.bf16 %v5241, %v5240
        %v5257 = vpack.c.bf16 %v5243, %v5242
        %v5258 = vpack.c.bf16 %v5245, %v5244
        %v5259 = vpack.c.bf16 %v5247, %v5246
        %v5260 = vpack.c.bf16 %v5249, %v5248
        %v5261 = vpack.c.bf16 %v5251, %v5250
        %s5262 = scalar_lea.vmem %s5, 512
        %v5263 = vld [vmem:[%s5262] sm:$0xff]
        %v5264 = vld [vmem:[%s5262 + $0x8] sm:$0xff]
        %v5265 = vld [vmem:[%s5262 + $0x10] sm:$0xff]
        %v5266 = vld [vmem:[%s5262 + $0x18] sm:$0xff]
        %v5267 = vld [vmem:[%s5262 + $0x20] sm:$0xff]
        %v5268 = vld [vmem:[%s5262 + $0x28] sm:$0xff]
        %v5269 = vld [vmem:[%s5262 + $0x30] sm:$0xff]
        %v5270 = vld [vmem:[%s5262 + $0x38] sm:$0xff]
        %v5271 = vld [vmem:[%s5262 + $0x40] sm:$0xff]
        %v5272 = vld [vmem:[%s5262 + $0x48] sm:$0xff]
        %v5273 = vld [vmem:[%s5262 + $0x50] sm:$0xff]
        %v5274 = vld [vmem:[%s5262 + $0x58] sm:$0xff]
        %v5275 = vld [vmem:[%s5262 + $0x60] sm:$0xff]
        %v5276 = vld [vmem:[%s5262 + $0x68] sm:$0xff]
        %v5277 = vld [vmem:[%s5262 + $0x70] sm:$0xff]
        %v5278 = vld [vmem:[%s5262 + $0x78] sm:$0xff]
        %v5295 = vunpack.c.l.b16 %v5263
        %v5296 = vunpack.c.h.b16 %v5263
        %v5297 = vunpack.c.l.b16 %v5264
        %v5298 = vunpack.c.h.b16 %v5264
        %v5299 = vunpack.c.l.b16 %v5265
        %v5300 = vunpack.c.h.b16 %v5265
        %v5301 = vunpack.c.l.b16 %v5266
        %v5302 = vunpack.c.h.b16 %v5266
        %v5303 = vunpack.c.l.b16 %v5267
        %v5304 = vunpack.c.h.b16 %v5267
        %v5305 = vunpack.c.l.b16 %v5268
        %v5306 = vunpack.c.h.b16 %v5268
        %v5307 = vunpack.c.l.b16 %v5269
        %v5308 = vunpack.c.h.b16 %v5269
        %v5309 = vunpack.c.l.b16 %v5270
        %v5310 = vunpack.c.h.b16 %v5270
        %v5311 = vunpack.c.l.b16 %v5271
        %v5312 = vunpack.c.h.b16 %v5271
        %v5313 = vunpack.c.l.b16 %v5272
        %v5314 = vunpack.c.h.b16 %v5272
        %v5315 = vunpack.c.l.b16 %v5273
        %v5316 = vunpack.c.h.b16 %v5273
        %v5317 = vunpack.c.l.b16 %v5274
        %v5318 = vunpack.c.h.b16 %v5274
        %v5319 = vunpack.c.l.b16 %v5275
        %v5320 = vunpack.c.h.b16 %v5275
        %v5321 = vunpack.c.l.b16 %v5276
        %v5322 = vunpack.c.h.b16 %v5276
        %v5323 = vunpack.c.l.b16 %v5277
        %v5324 = vunpack.c.h.b16 %v5277
        %v5325 = vunpack.c.l.b16 %v5278
        %v5326 = vunpack.c.h.b16 %v5278
        %v5327 = vpack.c.b16 %v5299, %v5295
        %v5328 = vpack.c.b16 %v5300, %v5296
        %v5329 = vpack.c.b16 %v5301, %v5297
        %v5330 = vpack.c.b16 %v5302, %v5298
        %v5331 = vpack.c.b16 %v5307, %v5303
        %v5332 = vpack.c.b16 %v5308, %v5304
        %v5333 = vpack.c.b16 %v5309, %v5305
        %v5334 = vpack.c.b16 %v5310, %v5306
        %v5335 = vpack.c.b16 %v5315, %v5311
        %v5336 = vpack.c.b16 %v5316, %v5312
        %v5337 = vpack.c.b16 %v5317, %v5313
        %v5338 = vpack.c.b16 %v5318, %v5314
        %v5339 = vpack.c.b16 %v5323, %v5319
        %v5340 = vpack.c.b16 %v5324, %v5320
        %v5341 = vpack.c.b16 %v5325, %v5321
        %v5342 = vpack.c.b16 %v5326, %v5322
        %v5360 = vsel %vm2714, %v5252, 0
        %v5363 = vsel %vm2714, %v5253, 0
        %v5366 = vsel %vm2714, %v5254, 0
        %v5369 = vsel %vm2714, %v5255, 0
        %v5372 = vsel %vm2714, %v5256, 0
        %v5375 = vsel %vm2714, %v5257, 0
        %v5378 = vsel %vm2714, %v5258, 0
        %v5381 = vsel %vm2714, %v5259, 0
        %v5384 = vsel %vm2714, %v5260, 0
        %v5387 = vsel %vm2714, %v5261, 0
        %5389 = vmatprep.subr.bf16.mxu0 %v5328
        %5390 = vmatpush1.bf16.msra.mxu0 %v5327
        %5391 = vmatprep.subr.bf16.mxu0 %v5332
        %5392 = vmatpush1.bf16.msra.mxu0 %v5331
        %5393 = vmatprep.subr.bf16.mxu0 %v5336
        %5394 = vmatpush1.bf16.msra.mxu0 %v5335
        %5395 = vmatprep.subr.bf16.mxu0 %v5340
        %5396 = vmatpush1.bf16.msra.mxu0 %v5339
        %5397 = vmatprep.subr.bf16.mxu0 0
        %5398 = vmatpush1.bf16.msra.mxu0 0
        %5399 = vmatprep.subr.bf16.mxu0 0
        %5400 = vmatpush1.bf16.msra.mxu0 0
        %5401 = vmatprep.subr.bf16.mxu0 0
        %5402 = vmatpush1.bf16.msra.mxu0 0
        %5403 = vmatprep.subr.bf16.mxu0 0
        %5404 = vmatpush1.bf16.msra.mxu0 0
        %5405 = vmatprep.subr.bf16.mxu0 0
        %5406 = vmatpush1.bf16.msra.mxu0 0
        %5407 = vmatprep.subr.bf16.mxu0 0
        %5408 = vmatpush1.bf16.msra.mxu0 0
        %5409 = vmatprep.subr.bf16.mxu0 0
        %5410 = vmatpush1.bf16.msra.mxu0 0
        %5411 = vmatprep.subr.bf16.mxu0 0
        %5412 = vmatpush1.bf16.msra.mxu0 0
        %5413 = vmatprep.subr.bf16.mxu0 0
        %5414 = vmatpush1.bf16.msra.mxu0 0
        %5415 = vmatprep.subr.bf16.mxu0 0
        %5416 = vmatpush1.bf16.msra.mxu0 0
        %5417 = vmatprep.subr.bf16.mxu0 0
        %5418 = vmatpush1.bf16.msra.mxu0 0
        %5419 = vmatprep.subr.bf16.mxu0 0
        %5420 = vmatpush1.bf16.msra.mxu0 0
        %5421 = vmatprep.mubr.bf16.mxu0 0
        %5422 = vmatmul.mubr.bf16.gmra.mrb[0].mxu0 %v5360
        %v5423 = vpop.f32.mrb[0].mxu0
        %v5424 = vadd.f32 0.0, %v5423
        %v5425 = vpop.f32.mrb[0].mxu0
        %v5426 = vadd.f32 0.0, %v5425
        %v5427 = vpop.f32.mrb[0].mxu0
        %v5428 = vadd.f32 0.0, %v5427
        %v5429 = vpop.f32.mrb[0].mxu0
        %v5430 = vadd.f32 0.0, %v5429
        %5431 = vmatprep.mubr.bf16.mxu0 0
        %5432 = vmatmul.mubr.bf16.gmra.mrb[0].mxu0 %v5363
        %v5433 = vpop.f32.mrb[0].mxu0
        %v5434 = vadd.f32 0.0, %v5433
        %v5435 = vpop.f32.mrb[0].mxu0
        %v5436 = vadd.f32 0.0, %v5435
        %v5437 = vpop.f32.mrb[0].mxu0
        %v5438 = vadd.f32 0.0, %v5437
        %v5439 = vpop.f32.mrb[0].mxu0
        %v5440 = vadd.f32 0.0, %v5439
        %5441 = vmatprep.mubr.bf16.mxu0 0
        %5442 = vmatmul.mubr.bf16.gmra.mrb[0].mxu0 %v5366
        %v5443 = vpop.f32.mrb[0].mxu0
        %v5444 = vadd.f32 0.0, %v5443
        %v5445 = vpop.f32.mrb[0].mxu0
        %v5446 = vadd.f32 0.0, %v5445
        %v5447 = vpop.f32.mrb[0].mxu0
        %v5448 = vadd.f32 0.0, %v5447
        %v5449 = vpop.f32.mrb[0].mxu0
        %v5450 = vadd.f32 0.0, %v5449
        %5451 = vmatprep.mubr.bf16.mxu0 0
        %5452 = vmatmul.mubr.bf16.gmra.mrb[0].mxu0 %v5369
        %v5453 = vpop.f32.mrb[0].mxu0
        %v5454 = vadd.f32 0.0, %v5453
        %v5455 = vpop.f32.mrb[0].mxu0
        %v5456 = vadd.f32 0.0, %v5455
        %v5457 = vpop.f32.mrb[0].mxu0
        %v5458 = vadd.f32 0.0, %v5457
        %v5459 = vpop.f32.mrb[0].mxu0
        %v5460 = vadd.f32 0.0, %v5459
        %5461 = vmatprep.mubr.bf16.mxu0 0
        %5462 = vmatmul.mubr.bf16.gmra.mrb[0].mxu0 %v5372
        %v5463 = vpop.f32.mrb[0].mxu0
        %v5464 = vadd.f32 0.0, %v5463
        %v5465 = vpop.f32.mrb[0].mxu0
        %v5466 = vadd.f32 0.0, %v5465
        %v5467 = vpop.f32.mrb[0].mxu0
        %v5468 = vadd.f32 0.0, %v5467
        %v5469 = vpop.f32.mrb[0].mxu0
        %v5470 = vadd.f32 0.0, %v5469
        %5471 = vmatprep.mubr.bf16.mxu0 0
        %5472 = vmatmul.mubr.bf16.gmra.mrb[0].mxu0 %v5375
        %v5473 = vpop.f32.mrb[0].mxu0
        %v5474 = vadd.f32 0.0, %v5473
        %v5475 = vpop.f32.mrb[0].mxu0
        %v5476 = vadd.f32 0.0, %v5475
        %v5477 = vpop.f32.mrb[0].mxu0
        %v5478 = vadd.f32 0.0, %v5477
        %v5479 = vpop.f32.mrb[0].mxu0
        %v5480 = vadd.f32 0.0, %v5479
        %5481 = vmatprep.mubr.bf16.mxu0 0
        %5482 = vmatmul.mubr.bf16.gmra.mrb[0].mxu0 %v5378
        %v5483 = vpop.f32.mrb[0].mxu0
        %v5484 = vadd.f32 0.0, %v5483
        %v5485 = vpop.f32.mrb[0].mxu0
        %v5486 = vadd.f32 0.0, %v5485
        %v5487 = vpop.f32.mrb[0].mxu0
        %v5488 = vadd.f32 0.0, %v5487
        %v5489 = vpop.f32.mrb[0].mxu0
        %v5490 = vadd.f32 0.0, %v5489
        %5491 = vmatprep.mubr.bf16.mxu0 0
        %5492 = vmatmul.mubr.bf16.gmra.mrb[0].mxu0 %v5381
        %v5493 = vpop.f32.mrb[0].mxu0
        %v5494 = vadd.f32 0.0, %v5493
        %v5495 = vpop.f32.mrb[0].mxu0
        %v5496 = vadd.f32 0.0, %v5495
        %v5497 = vpop.f32.mrb[0].mxu0
        %v5498 = vadd.f32 0.0, %v5497
        %v5499 = vpop.f32.mrb[0].mxu0
        %v5500 = vadd.f32 0.0, %v5499
        %5501 = vmatprep.mubr.bf16.mxu0 0
        %5502 = vmatmul.mubr.bf16.gmra.mrb[0].mxu0 %v5384
        %v5503 = vpop.f32.mrb[0].mxu0
        %v5504 = vadd.f32 0.0, %v5503
        %v5505 = vpop.f32.mrb[0].mxu0
        %v5506 = vadd.f32 0.0, %v5505
        %v5507 = vpop.f32.mrb[0].mxu0
        %v5508 = vadd.f32 0.0, %v5507
        %v5509 = vpop.f32.mrb[0].mxu0
        %v5510 = vadd.f32 0.0, %v5509
        %5511 = vmatprep.mubr.bf16.mxu0 0
        %5512 = vmatmul.mubr.bf16.gmra.mrb[0].mxu0 %v5387
        %v5513 = vpop.f32.mrb[0].mxu0
        %v5514 = vadd.f32 0.0, %v5513
        %v5515 = vpop.f32.mrb[0].mxu0
        %v5516 = vadd.f32 0.0, %v5515
        %v5517 = vpop.f32.mrb[0].mxu0
        %v5518 = vadd.f32 0.0, %v5517
        %v5519 = vpop.f32.mrb[0].mxu0
        %v5520 = vadd.f32 0.0, %v5519
        %5521 = vdwg.mxu0
        %5522 = vmatprep.subr.bf16.mxu0 %v5330
        %5523 = vmatpush1.bf16.msra.mxu0 %v5329
        %5524 = vmatprep.subr.bf16.mxu0 %v5334
        %5525 = vmatpush1.bf16.msra.mxu0 %v5333
        %5526 = vmatprep.subr.bf16.mxu0 %v5338
        %5527 = vmatpush1.bf16.msra.mxu0 %v5337
        %5528 = vmatprep.subr.bf16.mxu0 %v5342
        %5529 = vmatpush1.bf16.msra.mxu0 %v5341
        %5530 = vmatprep.subr.bf16.mxu0 0
        %5531 = vmatpush1.bf16.msra.mxu0 0
        %5532 = vmatprep.subr.bf16.mxu0 0
        %5533 = vmatpush1.bf16.msra.mxu0 0
        %5534 = vmatprep.subr.bf16.mxu0 0
        %5535 = vmatpush1.bf16.msra.mxu0 0
        %5536 = vmatprep.subr.bf16.mxu0 0
        %5537 = vmatpush1.bf16.msra.mxu0 0
        %5538 = vmatprep.subr.bf16.mxu0 0
        %5539 = vmatpush1.bf16.msra.mxu0 0
        %5540 = vmatprep.subr.bf16.mxu0 0
        %5541 = vmatpush1.bf16.msra.mxu0 0
        %5542 = vmatprep.subr.bf16.mxu0 0
        %5543 = vmatpush1.bf16.msra.mxu0 0
        %5544 = vmatprep.subr.bf16.mxu0 0
        %5545 = vmatpush1.bf16.msra.mxu0 0
        %5546 = vmatprep.subr.bf16.mxu0 0
        %5547 = vmatpush1.bf16.msra.mxu0 0
        %5548 = vmatprep.subr.bf16.mxu0 0
        %5549 = vmatpush1.bf16.msra.mxu0 0
        %5550 = vmatprep.subr.bf16.mxu0 0
        %5551 = vmatpush1.bf16.msra.mxu0 0
        %5552 = vmatprep.subr.bf16.mxu0 0
        %5553 = vmatpush1.bf16.msra.mxu0 0
        %5554 = vmatprep.mubr.bf16.mxu0 0
        %5555 = vmatmul.mubr.bf16.gmra.mrb[0].mxu0 %v5360
        %v5556 = vpop.f32.mrb[0].mxu0
        %v5557 = vadd.f32 0.0, %v5556
        %v5558 = vpop.f32.mrb[0].mxu0
        %v5559 = vadd.f32 0.0, %v5558
        %v5560 = vpop.f32.mrb[0].mxu0
        %v5561 = vadd.f32 0.0, %v5560
        %v5562 = vpop.f32.mrb[0].mxu0
        %v5563 = vadd.f32 0.0, %v5562
        %5564 = vmatprep.mubr.bf16.mxu0 0
        %5565 = vmatmul.mubr.bf16.gmra.mrb[0].mxu0 %v5363
        %v5566 = vpop.f32.mrb[0].mxu0
        %v5567 = vadd.f32 0.0, %v5566
        %v5568 = vpop.f32.mrb[0].mxu0
        %v5569 = vadd.f32 0.0, %v5568
        %v5570 = vpop.f32.mrb[0].mxu0
        %v5571 = vadd.f32 0.0, %v5570
        %v5572 = vpop.f32.mrb[0].mxu0
        %v5573 = vadd.f32 0.0, %v5572
        %5574 = vmatprep.mubr.bf16.mxu0 0
        %5575 = vmatmul.mubr.bf16.gmra.mrb[0].mxu0 %v5366
        %v5576 = vpop.f32.mrb[0].mxu0
        %v5577 = vadd.f32 0.0, %v5576
        %v5578 = vpop.f32.mrb[0].mxu0
        %v5579 = vadd.f32 0.0, %v5578
        %v5580 = vpop.f32.mrb[0].mxu0
        %v5581 = vadd.f32 0.0, %v5580
        %v5582 = vpop.f32.mrb[0].mxu0
        %v5583 = vadd.f32 0.0, %v5582
        %5584 = vmatprep.mubr.bf16.mxu0 0
        %5585 = vmatmul.mubr.bf16.gmra.mrb[0].mxu0 %v5369
        %v5586 = vpop.f32.mrb[0].mxu0
        %v5587 = vadd.f32 0.0, %v5586
        %v5588 = vpop.f32.mrb[0].mxu0
        %v5589 = vadd.f32 0.0, %v5588
        %v5590 = vpop.f32.mrb[0].mxu0
        %v5591 = vadd.f32 0.0, %v5590
        %v5592 = vpop.f32.mrb[0].mxu0
        %v5593 = vadd.f32 0.0, %v5592
        %5594 = vmatprep.mubr.bf16.mxu0 0
        %5595 = vmatmul.mubr.bf16.gmra.mrb[0].mxu0 %v5372
        %v5596 = vpop.f32.mrb[0].mxu0
        %v5597 = vadd.f32 0.0, %v5596
        %v5598 = vpop.f32.mrb[0].mxu0
        %v5599 = vadd.f32 0.0, %v5598
        %v5600 = vpop.f32.mrb[0].mxu0
        %v5601 = vadd.f32 0.0, %v5600
        %v5602 = vpop.f32.mrb[0].mxu0
        %v5603 = vadd.f32 0.0, %v5602
        %5604 = vmatprep.mubr.bf16.mxu0 0
        %5605 = vmatmul.mubr.bf16.gmra.mrb[0].mxu0 %v5375
        %v5606 = vpop.f32.mrb[0].mxu0
        %v5607 = vadd.f32 0.0, %v5606
        %v5608 = vpop.f32.mrb[0].mxu0
        %v5609 = vadd.f32 0.0, %v5608
        %v5610 = vpop.f32.mrb[0].mxu0
        %v5611 = vadd.f32 0.0, %v5610
        %v5612 = vpop.f32.mrb[0].mxu0
        %v5613 = vadd.f32 0.0, %v5612
        %5614 = vmatprep.mubr.bf16.mxu0 0
        %5615 = vmatmul.mubr.bf16.gmra.mrb[0].mxu0 %v5378
        %v5616 = vpop.f32.mrb[0].mxu0
        %v5617 = vadd.f32 0.0, %v5616
        %v5618 = vpop.f32.mrb[0].mxu0
        %v5619 = vadd.f32 0.0, %v5618
        %v5620 = vpop.f32.mrb[0].mxu0
        %v5621 = vadd.f32 0.0, %v5620
        %v5622 = vpop.f32.mrb[0].mxu0
        %v5623 = vadd.f32 0.0, %v5622
        %5624 = vmatprep.mubr.bf16.mxu0 0
        %5625 = vmatmul.mubr.bf16.gmra.mrb[0].mxu0 %v5381
        %v5626 = vpop.f32.mrb[0].mxu0
        %v5627 = vadd.f32 0.0, %v5626
        %v5628 = vpop.f32.mrb[0].mxu0
        %v5629 = vadd.f32 0.0, %v5628
        %v5630 = vpop.f32.mrb[0].mxu0
        %v5631 = vadd.f32 0.0, %v5630
        %v5632 = vpop.f32.mrb[0].mxu0
        %v5633 = vadd.f32 0.0, %v5632
        %5634 = vmatprep.mubr.bf16.mxu0 0
        %5635 = vmatmul.mubr.bf16.gmra.mrb[0].mxu0 %v5384
        %v5636 = vpop.f32.mrb[0].mxu0
        %v5637 = vadd.f32 0.0, %v5636
        %v5638 = vpop.f32.mrb[0].mxu0
        %v5639 = vadd.f32 0.0, %v5638
        %v5640 = vpop.f32.mrb[0].mxu0
        %v5641 = vadd.f32 0.0, %v5640
        %v5642 = vpop.f32.mrb[0].mxu0
        %v5643 = vadd.f32 0.0, %v5642
        %5644 = vmatprep.mubr.bf16.mxu0 0
        %5645 = vmatmul.mubr.bf16.gmra.mrb[0].mxu0 %v5387
        %v5646 = vpop.f32.mrb[0].mxu0
        %v5647 = vadd.f32 0.0, %v5646
        %v5648 = vpop.f32.mrb[0].mxu0
        %v5649 = vadd.f32 0.0, %v5648
        %v5650 = vpop.f32.mrb[0].mxu0
        %v5651 = vadd.f32 0.0, %v5650
        %v5652 = vpop.f32.mrb[0].mxu0
        %v5653 = vadd.f32 0.0, %v5652
        %5654 = vdwg.mxu0
        %v5655 = vld [vmem:[#allocation3] sm:$0xff]
        %v5656 = vld [vmem:[#allocation3 + $0x8] sm:$0xff]
        %v5657 = vld [vmem:[#allocation3 + $0x10] sm:$0xff]
        %v5658 = vld [vmem:[#allocation3 + $0x18] sm:$0xff]
        %v5659 = vld [vmem:[#allocation3 + $0x20] sm:$0xff]
        %v5660 = vld [vmem:[#allocation3 + $0x28] sm:$0xff]
        %v5661 = vld [vmem:[#allocation3 + $0x30] sm:$0xff]
        %v5662 = vld [vmem:[#allocation3 + $0x38] sm:$0xff]
        %v5663 = vld [vmem:[#allocation3 + $0x40] sm:$0xff]
        %v5664 = vld [vmem:[#allocation3 + $0x48] sm:$0xff]
        %v5665 = vld [vmem:[#allocation3 + $0x50] sm:$0xff]
        %v5666 = vld [vmem:[#allocation3 + $0x58] sm:$0xff]
        %v5667 = vld [vmem:[#allocation3 + $0x60] sm:$0xff]
        %v5668 = vld [vmem:[#allocation3 + $0x68] sm:$0xff]
        %v5669 = vld [vmem:[#allocation3 + $0x70] sm:$0xff]
        %v5670 = vld [vmem:[#allocation3 + $0x78] sm:$0xff]
        %v5671 = vld [vmem:[#allocation3 + $0x80] sm:$0xff]
        %v5672 = vld [vmem:[#allocation3 + $0x88] sm:$0xff]
        %v5673 = vld [vmem:[#allocation3 + $0x90] sm:$0xff]
        %v5674 = vld [vmem:[#allocation3 + $0x98] sm:$0xff]
        %v5675 = vld [vmem:[#allocation3 + $0xa0] sm:$0xff]
        %v5676 = vld [vmem:[#allocation3 + $0xa8] sm:$0xff]
        %v5677 = vld [vmem:[#allocation3 + $0xb0] sm:$0xff]
        %v5678 = vld [vmem:[#allocation3 + $0xb8] sm:$0xff]
        %v5679 = vld [vmem:[#allocation3 + $0xc0] sm:$0xff]
        %v5680 = vld [vmem:[#allocation3 + $0xc8] sm:$0xff]
        %v5681 = vld [vmem:[#allocation3 + $0xd0] sm:$0xff]
        %v5682 = vld [vmem:[#allocation3 + $0xd8] sm:$0xff]
        %v5683 = vld [vmem:[#allocation3 + $0xe0] sm:$0xff]
        %v5684 = vld [vmem:[#allocation3 + $0xe8] sm:$0xff]
        %v5685 = vld [vmem:[#allocation3 + $0xf0] sm:$0xff]
        %v5686 = vld [vmem:[#allocation3 + $0xf8] sm:$0xff]
        %v5687 = vld [vmem:[#allocation3 + $0x100] sm:$0xff]
        %v5688 = vld [vmem:[#allocation3 + $0x108] sm:$0xff]
        %v5689 = vld [vmem:[#allocation3 + $0x110] sm:$0xff]
        %v5690 = vld [vmem:[#allocation3 + $0x118] sm:$0xff]
        %v5691 = vld [vmem:[#allocation3 + $0x120] sm:$0xff]
        %v5692 = vld [vmem:[#allocation3 + $0x128] sm:$0xff]
        %v5693 = vld [vmem:[#allocation3 + $0x130] sm:$0xff]
        %v5694 = vld [vmem:[#allocation3 + $0x138] sm:$0xff]
        %v5695 = vld [vmem:[#allocation3 + $0x140] sm:$0xff]
        %v5696 = vld [vmem:[#allocation3 + $0x148] sm:$0xff]
        %v5697 = vld [vmem:[#allocation3 + $0x150] sm:$0xff]
        %v5698 = vld [vmem:[#allocation3 + $0x158] sm:$0xff]
        %v5699 = vld [vmem:[#allocation3 + $0x160] sm:$0xff]
        %v5700 = vld [vmem:[#allocation3 + $0x168] sm:$0xff]
        %v5701 = vld [vmem:[#allocation3 + $0x170] sm:$0xff]
        %v5702 = vld [vmem:[#allocation3 + $0x178] sm:$0xff]
        %v5703 = vld [vmem:[#allocation3 + $0x180] sm:$0xff]
        %v5704 = vld [vmem:[#allocation3 + $0x188] sm:$0xff]
        %v5705 = vld [vmem:[#allocation3 + $0x190] sm:$0xff]
        %v5706 = vld [vmem:[#allocation3 + $0x198] sm:$0xff]
        %v5707 = vld [vmem:[#allocation3 + $0x1a0] sm:$0xff]
        %v5708 = vld [vmem:[#allocation3 + $0x1a8] sm:$0xff]
        %v5709 = vld [vmem:[#allocation3 + $0x1b0] sm:$0xff]
        %v5710 = vld [vmem:[#allocation3 + $0x1b8] sm:$0xff]
        %v5711 = vld [vmem:[#allocation3 + $0x1c0] sm:$0xff]
        %v5712 = vld [vmem:[#allocation3 + $0x1c8] sm:$0xff]
        %v5713 = vld [vmem:[#allocation3 + $0x1d0] sm:$0xff]
        %v5714 = vld [vmem:[#allocation3 + $0x1d8] sm:$0xff]
        %v5715 = vld [vmem:[#allocation3 + $0x1e0] sm:$0xff]
        %v5716 = vld [vmem:[#allocation3 + $0x1e8] sm:$0xff]
        %v5717 = vld [vmem:[#allocation3 + $0x1f0] sm:$0xff]
        %v5718 = vld [vmem:[#allocation3 + $0x1f8] sm:$0xff]
        %v5719 = vld [vmem:[#allocation3 + $0x200] sm:$0xff]
        %v5720 = vld [vmem:[#allocation3 + $0x208] sm:$0xff]
        %v5721 = vld [vmem:[#allocation3 + $0x210] sm:$0xff]
        %v5722 = vld [vmem:[#allocation3 + $0x218] sm:$0xff]
        %v5723 = vld [vmem:[#allocation3 + $0x220] sm:$0xff]
        %v5724 = vld [vmem:[#allocation3 + $0x228] sm:$0xff]
        %v5725 = vld [vmem:[#allocation3 + $0x230] sm:$0xff]
        %v5726 = vld [vmem:[#allocation3 + $0x238] sm:$0xff]
        %v5727 = vld [vmem:[#allocation3 + $0x240] sm:$0xff]
        %v5728 = vld [vmem:[#allocation3 + $0x248] sm:$0xff]
        %v5729 = vld [vmem:[#allocation3 + $0x250] sm:$0xff]
        %v5730 = vld [vmem:[#allocation3 + $0x258] sm:$0xff]
        %v5731 = vld [vmem:[#allocation3 + $0x260] sm:$0xff]
        %v5732 = vld [vmem:[#allocation3 + $0x268] sm:$0xff]
        %v5733 = vld [vmem:[#allocation3 + $0x270] sm:$0xff]
        %v5734 = vld [vmem:[#allocation3 + $0x278] sm:$0xff]
        %v5735 = vadd.f32 %v5655, %v5424
        %v5736 = vadd.f32 %v5656, %v5426
        %v5737 = vadd.f32 %v5657, %v5557
        %v5738 = vadd.f32 %v5658, %v5559
        %v5739 = vadd.f32 %v5659, %v5428
        %v5740 = vadd.f32 %v5660, %v5430
        %v5741 = vadd.f32 %v5661, %v5561
        %v5742 = vadd.f32 %v5662, %v5563
        %v5743 = vadd.f32 %v5663, %v5434
        %v5744 = vadd.f32 %v5664, %v5436
        %v5745 = vadd.f32 %v5665, %v5567
        %v5746 = vadd.f32 %v5666, %v5569
        %v5747 = vadd.f32 %v5667, %v5438
        %v5748 = vadd.f32 %v5668, %v5440
        %v5749 = vadd.f32 %v5669, %v5571
        %v5750 = vadd.f32 %v5670, %v5573
        %v5751 = vadd.f32 %v5671, %v5444
        %v5752 = vadd.f32 %v5672, %v5446
        %v5753 = vadd.f32 %v5673, %v5577
        %v5754 = vadd.f32 %v5674, %v5579
        %v5755 = vadd.f32 %v5675, %v5448
        %v5756 = vadd.f32 %v5676, %v5450
        %v5757 = vadd.f32 %v5677, %v5581
        %v5758 = vadd.f32 %v5678, %v5583
        %v5759 = vadd.f32 %v5679, %v5454
        %v5760 = vadd.f32 %v5680, %v5456
        %v5761 = vadd.f32 %v5681, %v5587
        %v5762 = vadd.f32 %v5682, %v5589
        %v5763 = vadd.f32 %v5683, %v5458
        %v5764 = vadd.f32 %v5684, %v5460
        %v5765 = vadd.f32 %v5685, %v5591
        %v5766 = vadd.f32 %v5686, %v5593
        %v5767 = vadd.f32 %v5687, %v5464
        %v5768 = vadd.f32 %v5688, %v5466
        %v5769 = vadd.f32 %v5689, %v5597
        %v5770 = vadd.f32 %v5690, %v5599
        %v5771 = vadd.f32 %v5691, %v5468
        %v5772 = vadd.f32 %v5692, %v5470
        %v5773 = vadd.f32 %v5693, %v5601
        %v5774 = vadd.f32 %v5694, %v5603
        %v5775 = vadd.f32 %v5695, %v5474
        %v5776 = vadd.f32 %v5696, %v5476
        %v5777 = vadd.f32 %v5697, %v5607
        %v5778 = vadd.f32 %v5698, %v5609
        %v5779 = vadd.f32 %v5699, %v5478
        %v5780 = vadd.f32 %v5700, %v5480
        %v5781 = vadd.f32 %v5701, %v5611
        %v5782 = vadd.f32 %v5702, %v5613
        %v5783 = vadd.f32 %v5703, %v5484
        %v5784 = vadd.f32 %v5704, %v5486
        %v5785 = vadd.f32 %v5705, %v5617
        %v5786 = vadd.f32 %v5706, %v5619
        %v5787 = vadd.f32 %v5707, %v5488
        %v5788 = vadd.f32 %v5708, %v5490
        %v5789 = vadd.f32 %v5709, %v5621
        %v5790 = vadd.f32 %v5710, %v5623
        %v5791 = vadd.f32 %v5711, %v5494
        %v5792 = vadd.f32 %v5712, %v5496
        %v5793 = vadd.f32 %v5713, %v5627
        %v5794 = vadd.f32 %v5714, %v5629
        %v5795 = vadd.f32 %v5715, %v5498
        %v5796 = vadd.f32 %v5716, %v5500
        %v5797 = vadd.f32 %v5717, %v5631
        %v5798 = vadd.f32 %v5718, %v5633
        %v5799 = vadd.f32 %v5719, %v5504
        %v5800 = vadd.f32 %v5720, %v5506
        %v5801 = vadd.f32 %v5721, %v5637
        %v5802 = vadd.f32 %v5722, %v5639
        %v5803 = vadd.f32 %v5723, %v5508
        %v5804 = vadd.f32 %v5724, %v5510
        %v5805 = vadd.f32 %v5725, %v5641
        %v5806 = vadd.f32 %v5726, %v5643
        %v5807 = vadd.f32 %v5727, %v5514
        %v5808 = vadd.f32 %v5728, %v5516
        %v5809 = vadd.f32 %v5729, %v5647
        %v5810 = vadd.f32 %v5730, %v5649
        %v5811 = vadd.f32 %v5731, %v5518
        %v5812 = vadd.f32 %v5732, %v5520
        %v5813 = vadd.f32 %v5733, %v5651
        %v5814 = vadd.f32 %v5734, %v5653
        %5815 = vst [vmem:[#allocation3] sm:$0xff] %v5735
        %5816 = vst [vmem:[#allocation3 + $0x8] sm:$0xff] %v5736
        %5817 = vst [vmem:[#allocation3 + $0x10] sm:$0xff] %v5737
        %5818 = vst [vmem:[#allocation3 + $0x18] sm:$0xff] %v5738
        %5819 = vst [vmem:[#allocation3 + $0x20] sm:$0xff] %v5739
        %5820 = vst [vmem:[#allocation3 + $0x28] sm:$0xff] %v5740
        %5821 = vst [vmem:[#allocation3 + $0x30] sm:$0xff] %v5741
        %5822 = vst [vmem:[#allocation3 + $0x38] sm:$0xff] %v5742
        %5823 = vst [vmem:[#allocation3 + $0x40] sm:$0xff] %v5743
        %5824 = vst [vmem:[#allocation3 + $0x48] sm:$0xff] %v5744
        %5825 = vst [vmem:[#allocation3 + $0x50] sm:$0xff] %v5745
        %5826 = vst [vmem:[#allocation3 + $0x58] sm:$0xff] %v5746
        %5827 = vst [vmem:[#allocation3 + $0x60] sm:$0xff] %v5747
        %5828 = vst [vmem:[#allocation3 + $0x68] sm:$0xff] %v5748
        %5829 = vst [vmem:[#allocation3 + $0x70] sm:$0xff] %v5749
        %5830 = vst [vmem:[#allocation3 + $0x78] sm:$0xff] %v5750
        %5831 = vst [vmem:[#allocation3 + $0x80] sm:$0xff] %v5751
        %5832 = vst [vmem:[#allocation3 + $0x88] sm:$0xff] %v5752
        %5833 = vst [vmem:[#allocation3 + $0x90] sm:$0xff] %v5753
        %5834 = vst [vmem:[#allocation3 + $0x98] sm:$0xff] %v5754
        %5835 = vst [vmem:[#allocation3 + $0xa0] sm:$0xff] %v5755
        %5836 = vst [vmem:[#allocation3 + $0xa8] sm:$0xff] %v5756
        %5837 = vst [vmem:[#allocation3 + $0xb0] sm:$0xff] %v5757
        %5838 = vst [vmem:[#allocation3 + $0xb8] sm:$0xff] %v5758
        %5839 = vst [vmem:[#allocation3 + $0xc0] sm:$0xff] %v5759
        %5840 = vst [vmem:[#allocation3 + $0xc8] sm:$0xff] %v5760
        %5841 = vst [vmem:[#allocation3 + $0xd0] sm:$0xff] %v5761
        %5842 = vst [vmem:[#allocation3 + $0xd8] sm:$0xff] %v5762
        %5843 = vst [vmem:[#allocation3 + $0xe0] sm:$0xff] %v5763
        %5844 = vst [vmem:[#allocation3 + $0xe8] sm:$0xff] %v5764
        %5845 = vst [vmem:[#allocation3 + $0xf0] sm:$0xff] %v5765
        %5846 = vst [vmem:[#allocation3 + $0xf8] sm:$0xff] %v5766
        %5847 = vst [vmem:[#allocation3 + $0x100] sm:$0xff] %v5767
        %5848 = vst [vmem:[#allocation3 + $0x108] sm:$0xff] %v5768
        %5849 = vst [vmem:[#allocation3 + $0x110] sm:$0xff] %v5769
        %5850 = vst [vmem:[#allocation3 + $0x118] sm:$0xff] %v5770
        %5851 = vst [vmem:[#allocation3 + $0x120] sm:$0xff] %v5771
        %5852 = vst [vmem:[#allocation3 + $0x128] sm:$0xff] %v5772
        %5853 = vst [vmem:[#allocation3 + $0x130] sm:$0xff] %v5773
        %5854 = vst [vmem:[#allocation3 + $0x138] sm:$0xff] %v5774
        %5855 = vst [vmem:[#allocation3 + $0x140] sm:$0xff] %v5775
        %5856 = vst [vmem:[#allocation3 + $0x148] sm:$0xff] %v5776
        %5857 = vst [vmem:[#allocation3 + $0x150] sm:$0xff] %v5777
        %5858 = vst [vmem:[#allocation3 + $0x158] sm:$0xff] %v5778
        %5859 = vst [vmem:[#allocation3 + $0x160] sm:$0xff] %v5779
        %5860 = vst [vmem:[#allocation3 + $0x168] sm:$0xff] %v5780
        %5861 = vst [vmem:[#allocation3 + $0x170] sm:$0xff] %v5781
        %5862 = vst [vmem:[#allocation3 + $0x178] sm:$0xff] %v5782
        %5863 = vst [vmem:[#allocation3 + $0x180] sm:$0xff] %v5783
        %5864 = vst [vmem:[#allocation3 + $0x188] sm:$0xff] %v5784
        %5865 = vst [vmem:[#allocation3 + $0x190] sm:$0xff] %v5785
        %5866 = vst [vmem:[#allocation3 + $0x198] sm:$0xff] %v5786
        %5867 = vst [vmem:[#allocation3 + $0x1a0] sm:$0xff] %v5787
        %5868 = vst [vmem:[#allocation3 + $0x1a8] sm:$0xff] %v5788
        %5869 = vst [vmem:[#allocation3 + $0x1b0] sm:$0xff] %v5789
        %5870 = vst [vmem:[#allocation3 + $0x1b8] sm:$0xff] %v5790
        %5871 = vst [vmem:[#allocation3 + $0x1c0] sm:$0xff] %v5791
        %5872 = vst [vmem:[#allocation3 + $0x1c8] sm:$0xff] %v5792
        %5873 = vst [vmem:[#allocation3 + $0x1d0] sm:$0xff] %v5793
        %5874 = vst [vmem:[#allocation3 + $0x1d8] sm:$0xff] %v5794
        %5875 = vst [vmem:[#allocation3 + $0x1e0] sm:$0xff] %v5795
        %5876 = vst [vmem:[#allocation3 + $0x1e8] sm:$0xff] %v5796
        %5877 = vst [vmem:[#allocation3 + $0x1f0] sm:$0xff] %v5797
        %5878 = vst [vmem:[#allocation3 + $0x1f8] sm:$0xff] %v5798
        %5879 = vst [vmem:[#allocation3 + $0x200] sm:$0xff] %v5799
        %5880 = vst [vmem:[#allocation3 + $0x208] sm:$0xff] %v5800
        %5881 = vst [vmem:[#allocation3 + $0x210] sm:$0xff] %v5801
        %5882 = vst [vmem:[#allocation3 + $0x218] sm:$0xff] %v5802
        %5883 = vst [vmem:[#allocation3 + $0x220] sm:$0xff] %v5803
        %5884 = vst [vmem:[#allocation3 + $0x228] sm:$0xff] %v5804
        %5885 = vst [vmem:[#allocation3 + $0x230] sm:$0xff] %v5805
        %5886 = vst [vmem:[#allocation3 + $0x238] sm:$0xff] %v5806
        %5887 = vst [vmem:[#allocation3 + $0x240] sm:$0xff] %v5807
        %5888 = vst [vmem:[#allocation3 + $0x248] sm:$0xff] %v5808
        %5889 = vst [vmem:[#allocation3 + $0x250] sm:$0xff] %v5809
        %5890 = vst [vmem:[#allocation3 + $0x258] sm:$0xff] %v5810
        %5891 = vst [vmem:[#allocation3 + $0x260] sm:$0xff] %v5811
        %5892 = vst [vmem:[#allocation3 + $0x268] sm:$0xff] %v5812
        %5893 = vst [vmem:[#allocation3 + $0x270] sm:$0xff] %v5813
        %5894 = vst [vmem:[#allocation3 + $0x278] sm:$0xff] %v5814
        %v5895 = vld [vmem:[#allocation2 + $0x16] sm:$0xff]
        %v5896 = vld [vmem:[#allocation2 + $0x1e] sm:$0xff]
        %v5897 = vld [vmem:[#allocation2 + $0x26] sm:$0xff]
        %v5898 = vld [vmem:[#allocation2 + $0x2e] sm:$0xff]
        %v5899 = vld [vmem:[#allocation2 + $0x36] sm:$0xff]
        %v5900 = vld [vmem:[#allocation2 + $0x3e] sm:$0xff]
        %v5901 = vld [vmem:[#allocation2 + $0x46] sm:$0xff]
        %v5902 = vld [vmem:[#allocation2 + $0x4e] sm:$0xff]
        %v5903 = vld [vmem:[#allocation2 + $0x56] sm:$0xff]
        %v5904 = vld [vmem:[#allocation2 + $0x5e] sm:$0xff]
        %v5905 = vld [vmem:[#allocation2 + $0x66] sm:$0xff]
        %v5906 = vld [vmem:[#allocation2 + $0x6e] sm:$0xff]
        %v5907 = vld [vmem:[#allocation2 + $0x76] sm:$0xff]
        %v5908 = vld [vmem:[#allocation2 + $0x7e] sm:$0xff]
        %v5909 = vld [vmem:[#allocation2 + $0x86] sm:$0xff]
        %v5910 = vld [vmem:[#allocation2 + $0x8e] sm:$0xff]
        %v5911 = vld [vmem:[#allocation2 + $0x96] sm:$0xff]
        %v5912 = vld [vmem:[#allocation2 + $0x9e] sm:$0xff]
        %v5913 = vld [vmem:[#allocation2 + $0xa6] sm:$0xff]
        %v5914 = vld [vmem:[#allocation2 + $0xae] sm:$0xff]
        %v5915 = vpack.c.bf16 %v5896, %v5895
        %v5916 = vpack.c.bf16 %v5898, %v5897
        %v5917 = vpack.c.bf16 %v5900, %v5899
        %v5918 = vpack.c.bf16 %v5902, %v5901
        %v5919 = vpack.c.bf16 %v5904, %v5903
        %v5920 = vpack.c.bf16 %v5906, %v5905
        %v5921 = vpack.c.bf16 %v5908, %v5907
        %v5922 = vpack.c.bf16 %v5910, %v5909
        %v5923 = vpack.c.bf16 %v5912, %v5911
        %v5924 = vpack.c.bf16 %v5914, %v5913
        %s5925 = scalar_lea.vmem %s5, 640
        %v5926 = vld [vmem:[%s5925] sm:$0xff]
        %v5927 = vld [vmem:[%s5925 + $0x8] sm:$0xff]
        %v5928 = vld [vmem:[%s5925 + $0x10] sm:$0xff]
        %v5929 = vld [vmem:[%s5925 + $0x18] sm:$0xff]
        %v5930 = vld [vmem:[%s5925 + $0x20] sm:$0xff]
        %v5931 = vld [vmem:[%s5925 + $0x28] sm:$0xff]
        %v5932 = vld [vmem:[%s5925 + $0x30] sm:$0xff]
        %v5933 = vld [vmem:[%s5925 + $0x38] sm:$0xff]
        %v5934 = vld [vmem:[%s5925 + $0x40] sm:$0xff]
        %v5935 = vld [vmem:[%s5925 + $0x48] sm:$0xff]
        %v5936 = vld [vmem:[%s5925 + $0x50] sm:$0xff]
        %v5937 = vld [vmem:[%s5925 + $0x58] sm:$0xff]
        %v5938 = vld [vmem:[%s5925 + $0x60] sm:$0xff]
        %v5939 = vld [vmem:[%s5925 + $0x68] sm:$0xff]
        %v5940 = vld [vmem:[%s5925 + $0x70] sm:$0xff]
        %v5941 = vld [vmem:[%s5925 + $0x78] sm:$0xff]
        %v5958 = vunpack.c.l.b16 %v5926
        %v5959 = vunpack.c.h.b16 %v5926
        %v5960 = vunpack.c.l.b16 %v5927
        %v5961 = vunpack.c.h.b16 %v5927
        %v5962 = vunpack.c.l.b16 %v5928
        %v5963 = vunpack.c.h.b16 %v5928
        %v5964 = vunpack.c.l.b16 %v5929
        %v5965 = vunpack.c.h.b16 %v5929
        %v5966 = vunpack.c.l.b16 %v5930
        %v5967 = vunpack.c.h.b16 %v5930
        %v5968 = vunpack.c.l.b16 %v5931
        %v5969 = vunpack.c.h.b16 %v5931
        %v5970 = vunpack.c.l.b16 %v5932
        %v5971 = vunpack.c.h.b16 %v5932
        %v5972 = vunpack.c.l.b16 %v5933
        %v5973 = vunpack.c.h.b16 %v5933
        %v5974 = vunpack.c.l.b16 %v5934
        %v5975 = vunpack.c.h.b16 %v5934
        %v5976 = vunpack.c.l.b16 %v5935
        %v5977 = vunpack.c.h.b16 %v5935
        %v5978 = vunpack.c.l.b16 %v5936
        %v5979 = vunpack.c.h.b16 %v5936
        %v5980 = vunpack.c.l.b16 %v5937
        %v5981 = vunpack.c.h.b16 %v5937
        %v5982 = vunpack.c.l.b16 %v5938
        %v5983 = vunpack.c.h.b16 %v5938
        %v5984 = vunpack.c.l.b16 %v5939
        %v5985 = vunpack.c.h.b16 %v5939
        %v5986 = vunpack.c.l.b16 %v5940
        %v5987 = vunpack.c.h.b16 %v5940
        %v5988 = vunpack.c.l.b16 %v5941
        %v5989 = vunpack.c.h.b16 %v5941
        %v5990 = vpack.c.b16 %v5962, %v5958
        %v5991 = vpack.c.b16 %v5963, %v5959
        %v5992 = vpack.c.b16 %v5964, %v5960
        %v5993 = vpack.c.b16 %v5965, %v5961
        %v5994 = vpack.c.b16 %v5970, %v5966
        %v5995 = vpack.c.b16 %v5971, %v5967
        %v5996 = vpack.c.b16 %v5972, %v5968
        %v5997 = vpack.c.b16 %v5973, %v5969
        %v5998 = vpack.c.b16 %v5978, %v5974
        %v5999 = vpack.c.b16 %v5979, %v5975
        %v6000 = vpack.c.b16 %v5980, %v5976
        %v6001 = vpack.c.b16 %v5981, %v5977
        %v6002 = vpack.c.b16 %v5986, %v5982
        %v6003 = vpack.c.b16 %v5987, %v5983
        %v6004 = vpack.c.b16 %v5988, %v5984
        %v6005 = vpack.c.b16 %v5989, %v5985
        %v6023 = vsel %vm2714, %v5915, 0
        %v6026 = vsel %vm2714, %v5916, 0
        %v6029 = vsel %vm2714, %v5917, 0
        %v6032 = vsel %vm2714, %v5918, 0
        %v6035 = vsel %vm2714, %v5919, 0
        %v6038 = vsel %vm2714, %v5920, 0
        %v6041 = vsel %vm2714, %v5921, 0
        %v6044 = vsel %vm2714, %v5922, 0
        %v6047 = vsel %vm2714, %v5923, 0
        %v6050 = vsel %vm2714, %v5924, 0
        %6052 = vmatprep.subr.bf16.mxu0 %v5991
        %6053 = vmatpush1.bf16.msra.mxu0 %v5990
        %6054 = vmatprep.subr.bf16.mxu0 %v5995
        %6055 = vmatpush1.bf16.msra.mxu0 %v5994
        %6056 = vmatprep.subr.bf16.mxu0 %v5999
        %6057 = vmatpush1.bf16.msra.mxu0 %v5998
        %6058 = vmatprep.subr.bf16.mxu0 %v6003
        %6059 = vmatpush1.bf16.msra.mxu0 %v6002
        %6060 = vmatprep.subr.bf16.mxu0 0
        %6061 = vmatpush1.bf16.msra.mxu0 0
        %6062 = vmatprep.subr.bf16.mxu0 0
        %6063 = vmatpush1.bf16.msra.mxu0 0
        %6064 = vmatprep.subr.bf16.mxu0 0
        %6065 = vmatpush1.bf16.msra.mxu0 0
        %6066 = vmatprep.subr.bf16.mxu0 0
        %6067 = vmatpush1.bf16.msra.mxu0 0
        %6068 = vmatprep.subr.bf16.mxu0 0
        %6069 = vmatpush1.bf16.msra.mxu0 0
        %6070 = vmatprep.subr.bf16.mxu0 0
        %6071 = vmatpush1.bf16.msra.mxu0 0
        %6072 = vmatprep.subr.bf16.mxu0 0
        %6073 = vmatpush1.bf16.msra.mxu0 0
        %6074 = vmatprep.subr.bf16.mxu0 0
        %6075 = vmatpush1.bf16.msra.mxu0 0
        %6076 = vmatprep.subr.bf16.mxu0 0
        %6077 = vmatpush1.bf16.msra.mxu0 0
        %6078 = vmatprep.subr.bf16.mxu0 0
        %6079 = vmatpush1.bf16.msra.mxu0 0
        %6080 = vmatprep.subr.bf16.mxu0 0
        %6081 = vmatpush1.bf16.msra.mxu0 0
        %6082 = vmatprep.subr.bf16.mxu0 0
        %6083 = vmatpush1.bf16.msra.mxu0 0
        %6084 = vmatprep.mubr.bf16.mxu0 0
        %6085 = vmatmul.mubr.bf16.gmra.mrb[0].mxu0 %v6023
        %v6086 = vpop.f32.mrb[0].mxu0
        %v6087 = vadd.f32 0.0, %v6086
        %v6088 = vpop.f32.mrb[0].mxu0
        %v6089 = vadd.f32 0.0, %v6088
        %v6090 = vpop.f32.mrb[0].mxu0
        %v6091 = vadd.f32 0.0, %v6090
        %v6092 = vpop.f32.mrb[0].mxu0
        %v6093 = vadd.f32 0.0, %v6092
        %6094 = vmatprep.mubr.bf16.mxu0 0
        %6095 = vmatmul.mubr.bf16.gmra.mrb[0].mxu0 %v6026
        %v6096 = vpop.f32.mrb[0].mxu0
        %v6097 = vadd.f32 0.0, %v6096
        %v6098 = vpop.f32.mrb[0].mxu0
        %v6099 = vadd.f32 0.0, %v6098
        %v6100 = vpop.f32.mrb[0].mxu0
        %v6101 = vadd.f32 0.0, %v6100
        %v6102 = vpop.f32.mrb[0].mxu0
        %v6103 = vadd.f32 0.0, %v6102
        %6104 = vmatprep.mubr.bf16.mxu0 0
        %6105 = vmatmul.mubr.bf16.gmra.mrb[0].mxu0 %v6029
        %v6106 = vpop.f32.mrb[0].mxu0
        %v6107 = vadd.f32 0.0, %v6106
        %v6108 = vpop.f32.mrb[0].mxu0
        %v6109 = vadd.f32 0.0, %v6108
        %v6110 = vpop.f32.mrb[0].mxu0
        %v6111 = vadd.f32 0.0, %v6110
        %v6112 = vpop.f32.mrb[0].mxu0
        %v6113 = vadd.f32 0.0, %v6112
        %6114 = vmatprep.mubr.bf16.mxu0 0
        %6115 = vmatmul.mubr.bf16.gmra.mrb[0].mxu0 %v6032
        %v6116 = vpop.f32.mrb[0].mxu0
        %v6117 = vadd.f32 0.0, %v6116
        %v6118 = vpop.f32.mrb[0].mxu0
        %v6119 = vadd.f32 0.0, %v6118
        %v6120 = vpop.f32.mrb[0].mxu0
        %v6121 = vadd.f32 0.0, %v6120
        %v6122 = vpop.f32.mrb[0].mxu0
        %v6123 = vadd.f32 0.0, %v6122
        %6124 = vmatprep.mubr.bf16.mxu0 0
        %6125 = vmatmul.mubr.bf16.gmra.mrb[0].mxu0 %v6035
        %v6126 = vpop.f32.mrb[0].mxu0
        %v6127 = vadd.f32 0.0, %v6126
        %v6128 = vpop.f32.mrb[0].mxu0
        %v6129 = vadd.f32 0.0, %v6128
        %v6130 = vpop.f32.mrb[0].mxu0
        %v6131 = vadd.f32 0.0, %v6130
        %v6132 = vpop.f32.mrb[0].mxu0
        %v6133 = vadd.f32 0.0, %v6132
        %6134 = vmatprep.mubr.bf16.mxu0 0
        %6135 = vmatmul.mubr.bf16.gmra.mrb[0].mxu0 %v6038
        %v6136 = vpop.f32.mrb[0].mxu0
        %v6137 = vadd.f32 0.0, %v6136
        %v6138 = vpop.f32.mrb[0].mxu0
        %v6139 = vadd.f32 0.0, %v6138
        %v6140 = vpop.f32.mrb[0].mxu0
        %v6141 = vadd.f32 0.0, %v6140
        %v6142 = vpop.f32.mrb[0].mxu0
        %v6143 = vadd.f32 0.0, %v6142
        %6144 = vmatprep.mubr.bf16.mxu0 0
        %6145 = vmatmul.mubr.bf16.gmra.mrb[0].mxu0 %v6041
        %v6146 = vpop.f32.mrb[0].mxu0
        %v6147 = vadd.f32 0.0, %v6146
        %v6148 = vpop.f32.mrb[0].mxu0
        %v6149 = vadd.f32 0.0, %v6148
        %v6150 = vpop.f32.mrb[0].mxu0
        %v6151 = vadd.f32 0.0, %v6150
        %v6152 = vpop.f32.mrb[0].mxu0
        %v6153 = vadd.f32 0.0, %v6152
        %6154 = vmatprep.mubr.bf16.mxu0 0
        %6155 = vmatmul.mubr.bf16.gmra.mrb[0].mxu0 %v6044
        %v6156 = vpop.f32.mrb[0].mxu0
        %v6157 = vadd.f32 0.0, %v6156
        %v6158 = vpop.f32.mrb[0].mxu0
        %v6159 = vadd.f32 0.0, %v6158
        %v6160 = vpop.f32.mrb[0].mxu0
        %v6161 = vadd.f32 0.0, %v6160
        %v6162 = vpop.f32.mrb[0].mxu0
        %v6163 = vadd.f32 0.0, %v6162
        %6164 = vmatprep.mubr.bf16.mxu0 0
        %6165 = vmatmul.mubr.bf16.gmra.mrb[0].mxu0 %v6047
        %v6166 = vpop.f32.mrb[0].mxu0
        %v6167 = vadd.f32 0.0, %v6166
        %v6168 = vpop.f32.mrb[0].mxu0
        %v6169 = vadd.f32 0.0, %v6168
        %v6170 = vpop.f32.mrb[0].mxu0
        %v6171 = vadd.f32 0.0, %v6170
        %v6172 = vpop.f32.mrb[0].mxu0
        %v6173 = vadd.f32 0.0, %v6172
        %6174 = vmatprep.mubr.bf16.mxu0 0
        %6175 = vmatmul.mubr.bf16.gmra.mrb[0].mxu0 %v6050
        %v6176 = vpop.f32.mrb[0].mxu0
        %v6177 = vadd.f32 0.0, %v6176
        %v6178 = vpop.f32.mrb[0].mxu0
        %v6179 = vadd.f32 0.0, %v6178
        %v6180 = vpop.f32.mrb[0].mxu0
        %v6181 = vadd.f32 0.0, %v6180
        %v6182 = vpop.f32.mrb[0].mxu0
        %v6183 = vadd.f32 0.0, %v6182
        %6184 = vdwg.mxu0
        %6185 = vmatprep.subr.bf16.mxu0 %v5993
        %6186 = vmatpush1.bf16.msra.mxu0 %v5992
        %6187 = vmatprep.subr.bf16.mxu0 %v5997
        %6188 = vmatpush1.bf16.msra.mxu0 %v5996
        %6189 = vmatprep.subr.bf16.mxu0 %v6001
        %6190 = vmatpush1.bf16.msra.mxu0 %v6000
        %6191 = vmatprep.subr.bf16.mxu0 %v6005
        %6192 = vmatpush1.bf16.msra.mxu0 %v6004
        %6193 = vmatprep.subr.bf16.mxu0 0
        %6194 = vmatpush1.bf16.msra.mxu0 0
        %6195 = vmatprep.subr.bf16.mxu0 0
        %6196 = vmatpush1.bf16.msra.mxu0 0
        %6197 = vmatprep.subr.bf16.mxu0 0
        %6198 = vmatpush1.bf16.msra.mxu0 0
        %6199 = vmatprep.subr.bf16.mxu0 0
        %6200 = vmatpush1.bf16.msra.mxu0 0
        %6201 = vmatprep.subr.bf16.mxu0 0
        %6202 = vmatpush1.bf16.msra.mxu0 0
        %6203 = vmatprep.subr.bf16.mxu0 0
        %6204 = vmatpush1.bf16.msra.mxu0 0
        %6205 = vmatprep.subr.bf16.mxu0 0
        %6206 = vmatpush1.bf16.msra.mxu0 0
        %6207 = vmatprep.subr.bf16.mxu0 0
        %6208 = vmatpush1.bf16.msra.mxu0 0
        %6209 = vmatprep.subr.bf16.mxu0 0
        %6210 = vmatpush1.bf16.msra.mxu0 0
        %6211 = vmatprep.subr.bf16.mxu0 0
        %6212 = vmatpush1.bf16.msra.mxu0 0
        %6213 = vmatprep.subr.bf16.mxu0 0
        %6214 = vmatpush1.bf16.msra.mxu0 0
        %6215 = vmatprep.subr.bf16.mxu0 0
        %6216 = vmatpush1.bf16.msra.mxu0 0
        %6217 = vmatprep.mubr.bf16.mxu0 0
        %6218 = vmatmul.mubr.bf16.gmra.mrb[0].mxu0 %v6023
        %v6219 = vpop.f32.mrb[0].mxu0
        %v6220 = vadd.f32 0.0, %v6219
        %v6221 = vpop.f32.mrb[0].mxu0
        %v6222 = vadd.f32 0.0, %v6221
        %v6223 = vpop.f32.mrb[0].mxu0
        %v6224 = vadd.f32 0.0, %v6223
        %v6225 = vpop.f32.mrb[0].mxu0
        %v6226 = vadd.f32 0.0, %v6225
        %6227 = vmatprep.mubr.bf16.mxu0 0
        %6228 = vmatmul.mubr.bf16.gmra.mrb[0].mxu0 %v6026
        %v6229 = vpop.f32.mrb[0].mxu0
        %v6230 = vadd.f32 0.0, %v6229
        %v6231 = vpop.f32.mrb[0].mxu0
        %v6232 = vadd.f32 0.0, %v6231
        %v6233 = vpop.f32.mrb[0].mxu0
        %v6234 = vadd.f32 0.0, %v6233
        %v6235 = vpop.f32.mrb[0].mxu0
        %v6236 = vadd.f32 0.0, %v6235
        %6237 = vmatprep.mubr.bf16.mxu0 0
        %6238 = vmatmul.mubr.bf16.gmra.mrb[0].mxu0 %v6029
        %v6239 = vpop.f32.mrb[0].mxu0
        %v6240 = vadd.f32 0.0, %v6239
        %v6241 = vpop.f32.mrb[0].mxu0
        %v6242 = vadd.f32 0.0, %v6241
        %v6243 = vpop.f32.mrb[0].mxu0
        %v6244 = vadd.f32 0.0, %v6243
        %v6245 = vpop.f32.mrb[0].mxu0
        %v6246 = vadd.f32 0.0, %v6245
        %6247 = vmatprep.mubr.bf16.mxu0 0
        %6248 = vmatmul.mubr.bf16.gmra.mrb[0].mxu0 %v6032
        %v6249 = vpop.f32.mrb[0].mxu0
        %v6250 = vadd.f32 0.0, %v6249
        %v6251 = vpop.f32.mrb[0].mxu0
        %v6252 = vadd.f32 0.0, %v6251
        %v6253 = vpop.f32.mrb[0].mxu0
        %v6254 = vadd.f32 0.0, %v6253
        %v6255 = vpop.f32.mrb[0].mxu0
        %v6256 = vadd.f32 0.0, %v6255
        %6257 = vmatprep.mubr.bf16.mxu0 0
        %6258 = vmatmul.mubr.bf16.gmra.mrb[0].mxu0 %v6035
        %v6259 = vpop.f32.mrb[0].mxu0
        %v6260 = vadd.f32 0.0, %v6259
        %v6261 = vpop.f32.mrb[0].mxu0
        %v6262 = vadd.f32 0.0, %v6261
        %v6263 = vpop.f32.mrb[0].mxu0
        %v6264 = vadd.f32 0.0, %v6263
        %v6265 = vpop.f32.mrb[0].mxu0
        %v6266 = vadd.f32 0.0, %v6265
        %6267 = vmatprep.mubr.bf16.mxu0 0
        %6268 = vmatmul.mubr.bf16.gmra.mrb[0].mxu0 %v6038
        %v6269 = vpop.f32.mrb[0].mxu0
        %v6270 = vadd.f32 0.0, %v6269
        %v6271 = vpop.f32.mrb[0].mxu0
        %v6272 = vadd.f32 0.0, %v6271
        %v6273 = vpop.f32.mrb[0].mxu0
        %v6274 = vadd.f32 0.0, %v6273
        %v6275 = vpop.f32.mrb[0].mxu0
        %v6276 = vadd.f32 0.0, %v6275
        %6277 = vmatprep.mubr.bf16.mxu0 0
        %6278 = vmatmul.mubr.bf16.gmra.mrb[0].mxu0 %v6041
        %v6279 = vpop.f32.mrb[0].mxu0
        %v6280 = vadd.f32 0.0, %v6279
        %v6281 = vpop.f32.mrb[0].mxu0
        %v6282 = vadd.f32 0.0, %v6281
        %v6283 = vpop.f32.mrb[0].mxu0
        %v6284 = vadd.f32 0.0, %v6283
        %v6285 = vpop.f32.mrb[0].mxu0
        %v6286 = vadd.f32 0.0, %v6285
        %6287 = vmatprep.mubr.bf16.mxu0 0
        %6288 = vmatmul.mubr.bf16.gmra.mrb[0].mxu0 %v6044
        %v6289 = vpop.f32.mrb[0].mxu0
        %v6290 = vadd.f32 0.0, %v6289
        %v6291 = vpop.f32.mrb[0].mxu0
        %v6292 = vadd.f32 0.0, %v6291
        %v6293 = vpop.f32.mrb[0].mxu0
        %v6294 = vadd.f32 0.0, %v6293
        %v6295 = vpop.f32.mrb[0].mxu0
        %v6296 = vadd.f32 0.0, %v6295
        %6297 = vmatprep.mubr.bf16.mxu0 0
        %6298 = vmatmul.mubr.bf16.gmra.mrb[0].mxu0 %v6047
        %v6299 = vpop.f32.mrb[0].mxu0
        %v6300 = vadd.f32 0.0, %v6299
        %v6301 = vpop.f32.mrb[0].mxu0
        %v6302 = vadd.f32 0.0, %v6301
        %v6303 = vpop.f32.mrb[0].mxu0
        %v6304 = vadd.f32 0.0, %v6303
        %v6305 = vpop.f32.mrb[0].mxu0
        %v6306 = vadd.f32 0.0, %v6305
        %6307 = vmatprep.mubr.bf16.mxu0 0
        %6308 = vmatmul.mubr.bf16.gmra.mrb[0].mxu0 %v6050
        %v6309 = vpop.f32.mrb[0].mxu0
        %v6310 = vadd.f32 0.0, %v6309
        %v6311 = vpop.f32.mrb[0].mxu0
        %v6312 = vadd.f32 0.0, %v6311
        %v6313 = vpop.f32.mrb[0].mxu0
        %v6314 = vadd.f32 0.0, %v6313
        %v6315 = vpop.f32.mrb[0].mxu0
        %v6316 = vadd.f32 0.0, %v6315
        %6317 = vdwg.mxu0
        %v6318 = vld [vmem:[#allocation3] sm:$0xff]
        %v6319 = vld [vmem:[#allocation3 + $0x8] sm:$0xff]
        %v6320 = vld [vmem:[#allocation3 + $0x10] sm:$0xff]
        %v6321 = vld [vmem:[#allocation3 + $0x18] sm:$0xff]
        %v6322 = vld [vmem:[#allocation3 + $0x20] sm:$0xff]
        %v6323 = vld [vmem:[#allocation3 + $0x28] sm:$0xff]
        %v6324 = vld [vmem:[#allocation3 + $0x30] sm:$0xff]
        %v6325 = vld [vmem:[#allocation3 + $0x38] sm:$0xff]
        %v6326 = vld [vmem:[#allocation3 + $0x40] sm:$0xff]
        %v6327 = vld [vmem:[#allocation3 + $0x48] sm:$0xff]
        %v6328 = vld [vmem:[#allocation3 + $0x50] sm:$0xff]
        %v6329 = vld [vmem:[#allocation3 + $0x58] sm:$0xff]
        %v6330 = vld [vmem:[#allocation3 + $0x60] sm:$0xff]
        %v6331 = vld [vmem:[#allocation3 + $0x68] sm:$0xff]
        %v6332 = vld [vmem:[#allocation3 + $0x70] sm:$0xff]
        %v6333 = vld [vmem:[#allocation3 + $0x78] sm:$0xff]
        %v6334 = vld [vmem:[#allocation3 + $0x80] sm:$0xff]
        %v6335 = vld [vmem:[#allocation3 + $0x88] sm:$0xff]
        %v6336 = vld [vmem:[#allocation3 + $0x90] sm:$0xff]
        %v6337 = vld [vmem:[#allocation3 + $0x98] sm:$0xff]
        %v6338 = vld [vmem:[#allocation3 + $0xa0] sm:$0xff]
        %v6339 = vld [vmem:[#allocation3 + $0xa8] sm:$0xff]
        %v6340 = vld [vmem:[#allocation3 + $0xb0] sm:$0xff]
        %v6341 = vld [vmem:[#allocation3 + $0xb8] sm:$0xff]
        %v6342 = vld [vmem:[#allocation3 + $0xc0] sm:$0xff]
        %v6343 = vld [vmem:[#allocation3 + $0xc8] sm:$0xff]
        %v6344 = vld [vmem:[#allocation3 + $0xd0] sm:$0xff]
        %v6345 = vld [vmem:[#allocation3 + $0xd8] sm:$0xff]
        %v6346 = vld [vmem:[#allocation3 + $0xe0] sm:$0xff]
        %v6347 = vld [vmem:[#allocation3 + $0xe8] sm:$0xff]
        %v6348 = vld [vmem:[#allocation3 + $0xf0] sm:$0xff]
        %v6349 = vld [vmem:[#allocation3 + $0xf8] sm:$0xff]
        %v6350 = vld [vmem:[#allocation3 + $0x100] sm:$0xff]
        %v6351 = vld [vmem:[#allocation3 + $0x108] sm:$0xff]
        %v6352 = vld [vmem:[#allocation3 + $0x110] sm:$0xff]
        %v6353 = vld [vmem:[#allocation3 + $0x118] sm:$0xff]
        %v6354 = vld [vmem:[#allocation3 + $0x120] sm:$0xff]
        %v6355 = vld [vmem:[#allocation3 + $0x128] sm:$0xff]
        %v6356 = vld [vmem:[#allocation3 + $0x130] sm:$0xff]
        %v6357 = vld [vmem:[#allocation3 + $0x138] sm:$0xff]
        %v6358 = vld [vmem:[#allocation3 + $0x140] sm:$0xff]
        %v6359 = vld [vmem:[#allocation3 + $0x148] sm:$0xff]
        %v6360 = vld [vmem:[#allocation3 + $0x150] sm:$0xff]
        %v6361 = vld [vmem:[#allocation3 + $0x158] sm:$0xff]
        %v6362 = vld [vmem:[#allocation3 + $0x160] sm:$0xff]
        %v6363 = vld [vmem:[#allocation3 + $0x168] sm:$0xff]
        %v6364 = vld [vmem:[#allocation3 + $0x170] sm:$0xff]
        %v6365 = vld [vmem:[#allocation3 + $0x178] sm:$0xff]
        %v6366 = vld [vmem:[#allocation3 + $0x180] sm:$0xff]
        %v6367 = vld [vmem:[#allocation3 + $0x188] sm:$0xff]
        %v6368 = vld [vmem:[#allocation3 + $0x190] sm:$0xff]
        %v6369 = vld [vmem:[#allocation3 + $0x198] sm:$0xff]
        %v6370 = vld [vmem:[#allocation3 + $0x1a0] sm:$0xff]
        %v6371 = vld [vmem:[#allocation3 + $0x1a8] sm:$0xff]
        %v6372 = vld [vmem:[#allocation3 + $0x1b0] sm:$0xff]
        %v6373 = vld [vmem:[#allocation3 + $0x1b8] sm:$0xff]
        %v6374 = vld [vmem:[#allocation3 + $0x1c0] sm:$0xff]
        %v6375 = vld [vmem:[#allocation3 + $0x1c8] sm:$0xff]
        %v6376 = vld [vmem:[#allocation3 + $0x1d0] sm:$0xff]
        %v6377 = vld [vmem:[#allocation3 + $0x1d8] sm:$0xff]
        %v6378 = vld [vmem:[#allocation3 + $0x1e0] sm:$0xff]
        %v6379 = vld [vmem:[#allocation3 + $0x1e8] sm:$0xff]
        %v6380 = vld [vmem:[#allocation3 + $0x1f0] sm:$0xff]
        %v6381 = vld [vmem:[#allocation3 + $0x1f8] sm:$0xff]
        %v6382 = vld [vmem:[#allocation3 + $0x200] sm:$0xff]
        %v6383 = vld [vmem:[#allocation3 + $0x208] sm:$0xff]
        %v6384 = vld [vmem:[#allocation3 + $0x210] sm:$0xff]
        %v6385 = vld [vmem:[#allocation3 + $0x218] sm:$0xff]
        %v6386 = vld [vmem:[#allocation3 + $0x220] sm:$0xff]
        %v6387 = vld [vmem:[#allocation3 + $0x228] sm:$0xff]
        %v6388 = vld [vmem:[#allocation3 + $0x230] sm:$0xff]
        %v6389 = vld [vmem:[#allocation3 + $0x238] sm:$0xff]
        %v6390 = vld [vmem:[#allocation3 + $0x240] sm:$0xff]
        %v6391 = vld [vmem:[#allocation3 + $0x248] sm:$0xff]
        %v6392 = vld [vmem:[#allocation3 + $0x250] sm:$0xff]
        %v6393 = vld [vmem:[#allocation3 + $0x258] sm:$0xff]
        %v6394 = vld [vmem:[#allocation3 + $0x260] sm:$0xff]
        %v6395 = vld [vmem:[#allocation3 + $0x268] sm:$0xff]
        %v6396 = vld [vmem:[#allocation3 + $0x270] sm:$0xff]
        %v6397 = vld [vmem:[#allocation3 + $0x278] sm:$0xff]
        %v6398 = vadd.f32 %v6318, %v6087
        %v6399 = vadd.f32 %v6319, %v6089
        %v6400 = vadd.f32 %v6320, %v6220
        %v6401 = vadd.f32 %v6321, %v6222
        %v6402 = vadd.f32 %v6322, %v6091
        %v6403 = vadd.f32 %v6323, %v6093
        %v6404 = vadd.f32 %v6324, %v6224
        %v6405 = vadd.f32 %v6325, %v6226
        %v6406 = vadd.f32 %v6326, %v6097
        %v6407 = vadd.f32 %v6327, %v6099
        %v6408 = vadd.f32 %v6328, %v6230
        %v6409 = vadd.f32 %v6329, %v6232
        %v6410 = vadd.f32 %v6330, %v6101
        %v6411 = vadd.f32 %v6331, %v6103
        %v6412 = vadd.f32 %v6332, %v6234
        %v6413 = vadd.f32 %v6333, %v6236
        %v6414 = vadd.f32 %v6334, %v6107
        %v6415 = vadd.f32 %v6335, %v6109
        %v6416 = vadd.f32 %v6336, %v6240
        %v6417 = vadd.f32 %v6337, %v6242
        %v6418 = vadd.f32 %v6338, %v6111
        %v6419 = vadd.f32 %v6339, %v6113
        %v6420 = vadd.f32 %v6340, %v6244
        %v6421 = vadd.f32 %v6341, %v6246
        %v6422 = vadd.f32 %v6342, %v6117
        %v6423 = vadd.f32 %v6343, %v6119
        %v6424 = vadd.f32 %v6344, %v6250
        %v6425 = vadd.f32 %v6345, %v6252
        %v6426 = vadd.f32 %v6346, %v6121
        %v6427 = vadd.f32 %v6347, %v6123
        %v6428 = vadd.f32 %v6348, %v6254
        %v6429 = vadd.f32 %v6349, %v6256
        %v6430 = vadd.f32 %v6350, %v6127
        %v6431 = vadd.f32 %v6351, %v6129
        %v6432 = vadd.f32 %v6352, %v6260
        %v6433 = vadd.f32 %v6353, %v6262
        %v6434 = vadd.f32 %v6354, %v6131
        %v6435 = vadd.f32 %v6355, %v6133
        %v6436 = vadd.f32 %v6356, %v6264
        %v6437 = vadd.f32 %v6357, %v6266
        %v6438 = vadd.f32 %v6358, %v6137
        %v6439 = vadd.f32 %v6359, %v6139
        %v6440 = vadd.f32 %v6360, %v6270
        %v6441 = vadd.f32 %v6361, %v6272
        %v6442 = vadd.f32 %v6362, %v6141
        %v6443 = vadd.f32 %v6363, %v6143
        %v6444 = vadd.f32 %v6364, %v6274
        %v6445 = vadd.f32 %v6365, %v6276
        %v6446 = vadd.f32 %v6366, %v6147
        %v6447 = vadd.f32 %v6367, %v6149
        %v6448 = vadd.f32 %v6368, %v6280
        %v6449 = vadd.f32 %v6369, %v6282
        %v6450 = vadd.f32 %v6370, %v6151
        %v6451 = vadd.f32 %v6371, %v6153
        %v6452 = vadd.f32 %v6372, %v6284
        %v6453 = vadd.f32 %v6373, %v6286
        %v6454 = vadd.f32 %v6374, %v6157
        %v6455 = vadd.f32 %v6375, %v6159
        %v6456 = vadd.f32 %v6376, %v6290
        %v6457 = vadd.f32 %v6377, %v6292
        %v6458 = vadd.f32 %v6378, %v6161
        %v6459 = vadd.f32 %v6379, %v6163
        %v6460 = vadd.f32 %v6380, %v6294
        %v6461 = vadd.f32 %v6381, %v6296
        %v6462 = vadd.f32 %v6382, %v6167
        %v6463 = vadd.f32 %v6383, %v6169
        %v6464 = vadd.f32 %v6384, %v6300
        %v6465 = vadd.f32 %v6385, %v6302
        %v6466 = vadd.f32 %v6386, %v6171
        %v6467 = vadd.f32 %v6387, %v6173
        %v6468 = vadd.f32 %v6388, %v6304
        %v6469 = vadd.f32 %v6389, %v6306
        %v6470 = vadd.f32 %v6390, %v6177
        %v6471 = vadd.f32 %v6391, %v6179
        %v6472 = vadd.f32 %v6392, %v6310
        %v6473 = vadd.f32 %v6393, %v6312
        %v6474 = vadd.f32 %v6394, %v6181
        %v6475 = vadd.f32 %v6395, %v6183
        %v6476 = vadd.f32 %v6396, %v6314
        %v6477 = vadd.f32 %v6397, %v6316
        %6478 = vst [vmem:[#allocation3] sm:$0xff] %v6398
        %6479 = vst [vmem:[#allocation3 + $0x8] sm:$0xff] %v6399
        %6480 = vst [vmem:[#allocation3 + $0x10] sm:$0xff] %v6400
        %6481 = vst [vmem:[#allocation3 + $0x18] sm:$0xff] %v6401
        %6482 = vst [vmem:[#allocation3 + $0x20] sm:$0xff] %v6402
        %6483 = vst [vmem:[#allocation3 + $0x28] sm:$0xff] %v6403
        %6484 = vst [vmem:[#allocation3 + $0x30] sm:$0xff] %v6404
        %6485 = vst [vmem:[#allocation3 + $0x38] sm:$0xff] %v6405
        %6486 = vst [vmem:[#allocation3 + $0x40] sm:$0xff] %v6406
        %6487 = vst [vmem:[#allocation3 + $0x48] sm:$0xff] %v6407
        %6488 = vst [vmem:[#allocation3 + $0x50] sm:$0xff] %v6408
        %6489 = vst [vmem:[#allocation3 + $0x58] sm:$0xff] %v6409
        %6490 = vst [vmem:[#allocation3 + $0x60] sm:$0xff] %v6410
        %6491 = vst [vmem:[#allocation3 + $0x68] sm:$0xff] %v6411
        %6492 = vst [vmem:[#allocation3 + $0x70] sm:$0xff] %v6412
        %6493 = vst [vmem:[#allocation3 + $0x78] sm:$0xff] %v6413
        %6494 = vst [vmem:[#allocation3 + $0x80] sm:$0xff] %v6414
        %6495 = vst [vmem:[#allocation3 + $0x88] sm:$0xff] %v6415
        %6496 = vst [vmem:[#allocation3 + $0x90] sm:$0xff] %v6416
        %6497 = vst [vmem:[#allocation3 + $0x98] sm:$0xff] %v6417
        %6498 = vst [vmem:[#allocation3 + $0xa0] sm:$0xff] %v6418
        %6499 = vst [vmem:[#allocation3 + $0xa8] sm:$0xff] %v6419
        %6500 = vst [vmem:[#allocation3 + $0xb0] sm:$0xff] %v6420
        %6501 = vst [vmem:[#allocation3 + $0xb8] sm:$0xff] %v6421
        %6502 = vst [vmem:[#allocation3 + $0xc0] sm:$0xff] %v6422
        %6503 = vst [vmem:[#allocation3 + $0xc8] sm:$0xff] %v6423
        %6504 = vst [vmem:[#allocation3 + $0xd0] sm:$0xff] %v6424
        %6505 = vst [vmem:[#allocation3 + $0xd8] sm:$0xff] %v6425
        %6506 = vst [vmem:[#allocation3 + $0xe0] sm:$0xff] %v6426
        %6507 = vst [vmem:[#allocation3 + $0xe8] sm:$0xff] %v6427
        %6508 = vst [vmem:[#allocation3 + $0xf0] sm:$0xff] %v6428
        %6509 = vst [vmem:[#allocation3 + $0xf8] sm:$0xff] %v6429
        %6510 = vst [vmem:[#allocation3 + $0x100] sm:$0xff] %v6430
        %6511 = vst [vmem:[#allocation3 + $0x108] sm:$0xff] %v6431
        %6512 = vst [vmem:[#allocation3 + $0x110] sm:$0xff] %v6432
        %6513 = vst [vmem:[#allocation3 + $0x118] sm:$0xff] %v6433
        %6514 = vst [vmem:[#allocation3 + $0x120] sm:$0xff] %v6434
        %6515 = vst [vmem:[#allocation3 + $0x128] sm:$0xff] %v6435
        %6516 = vst [vmem:[#allocation3 + $0x130] sm:$0xff] %v6436
        %6517 = vst [vmem:[#allocation3 + $0x138] sm:$0xff] %v6437
        %6518 = vst [vmem:[#allocation3 + $0x140] sm:$0xff] %v6438
        %6519 = vst [vmem:[#allocation3 + $0x148] sm:$0xff] %v6439
        %6520 = vst [vmem:[#allocation3 + $0x150] sm:$0xff] %v6440
        %6521 = vst [vmem:[#allocation3 + $0x158] sm:$0xff] %v6441
        %6522 = vst [vmem:[#allocation3 + $0x160] sm:$0xff] %v6442
        %6523 = vst [vmem:[#allocation3 + $0x168] sm:$0xff] %v6443
        %6524 = vst [vmem:[#allocation3 + $0x170] sm:$0xff] %v6444
        %6525 = vst [vmem:[#allocation3 + $0x178] sm:$0xff] %v6445
        %6526 = vst [vmem:[#allocation3 + $0x180] sm:$0xff] %v6446
        %6527 = vst [vmem:[#allocation3 + $0x188] sm:$0xff] %v6447
        %6528 = vst [vmem:[#allocation3 + $0x190] sm:$0xff] %v6448
        %6529 = vst [vmem:[#allocation3 + $0x198] sm:$0xff] %v6449
        %6530 = vst [vmem:[#allocation3 + $0x1a0] sm:$0xff] %v6450
        %6531 = vst [vmem:[#allocation3 + $0x1a8] sm:$0xff] %v6451
        %6532 = vst [vmem:[#allocation3 + $0x1b0] sm:$0xff] %v6452
        %6533 = vst [vmem:[#allocation3 + $0x1b8] sm:$0xff] %v6453
        %6534 = vst [vmem:[#allocation3 + $0x1c0] sm:$0xff] %v6454
        %6535 = vst [vmem:[#allocation3 + $0x1c8] sm:$0xff] %v6455
        %6536 = vst [vmem:[#allocation3 + $0x1d0] sm:$0xff] %v6456
        %6537 = vst [vmem:[#allocation3 + $0x1d8] sm:$0xff] %v6457
        %6538 = vst [vmem:[#allocation3 + $0x1e0] sm:$0xff] %v6458
        %6539 = vst [vmem:[#allocation3 + $0x1e8] sm:$0xff] %v6459
        %6540 = vst [vmem:[#allocation3 + $0x1f0] sm:$0xff] %v6460
        %6541 = vst [vmem:[#allocation3 + $0x1f8] sm:$0xff] %v6461
        %6542 = vst [vmem:[#allocation3 + $0x200] sm:$0xff] %v6462
        %6543 = vst [vmem:[#allocation3 + $0x208] sm:$0xff] %v6463
        %6544 = vst [vmem:[#allocation3 + $0x210] sm:$0xff] %v6464
        %6545 = vst [vmem:[#allocation3 + $0x218] sm:$0xff] %v6465
        %6546 = vst [vmem:[#allocation3 + $0x220] sm:$0xff] %v6466
        %6547 = vst [vmem:[#allocation3 + $0x228] sm:$0xff] %v6467
        %6548 = vst [vmem:[#allocation3 + $0x230] sm:$0xff] %v6468
        %6549 = vst [vmem:[#allocation3 + $0x238] sm:$0xff] %v6469
        %6550 = vst [vmem:[#allocation3 + $0x240] sm:$0xff] %v6470
        %6551 = vst [vmem:[#allocation3 + $0x248] sm:$0xff] %v6471
        %6552 = vst [vmem:[#allocation3 + $0x250] sm:$0xff] %v6472
        %6553 = vst [vmem:[#allocation3 + $0x258] sm:$0xff] %v6473
        %6554 = vst [vmem:[#allocation3 + $0x260] sm:$0xff] %v6474
        %6555 = vst [vmem:[#allocation3 + $0x268] sm:$0xff] %v6475
        %6556 = vst [vmem:[#allocation3 + $0x270] sm:$0xff] %v6476
        %6557 = vst [vmem:[#allocation3 + $0x278] sm:$0xff] %v6477
        %v6558 = vld [vmem:[#allocation2 + $0x28] sm:$0xff]
        %v6559 = vld [vmem:[#allocation2 + $0x30] sm:$0xff]
        %v6560 = vld [vmem:[#allocation2 + $0x38] sm:$0xff]
        %v6561 = vld [vmem:[#allocation2 + $0x40] sm:$0xff]
        %v6562 = vld [vmem:[#allocation2 + $0x48] sm:$0xff]
        %v6563 = vld [vmem:[#allocation2 + $0x50] sm:$0xff]
        %v6564 = vld [vmem:[#allocation2 + $0x58] sm:$0xff]
        %v6565 = vld [vmem:[#allocation2 + $0x60] sm:$0xff]
        %v6566 = vld [vmem:[#allocation2 + $0x68] sm:$0xff]
        %v6567 = vld [vmem:[#allocation2 + $0x70] sm:$0xff]
        %v6568 = vld [vmem:[#allocation2 + $0x78] sm:$0xff]
        %v6569 = vld [vmem:[#allocation2 + $0x80] sm:$0xff]
        %v6570 = vld [vmem:[#allocation2 + $0x88] sm:$0xff]
        %v6571 = vld [vmem:[#allocation2 + $0x90] sm:$0xff]
        %v6572 = vld [vmem:[#allocation2 + $0x98] sm:$0xff]
        %v6573 = vld [vmem:[#allocation2 + $0xa0] sm:$0xff]
        %v6574 = vld [vmem:[#allocation2 + $0xa8] sm:$0xff]
        %v6575 = vld [vmem:[#allocation2 + $0xb0] sm:$0xff]
        %v6576 = vld [vmem:[#allocation2 + $0xb8] sm:$0xff]
        %v6577 = vld [vmem:[#allocation2 + $0xc0] sm:$0xff]
        %v6578 = vpack.c.bf16 %v6559, %v6558
        %v6579 = vpack.c.bf16 %v6561, %v6560
        %v6580 = vpack.c.bf16 %v6563, %v6562
        %v6581 = vpack.c.bf16 %v6565, %v6564
        %v6582 = vpack.c.bf16 %v6567, %v6566
        %v6583 = vpack.c.bf16 %v6569, %v6568
        %v6584 = vpack.c.bf16 %v6571, %v6570
        %v6585 = vpack.c.bf16 %v6573, %v6572
        %v6586 = vpack.c.bf16 %v6575, %v6574
        %v6587 = vpack.c.bf16 %v6577, %v6576
        %s6588 = scalar_lea.vmem %s5, 768
        %v6589 = vld [vmem:[%s6588] sm:$0xff]
        %v6590 = vld [vmem:[%s6588 + $0x8] sm:$0xff]
        %v6591 = vld [vmem:[%s6588 + $0x10] sm:$0xff]
        %v6592 = vld [vmem:[%s6588 + $0x18] sm:$0xff]
        %v6593 = vld [vmem:[%s6588 + $0x20] sm:$0xff]
        %v6594 = vld [vmem:[%s6588 + $0x28] sm:$0xff]
        %v6595 = vld [vmem:[%s6588 + $0x30] sm:$0xff]
        %v6596 = vld [vmem:[%s6588 + $0x38] sm:$0xff]
        %v6597 = vld [vmem:[%s6588 + $0x40] sm:$0xff]
        %v6598 = vld [vmem:[%s6588 + $0x48] sm:$0xff]
        %v6599 = vld [vmem:[%s6588 + $0x50] sm:$0xff]
        %v6600 = vld [vmem:[%s6588 + $0x58] sm:$0xff]
        %v6601 = vld [vmem:[%s6588 + $0x60] sm:$0xff]
        %v6602 = vld [vmem:[%s6588 + $0x68] sm:$0xff]
        %v6603 = vld [vmem:[%s6588 + $0x70] sm:$0xff]
        %v6604 = vld [vmem:[%s6588 + $0x78] sm:$0xff]
        %v6621 = vunpack.c.l.b16 %v6589
        %v6622 = vunpack.c.h.b16 %v6589
        %v6623 = vunpack.c.l.b16 %v6590
        %v6624 = vunpack.c.h.b16 %v6590
        %v6625 = vunpack.c.l.b16 %v6591
        %v6626 = vunpack.c.h.b16 %v6591
        %v6627 = vunpack.c.l.b16 %v6592
        %v6628 = vunpack.c.h.b16 %v6592
        %v6629 = vunpack.c.l.b16 %v6593
        %v6630 = vunpack.c.h.b16 %v6593
        %v6631 = vunpack.c.l.b16 %v6594
        %v6632 = vunpack.c.h.b16 %v6594
        %v6633 = vunpack.c.l.b16 %v6595
        %v6634 = vunpack.c.h.b16 %v6595
        %v6635 = vunpack.c.l.b16 %v6596
        %v6636 = vunpack.c.h.b16 %v6596
        %v6637 = vunpack.c.l.b16 %v6597
        %v6638 = vunpack.c.h.b16 %v6597
        %v6639 = vunpack.c.l.b16 %v6598
        %v6640 = vunpack.c.h.b16 %v6598
        %v6641 = vunpack.c.l.b16 %v6599
        %v6642 = vunpack.c.h.b16 %v6599
        %v6643 = vunpack.c.l.b16 %v6600
        %v6644 = vunpack.c.h.b16 %v6600
        %v6645 = vunpack.c.l.b16 %v6601
        %v6646 = vunpack.c.h.b16 %v6601
        %v6647 = vunpack.c.l.b16 %v6602
        %v6648 = vunpack.c.h.b16 %v6602
        %v6649 = vunpack.c.l.b16 %v6603
        %v6650 = vunpack.c.h.b16 %v6603
        %v6651 = vunpack.c.l.b16 %v6604
        %v6652 = vunpack.c.h.b16 %v6604
        %v6653 = vpack.c.b16 %v6625, %v6621
        %v6654 = vpack.c.b16 %v6626, %v6622
        %v6655 = vpack.c.b16 %v6627, %v6623
        %v6656 = vpack.c.b16 %v6628, %v6624
        %v6657 = vpack.c.b16 %v6633, %v6629
        %v6658 = vpack.c.b16 %v6634, %v6630
        %v6659 = vpack.c.b16 %v6635, %v6631
        %v6660 = vpack.c.b16 %v6636, %v6632
        %v6661 = vpack.c.b16 %v6641, %v6637
        %v6662 = vpack.c.b16 %v6642, %v6638
        %v6663 = vpack.c.b16 %v6643, %v6639
        %v6664 = vpack.c.b16 %v6644, %v6640
        %v6665 = vpack.c.b16 %v6649, %v6645
        %v6666 = vpack.c.b16 %v6650, %v6646
        %v6667 = vpack.c.b16 %v6651, %v6647
        %v6668 = vpack.c.b16 %v6652, %v6648
        %v6686 = vsel %vm2714, %v6578, 0
        %v6689 = vsel %vm2714, %v6579, 0
        %v6692 = vsel %vm2714, %v6580, 0
        %v6695 = vsel %vm2714, %v6581, 0
        %v6698 = vsel %vm2714, %v6582, 0
        %v6701 = vsel %vm2714, %v6583, 0
        %v6704 = vsel %vm2714, %v6584, 0
        %v6707 = vsel %vm2714, %v6585, 0
        %v6710 = vsel %vm2714, %v6586, 0
        %v6713 = vsel %vm2714, %v6587, 0
        %6715 = vmatprep.subr.bf16.mxu0 %v6654
        %6716 = vmatpush1.bf16.msra.mxu0 %v6653
        %6717 = vmatprep.subr.bf16.mxu0 %v6658
        %6718 = vmatpush1.bf16.msra.mxu0 %v6657
        %6719 = vmatprep.subr.bf16.mxu0 %v6662
        %6720 = vmatpush1.bf16.msra.mxu0 %v6661
        %6721 = vmatprep.subr.bf16.mxu0 %v6666
        %6722 = vmatpush1.bf16.msra.mxu0 %v6665
        %6723 = vmatprep.subr.bf16.mxu0 0
        %6724 = vmatpush1.bf16.msra.mxu0 0
        %6725 = vmatprep.subr.bf16.mxu0 0
        %6726 = vmatpush1.bf16.msra.mxu0 0
        %6727 = vmatprep.subr.bf16.mxu0 0
        %6728 = vmatpush1.bf16.msra.mxu0 0
        %6729 = vmatprep.subr.bf16.mxu0 0
        %6730 = vmatpush1.bf16.msra.mxu0 0
        %6731 = vmatprep.subr.bf16.mxu0 0
        %6732 = vmatpush1.bf16.msra.mxu0 0
        %6733 = vmatprep.subr.bf16.mxu0 0
        %6734 = vmatpush1.bf16.msra.mxu0 0
        %6735 = vmatprep.subr.bf16.mxu0 0
        %6736 = vmatpush1.bf16.msra.mxu0 0
        %6737 = vmatprep.subr.bf16.mxu0 0
        %6738 = vmatpush1.bf16.msra.mxu0 0
        %6739 = vmatprep.subr.bf16.mxu0 0
        %6740 = vmatpush1.bf16.msra.mxu0 0
        %6741 = vmatprep.subr.bf16.mxu0 0
        %6742 = vmatpush1.bf16.msra.mxu0 0
        %6743 = vmatprep.subr.bf16.mxu0 0
        %6744 = vmatpush1.bf16.msra.mxu0 0
        %6745 = vmatprep.subr.bf16.mxu0 0
        %6746 = vmatpush1.bf16.msra.mxu0 0
        %6747 = vmatprep.mubr.bf16.mxu0 0
        %6748 = vmatmul.mubr.bf16.gmra.mrb[0].mxu0 %v6686
        %v6749 = vpop.f32.mrb[0].mxu0
        %v6750 = vadd.f32 0.0, %v6749
        %v6751 = vpop.f32.mrb[0].mxu0
        %v6752 = vadd.f32 0.0, %v6751
        %v6753 = vpop.f32.mrb[0].mxu0
        %v6754 = vadd.f32 0.0, %v6753
        %v6755 = vpop.f32.mrb[0].mxu0
        %v6756 = vadd.f32 0.0, %v6755
        %6757 = vmatprep.mubr.bf16.mxu0 0
        %6758 = vmatmul.mubr.bf16.gmra.mrb[0].mxu0 %v6689
        %v6759 = vpop.f32.mrb[0].mxu0
        %v6760 = vadd.f32 0.0, %v6759
        %v6761 = vpop.f32.mrb[0].mxu0
        %v6762 = vadd.f32 0.0, %v6761
        %v6763 = vpop.f32.mrb[0].mxu0
        %v6764 = vadd.f32 0.0, %v6763
        %v6765 = vpop.f32.mrb[0].mxu0
        %v6766 = vadd.f32 0.0, %v6765
        %6767 = vmatprep.mubr.bf16.mxu0 0
        %6768 = vmatmul.mubr.bf16.gmra.mrb[0].mxu0 %v6692
        %v6769 = vpop.f32.mrb[0].mxu0
        %v6770 = vadd.f32 0.0, %v6769
        %v6771 = vpop.f32.mrb[0].mxu0
        %v6772 = vadd.f32 0.0, %v6771
        %v6773 = vpop.f32.mrb[0].mxu0
        %v6774 = vadd.f32 0.0, %v6773
        %v6775 = vpop.f32.mrb[0].mxu0
        %v6776 = vadd.f32 0.0, %v6775
        %6777 = vmatprep.mubr.bf16.mxu0 0
        %6778 = vmatmul.mubr.bf16.gmra.mrb[0].mxu0 %v6695
        %v6779 = vpop.f32.mrb[0].mxu0
        %v6780 = vadd.f32 0.0, %v6779
        %v6781 = vpop.f32.mrb[0].mxu0
        %v6782 = vadd.f32 0.0, %v6781
        %v6783 = vpop.f32.mrb[0].mxu0
        %v6784 = vadd.f32 0.0, %v6783
        %v6785 = vpop.f32.mrb[0].mxu0
        %v6786 = vadd.f32 0.0, %v6785
        %6787 = vmatprep.mubr.bf16.mxu0 0
        %6788 = vmatmul.mubr.bf16.gmra.mrb[0].mxu0 %v6698
        %v6789 = vpop.f32.mrb[0].mxu0
        %v6790 = vadd.f32 0.0, %v6789
        %v6791 = vpop.f32.mrb[0].mxu0
        %v6792 = vadd.f32 0.0, %v6791
        %v6793 = vpop.f32.mrb[0].mxu0
        %v6794 = vadd.f32 0.0, %v6793
        %v6795 = vpop.f32.mrb[0].mxu0
        %v6796 = vadd.f32 0.0, %v6795
        %6797 = vmatprep.mubr.bf16.mxu0 0
        %6798 = vmatmul.mubr.bf16.gmra.mrb[0].mxu0 %v6701
        %v6799 = vpop.f32.mrb[0].mxu0
        %v6800 = vadd.f32 0.0, %v6799
        %v6801 = vpop.f32.mrb[0].mxu0
        %v6802 = vadd.f32 0.0, %v6801
        %v6803 = vpop.f32.mrb[0].mxu0
        %v6804 = vadd.f32 0.0, %v6803
        %v6805 = vpop.f32.mrb[0].mxu0
        %v6806 = vadd.f32 0.0, %v6805
        %6807 = vmatprep.mubr.bf16.mxu0 0
        %6808 = vmatmul.mubr.bf16.gmra.mrb[0].mxu0 %v6704
        %v6809 = vpop.f32.mrb[0].mxu0
        %v6810 = vadd.f32 0.0, %v6809
        %v6811 = vpop.f32.mrb[0].mxu0
        %v6812 = vadd.f32 0.0, %v6811
        %v6813 = vpop.f32.mrb[0].mxu0
        %v6814 = vadd.f32 0.0, %v6813
        %v6815 = vpop.f32.mrb[0].mxu0
        %v6816 = vadd.f32 0.0, %v6815
        %6817 = vmatprep.mubr.bf16.mxu0 0
        %6818 = vmatmul.mubr.bf16.gmra.mrb[0].mxu0 %v6707
        %v6819 = vpop.f32.mrb[0].mxu0
        %v6820 = vadd.f32 0.0, %v6819
        %v6821 = vpop.f32.mrb[0].mxu0
        %v6822 = vadd.f32 0.0, %v6821
        %v6823 = vpop.f32.mrb[0].mxu0
        %v6824 = vadd.f32 0.0, %v6823
        %v6825 = vpop.f32.mrb[0].mxu0
        %v6826 = vadd.f32 0.0, %v6825
        %6827 = vmatprep.mubr.bf16.mxu0 0
        %6828 = vmatmul.mubr.bf16.gmra.mrb[0].mxu0 %v6710
        %v6829 = vpop.f32.mrb[0].mxu0
        %v6830 = vadd.f32 0.0, %v6829
        %v6831 = vpop.f32.mrb[0].mxu0
        %v6832 = vadd.f32 0.0, %v6831
        %v6833 = vpop.f32.mrb[0].mxu0
        %v6834 = vadd.f32 0.0, %v6833
        %v6835 = vpop.f32.mrb[0].mxu0
        %v6836 = vadd.f32 0.0, %v6835
        %6837 = vmatprep.mubr.bf16.mxu0 0
        %6838 = vmatmul.mubr.bf16.gmra.mrb[0].mxu0 %v6713
        %v6839 = vpop.f32.mrb[0].mxu0
        %v6840 = vadd.f32 0.0, %v6839
        %v6841 = vpop.f32.mrb[0].mxu0
        %v6842 = vadd.f32 0.0, %v6841
        %v6843 = vpop.f32.mrb[0].mxu0
        %v6844 = vadd.f32 0.0, %v6843
        %v6845 = vpop.f32.mrb[0].mxu0
        %v6846 = vadd.f32 0.0, %v6845
        %6847 = vdwg.mxu0
        %6848 = vmatprep.subr.bf16.mxu0 %v6656
        %6849 = vmatpush1.bf16.msra.mxu0 %v6655
        %6850 = vmatprep.subr.bf16.mxu0 %v6660
        %6851 = vmatpush1.bf16.msra.mxu0 %v6659
        %6852 = vmatprep.subr.bf16.mxu0 %v6664
        %6853 = vmatpush1.bf16.msra.mxu0 %v6663
        %6854 = vmatprep.subr.bf16.mxu0 %v6668
        %6855 = vmatpush1.bf16.msra.mxu0 %v6667
        %6856 = vmatprep.subr.bf16.mxu0 0
        %6857 = vmatpush1.bf16.msra.mxu0 0
        %6858 = vmatprep.subr.bf16.mxu0 0
        %6859 = vmatpush1.bf16.msra.mxu0 0
        %6860 = vmatprep.subr.bf16.mxu0 0
        %6861 = vmatpush1.bf16.msra.mxu0 0
        %6862 = vmatprep.subr.bf16.mxu0 0
        %6863 = vmatpush1.bf16.msra.mxu0 0
        %6864 = vmatprep.subr.bf16.mxu0 0
        %6865 = vmatpush1.bf16.msra.mxu0 0
        %6866 = vmatprep.subr.bf16.mxu0 0
        %6867 = vmatpush1.bf16.msra.mxu0 0
        %6868 = vmatprep.subr.bf16.mxu0 0
        %6869 = vmatpush1.bf16.msra.mxu0 0
        %6870 = vmatprep.subr.bf16.mxu0 0
        %6871 = vmatpush1.bf16.msra.mxu0 0
        %6872 = vmatprep.subr.bf16.mxu0 0
        %6873 = vmatpush1.bf16.msra.mxu0 0
        %6874 = vmatprep.subr.bf16.mxu0 0
        %6875 = vmatpush1.bf16.msra.mxu0 0
        %6876 = vmatprep.subr.bf16.mxu0 0
        %6877 = vmatpush1.bf16.msra.mxu0 0
        %6878 = vmatprep.subr.bf16.mxu0 0
        %6879 = vmatpush1.bf16.msra.mxu0 0
        %6880 = vmatprep.mubr.bf16.mxu0 0
        %6881 = vmatmul.mubr.bf16.gmra.mrb[0].mxu0 %v6686
        %v6882 = vpop.f32.mrb[0].mxu0
        %v6883 = vadd.f32 0.0, %v6882
        %v6884 = vpop.f32.mrb[0].mxu0
        %v6885 = vadd.f32 0.0, %v6884
        %v6886 = vpop.f32.mrb[0].mxu0
        %v6887 = vadd.f32 0.0, %v6886
        %v6888 = vpop.f32.mrb[0].mxu0
        %v6889 = vadd.f32 0.0, %v6888
        %6890 = vmatprep.mubr.bf16.mxu0 0
        %6891 = vmatmul.mubr.bf16.gmra.mrb[0].mxu0 %v6689
        %v6892 = vpop.f32.mrb[0].mxu0
        %v6893 = vadd.f32 0.0, %v6892
        %v6894 = vpop.f32.mrb[0].mxu0
        %v6895 = vadd.f32 0.0, %v6894
        %v6896 = vpop.f32.mrb[0].mxu0
        %v6897 = vadd.f32 0.0, %v6896
        %v6898 = vpop.f32.mrb[0].mxu0
        %v6899 = vadd.f32 0.0, %v6898
        %6900 = vmatprep.mubr.bf16.mxu0 0
        %6901 = vmatmul.mubr.bf16.gmra.mrb[0].mxu0 %v6692
        %v6902 = vpop.f32.mrb[0].mxu0
        %v6903 = vadd.f32 0.0, %v6902
        %v6904 = vpop.f32.mrb[0].mxu0
        %v6905 = vadd.f32 0.0, %v6904
        %v6906 = vpop.f32.mrb[0].mxu0
        %v6907 = vadd.f32 0.0, %v6906
        %v6908 = vpop.f32.mrb[0].mxu0
        %v6909 = vadd.f32 0.0, %v6908
        %6910 = vmatprep.mubr.bf16.mxu0 0
        %6911 = vmatmul.mubr.bf16.gmra.mrb[0].mxu0 %v6695
        %v6912 = vpop.f32.mrb[0].mxu0
        %v6913 = vadd.f32 0.0, %v6912
        %v6914 = vpop.f32.mrb[0].mxu0
        %v6915 = vadd.f32 0.0, %v6914
        %v6916 = vpop.f32.mrb[0].mxu0
        %v6917 = vadd.f32 0.0, %v6916
        %v6918 = vpop.f32.mrb[0].mxu0
        %v6919 = vadd.f32 0.0, %v6918
        %6920 = vmatprep.mubr.bf16.mxu0 0
        %6921 = vmatmul.mubr.bf16.gmra.mrb[0].mxu0 %v6698
        %v6922 = vpop.f32.mrb[0].mxu0
        %v6923 = vadd.f32 0.0, %v6922
        %v6924 = vpop.f32.mrb[0].mxu0
        %v6925 = vadd.f32 0.0, %v6924
        %v6926 = vpop.f32.mrb[0].mxu0
        %v6927 = vadd.f32 0.0, %v6926
        %v6928 = vpop.f32.mrb[0].mxu0
        %v6929 = vadd.f32 0.0, %v6928
        %6930 = vmatprep.mubr.bf16.mxu0 0
        %6931 = vmatmul.mubr.bf16.gmra.mrb[0].mxu0 %v6701
        %v6932 = vpop.f32.mrb[0].mxu0
        %v6933 = vadd.f32 0.0, %v6932
        %v6934 = vpop.f32.mrb[0].mxu0
        %v6935 = vadd.f32 0.0, %v6934
        %v6936 = vpop.f32.mrb[0].mxu0
        %v6937 = vadd.f32 0.0, %v6936
        %v6938 = vpop.f32.mrb[0].mxu0
        %v6939 = vadd.f32 0.0, %v6938
        %6940 = vmatprep.mubr.bf16.mxu0 0
        %6941 = vmatmul.mubr.bf16.gmra.mrb[0].mxu0 %v6704
        %v6942 = vpop.f32.mrb[0].mxu0
        %v6943 = vadd.f32 0.0, %v6942
        %v6944 = vpop.f32.mrb[0].mxu0
        %v6945 = vadd.f32 0.0, %v6944
        %v6946 = vpop.f32.mrb[0].mxu0
        %v6947 = vadd.f32 0.0, %v6946
        %v6948 = vpop.f32.mrb[0].mxu0
        %v6949 = vadd.f32 0.0, %v6948
        %6950 = vmatprep.mubr.bf16.mxu0 0
        %6951 = vmatmul.mubr.bf16.gmra.mrb[0].mxu0 %v6707
        %v6952 = vpop.f32.mrb[0].mxu0
        %v6953 = vadd.f32 0.0, %v6952
        %v6954 = vpop.f32.mrb[0].mxu0
        %v6955 = vadd.f32 0.0, %v6954
        %v6956 = vpop.f32.mrb[0].mxu0
        %v6957 = vadd.f32 0.0, %v6956
        %v6958 = vpop.f32.mrb[0].mxu0
        %v6959 = vadd.f32 0.0, %v6958
        %6960 = vmatprep.mubr.bf16.mxu0 0
        %6961 = vmatmul.mubr.bf16.gmra.mrb[0].mxu0 %v6710
        %v6962 = vpop.f32.mrb[0].mxu0
        %v6963 = vadd.f32 0.0, %v6962
        %v6964 = vpop.f32.mrb[0].mxu0
        %v6965 = vadd.f32 0.0, %v6964
        %v6966 = vpop.f32.mrb[0].mxu0
        %v6967 = vadd.f32 0.0, %v6966
        %v6968 = vpop.f32.mrb[0].mxu0
        %v6969 = vadd.f32 0.0, %v6968
        %6970 = vmatprep.mubr.bf16.mxu0 0
        %6971 = vmatmul.mubr.bf16.gmra.mrb[0].mxu0 %v6713
        %v6972 = vpop.f32.mrb[0].mxu0
        %v6973 = vadd.f32 0.0, %v6972
        %v6974 = vpop.f32.mrb[0].mxu0
        %v6975 = vadd.f32 0.0, %v6974
        %v6976 = vpop.f32.mrb[0].mxu0
        %v6977 = vadd.f32 0.0, %v6976
        %v6978 = vpop.f32.mrb[0].mxu0
        %v6979 = vadd.f32 0.0, %v6978
        %6980 = vdwg.mxu0
        %v6981 = vld [vmem:[#allocation3] sm:$0xff]
        %v6982 = vld [vmem:[#allocation3 + $0x8] sm:$0xff]
        %v6983 = vld [vmem:[#allocation3 + $0x10] sm:$0xff]
        %v6984 = vld [vmem:[#allocation3 + $0x18] sm:$0xff]
        %v6985 = vld [vmem:[#allocation3 + $0x20] sm:$0xff]
        %v6986 = vld [vmem:[#allocation3 + $0x28] sm:$0xff]
        %v6987 = vld [vmem:[#allocation3 + $0x30] sm:$0xff]
        %v6988 = vld [vmem:[#allocation3 + $0x38] sm:$0xff]
        %v6989 = vld [vmem:[#allocation3 + $0x40] sm:$0xff]
        %v6990 = vld [vmem:[#allocation3 + $0x48] sm:$0xff]
        %v6991 = vld [vmem:[#allocation3 + $0x50] sm:$0xff]
        %v6992 = vld [vmem:[#allocation3 + $0x58] sm:$0xff]
        %v6993 = vld [vmem:[#allocation3 + $0x60] sm:$0xff]
        %v6994 = vld [vmem:[#allocation3 + $0x68] sm:$0xff]
        %v6995 = vld [vmem:[#allocation3 + $0x70] sm:$0xff]
        %v6996 = vld [vmem:[#allocation3 + $0x78] sm:$0xff]
        %v6997 = vld [vmem:[#allocation3 + $0x80] sm:$0xff]
        %v6998 = vld [vmem:[#allocation3 + $0x88] sm:$0xff]
        %v6999 = vld [vmem:[#allocation3 + $0x90] sm:$0xff]
        %v7000 = vld [vmem:[#allocation3 + $0x98] sm:$0xff]
        %v7001 = vld [vmem:[#allocation3 + $0xa0] sm:$0xff]
        %v7002 = vld [vmem:[#allocation3 + $0xa8] sm:$0xff]
        %v7003 = vld [vmem:[#allocation3 + $0xb0] sm:$0xff]
        %v7004 = vld [vmem:[#allocation3 + $0xb8] sm:$0xff]
        %v7005 = vld [vmem:[#allocation3 + $0xc0] sm:$0xff]
        %v7006 = vld [vmem:[#allocation3 + $0xc8] sm:$0xff]
        %v7007 = vld [vmem:[#allocation3 + $0xd0] sm:$0xff]
        %v7008 = vld [vmem:[#allocation3 + $0xd8] sm:$0xff]
        %v7009 = vld [vmem:[#allocation3 + $0xe0] sm:$0xff]
        %v7010 = vld [vmem:[#allocation3 + $0xe8] sm:$0xff]
        %v7011 = vld [vmem:[#allocation3 + $0xf0] sm:$0xff]
        %v7012 = vld [vmem:[#allocation3 + $0xf8] sm:$0xff]
        %v7013 = vld [vmem:[#allocation3 + $0x100] sm:$0xff]
        %v7014 = vld [vmem:[#allocation3 + $0x108] sm:$0xff]
        %v7015 = vld [vmem:[#allocation3 + $0x110] sm:$0xff]
        %v7016 = vld [vmem:[#allocation3 + $0x118] sm:$0xff]
        %v7017 = vld [vmem:[#allocation3 + $0x120] sm:$0xff]
        %v7018 = vld [vmem:[#allocation3 + $0x128] sm:$0xff]
        %v7019 = vld [vmem:[#allocation3 + $0x130] sm:$0xff]
        %v7020 = vld [vmem:[#allocation3 + $0x138] sm:$0xff]
        %v7021 = vld [vmem:[#allocation3 + $0x140] sm:$0xff]
        %v7022 = vld [vmem:[#allocation3 + $0x148] sm:$0xff]
        %v7023 = vld [vmem:[#allocation3 + $0x150] sm:$0xff]
        %v7024 = vld [vmem:[#allocation3 + $0x158] sm:$0xff]
        %v7025 = vld [vmem:[#allocation3 + $0x160] sm:$0xff]
        %v7026 = vld [vmem:[#allocation3 + $0x168] sm:$0xff]
        %v7027 = vld [vmem:[#allocation3 + $0x170] sm:$0xff]
        %v7028 = vld [vmem:[#allocation3 + $0x178] sm:$0xff]
        %v7029 = vld [vmem:[#allocation3 + $0x180] sm:$0xff]
        %v7030 = vld [vmem:[#allocation3 + $0x188] sm:$0xff]
        %v7031 = vld [vmem:[#allocation3 + $0x190] sm:$0xff]
        %v7032 = vld [vmem:[#allocation3 + $0x198] sm:$0xff]
        %v7033 = vld [vmem:[#allocation3 + $0x1a0] sm:$0xff]
        %v7034 = vld [vmem:[#allocation3 + $0x1a8] sm:$0xff]
        %v7035 = vld [vmem:[#allocation3 + $0x1b0] sm:$0xff]
        %v7036 = vld [vmem:[#allocation3 + $0x1b8] sm:$0xff]
        %v7037 = vld [vmem:[#allocation3 + $0x1c0] sm:$0xff]
        %v7038 = vld [vmem:[#allocation3 + $0x1c8] sm:$0xff]
        %v7039 = vld [vmem:[#allocation3 + $0x1d0] sm:$0xff]
        %v7040 = vld [vmem:[#allocation3 + $0x1d8] sm:$0xff]
        %v7041 = vld [vmem:[#allocation3 + $0x1e0] sm:$0xff]
        %v7042 = vld [vmem:[#allocation3 + $0x1e8] sm:$0xff]
        %v7043 = vld [vmem:[#allocation3 + $0x1f0] sm:$0xff]
        %v7044 = vld [vmem:[#allocation3 + $0x1f8] sm:$0xff]
        %v7045 = vld [vmem:[#allocation3 + $0x200] sm:$0xff]
        %v7046 = vld [vmem:[#allocation3 + $0x208] sm:$0xff]
        %v7047 = vld [vmem:[#allocation3 + $0x210] sm:$0xff]
        %v7048 = vld [vmem:[#allocation3 + $0x218] sm:$0xff]
        %v7049 = vld [vmem:[#allocation3 + $0x220] sm:$0xff]
        %v7050 = vld [vmem:[#allocation3 + $0x228] sm:$0xff]
        %v7051 = vld [vmem:[#allocation3 + $0x230] sm:$0xff]
        %v7052 = vld [vmem:[#allocation3 + $0x238] sm:$0xff]
        %v7053 = vld [vmem:[#allocation3 + $0x240] sm:$0xff]
        %v7054 = vld [vmem:[#allocation3 + $0x248] sm:$0xff]
        %v7055 = vld [vmem:[#allocation3 + $0x250] sm:$0xff]
        %v7056 = vld [vmem:[#allocation3 + $0x258] sm:$0xff]
        %v7057 = vld [vmem:[#allocation3 + $0x260] sm:$0xff]
        %v7058 = vld [vmem:[#allocation3 + $0x268] sm:$0xff]
        %v7059 = vld [vmem:[#allocation3 + $0x270] sm:$0xff]
        %v7060 = vld [vmem:[#allocation3 + $0x278] sm:$0xff]
        %v7061 = vadd.f32 %v6981, %v6750
        %v7062 = vadd.f32 %v6982, %v6752
        %v7063 = vadd.f32 %v6983, %v6883
        %v7064 = vadd.f32 %v6984, %v6885
        %v7065 = vadd.f32 %v6985, %v6754
        %v7066 = vadd.f32 %v6986, %v6756
        %v7067 = vadd.f32 %v6987, %v6887
        %v7068 = vadd.f32 %v6988, %v6889
        %v7069 = vadd.f32 %v6989, %v6760
        %v7070 = vadd.f32 %v6990, %v6762
        %v7071 = vadd.f32 %v6991, %v6893
        %v7072 = vadd.f32 %v6992, %v6895
        %v7073 = vadd.f32 %v6993, %v6764
        %v7074 = vadd.f32 %v6994, %v6766
        %v7075 = vadd.f32 %v6995, %v6897
        %v7076 = vadd.f32 %v6996, %v6899
        %v7077 = vadd.f32 %v6997, %v6770
        %v7078 = vadd.f32 %v6998, %v6772
        %v7079 = vadd.f32 %v6999, %v6903
        %v7080 = vadd.f32 %v7000, %v6905
        %v7081 = vadd.f32 %v7001, %v6774
        %v7082 = vadd.f32 %v7002, %v6776
        %v7083 = vadd.f32 %v7003, %v6907
        %v7084 = vadd.f32 %v7004, %v6909
        %v7085 = vadd.f32 %v7005, %v6780
        %v7086 = vadd.f32 %v7006, %v6782
        %v7087 = vadd.f32 %v7007, %v6913
        %v7088 = vadd.f32 %v7008, %v6915
        %v7089 = vadd.f32 %v7009, %v6784
        %v7090 = vadd.f32 %v7010, %v6786
        %v7091 = vadd.f32 %v7011, %v6917
        %v7092 = vadd.f32 %v7012, %v6919
        %v7093 = vadd.f32 %v7013, %v6790
        %v7094 = vadd.f32 %v7014, %v6792
        %v7095 = vadd.f32 %v7015, %v6923
        %v7096 = vadd.f32 %v7016, %v6925
        %v7097 = vadd.f32 %v7017, %v6794
        %v7098 = vadd.f32 %v7018, %v6796
        %v7099 = vadd.f32 %v7019, %v6927
        %v7100 = vadd.f32 %v7020, %v6929
        %v7101 = vadd.f32 %v7021, %v6800
        %v7102 = vadd.f32 %v7022, %v6802
        %v7103 = vadd.f32 %v7023, %v6933
        %v7104 = vadd.f32 %v7024, %v6935
        %v7105 = vadd.f32 %v7025, %v6804
        %v7106 = vadd.f32 %v7026, %v6806
        %v7107 = vadd.f32 %v7027, %v6937
        %v7108 = vadd.f32 %v7028, %v6939
        %v7109 = vadd.f32 %v7029, %v6810
        %v7110 = vadd.f32 %v7030, %v6812
        %v7111 = vadd.f32 %v7031, %v6943
        %v7112 = vadd.f32 %v7032, %v6945
        %v7113 = vadd.f32 %v7033, %v6814
        %v7114 = vadd.f32 %v7034, %v6816
        %v7115 = vadd.f32 %v7035, %v6947
        %v7116 = vadd.f32 %v7036, %v6949
        %v7117 = vadd.f32 %v7037, %v6820
        %v7118 = vadd.f32 %v7038, %v6822
        %v7119 = vadd.f32 %v7039, %v6953
        %v7120 = vadd.f32 %v7040, %v6955
        %v7121 = vadd.f32 %v7041, %v6824
        %v7122 = vadd.f32 %v7042, %v6826
        %v7123 = vadd.f32 %v7043, %v6957
        %v7124 = vadd.f32 %v7044, %v6959
        %v7125 = vadd.f32 %v7045, %v6830
        %v7126 = vadd.f32 %v7046, %v6832
        %v7127 = vadd.f32 %v7047, %v6963
        %v7128 = vadd.f32 %v7048, %v6965
        %v7129 = vadd.f32 %v7049, %v6834
        %v7130 = vadd.f32 %v7050, %v6836
        %v7131 = vadd.f32 %v7051, %v6967
        %v7132 = vadd.f32 %v7052, %v6969
        %v7133 = vadd.f32 %v7053, %v6840
        %v7134 = vadd.f32 %v7054, %v6842
        %v7135 = vadd.f32 %v7055, %v6973
        %v7136 = vadd.f32 %v7056, %v6975
        %v7137 = vadd.f32 %v7057, %v6844
        %v7138 = vadd.f32 %v7058, %v6846
        %v7139 = vadd.f32 %v7059, %v6977
        %v7140 = vadd.f32 %v7060, %v6979
        %7141 = vst [vmem:[#allocation3] sm:$0xff] %v7061
        %7142 = vst [vmem:[#allocation3 + $0x8] sm:$0xff] %v7062
        %7143 = vst [vmem:[#allocation3 + $0x10] sm:$0xff] %v7063
        %7144 = vst [vmem:[#allocation3 + $0x18] sm:$0xff] %v7064
        %7145 = vst [vmem:[#allocation3 + $0x20] sm:$0xff] %v7065
        %7146 = vst [vmem:[#allocation3 + $0x28] sm:$0xff] %v7066
        %7147 = vst [vmem:[#allocation3 + $0x30] sm:$0xff] %v7067
        %7148 = vst [vmem:[#allocation3 + $0x38] sm:$0xff] %v7068
        %7149 = vst [vmem:[#allocation3 + $0x40] sm:$0xff] %v7069
        %7150 = vst [vmem:[#allocation3 + $0x48] sm:$0xff] %v7070
        %7151 = vst [vmem:[#allocation3 + $0x50] sm:$0xff] %v7071
        %7152 = vst [vmem:[#allocation3 + $0x58] sm:$0xff] %v7072
        %7153 = vst [vmem:[#allocation3 + $0x60] sm:$0xff] %v7073
        %7154 = vst [vmem:[#allocation3 + $0x68] sm:$0xff] %v7074
        %7155 = vst [vmem:[#allocation3 + $0x70] sm:$0xff] %v7075
        %7156 = vst [vmem:[#allocation3 + $0x78] sm:$0xff] %v7076
        %7157 = vst [vmem:[#allocation3 + $0x80] sm:$0xff] %v7077
        %7158 = vst [vmem:[#allocation3 + $0x88] sm:$0xff] %v7078
        %7159 = vst [vmem:[#allocation3 + $0x90] sm:$0xff] %v7079
        %7160 = vst [vmem:[#allocation3 + $0x98] sm:$0xff] %v7080
        %7161 = vst [vmem:[#allocation3 + $0xa0] sm:$0xff] %v7081
        %7162 = vst [vmem:[#allocation3 + $0xa8] sm:$0xff] %v7082
        %7163 = vst [vmem:[#allocation3 + $0xb0] sm:$0xff] %v7083
        %7164 = vst [vmem:[#allocation3 + $0xb8] sm:$0xff] %v7084
        %7165 = vst [vmem:[#allocation3 + $0xc0] sm:$0xff] %v7085
        %7166 = vst [vmem:[#allocation3 + $0xc8] sm:$0xff] %v7086
        %7167 = vst [vmem:[#allocation3 + $0xd0] sm:$0xff] %v7087
        %7168 = vst [vmem:[#allocation3 + $0xd8] sm:$0xff] %v7088
        %7169 = vst [vmem:[#allocation3 + $0xe0] sm:$0xff] %v7089
        %7170 = vst [vmem:[#allocation3 + $0xe8] sm:$0xff] %v7090
        %7171 = vst [vmem:[#allocation3 + $0xf0] sm:$0xff] %v7091
        %7172 = vst [vmem:[#allocation3 + $0xf8] sm:$0xff] %v7092
        %7173 = vst [vmem:[#allocation3 + $0x100] sm:$0xff] %v7093
        %7174 = vst [vmem:[#allocation3 + $0x108] sm:$0xff] %v7094
        %7175 = vst [vmem:[#allocation3 + $0x110] sm:$0xff] %v7095
        %7176 = vst [vmem:[#allocation3 + $0x118] sm:$0xff] %v7096
        %7177 = vst [vmem:[#allocation3 + $0x120] sm:$0xff] %v7097
        %7178 = vst [vmem:[#allocation3 + $0x128] sm:$0xff] %v7098
        %7179 = vst [vmem:[#allocation3 + $0x130] sm:$0xff] %v7099
        %7180 = vst [vmem:[#allocation3 + $0x138] sm:$0xff] %v7100
        %7181 = vst [vmem:[#allocation3 + $0x140] sm:$0xff] %v7101
        %7182 = vst [vmem:[#allocation3 + $0x148] sm:$0xff] %v7102
        %7183 = vst [vmem:[#allocation3 + $0x150] sm:$0xff] %v7103
        %7184 = vst [vmem:[#allocation3 + $0x158] sm:$0xff] %v7104
        %7185 = vst [vmem:[#allocation3 + $0x160] sm:$0xff] %v7105
        %7186 = vst [vmem:[#allocation3 + $0x168] sm:$0xff] %v7106
        %7187 = vst [vmem:[#allocation3 + $0x170] sm:$0xff] %v7107
        %7188 = vst [vmem:[#allocation3 + $0x178] sm:$0xff] %v7108
        %7189 = vst [vmem:[#allocation3 + $0x180] sm:$0xff] %v7109
        %7190 = vst [vmem:[#allocation3 + $0x188] sm:$0xff] %v7110
        %7191 = vst [vmem:[#allocation3 + $0x190] sm:$0xff] %v7111
        %7192 = vst [vmem:[#allocation3 + $0x198] sm:$0xff] %v7112
        %7193 = vst [vmem:[#allocation3 + $0x1a0] sm:$0xff] %v7113
        %7194 = vst [vmem:[#allocation3 + $0x1a8] sm:$0xff] %v7114
        %7195 = vst [vmem:[#allocation3 + $0x1b0] sm:$0xff] %v7115
        %7196 = vst [vmem:[#allocation3 + $0x1b8] sm:$0xff] %v7116
        %7197 = vst [vmem:[#allocation3 + $0x1c0] sm:$0xff] %v7117
        %7198 = vst [vmem:[#allocation3 + $0x1c8] sm:$0xff] %v7118
        %7199 = vst [vmem:[#allocation3 + $0x1d0] sm:$0xff] %v7119
        %7200 = vst [vmem:[#allocation3 + $0x1d8] sm:$0xff] %v7120
        %7201 = vst [vmem:[#allocation3 + $0x1e0] sm:$0xff] %v7121
        %7202 = vst [vmem:[#allocation3 + $0x1e8] sm:$0xff] %v7122
        %7203 = vst [vmem:[#allocation3 + $0x1f0] sm:$0xff] %v7123
        %7204 = vst [vmem:[#allocation3 + $0x1f8] sm:$0xff] %v7124
        %7205 = vst [vmem:[#allocation3 + $0x200] sm:$0xff] %v7125
        %7206 = vst [vmem:[#allocation3 + $0x208] sm:$0xff] %v7126
        %7207 = vst [vmem:[#allocation3 + $0x210] sm:$0xff] %v7127
        %7208 = vst [vmem:[#allocation3 + $0x218] sm:$0xff] %v7128
        %7209 = vst [vmem:[#allocation3 + $0x220] sm:$0xff] %v7129
        %7210 = vst [vmem:[#allocation3 + $0x228] sm:$0xff] %v7130
        %7211 = vst [vmem:[#allocation3 + $0x230] sm:$0xff] %v7131
        %7212 = vst [vmem:[#allocation3 + $0x238] sm:$0xff] %v7132
        %7213 = vst [vmem:[#allocation3 + $0x240] sm:$0xff] %v7133
        %7214 = vst [vmem:[#allocation3 + $0x248] sm:$0xff] %v7134
        %7215 = vst [vmem:[#allocation3 + $0x250] sm:$0xff] %v7135
        %7216 = vst [vmem:[#allocation3 + $0x258] sm:$0xff] %v7136
        %7217 = vst [vmem:[#allocation3 + $0x260] sm:$0xff] %v7137
        %7218 = vst [vmem:[#allocation3 + $0x268] sm:$0xff] %v7138
        %7219 = vst [vmem:[#allocation3 + $0x270] sm:$0xff] %v7139
        %7220 = vst [vmem:[#allocation3 + $0x278] sm:$0xff] %v7140
        %v7221 = vld [vmem:[#allocation2 + $0x29] sm:$0xff]
        %v7222 = vld [vmem:[#allocation2 + $0x31] sm:$0xff]
        %v7223 = vld [vmem:[#allocation2 + $0x39] sm:$0xff]
        %v7224 = vld [vmem:[#allocation2 + $0x41] sm:$0xff]
        %v7225 = vld [vmem:[#allocation2 + $0x49] sm:$0xff]
        %v7226 = vld [vmem:[#allocation2 + $0x51] sm:$0xff]
        %v7227 = vld [vmem:[#allocation2 + $0x59] sm:$0xff]
        %v7228 = vld [vmem:[#allocation2 + $0x61] sm:$0xff]
        %v7229 = vld [vmem:[#allocation2 + $0x69] sm:$0xff]
        %v7230 = vld [vmem:[#allocation2 + $0x71] sm:$0xff]
        %v7231 = vld [vmem:[#allocation2 + $0x79] sm:$0xff]
        %v7232 = vld [vmem:[#allocation2 + $0x81] sm:$0xff]
        %v7233 = vld [vmem:[#allocation2 + $0x89] sm:$0xff]
        %v7234 = vld [vmem:[#allocation2 + $0x91] sm:$0xff]
        %v7235 = vld [vmem:[#allocation2 + $0x99] sm:$0xff]
        %v7236 = vld [vmem:[#allocation2 + $0xa1] sm:$0xff]
        %v7237 = vld [vmem:[#allocation2 + $0xa9] sm:$0xff]
        %v7238 = vld [vmem:[#allocation2 + $0xb1] sm:$0xff]
        %v7239 = vld [vmem:[#allocation2 + $0xb9] sm:$0xff]
        %v7240 = vld [vmem:[#allocation2 + $0xc1] sm:$0xff]
        %v7241 = vpack.c.bf16 %v7222, %v7221
        %v7242 = vpack.c.bf16 %v7224, %v7223
        %v7243 = vpack.c.bf16 %v7226, %v7225
        %v7244 = vpack.c.bf16 %v7228, %v7227
        %v7245 = vpack.c.bf16 %v7230, %v7229
        %v7246 = vpack.c.bf16 %v7232, %v7231
        %v7247 = vpack.c.bf16 %v7234, %v7233
        %v7248 = vpack.c.bf16 %v7236, %v7235
        %v7249 = vpack.c.bf16 %v7238, %v7237
        %v7250 = vpack.c.bf16 %v7240, %v7239
        %s7251 = scalar_lea.vmem %s5, 896
        %v7252 = vld [vmem:[%s7251] sm:$0xff]
        %v7253 = vld [vmem:[%s7251 + $0x8] sm:$0xff]
        %v7254 = vld [vmem:[%s7251 + $0x10] sm:$0xff]
        %v7255 = vld [vmem:[%s7251 + $0x18] sm:$0xff]
        %v7256 = vld [vmem:[%s7251 + $0x20] sm:$0xff]
        %v7257 = vld [vmem:[%s7251 + $0x28] sm:$0xff]
        %v7258 = vld [vmem:[%s7251 + $0x30] sm:$0xff]
        %v7259 = vld [vmem:[%s7251 + $0x38] sm:$0xff]
        %v7260 = vld [vmem:[%s7251 + $0x40] sm:$0xff]
        %v7261 = vld [vmem:[%s7251 + $0x48] sm:$0xff]
        %v7262 = vld [vmem:[%s7251 + $0x50] sm:$0xff]
        %v7263 = vld [vmem:[%s7251 + $0x58] sm:$0xff]
        %v7264 = vld [vmem:[%s7251 + $0x60] sm:$0xff]
        %v7265 = vld [vmem:[%s7251 + $0x68] sm:$0xff]
        %v7266 = vld [vmem:[%s7251 + $0x70] sm:$0xff]
        %v7267 = vld [vmem:[%s7251 + $0x78] sm:$0xff]
        %v7284 = vunpack.c.l.b16 %v7252
        %v7285 = vunpack.c.h.b16 %v7252
        %v7286 = vunpack.c.l.b16 %v7253
        %v7287 = vunpack.c.h.b16 %v7253
        %v7288 = vunpack.c.l.b16 %v7254
        %v7289 = vunpack.c.h.b16 %v7254
        %v7290 = vunpack.c.l.b16 %v7255
        %v7291 = vunpack.c.h.b16 %v7255
        %v7292 = vunpack.c.l.b16 %v7256
        %v7293 = vunpack.c.h.b16 %v7256
        %v7294 = vunpack.c.l.b16 %v7257
        %v7295 = vunpack.c.h.b16 %v7257
        %v7296 = vunpack.c.l.b16 %v7258
        %v7297 = vunpack.c.h.b16 %v7258
        %v7298 = vunpack.c.l.b16 %v7259
        %v7299 = vunpack.c.h.b16 %v7259
        %v7300 = vunpack.c.l.b16 %v7260
        %v7301 = vunpack.c.h.b16 %v7260
        %v7302 = vunpack.c.l.b16 %v7261
        %v7303 = vunpack.c.h.b16 %v7261
        %v7304 = vunpack.c.l.b16 %v7262
        %v7305 = vunpack.c.h.b16 %v7262
        %v7306 = vunpack.c.l.b16 %v7263
        %v7307 = vunpack.c.h.b16 %v7263
        %v7308 = vunpack.c.l.b16 %v7264
        %v7309 = vunpack.c.h.b16 %v7264
        %v7310 = vunpack.c.l.b16 %v7265
        %v7311 = vunpack.c.h.b16 %v7265
        %v7312 = vunpack.c.l.b16 %v7266
        %v7313 = vunpack.c.h.b16 %v7266
        %v7314 = vunpack.c.l.b16 %v7267
        %v7315 = vunpack.c.h.b16 %v7267
        %v7316 = vpack.c.b16 %v7288, %v7284
        %v7317 = vpack.c.b16 %v7289, %v7285
        %v7318 = vpack.c.b16 %v7290, %v7286
        %v7319 = vpack.c.b16 %v7291, %v7287
        %v7320 = vpack.c.b16 %v7296, %v7292
        %v7321 = vpack.c.b16 %v7297, %v7293
        %v7322 = vpack.c.b16 %v7298, %v7294
        %v7323 = vpack.c.b16 %v7299, %v7295
        %v7324 = vpack.c.b16 %v7304, %v7300
        %v7325 = vpack.c.b16 %v7305, %v7301
        %v7326 = vpack.c.b16 %v7306, %v7302
        %v7327 = vpack.c.b16 %v7307, %v7303
        %v7328 = vpack.c.b16 %v7312, %v7308
        %v7329 = vpack.c.b16 %v7313, %v7309
        %v7330 = vpack.c.b16 %v7314, %v7310
        %v7331 = vpack.c.b16 %v7315, %v7311
        %v7349 = vsel %vm2714, %v7241, 0
        %v7352 = vsel %vm2714, %v7242, 0
        %v7355 = vsel %vm2714, %v7243, 0
        %v7358 = vsel %vm2714, %v7244, 0
        %v7361 = vsel %vm2714, %v7245, 0
        %v7364 = vsel %vm2714, %v7246, 0
        %v7367 = vsel %vm2714, %v7247, 0
        %v7370 = vsel %vm2714, %v7248, 0
        %v7373 = vsel %vm2714, %v7249, 0
        %v7376 = vsel %vm2714, %v7250, 0
        %7378 = vmatprep.subr.bf16.mxu0 %v7317
        %7379 = vmatpush1.bf16.msra.mxu0 %v7316
        %7380 = vmatprep.subr.bf16.mxu0 %v7321
        %7381 = vmatpush1.bf16.msra.mxu0 %v7320
        %7382 = vmatprep.subr.bf16.mxu0 %v7325
        %7383 = vmatpush1.bf16.msra.mxu0 %v7324
        %7384 = vmatprep.subr.bf16.mxu0 %v7329
        %7385 = vmatpush1.bf16.msra.mxu0 %v7328
        %7386 = vmatprep.subr.bf16.mxu0 0
        %7387 = vmatpush1.bf16.msra.mxu0 0
        %7388 = vmatprep.subr.bf16.mxu0 0
        %7389 = vmatpush1.bf16.msra.mxu0 0
        %7390 = vmatprep.subr.bf16.mxu0 0
        %7391 = vmatpush1.bf16.msra.mxu0 0
        %7392 = vmatprep.subr.bf16.mxu0 0
        %7393 = vmatpush1.bf16.msra.mxu0 0
        %7394 = vmatprep.subr.bf16.mxu0 0
        %7395 = vmatpush1.bf16.msra.mxu0 0
        %7396 = vmatprep.subr.bf16.mxu0 0
        %7397 = vmatpush1.bf16.msra.mxu0 0
        %7398 = vmatprep.subr.bf16.mxu0 0
        %7399 = vmatpush1.bf16.msra.mxu0 0
        %7400 = vmatprep.subr.bf16.mxu0 0
        %7401 = vmatpush1.bf16.msra.mxu0 0
        %7402 = vmatprep.subr.bf16.mxu0 0
        %7403 = vmatpush1.bf16.msra.mxu0 0
        %7404 = vmatprep.subr.bf16.mxu0 0
        %7405 = vmatpush1.bf16.msra.mxu0 0
        %7406 = vmatprep.subr.bf16.mxu0 0
        %7407 = vmatpush1.bf16.msra.mxu0 0
        %7408 = vmatprep.subr.bf16.mxu0 0
        %7409 = vmatpush1.bf16.msra.mxu0 0
        %7410 = vmatprep.mubr.bf16.mxu0 0
        %7411 = vmatmul.mubr.bf16.gmra.mrb[0].mxu0 %v7349
        %v7412 = vpop.f32.mrb[0].mxu0
        %v7413 = vadd.f32 0.0, %v7412
        %v7414 = vpop.f32.mrb[0].mxu0
        %v7415 = vadd.f32 0.0, %v7414
        %v7416 = vpop.f32.mrb[0].mxu0
        %v7417 = vadd.f32 0.0, %v7416
        %v7418 = vpop.f32.mrb[0].mxu0
        %v7419 = vadd.f32 0.0, %v7418
        %7420 = vmatprep.mubr.bf16.mxu0 0
        %7421 = vmatmul.mubr.bf16.gmra.mrb[0].mxu0 %v7352
        %v7422 = vpop.f32.mrb[0].mxu0
        %v7423 = vadd.f32 0.0, %v7422
        %v7424 = vpop.f32.mrb[0].mxu0
        %v7425 = vadd.f32 0.0, %v7424
        %v7426 = vpop.f32.mrb[0].mxu0
        %v7427 = vadd.f32 0.0, %v7426
        %v7428 = vpop.f32.mrb[0].mxu0
        %v7429 = vadd.f32 0.0, %v7428
        %7430 = vmatprep.mubr.bf16.mxu0 0
        %7431 = vmatmul.mubr.bf16.gmra.mrb[0].mxu0 %v7355
        %v7432 = vpop.f32.mrb[0].mxu0
        %v7433 = vadd.f32 0.0, %v7432
        %v7434 = vpop.f32.mrb[0].mxu0
        %v7435 = vadd.f32 0.0, %v7434
        %v7436 = vpop.f32.mrb[0].mxu0
        %v7437 = vadd.f32 0.0, %v7436
        %v7438 = vpop.f32.mrb[0].mxu0
        %v7439 = vadd.f32 0.0, %v7438
        %7440 = vmatprep.mubr.bf16.mxu0 0
        %7441 = vmatmul.mubr.bf16.gmra.mrb[0].mxu0 %v7358
        %v7442 = vpop.f32.mrb[0].mxu0
        %v7443 = vadd.f32 0.0, %v7442
        %v7444 = vpop.f32.mrb[0].mxu0
        %v7445 = vadd.f32 0.0, %v7444
        %v7446 = vpop.f32.mrb[0].mxu0
        %v7447 = vadd.f32 0.0, %v7446
        %v7448 = vpop.f32.mrb[0].mxu0
        %v7449 = vadd.f32 0.0, %v7448
        %7450 = vmatprep.mubr.bf16.mxu0 0
        %7451 = vmatmul.mubr.bf16.gmra.mrb[0].mxu0 %v7361
        %v7452 = vpop.f32.mrb[0].mxu0
        %v7453 = vadd.f32 0.0, %v7452
        %v7454 = vpop.f32.mrb[0].mxu0
        %v7455 = vadd.f32 0.0, %v7454
        %v7456 = vpop.f32.mrb[0].mxu0
        %v7457 = vadd.f32 0.0, %v7456
        %v7458 = vpop.f32.mrb[0].mxu0
        %v7459 = vadd.f32 0.0, %v7458
        %7460 = vmatprep.mubr.bf16.mxu0 0
        %7461 = vmatmul.mubr.bf16.gmra.mrb[0].mxu0 %v7364
        %v7462 = vpop.f32.mrb[0].mxu0
        %v7463 = vadd.f32 0.0, %v7462
        %v7464 = vpop.f32.mrb[0].mxu0
        %v7465 = vadd.f32 0.0, %v7464
        %v7466 = vpop.f32.mrb[0].mxu0
        %v7467 = vadd.f32 0.0, %v7466
        %v7468 = vpop.f32.mrb[0].mxu0
        %v7469 = vadd.f32 0.0, %v7468
        %7470 = vmatprep.mubr.bf16.mxu0 0
        %7471 = vmatmul.mubr.bf16.gmra.mrb[0].mxu0 %v7367
        %v7472 = vpop.f32.mrb[0].mxu0
        %v7473 = vadd.f32 0.0, %v7472
        %v7474 = vpop.f32.mrb[0].mxu0
        %v7475 = vadd.f32 0.0, %v7474
        %v7476 = vpop.f32.mrb[0].mxu0
        %v7477 = vadd.f32 0.0, %v7476
        %v7478 = vpop.f32.mrb[0].mxu0
        %v7479 = vadd.f32 0.0, %v7478
        %7480 = vmatprep.mubr.bf16.mxu0 0
        %7481 = vmatmul.mubr.bf16.gmra.mrb[0].mxu0 %v7370
        %v7482 = vpop.f32.mrb[0].mxu0
        %v7483 = vadd.f32 0.0, %v7482
        %v7484 = vpop.f32.mrb[0].mxu0
        %v7485 = vadd.f32 0.0, %v7484
        %v7486 = vpop.f32.mrb[0].mxu0
        %v7487 = vadd.f32 0.0, %v7486
        %v7488 = vpop.f32.mrb[0].mxu0
        %v7489 = vadd.f32 0.0, %v7488
        %7490 = vmatprep.mubr.bf16.mxu0 0
        %7491 = vmatmul.mubr.bf16.gmra.mrb[0].mxu0 %v7373
        %v7492 = vpop.f32.mrb[0].mxu0
        %v7493 = vadd.f32 0.0, %v7492
        %v7494 = vpop.f32.mrb[0].mxu0
        %v7495 = vadd.f32 0.0, %v7494
        %v7496 = vpop.f32.mrb[0].mxu0
        %v7497 = vadd.f32 0.0, %v7496
        %v7498 = vpop.f32.mrb[0].mxu0
        %v7499 = vadd.f32 0.0, %v7498
        %7500 = vmatprep.mubr.bf16.mxu0 0
        %7501 = vmatmul.mubr.bf16.gmra.mrb[0].mxu0 %v7376
        %v7502 = vpop.f32.mrb[0].mxu0
        %v7503 = vadd.f32 0.0, %v7502
        %v7504 = vpop.f32.mrb[0].mxu0
        %v7505 = vadd.f32 0.0, %v7504
        %v7506 = vpop.f32.mrb[0].mxu0
        %v7507 = vadd.f32 0.0, %v7506
        %v7508 = vpop.f32.mrb[0].mxu0
        %v7509 = vadd.f32 0.0, %v7508
        %7510 = vdwg.mxu0
        %7511 = vmatprep.subr.bf16.mxu0 %v7319
        %7512 = vmatpush1.bf16.msra.mxu0 %v7318
        %7513 = vmatprep.subr.bf16.mxu0 %v7323
        %7514 = vmatpush1.bf16.msra.mxu0 %v7322
        %7515 = vmatprep.subr.bf16.mxu0 %v7327
        %7516 = vmatpush1.bf16.msra.mxu0 %v7326
        %7517 = vmatprep.subr.bf16.mxu0 %v7331
        %7518 = vmatpush1.bf16.msra.mxu0 %v7330
        %7519 = vmatprep.subr.bf16.mxu0 0
        %7520 = vmatpush1.bf16.msra.mxu0 0
        %7521 = vmatprep.subr.bf16.mxu0 0
        %7522 = vmatpush1.bf16.msra.mxu0 0
        %7523 = vmatprep.subr.bf16.mxu0 0
        %7524 = vmatpush1.bf16.msra.mxu0 0
        %7525 = vmatprep.subr.bf16.mxu0 0
        %7526 = vmatpush1.bf16.msra.mxu0 0
        %7527 = vmatprep.subr.bf16.mxu0 0
        %7528 = vmatpush1.bf16.msra.mxu0 0
        %7529 = vmatprep.subr.bf16.mxu0 0
        %7530 = vmatpush1.bf16.msra.mxu0 0
        %7531 = vmatprep.subr.bf16.mxu0 0
        %7532 = vmatpush1.bf16.msra.mxu0 0
        %7533 = vmatprep.subr.bf16.mxu0 0
        %7534 = vmatpush1.bf16.msra.mxu0 0
        %7535 = vmatprep.subr.bf16.mxu0 0
        %7536 = vmatpush1.bf16.msra.mxu0 0
        %7537 = vmatprep.subr.bf16.mxu0 0
        %7538 = vmatpush1.bf16.msra.mxu0 0
        %7539 = vmatprep.subr.bf16.mxu0 0
        %7540 = vmatpush1.bf16.msra.mxu0 0
        %7541 = vmatprep.subr.bf16.mxu0 0
        %7542 = vmatpush1.bf16.msra.mxu0 0
        %7543 = vmatprep.mubr.bf16.mxu0 0
        %7544 = vmatmul.mubr.bf16.gmra.mrb[0].mxu0 %v7349
        %v7545 = vpop.f32.mrb[0].mxu0
        %v7546 = vadd.f32 0.0, %v7545
        %v7547 = vpop.f32.mrb[0].mxu0
        %v7548 = vadd.f32 0.0, %v7547
        %v7549 = vpop.f32.mrb[0].mxu0
        %v7550 = vadd.f32 0.0, %v7549
        %v7551 = vpop.f32.mrb[0].mxu0
        %v7552 = vadd.f32 0.0, %v7551
        %7553 = vmatprep.mubr.bf16.mxu0 0
        %7554 = vmatmul.mubr.bf16.gmra.mrb[0].mxu0 %v7352
        %v7555 = vpop.f32.mrb[0].mxu0
        %v7556 = vadd.f32 0.0, %v7555
        %v7557 = vpop.f32.mrb[0].mxu0
        %v7558 = vadd.f32 0.0, %v7557
        %v7559 = vpop.f32.mrb[0].mxu0
        %v7560 = vadd.f32 0.0, %v7559
        %v7561 = vpop.f32.mrb[0].mxu0
        %v7562 = vadd.f32 0.0, %v7561
        %7563 = vmatprep.mubr.bf16.mxu0 0
        %7564 = vmatmul.mubr.bf16.gmra.mrb[0].mxu0 %v7355
        %v7565 = vpop.f32.mrb[0].mxu0
        %v7566 = vadd.f32 0.0, %v7565
        %v7567 = vpop.f32.mrb[0].mxu0
        %v7568 = vadd.f32 0.0, %v7567
        %v7569 = vpop.f32.mrb[0].mxu0
        %v7570 = vadd.f32 0.0, %v7569
        %v7571 = vpop.f32.mrb[0].mxu0
        %v7572 = vadd.f32 0.0, %v7571
        %7573 = vmatprep.mubr.bf16.mxu0 0
        %7574 = vmatmul.mubr.bf16.gmra.mrb[0].mxu0 %v7358
        %v7575 = vpop.f32.mrb[0].mxu0
        %v7576 = vadd.f32 0.0, %v7575
        %v7577 = vpop.f32.mrb[0].mxu0
        %v7578 = vadd.f32 0.0, %v7577
        %v7579 = vpop.f32.mrb[0].mxu0
        %v7580 = vadd.f32 0.0, %v7579
        %v7581 = vpop.f32.mrb[0].mxu0
        %v7582 = vadd.f32 0.0, %v7581
        %7583 = vmatprep.mubr.bf16.mxu0 0
        %7584 = vmatmul.mubr.bf16.gmra.mrb[0].mxu0 %v7361
        %v7585 = vpop.f32.mrb[0].mxu0
        %v7586 = vadd.f32 0.0, %v7585
        %v7587 = vpop.f32.mrb[0].mxu0
        %v7588 = vadd.f32 0.0, %v7587
        %v7589 = vpop.f32.mrb[0].mxu0
        %v7590 = vadd.f32 0.0, %v7589
        %v7591 = vpop.f32.mrb[0].mxu0
        %v7592 = vadd.f32 0.0, %v7591
        %7593 = vmatprep.mubr.bf16.mxu0 0
        %7594 = vmatmul.mubr.bf16.gmra.mrb[0].mxu0 %v7364
        %v7595 = vpop.f32.mrb[0].mxu0
        %v7596 = vadd.f32 0.0, %v7595
        %v7597 = vpop.f32.mrb[0].mxu0
        %v7598 = vadd.f32 0.0, %v7597
        %v7599 = vpop.f32.mrb[0].mxu0
        %v7600 = vadd.f32 0.0, %v7599
        %v7601 = vpop.f32.mrb[0].mxu0
        %v7602 = vadd.f32 0.0, %v7601
        %7603 = vmatprep.mubr.bf16.mxu0 0
        %7604 = vmatmul.mubr.bf16.gmra.mrb[0].mxu0 %v7367
        %v7605 = vpop.f32.mrb[0].mxu0
        %v7606 = vadd.f32 0.0, %v7605
        %v7607 = vpop.f32.mrb[0].mxu0
        %v7608 = vadd.f32 0.0, %v7607
        %v7609 = vpop.f32.mrb[0].mxu0
        %v7610 = vadd.f32 0.0, %v7609
        %v7611 = vpop.f32.mrb[0].mxu0
        %v7612 = vadd.f32 0.0, %v7611
        %7613 = vmatprep.mubr.bf16.mxu0 0
        %7614 = vmatmul.mubr.bf16.gmra.mrb[0].mxu0 %v7370
        %v7615 = vpop.f32.mrb[0].mxu0
        %v7616 = vadd.f32 0.0, %v7615
        %v7617 = vpop.f32.mrb[0].mxu0
        %v7618 = vadd.f32 0.0, %v7617
        %v7619 = vpop.f32.mrb[0].mxu0
        %v7620 = vadd.f32 0.0, %v7619
        %v7621 = vpop.f32.mrb[0].mxu0
        %v7622 = vadd.f32 0.0, %v7621
        %7623 = vmatprep.mubr.bf16.mxu0 0
        %7624 = vmatmul.mubr.bf16.gmra.mrb[0].mxu0 %v7373
        %v7625 = vpop.f32.mrb[0].mxu0
        %v7626 = vadd.f32 0.0, %v7625
        %v7627 = vpop.f32.mrb[0].mxu0
        %v7628 = vadd.f32 0.0, %v7627
        %v7629 = vpop.f32.mrb[0].mxu0
        %v7630 = vadd.f32 0.0, %v7629
        %v7631 = vpop.f32.mrb[0].mxu0
        %v7632 = vadd.f32 0.0, %v7631
        %7633 = vmatprep.mubr.bf16.mxu0 0
        %7634 = vmatmul.mubr.bf16.gmra.mrb[0].mxu0 %v7376
        %v7635 = vpop.f32.mrb[0].mxu0
        %v7636 = vadd.f32 0.0, %v7635
        %v7637 = vpop.f32.mrb[0].mxu0
        %v7638 = vadd.f32 0.0, %v7637
        %v7639 = vpop.f32.mrb[0].mxu0
        %v7640 = vadd.f32 0.0, %v7639
        %v7641 = vpop.f32.mrb[0].mxu0
        %v7642 = vadd.f32 0.0, %v7641
        %7643 = vdwg.mxu0
        %v7644 = vld [vmem:[#allocation3] sm:$0xff]
        %v7645 = vld [vmem:[#allocation3 + $0x8] sm:$0xff]
        %v7646 = vld [vmem:[#allocation3 + $0x10] sm:$0xff]
        %v7647 = vld [vmem:[#allocation3 + $0x18] sm:$0xff]
        %v7648 = vld [vmem:[#allocation3 + $0x20] sm:$0xff]
        %v7649 = vld [vmem:[#allocation3 + $0x28] sm:$0xff]
        %v7650 = vld [vmem:[#allocation3 + $0x30] sm:$0xff]
        %v7651 = vld [vmem:[#allocation3 + $0x38] sm:$0xff]
        %v7652 = vld [vmem:[#allocation3 + $0x40] sm:$0xff]
        %v7653 = vld [vmem:[#allocation3 + $0x48] sm:$0xff]
        %v7654 = vld [vmem:[#allocation3 + $0x50] sm:$0xff]
        %v7655 = vld [vmem:[#allocation3 + $0x58] sm:$0xff]
        %v7656 = vld [vmem:[#allocation3 + $0x60] sm:$0xff]
        %v7657 = vld [vmem:[#allocation3 + $0x68] sm:$0xff]
        %v7658 = vld [vmem:[#allocation3 + $0x70] sm:$0xff]
        %v7659 = vld [vmem:[#allocation3 + $0x78] sm:$0xff]
        %v7660 = vld [vmem:[#allocation3 + $0x80] sm:$0xff]
        %v7661 = vld [vmem:[#allocation3 + $0x88] sm:$0xff]
        %v7662 = vld [vmem:[#allocation3 + $0x90] sm:$0xff]
        %v7663 = vld [vmem:[#allocation3 + $0x98] sm:$0xff]
        %v7664 = vld [vmem:[#allocation3 + $0xa0] sm:$0xff]
        %v7665 = vld [vmem:[#allocation3 + $0xa8] sm:$0xff]
        %v7666 = vld [vmem:[#allocation3 + $0xb0] sm:$0xff]
        %v7667 = vld [vmem:[#allocation3 + $0xb8] sm:$0xff]
        %v7668 = vld [vmem:[#allocation3 + $0xc0] sm:$0xff]
        %v7669 = vld [vmem:[#allocation3 + $0xc8] sm:$0xff]
        %v7670 = vld [vmem:[#allocation3 + $0xd0] sm:$0xff]
        %v7671 = vld [vmem:[#allocation3 + $0xd8] sm:$0xff]
        %v7672 = vld [vmem:[#allocation3 + $0xe0] sm:$0xff]
        %v7673 = vld [vmem:[#allocation3 + $0xe8] sm:$0xff]
        %v7674 = vld [vmem:[#allocation3 + $0xf0] sm:$0xff]
        %v7675 = vld [vmem:[#allocation3 + $0xf8] sm:$0xff]
        %v7676 = vld [vmem:[#allocation3 + $0x100] sm:$0xff]
        %v7677 = vld [vmem:[#allocation3 + $0x108] sm:$0xff]
        %v7678 = vld [vmem:[#allocation3 + $0x110] sm:$0xff]
        %v7679 = vld [vmem:[#allocation3 + $0x118] sm:$0xff]
        %v7680 = vld [vmem:[#allocation3 + $0x120] sm:$0xff]
        %v7681 = vld [vmem:[#allocation3 + $0x128] sm:$0xff]
        %v7682 = vld [vmem:[#allocation3 + $0x130] sm:$0xff]
        %v7683 = vld [vmem:[#allocation3 + $0x138] sm:$0xff]
        %v7684 = vld [vmem:[#allocation3 + $0x140] sm:$0xff]
        %v7685 = vld [vmem:[#allocation3 + $0x148] sm:$0xff]
        %v7686 = vld [vmem:[#allocation3 + $0x150] sm:$0xff]
        %v7687 = vld [vmem:[#allocation3 + $0x158] sm:$0xff]
        %v7688 = vld [vmem:[#allocation3 + $0x160] sm:$0xff]
        %v7689 = vld [vmem:[#allocation3 + $0x168] sm:$0xff]
        %v7690 = vld [vmem:[#allocation3 + $0x170] sm:$0xff]
        %v7691 = vld [vmem:[#allocation3 + $0x178] sm:$0xff]
        %v7692 = vld [vmem:[#allocation3 + $0x180] sm:$0xff]
        %v7693 = vld [vmem:[#allocation3 + $0x188] sm:$0xff]
        %v7694 = vld [vmem:[#allocation3 + $0x190] sm:$0xff]
        %v7695 = vld [vmem:[#allocation3 + $0x198] sm:$0xff]
        %v7696 = vld [vmem:[#allocation3 + $0x1a0] sm:$0xff]
        %v7697 = vld [vmem:[#allocation3 + $0x1a8] sm:$0xff]
        %v7698 = vld [vmem:[#allocation3 + $0x1b0] sm:$0xff]
        %v7699 = vld [vmem:[#allocation3 + $0x1b8] sm:$0xff]
        %v7700 = vld [vmem:[#allocation3 + $0x1c0] sm:$0xff]
        %v7701 = vld [vmem:[#allocation3 + $0x1c8] sm:$0xff]
        %v7702 = vld [vmem:[#allocation3 + $0x1d0] sm:$0xff]
        %v7703 = vld [vmem:[#allocation3 + $0x1d8] sm:$0xff]
        %v7704 = vld [vmem:[#allocation3 + $0x1e0] sm:$0xff]
        %v7705 = vld [vmem:[#allocation3 + $0x1e8] sm:$0xff]
        %v7706 = vld [vmem:[#allocation3 + $0x1f0] sm:$0xff]
        %v7707 = vld [vmem:[#allocation3 + $0x1f8] sm:$0xff]
        %v7708 = vld [vmem:[#allocation3 + $0x200] sm:$0xff]
        %v7709 = vld [vmem:[#allocation3 + $0x208] sm:$0xff]
        %v7710 = vld [vmem:[#allocation3 + $0x210] sm:$0xff]
        %v7711 = vld [vmem:[#allocation3 + $0x218] sm:$0xff]
        %v7712 = vld [vmem:[#allocation3 + $0x220] sm:$0xff]
        %v7713 = vld [vmem:[#allocation3 + $0x228] sm:$0xff]
        %v7714 = vld [vmem:[#allocation3 + $0x230] sm:$0xff]
        %v7715 = vld [vmem:[#allocation3 + $0x238] sm:$0xff]
        %v7716 = vld [vmem:[#allocation3 + $0x240] sm:$0xff]
        %v7717 = vld [vmem:[#allocation3 + $0x248] sm:$0xff]
        %v7718 = vld [vmem:[#allocation3 + $0x250] sm:$0xff]
        %v7719 = vld [vmem:[#allocation3 + $0x258] sm:$0xff]
        %v7720 = vld [vmem:[#allocation3 + $0x260] sm:$0xff]
        %v7721 = vld [vmem:[#allocation3 + $0x268] sm:$0xff]
        %v7722 = vld [vmem:[#allocation3 + $0x270] sm:$0xff]
        %v7723 = vld [vmem:[#allocation3 + $0x278] sm:$0xff]
        %v7724 = vadd.f32 %v7644, %v7413
        %v7725 = vadd.f32 %v7645, %v7415
        %v7726 = vadd.f32 %v7646, %v7546
        %v7727 = vadd.f32 %v7647, %v7548
        %v7728 = vadd.f32 %v7648, %v7417
        %v7729 = vadd.f32 %v7649, %v7419
        %v7730 = vadd.f32 %v7650, %v7550
        %v7731 = vadd.f32 %v7651, %v7552
        %v7732 = vadd.f32 %v7652, %v7423
        %v7733 = vadd.f32 %v7653, %v7425
        %v7734 = vadd.f32 %v7654, %v7556
        %v7735 = vadd.f32 %v7655, %v7558
        %v7736 = vadd.f32 %v7656, %v7427
        %v7737 = vadd.f32 %v7657, %v7429
        %v7738 = vadd.f32 %v7658, %v7560
        %v7739 = vadd.f32 %v7659, %v7562
        %v7740 = vadd.f32 %v7660, %v7433
        %v7741 = vadd.f32 %v7661, %v7435
        %v7742 = vadd.f32 %v7662, %v7566
        %v7743 = vadd.f32 %v7663, %v7568
        %v7744 = vadd.f32 %v7664, %v7437
        %v7745 = vadd.f32 %v7665, %v7439
        %v7746 = vadd.f32 %v7666, %v7570
        %v7747 = vadd.f32 %v7667, %v7572
        %v7748 = vadd.f32 %v7668, %v7443
        %v7749 = vadd.f32 %v7669, %v7445
        %v7750 = vadd.f32 %v7670, %v7576
        %v7751 = vadd.f32 %v7671, %v7578
        %v7752 = vadd.f32 %v7672, %v7447
        %v7753 = vadd.f32 %v7673, %v7449
        %v7754 = vadd.f32 %v7674, %v7580
        %v7755 = vadd.f32 %v7675, %v7582
        %v7756 = vadd.f32 %v7676, %v7453
        %v7757 = vadd.f32 %v7677, %v7455
        %v7758 = vadd.f32 %v7678, %v7586
        %v7759 = vadd.f32 %v7679, %v7588
        %v7760 = vadd.f32 %v7680, %v7457
        %v7761 = vadd.f32 %v7681, %v7459
        %v7762 = vadd.f32 %v7682, %v7590
        %v7763 = vadd.f32 %v7683, %v7592
        %v7764 = vadd.f32 %v7684, %v7463
        %v7765 = vadd.f32 %v7685, %v7465
        %v7766 = vadd.f32 %v7686, %v7596
        %v7767 = vadd.f32 %v7687, %v7598
        %v7768 = vadd.f32 %v7688, %v7467
        %v7769 = vadd.f32 %v7689, %v7469
        %v7770 = vadd.f32 %v7690, %v7600
        %v7771 = vadd.f32 %v7691, %v7602
        %v7772 = vadd.f32 %v7692, %v7473
        %v7773 = vadd.f32 %v7693, %v7475
        %v7774 = vadd.f32 %v7694, %v7606
        %v7775 = vadd.f32 %v7695, %v7608
        %v7776 = vadd.f32 %v7696, %v7477
        %v7777 = vadd.f32 %v7697, %v7479
        %v7778 = vadd.f32 %v7698, %v7610
        %v7779 = vadd.f32 %v7699, %v7612
        %v7780 = vadd.f32 %v7700, %v7483
        %v7781 = vadd.f32 %v7701, %v7485
        %v7782 = vadd.f32 %v7702, %v7616
        %v7783 = vadd.f32 %v7703, %v7618
        %v7784 = vadd.f32 %v7704, %v7487
        %v7785 = vadd.f32 %v7705, %v7489
        %v7786 = vadd.f32 %v7706, %v7620
        %v7787 = vadd.f32 %v7707, %v7622
        %v7788 = vadd.f32 %v7708, %v7493
        %v7789 = vadd.f32 %v7709, %v7495
        %v7790 = vadd.f32 %v7710, %v7626
        %v7791 = vadd.f32 %v7711, %v7628
        %v7792 = vadd.f32 %v7712, %v7497
        %v7793 = vadd.f32 %v7713, %v7499
        %v7794 = vadd.f32 %v7714, %v7630
        %v7795 = vadd.f32 %v7715, %v7632
        %v7796 = vadd.f32 %v7716, %v7503
        %v7797 = vadd.f32 %v7717, %v7505
        %v7798 = vadd.f32 %v7718, %v7636
        %v7799 = vadd.f32 %v7719, %v7638
        %v7800 = vadd.f32 %v7720, %v7507
        %v7801 = vadd.f32 %v7721, %v7509
        %v7802 = vadd.f32 %v7722, %v7640
        %v7803 = vadd.f32 %v7723, %v7642
        %7804 = vst [vmem:[#allocation3] sm:$0xff] %v7724
        %7805 = vst [vmem:[#allocation3 + $0x8] sm:$0xff] %v7725
        %7806 = vst [vmem:[#allocation3 + $0x10] sm:$0xff] %v7726
        %7807 = vst [vmem:[#allocation3 + $0x18] sm:$0xff] %v7727
        %7808 = vst [vmem:[#allocation3 + $0x20] sm:$0xff] %v7728
        %7809 = vst [vmem:[#allocation3 + $0x28] sm:$0xff] %v7729
        %7810 = vst [vmem:[#allocation3 + $0x30] sm:$0xff] %v7730
        %7811 = vst [vmem:[#allocation3 + $0x38] sm:$0xff] %v7731
        %7812 = vst [vmem:[#allocation3 + $0x40] sm:$0xff] %v7732
        %7813 = vst [vmem:[#allocation3 + $0x48] sm:$0xff] %v7733
        %7814 = vst [vmem:[#allocation3 + $0x50] sm:$0xff] %v7734
        %7815 = vst [vmem:[#allocation3 + $0x58] sm:$0xff] %v7735
        %7816 = vst [vmem:[#allocation3 + $0x60] sm:$0xff] %v7736
        %7817 = vst [vmem:[#allocation3 + $0x68] sm:$0xff] %v7737
        %7818 = vst [vmem:[#allocation3 + $0x70] sm:$0xff] %v7738
        %7819 = vst [vmem:[#allocation3 + $0x78] sm:$0xff] %v7739
        %7820 = vst [vmem:[#allocation3 + $0x80] sm:$0xff] %v7740
        %7821 = vst [vmem:[#allocation3 + $0x88] sm:$0xff] %v7741
        %7822 = vst [vmem:[#allocation3 + $0x90] sm:$0xff] %v7742
        %7823 = vst [vmem:[#allocation3 + $0x98] sm:$0xff] %v7743
        %7824 = vst [vmem:[#allocation3 + $0xa0] sm:$0xff] %v7744
        %7825 = vst [vmem:[#allocation3 + $0xa8] sm:$0xff] %v7745
        %7826 = vst [vmem:[#allocation3 + $0xb0] sm:$0xff] %v7746
        %7827 = vst [vmem:[#allocation3 + $0xb8] sm:$0xff] %v7747
        %7828 = vst [vmem:[#allocation3 + $0xc0] sm:$0xff] %v7748
        %7829 = vst [vmem:[#allocation3 + $0xc8] sm:$0xff] %v7749
        %7830 = vst [vmem:[#allocation3 + $0xd0] sm:$0xff] %v7750
        %7831 = vst [vmem:[#allocation3 + $0xd8] sm:$0xff] %v7751
        %7832 = vst [vmem:[#allocation3 + $0xe0] sm:$0xff] %v7752
        %7833 = vst [vmem:[#allocation3 + $0xe8] sm:$0xff] %v7753
        %7834 = vst [vmem:[#allocation3 + $0xf0] sm:$0xff] %v7754
        %7835 = vst [vmem:[#allocation3 + $0xf8] sm:$0xff] %v7755
        %7836 = vst [vmem:[#allocation3 + $0x100] sm:$0xff] %v7756
        %7837 = vst [vmem:[#allocation3 + $0x108] sm:$0xff] %v7757
        %7838 = vst [vmem:[#allocation3 + $0x110] sm:$0xff] %v7758
        %7839 = vst [vmem:[#allocation3 + $0x118] sm:$0xff] %v7759
        %7840 = vst [vmem:[#allocation3 + $0x120] sm:$0xff] %v7760
        %7841 = vst [vmem:[#allocation3 + $0x128] sm:$0xff] %v7761
        %7842 = vst [vmem:[#allocation3 + $0x130] sm:$0xff] %v7762
        %7843 = vst [vmem:[#allocation3 + $0x138] sm:$0xff] %v7763
        %7844 = vst [vmem:[#allocation3 + $0x140] sm:$0xff] %v7764
        %7845 = vst [vmem:[#allocation3 + $0x148] sm:$0xff] %v7765
        %7846 = vst [vmem:[#allocation3 + $0x150] sm:$0xff] %v7766
        %7847 = vst [vmem:[#allocation3 + $0x158] sm:$0xff] %v7767
        %7848 = vst [vmem:[#allocation3 + $0x160] sm:$0xff] %v7768
        %7849 = vst [vmem:[#allocation3 + $0x168] sm:$0xff] %v7769
        %7850 = vst [vmem:[#allocation3 + $0x170] sm:$0xff] %v7770
        %7851 = vst [vmem:[#allocation3 + $0x178] sm:$0xff] %v7771
        %7852 = vst [vmem:[#allocation3 + $0x180] sm:$0xff] %v7772
        %7853 = vst [vmem:[#allocation3 + $0x188] sm:$0xff] %v7773
        %7854 = vst [vmem:[#allocation3 + $0x190] sm:$0xff] %v7774
        %7855 = vst [vmem:[#allocation3 + $0x198] sm:$0xff] %v7775
        %7856 = vst [vmem:[#allocation3 + $0x1a0] sm:$0xff] %v7776
        %7857 = vst [vmem:[#allocation3 + $0x1a8] sm:$0xff] %v7777
        %7858 = vst [vmem:[#allocation3 + $0x1b0] sm:$0xff] %v7778
        %7859 = vst [vmem:[#allocation3 + $0x1b8] sm:$0xff] %v7779
        %7860 = vst [vmem:[#allocation3 + $0x1c0] sm:$0xff] %v7780
        %7861 = vst [vmem:[#allocation3 + $0x1c8] sm:$0xff] %v7781
        %7862 = vst [vmem:[#allocation3 + $0x1d0] sm:$0xff] %v7782
        %7863 = vst [vmem:[#allocation3 + $0x1d8] sm:$0xff] %v7783
        %7864 = vst [vmem:[#allocation3 + $0x1e0] sm:$0xff] %v7784
        %7865 = vst [vmem:[#allocation3 + $0x1e8] sm:$0xff] %v7785
        %7866 = vst [vmem:[#allocation3 + $0x1f0] sm:$0xff] %v7786
        %7867 = vst [vmem:[#allocation3 + $0x1f8] sm:$0xff] %v7787
        %7868 = vst [vmem:[#allocation3 + $0x200] sm:$0xff] %v7788
        %7869 = vst [vmem:[#allocation3 + $0x208] sm:$0xff] %v7789
        %7870 = vst [vmem:[#allocation3 + $0x210] sm:$0xff] %v7790
        %7871 = vst [vmem:[#allocation3 + $0x218] sm:$0xff] %v7791
        %7872 = vst [vmem:[#allocation3 + $0x220] sm:$0xff] %v7792
        %7873 = vst [vmem:[#allocation3 + $0x228] sm:$0xff] %v7793
        %7874 = vst [vmem:[#allocation3 + $0x230] sm:$0xff] %v7794
        %7875 = vst [vmem:[#allocation3 + $0x238] sm:$0xff] %v7795
        %7876 = vst [vmem:[#allocation3 + $0x240] sm:$0xff] %v7796
        %7877 = vst [vmem:[#allocation3 + $0x248] sm:$0xff] %v7797
        %7878 = vst [vmem:[#allocation3 + $0x250] sm:$0xff] %v7798
        %7879 = vst [vmem:[#allocation3 + $0x258] sm:$0xff] %v7799
        %7880 = vst [vmem:[#allocation3 + $0x260] sm:$0xff] %v7800
        %7881 = vst [vmem:[#allocation3 + $0x268] sm:$0xff] %v7801
        %7882 = vst [vmem:[#allocation3 + $0x270] sm:$0xff] %v7802
        %7883 = vst [vmem:[#allocation3 + $0x278] sm:$0xff] %v7803
        %v7884 = vld [vmem:[#allocation2 + $0x2a] sm:$0xff]
        %v7885 = vld [vmem:[#allocation2 + $0x32] sm:$0xff]
        %v7886 = vld [vmem:[#allocation2 + $0x3a] sm:$0xff]
        %v7887 = vld [vmem:[#allocation2 + $0x42] sm:$0xff]
        %v7888 = vld [vmem:[#allocation2 + $0x4a] sm:$0xff]
        %v7889 = vld [vmem:[#allocation2 + $0x52] sm:$0xff]
        %v7890 = vld [vmem:[#allocation2 + $0x5a] sm:$0xff]
        %v7891 = vld [vmem:[#allocation2 + $0x62] sm:$0xff]
        %v7892 = vld [vmem:[#allocation2 + $0x6a] sm:$0xff]
        %v7893 = vld [vmem:[#allocation2 + $0x72] sm:$0xff]
        %v7894 = vld [vmem:[#allocation2 + $0x7a] sm:$0xff]
        %v7895 = vld [vmem:[#allocation2 + $0x82] sm:$0xff]
        %v7896 = vld [vmem:[#allocation2 + $0x8a] sm:$0xff]
        %v7897 = vld [vmem:[#allocation2 + $0x92] sm:$0xff]
        %v7898 = vld [vmem:[#allocation2 + $0x9a] sm:$0xff]
        %v7899 = vld [vmem:[#allocation2 + $0xa2] sm:$0xff]
        %v7900 = vld [vmem:[#allocation2 + $0xaa] sm:$0xff]
        %v7901 = vld [vmem:[#allocation2 + $0xb2] sm:$0xff]
        %v7902 = vld [vmem:[#allocation2 + $0xba] sm:$0xff]
        %v7903 = vld [vmem:[#allocation2 + $0xc2] sm:$0xff]
        %v7904 = vpack.c.bf16 %v7885, %v7884
        %v7905 = vpack.c.bf16 %v7887, %v7886
        %v7906 = vpack.c.bf16 %v7889, %v7888
        %v7907 = vpack.c.bf16 %v7891, %v7890
        %v7908 = vpack.c.bf16 %v7893, %v7892
        %v7909 = vpack.c.bf16 %v7895, %v7894
        %v7910 = vpack.c.bf16 %v7897, %v7896
        %v7911 = vpack.c.bf16 %v7899, %v7898
        %v7912 = vpack.c.bf16 %v7901, %v7900
        %v7913 = vpack.c.bf16 %v7903, %v7902
        %s7914 = scalar_lea.vmem %s5, 1024
        %v7915 = vld [vmem:[%s7914] sm:$0xff]
        %v7916 = vld [vmem:[%s7914 + $0x8] sm:$0xff]
        %v7917 = vld [vmem:[%s7914 + $0x10] sm:$0xff]
        %v7918 = vld [vmem:[%s7914 + $0x18] sm:$0xff]
        %v7919 = vld [vmem:[%s7914 + $0x20] sm:$0xff]
        %v7920 = vld [vmem:[%s7914 + $0x28] sm:$0xff]
        %v7921 = vld [vmem:[%s7914 + $0x30] sm:$0xff]
        %v7922 = vld [vmem:[%s7914 + $0x38] sm:$0xff]
        %v7923 = vld [vmem:[%s7914 + $0x40] sm:$0xff]
        %v7924 = vld [vmem:[%s7914 + $0x48] sm:$0xff]
        %v7925 = vld [vmem:[%s7914 + $0x50] sm:$0xff]
        %v7926 = vld [vmem:[%s7914 + $0x58] sm:$0xff]
        %v7927 = vld [vmem:[%s7914 + $0x60] sm:$0xff]
        %v7928 = vld [vmem:[%s7914 + $0x68] sm:$0xff]
        %v7929 = vld [vmem:[%s7914 + $0x70] sm:$0xff]
        %v7930 = vld [vmem:[%s7914 + $0x78] sm:$0xff]
        %v7947 = vunpack.c.l.b16 %v7915
        %v7948 = vunpack.c.h.b16 %v7915
        %v7949 = vunpack.c.l.b16 %v7916
        %v7950 = vunpack.c.h.b16 %v7916
        %v7951 = vunpack.c.l.b16 %v7917
        %v7952 = vunpack.c.h.b16 %v7917
        %v7953 = vunpack.c.l.b16 %v7918
        %v7954 = vunpack.c.h.b16 %v7918
        %v7955 = vunpack.c.l.b16 %v7919
        %v7956 = vunpack.c.h.b16 %v7919
        %v7957 = vunpack.c.l.b16 %v7920
        %v7958 = vunpack.c.h.b16 %v7920
        %v7959 = vunpack.c.l.b16 %v7921
        %v7960 = vunpack.c.h.b16 %v7921
        %v7961 = vunpack.c.l.b16 %v7922
        %v7962 = vunpack.c.h.b16 %v7922
        %v7963 = vunpack.c.l.b16 %v7923
        %v7964 = vunpack.c.h.b16 %v7923
        %v7965 = vunpack.c.l.b16 %v7924
        %v7966 = vunpack.c.h.b16 %v7924
        %v7967 = vunpack.c.l.b16 %v7925
        %v7968 = vunpack.c.h.b16 %v7925
        %v7969 = vunpack.c.l.b16 %v7926
        %v7970 = vunpack.c.h.b16 %v7926
        %v7971 = vunpack.c.l.b16 %v7927
        %v7972 = vunpack.c.h.b16 %v7927
        %v7973 = vunpack.c.l.b16 %v7928
        %v7974 = vunpack.c.h.b16 %v7928
        %v7975 = vunpack.c.l.b16 %v7929
        %v7976 = vunpack.c.h.b16 %v7929
        %v7977 = vunpack.c.l.b16 %v7930
        %v7978 = vunpack.c.h.b16 %v7930
        %v7979 = vpack.c.b16 %v7951, %v7947
        %v7980 = vpack.c.b16 %v7952, %v7948
        %v7981 = vpack.c.b16 %v7953, %v7949
        %v7982 = vpack.c.b16 %v7954, %v7950
        %v7983 = vpack.c.b16 %v7959, %v7955
        %v7984 = vpack.c.b16 %v7960, %v7956
        %v7985 = vpack.c.b16 %v7961, %v7957
        %v7986 = vpack.c.b16 %v7962, %v7958
        %v7987 = vpack.c.b16 %v7967, %v7963
        %v7988 = vpack.c.b16 %v7968, %v7964
        %v7989 = vpack.c.b16 %v7969, %v7965
        %v7990 = vpack.c.b16 %v7970, %v7966
        %v7991 = vpack.c.b16 %v7975, %v7971
        %v7992 = vpack.c.b16 %v7976, %v7972
        %v7993 = vpack.c.b16 %v7977, %v7973
        %v7994 = vpack.c.b16 %v7978, %v7974
        %v8012 = vsel %vm2714, %v7904, 0
        %v8015 = vsel %vm2714, %v7905, 0
        %v8018 = vsel %vm2714, %v7906, 0
        %v8021 = vsel %vm2714, %v7907, 0
        %v8024 = vsel %vm2714, %v7908, 0
        %v8027 = vsel %vm2714, %v7909, 0
        %v8030 = vsel %vm2714, %v7910, 0
        %v8033 = vsel %vm2714, %v7911, 0
        %v8036 = vsel %vm2714, %v7912, 0
        %v8039 = vsel %vm2714, %v7913, 0
        %8041 = vmatprep.subr.bf16.mxu0 %v7980
        %8042 = vmatpush1.bf16.msra.mxu0 %v7979
        %8043 = vmatprep.subr.bf16.mxu0 %v7984
        %8044 = vmatpush1.bf16.msra.mxu0 %v7983
        %8045 = vmatprep.subr.bf16.mxu0 %v7988
        %8046 = vmatpush1.bf16.msra.mxu0 %v7987
        %8047 = vmatprep.subr.bf16.mxu0 %v7992
        %8048 = vmatpush1.bf16.msra.mxu0 %v7991
        %8049 = vmatprep.subr.bf16.mxu0 0
        %8050 = vmatpush1.bf16.msra.mxu0 0
        %8051 = vmatprep.subr.bf16.mxu0 0
        %8052 = vmatpush1.bf16.msra.mxu0 0
        %8053 = vmatprep.subr.bf16.mxu0 0
        %8054 = vmatpush1.bf16.msra.mxu0 0
        %8055 = vmatprep.subr.bf16.mxu0 0
        %8056 = vmatpush1.bf16.msra.mxu0 0
        %8057 = vmatprep.subr.bf16.mxu0 0
        %8058 = vmatpush1.bf16.msra.mxu0 0
        %8059 = vmatprep.subr.bf16.mxu0 0
        %8060 = vmatpush1.bf16.msra.mxu0 0
        %8061 = vmatprep.subr.bf16.mxu0 0
        %8062 = vmatpush1.bf16.msra.mxu0 0
        %8063 = vmatprep.subr.bf16.mxu0 0
        %8064 = vmatpush1.bf16.msra.mxu0 0
        %8065 = vmatprep.subr.bf16.mxu0 0
        %8066 = vmatpush1.bf16.msra.mxu0 0
        %8067 = vmatprep.subr.bf16.mxu0 0
        %8068 = vmatpush1.bf16.msra.mxu0 0
        %8069 = vmatprep.subr.bf16.mxu0 0
        %8070 = vmatpush1.bf16.msra.mxu0 0
        %8071 = vmatprep.subr.bf16.mxu0 0
        %8072 = vmatpush1.bf16.msra.mxu0 0
        %8073 = vmatprep.mubr.bf16.mxu0 0
        %8074 = vmatmul.mubr.bf16.gmra.mrb[0].mxu0 %v8012
        %v8075 = vpop.f32.mrb[0].mxu0
        %v8076 = vadd.f32 0.0, %v8075
        %v8077 = vpop.f32.mrb[0].mxu0
        %v8078 = vadd.f32 0.0, %v8077
        %v8079 = vpop.f32.mrb[0].mxu0
        %v8080 = vadd.f32 0.0, %v8079
        %v8081 = vpop.f32.mrb[0].mxu0
        %v8082 = vadd.f32 0.0, %v8081
        %8083 = vmatprep.mubr.bf16.mxu0 0
        %8084 = vmatmul.mubr.bf16.gmra.mrb[0].mxu0 %v8015
        %v8085 = vpop.f32.mrb[0].mxu0
        %v8086 = vadd.f32 0.0, %v8085
        %v8087 = vpop.f32.mrb[0].mxu0
        %v8088 = vadd.f32 0.0, %v8087
        %v8089 = vpop.f32.mrb[0].mxu0
        %v8090 = vadd.f32 0.0, %v8089
        %v8091 = vpop.f32.mrb[0].mxu0
        %v8092 = vadd.f32 0.0, %v8091
        %8093 = vmatprep.mubr.bf16.mxu0 0
        %8094 = vmatmul.mubr.bf16.gmra.mrb[0].mxu0 %v8018
        %v8095 = vpop.f32.mrb[0].mxu0
        %v8096 = vadd.f32 0.0, %v8095
        %v8097 = vpop.f32.mrb[0].mxu0
        %v8098 = vadd.f32 0.0, %v8097
        %v8099 = vpop.f32.mrb[0].mxu0
        %v8100 = vadd.f32 0.0, %v8099
        %v8101 = vpop.f32.mrb[0].mxu0
        %v8102 = vadd.f32 0.0, %v8101
        %8103 = vmatprep.mubr.bf16.mxu0 0
        %8104 = vmatmul.mubr.bf16.gmra.mrb[0].mxu0 %v8021
        %v8105 = vpop.f32.mrb[0].mxu0
        %v8106 = vadd.f32 0.0, %v8105
        %v8107 = vpop.f32.mrb[0].mxu0
        %v8108 = vadd.f32 0.0, %v8107
        %v8109 = vpop.f32.mrb[0].mxu0
        %v8110 = vadd.f32 0.0, %v8109
        %v8111 = vpop.f32.mrb[0].mxu0
        %v8112 = vadd.f32 0.0, %v8111
        %8113 = vmatprep.mubr.bf16.mxu0 0
        %8114 = vmatmul.mubr.bf16.gmra.mrb[0].mxu0 %v8024
        %v8115 = vpop.f32.mrb[0].mxu0
        %v8116 = vadd.f32 0.0, %v8115
        %v8117 = vpop.f32.mrb[0].mxu0
        %v8118 = vadd.f32 0.0, %v8117
        %v8119 = vpop.f32.mrb[0].mxu0
        %v8120 = vadd.f32 0.0, %v8119
        %v8121 = vpop.f32.mrb[0].mxu0
        %v8122 = vadd.f32 0.0, %v8121
        %8123 = vmatprep.mubr.bf16.mxu0 0
        %8124 = vmatmul.mubr.bf16.gmra.mrb[0].mxu0 %v8027
        %v8125 = vpop.f32.mrb[0].mxu0
        %v8126 = vadd.f32 0.0, %v8125
        %v8127 = vpop.f32.mrb[0].mxu0
        %v8128 = vadd.f32 0.0, %v8127
        %v8129 = vpop.f32.mrb[0].mxu0
        %v8130 = vadd.f32 0.0, %v8129
        %v8131 = vpop.f32.mrb[0].mxu0
        %v8132 = vadd.f32 0.0, %v8131
        %8133 = vmatprep.mubr.bf16.mxu0 0
        %8134 = vmatmul.mubr.bf16.gmra.mrb[0].mxu0 %v8030
        %v8135 = vpop.f32.mrb[0].mxu0
        %v8136 = vadd.f32 0.0, %v8135
        %v8137 = vpop.f32.mrb[0].mxu0
        %v8138 = vadd.f32 0.0, %v8137
        %v8139 = vpop.f32.mrb[0].mxu0
        %v8140 = vadd.f32 0.0, %v8139
        %v8141 = vpop.f32.mrb[0].mxu0
        %v8142 = vadd.f32 0.0, %v8141
        %8143 = vmatprep.mubr.bf16.mxu0 0
        %8144 = vmatmul.mubr.bf16.gmra.mrb[0].mxu0 %v8033
        %v8145 = vpop.f32.mrb[0].mxu0
        %v8146 = vadd.f32 0.0, %v8145
        %v8147 = vpop.f32.mrb[0].mxu0
        %v8148 = vadd.f32 0.0, %v8147
        %v8149 = vpop.f32.mrb[0].mxu0
        %v8150 = vadd.f32 0.0, %v8149
        %v8151 = vpop.f32.mrb[0].mxu0
        %v8152 = vadd.f32 0.0, %v8151
        %8153 = vmatprep.mubr.bf16.mxu0 0
        %8154 = vmatmul.mubr.bf16.gmra.mrb[0].mxu0 %v8036
        %v8155 = vpop.f32.mrb[0].mxu0
        %v8156 = vadd.f32 0.0, %v8155
        %v8157 = vpop.f32.mrb[0].mxu0
        %v8158 = vadd.f32 0.0, %v8157
        %v8159 = vpop.f32.mrb[0].mxu0
        %v8160 = vadd.f32 0.0, %v8159
        %v8161 = vpop.f32.mrb[0].mxu0
        %v8162 = vadd.f32 0.0, %v8161
        %8163 = vmatprep.mubr.bf16.mxu0 0
        %8164 = vmatmul.mubr.bf16.gmra.mrb[0].mxu0 %v8039
        %v8165 = vpop.f32.mrb[0].mxu0
        %v8166 = vadd.f32 0.0, %v8165
        %v8167 = vpop.f32.mrb[0].mxu0
        %v8168 = vadd.f32 0.0, %v8167
        %v8169 = vpop.f32.mrb[0].mxu0
        %v8170 = vadd.f32 0.0, %v8169
        %v8171 = vpop.f32.mrb[0].mxu0
        %v8172 = vadd.f32 0.0, %v8171
        %8173 = vdwg.mxu0
        %8174 = vmatprep.subr.bf16.mxu0 %v7982
        %8175 = vmatpush1.bf16.msra.mxu0 %v7981
        %8176 = vmatprep.subr.bf16.mxu0 %v7986
        %8177 = vmatpush1.bf16.msra.mxu0 %v7985
        %8178 = vmatprep.subr.bf16.mxu0 %v7990
        %8179 = vmatpush1.bf16.msra.mxu0 %v7989
        %8180 = vmatprep.subr.bf16.mxu0 %v7994
        %8181 = vmatpush1.bf16.msra.mxu0 %v7993
        %8182 = vmatprep.subr.bf16.mxu0 0
        %8183 = vmatpush1.bf16.msra.mxu0 0
        %8184 = vmatprep.subr.bf16.mxu0 0
        %8185 = vmatpush1.bf16.msra.mxu0 0
        %8186 = vmatprep.subr.bf16.mxu0 0
        %8187 = vmatpush1.bf16.msra.mxu0 0
        %8188 = vmatprep.subr.bf16.mxu0 0
        %8189 = vmatpush1.bf16.msra.mxu0 0
        %8190 = vmatprep.subr.bf16.mxu0 0
        %8191 = vmatpush1.bf16.msra.mxu0 0
        %8192 = vmatprep.subr.bf16.mxu0 0
        %8193 = vmatpush1.bf16.msra.mxu0 0
        %8194 = vmatprep.subr.bf16.mxu0 0
        %8195 = vmatpush1.bf16.msra.mxu0 0
        %8196 = vmatprep.subr.bf16.mxu0 0
        %8197 = vmatpush1.bf16.msra.mxu0 0
        %8198 = vmatprep.subr.bf16.mxu0 0
        %8199 = vmatpush1.bf16.msra.mxu0 0
        %8200 = vmatprep.subr.bf16.mxu0 0
        %8201 = vmatpush1.bf16.msra.mxu0 0
        %8202 = vmatprep.subr.bf16.mxu0 0
        %8203 = vmatpush1.bf16.msra.mxu0 0
        %8204 = vmatprep.subr.bf16.mxu0 0
        %8205 = vmatpush1.bf16.msra.mxu0 0
        %8206 = vmatprep.mubr.bf16.mxu0 0
        %8207 = vmatmul.mubr.bf16.gmra.mrb[0].mxu0 %v8012
        %v8208 = vpop.f32.mrb[0].mxu0
        %v8209 = vadd.f32 0.0, %v8208
        %v8210 = vpop.f32.mrb[0].mxu0
        %v8211 = vadd.f32 0.0, %v8210
        %v8212 = vpop.f32.mrb[0].mxu0
        %v8213 = vadd.f32 0.0, %v8212
        %v8214 = vpop.f32.mrb[0].mxu0
        %v8215 = vadd.f32 0.0, %v8214
        %8216 = vmatprep.mubr.bf16.mxu0 0
        %8217 = vmatmul.mubr.bf16.gmra.mrb[0].mxu0 %v8015
        %v8218 = vpop.f32.mrb[0].mxu0
        %v8219 = vadd.f32 0.0, %v8218
        %v8220 = vpop.f32.mrb[0].mxu0
        %v8221 = vadd.f32 0.0, %v8220
        %v8222 = vpop.f32.mrb[0].mxu0
        %v8223 = vadd.f32 0.0, %v8222
        %v8224 = vpop.f32.mrb[0].mxu0
        %v8225 = vadd.f32 0.0, %v8224
        %8226 = vmatprep.mubr.bf16.mxu0 0
        %8227 = vmatmul.mubr.bf16.gmra.mrb[0].mxu0 %v8018
        %v8228 = vpop.f32.mrb[0].mxu0
        %v8229 = vadd.f32 0.0, %v8228
        %v8230 = vpop.f32.mrb[0].mxu0
        %v8231 = vadd.f32 0.0, %v8230
        %v8232 = vpop.f32.mrb[0].mxu0
        %v8233 = vadd.f32 0.0, %v8232
        %v8234 = vpop.f32.mrb[0].mxu0
        %v8235 = vadd.f32 0.0, %v8234
        %8236 = vmatprep.mubr.bf16.mxu0 0
        %8237 = vmatmul.mubr.bf16.gmra.mrb[0].mxu0 %v8021
        %v8238 = vpop.f32.mrb[0].mxu0
        %v8239 = vadd.f32 0.0, %v8238
        %v8240 = vpop.f32.mrb[0].mxu0
        %v8241 = vadd.f32 0.0, %v8240
        %v8242 = vpop.f32.mrb[0].mxu0
        %v8243 = vadd.f32 0.0, %v8242
        %v8244 = vpop.f32.mrb[0].mxu0
        %v8245 = vadd.f32 0.0, %v8244
        %8246 = vmatprep.mubr.bf16.mxu0 0
        %8247 = vmatmul.mubr.bf16.gmra.mrb[0].mxu0 %v8024
        %v8248 = vpop.f32.mrb[0].mxu0
        %v8249 = vadd.f32 0.0, %v8248
        %v8250 = vpop.f32.mrb[0].mxu0
        %v8251 = vadd.f32 0.0, %v8250
        %v8252 = vpop.f32.mrb[0].mxu0
        %v8253 = vadd.f32 0.0, %v8252
        %v8254 = vpop.f32.mrb[0].mxu0
        %v8255 = vadd.f32 0.0, %v8254
        %8256 = vmatprep.mubr.bf16.mxu0 0
        %8257 = vmatmul.mubr.bf16.gmra.mrb[0].mxu0 %v8027
        %v8258 = vpop.f32.mrb[0].mxu0
        %v8259 = vadd.f32 0.0, %v8258
        %v8260 = vpop.f32.mrb[0].mxu0
        %v8261 = vadd.f32 0.0, %v8260
        %v8262 = vpop.f32.mrb[0].mxu0
        %v8263 = vadd.f32 0.0, %v8262
        %v8264 = vpop.f32.mrb[0].mxu0
        %v8265 = vadd.f32 0.0, %v8264
        %8266 = vmatprep.mubr.bf16.mxu0 0
        %8267 = vmatmul.mubr.bf16.gmra.mrb[0].mxu0 %v8030
        %v8268 = vpop.f32.mrb[0].mxu0
        %v8269 = vadd.f32 0.0, %v8268
        %v8270 = vpop.f32.mrb[0].mxu0
        %v8271 = vadd.f32 0.0, %v8270
        %v8272 = vpop.f32.mrb[0].mxu0
        %v8273 = vadd.f32 0.0, %v8272
        %v8274 = vpop.f32.mrb[0].mxu0
        %v8275 = vadd.f32 0.0, %v8274
        %8276 = vmatprep.mubr.bf16.mxu0 0
        %8277 = vmatmul.mubr.bf16.gmra.mrb[0].mxu0 %v8033
        %v8278 = vpop.f32.mrb[0].mxu0
        %v8279 = vadd.f32 0.0, %v8278
        %v8280 = vpop.f32.mrb[0].mxu0
        %v8281 = vadd.f32 0.0, %v8280
        %v8282 = vpop.f32.mrb[0].mxu0
        %v8283 = vadd.f32 0.0, %v8282
        %v8284 = vpop.f32.mrb[0].mxu0
        %v8285 = vadd.f32 0.0, %v8284
        %8286 = vmatprep.mubr.bf16.mxu0 0
        %8287 = vmatmul.mubr.bf16.gmra.mrb[0].mxu0 %v8036
        %v8288 = vpop.f32.mrb[0].mxu0
        %v8289 = vadd.f32 0.0, %v8288
        %v8290 = vpop.f32.mrb[0].mxu0
        %v8291 = vadd.f32 0.0, %v8290
        %v8292 = vpop.f32.mrb[0].mxu0
        %v8293 = vadd.f32 0.0, %v8292
        %v8294 = vpop.f32.mrb[0].mxu0
        %v8295 = vadd.f32 0.0, %v8294
        %8296 = vmatprep.mubr.bf16.mxu0 0
        %8297 = vmatmul.mubr.bf16.gmra.mrb[0].mxu0 %v8039
        %v8298 = vpop.f32.mrb[0].mxu0
        %v8299 = vadd.f32 0.0, %v8298
        %v8300 = vpop.f32.mrb[0].mxu0
        %v8301 = vadd.f32 0.0, %v8300
        %v8302 = vpop.f32.mrb[0].mxu0
        %v8303 = vadd.f32 0.0, %v8302
        %v8304 = vpop.f32.mrb[0].mxu0
        %v8305 = vadd.f32 0.0, %v8304
        %8306 = vdwg.mxu0
        %v8307 = vld [vmem:[#allocation3] sm:$0xff]
        %v8308 = vld [vmem:[#allocation3 + $0x8] sm:$0xff]
        %v8309 = vld [vmem:[#allocation3 + $0x10] sm:$0xff]
        %v8310 = vld [vmem:[#allocation3 + $0x18] sm:$0xff]
        %v8311 = vld [vmem:[#allocation3 + $0x20] sm:$0xff]
        %v8312 = vld [vmem:[#allocation3 + $0x28] sm:$0xff]
        %v8313 = vld [vmem:[#allocation3 + $0x30] sm:$0xff]
        %v8314 = vld [vmem:[#allocation3 + $0x38] sm:$0xff]
        %v8315 = vld [vmem:[#allocation3 + $0x40] sm:$0xff]
        %v8316 = vld [vmem:[#allocation3 + $0x48] sm:$0xff]
        %v8317 = vld [vmem:[#allocation3 + $0x50] sm:$0xff]
        %v8318 = vld [vmem:[#allocation3 + $0x58] sm:$0xff]
        %v8319 = vld [vmem:[#allocation3 + $0x60] sm:$0xff]
        %v8320 = vld [vmem:[#allocation3 + $0x68] sm:$0xff]
        %v8321 = vld [vmem:[#allocation3 + $0x70] sm:$0xff]
        %v8322 = vld [vmem:[#allocation3 + $0x78] sm:$0xff]
        %v8323 = vld [vmem:[#allocation3 + $0x80] sm:$0xff]
        %v8324 = vld [vmem:[#allocation3 + $0x88] sm:$0xff]
        %v8325 = vld [vmem:[#allocation3 + $0x90] sm:$0xff]
        %v8326 = vld [vmem:[#allocation3 + $0x98] sm:$0xff]
        %v8327 = vld [vmem:[#allocation3 + $0xa0] sm:$0xff]
        %v8328 = vld [vmem:[#allocation3 + $0xa8] sm:$0xff]
        %v8329 = vld [vmem:[#allocation3 + $0xb0] sm:$0xff]
        %v8330 = vld [vmem:[#allocation3 + $0xb8] sm:$0xff]
        %v8331 = vld [vmem:[#allocation3 + $0xc0] sm:$0xff]
        %v8332 = vld [vmem:[#allocation3 + $0xc8] sm:$0xff]
        %v8333 = vld [vmem:[#allocation3 + $0xd0] sm:$0xff]
        %v8334 = vld [vmem:[#allocation3 + $0xd8] sm:$0xff]
        %v8335 = vld [vmem:[#allocation3 + $0xe0] sm:$0xff]
        %v8336 = vld [vmem:[#allocation3 + $0xe8] sm:$0xff]
        %v8337 = vld [vmem:[#allocation3 + $0xf0] sm:$0xff]
        %v8338 = vld [vmem:[#allocation3 + $0xf8] sm:$0xff]
        %v8339 = vld [vmem:[#allocation3 + $0x100] sm:$0xff]
        %v8340 = vld [vmem:[#allocation3 + $0x108] sm:$0xff]
        %v8341 = vld [vmem:[#allocation3 + $0x110] sm:$0xff]
        %v8342 = vld [vmem:[#allocation3 + $0x118] sm:$0xff]
        %v8343 = vld [vmem:[#allocation3 + $0x120] sm:$0xff]
        %v8344 = vld [vmem:[#allocation3 + $0x128] sm:$0xff]
        %v8345 = vld [vmem:[#allocation3 + $0x130] sm:$0xff]
        %v8346 = vld [vmem:[#allocation3 + $0x138] sm:$0xff]
        %v8347 = vld [vmem:[#allocation3 + $0x140] sm:$0xff]
        %v8348 = vld [vmem:[#allocation3 + $0x148] sm:$0xff]
        %v8349 = vld [vmem:[#allocation3 + $0x150] sm:$0xff]
        %v8350 = vld [vmem:[#allocation3 + $0x158] sm:$0xff]
        %v8351 = vld [vmem:[#allocation3 + $0x160] sm:$0xff]
        %v8352 = vld [vmem:[#allocation3 + $0x168] sm:$0xff]
        %v8353 = vld [vmem:[#allocation3 + $0x170] sm:$0xff]
        %v8354 = vld [vmem:[#allocation3 + $0x178] sm:$0xff]
        %v8355 = vld [vmem:[#allocation3 + $0x180] sm:$0xff]
        %v8356 = vld [vmem:[#allocation3 + $0x188] sm:$0xff]
        %v8357 = vld [vmem:[#allocation3 + $0x190] sm:$0xff]
        %v8358 = vld [vmem:[#allocation3 + $0x198] sm:$0xff]
        %v8359 = vld [vmem:[#allocation3 + $0x1a0] sm:$0xff]
        %v8360 = vld [vmem:[#allocation3 + $0x1a8] sm:$0xff]
        %v8361 = vld [vmem:[#allocation3 + $0x1b0] sm:$0xff]
        %v8362 = vld [vmem:[#allocation3 + $0x1b8] sm:$0xff]
        %v8363 = vld [vmem:[#allocation3 + $0x1c0] sm:$0xff]
        %v8364 = vld [vmem:[#allocation3 + $0x1c8] sm:$0xff]
        %v8365 = vld [vmem:[#allocation3 + $0x1d0] sm:$0xff]
        %v8366 = vld [vmem:[#allocation3 + $0x1d8] sm:$0xff]
        %v8367 = vld [vmem:[#allocation3 + $0x1e0] sm:$0xff]
        %v8368 = vld [vmem:[#allocation3 + $0x1e8] sm:$0xff]
        %v8369 = vld [vmem:[#allocation3 + $0x1f0] sm:$0xff]
        %v8370 = vld [vmem:[#allocation3 + $0x1f8] sm:$0xff]
        %v8371 = vld [vmem:[#allocation3 + $0x200] sm:$0xff]
        %v8372 = vld [vmem:[#allocation3 + $0x208] sm:$0xff]
        %v8373 = vld [vmem:[#allocation3 + $0x210] sm:$0xff]
        %v8374 = vld [vmem:[#allocation3 + $0x218] sm:$0xff]
        %v8375 = vld [vmem:[#allocation3 + $0x220] sm:$0xff]
        %v8376 = vld [vmem:[#allocation3 + $0x228] sm:$0xff]
        %v8377 = vld [vmem:[#allocation3 + $0x230] sm:$0xff]
        %v8378 = vld [vmem:[#allocation3 + $0x238] sm:$0xff]
        %v8379 = vld [vmem:[#allocation3 + $0x240] sm:$0xff]
        %v8380 = vld [vmem:[#allocation3 + $0x248] sm:$0xff]
        %v8381 = vld [vmem:[#allocation3 + $0x250] sm:$0xff]
        %v8382 = vld [vmem:[#allocation3 + $0x258] sm:$0xff]
        %v8383 = vld [vmem:[#allocation3 + $0x260] sm:$0xff]
        %v8384 = vld [vmem:[#allocation3 + $0x268] sm:$0xff]
        %v8385 = vld [vmem:[#allocation3 + $0x270] sm:$0xff]
        %v8386 = vld [vmem:[#allocation3 + $0x278] sm:$0xff]
        %v8387 = vadd.f32 %v8307, %v8076
        %v8388 = vadd.f32 %v8308, %v8078
        %v8389 = vadd.f32 %v8309, %v8209
        %v8390 = vadd.f32 %v8310, %v8211
        %v8391 = vadd.f32 %v8311, %v8080
        %v8392 = vadd.f32 %v8312, %v8082
        %v8393 = vadd.f32 %v8313, %v8213
        %v8394 = vadd.f32 %v8314, %v8215
        %v8395 = vadd.f32 %v8315, %v8086
        %v8396 = vadd.f32 %v8316, %v8088
        %v8397 = vadd.f32 %v8317, %v8219
        %v8398 = vadd.f32 %v8318, %v8221
        %v8399 = vadd.f32 %v8319, %v8090
        %v8400 = vadd.f32 %v8320, %v8092
        %v8401 = vadd.f32 %v8321, %v8223
        %v8402 = vadd.f32 %v8322, %v8225
        %v8403 = vadd.f32 %v8323, %v8096
        %v8404 = vadd.f32 %v8324, %v8098
        %v8405 = vadd.f32 %v8325, %v8229
        %v8406 = vadd.f32 %v8326, %v8231
        %v8407 = vadd.f32 %v8327, %v8100
        %v8408 = vadd.f32 %v8328, %v8102
        %v8409 = vadd.f32 %v8329, %v8233
        %v8410 = vadd.f32 %v8330, %v8235
        %v8411 = vadd.f32 %v8331, %v8106
        %v8412 = vadd.f32 %v8332, %v8108
        %v8413 = vadd.f32 %v8333, %v8239
        %v8414 = vadd.f32 %v8334, %v8241
        %v8415 = vadd.f32 %v8335, %v8110
        %v8416 = vadd.f32 %v8336, %v8112
        %v8417 = vadd.f32 %v8337, %v8243
        %v8418 = vadd.f32 %v8338, %v8245
        %v8419 = vadd.f32 %v8339, %v8116
        %v8420 = vadd.f32 %v8340, %v8118
        %v8421 = vadd.f32 %v8341, %v8249
        %v8422 = vadd.f32 %v8342, %v8251
        %v8423 = vadd.f32 %v8343, %v8120
        %v8424 = vadd.f32 %v8344, %v8122
        %v8425 = vadd.f32 %v8345, %v8253
        %v8426 = vadd.f32 %v8346, %v8255
        %v8427 = vadd.f32 %v8347, %v8126
        %v8428 = vadd.f32 %v8348, %v8128
        %v8429 = vadd.f32 %v8349, %v8259
        %v8430 = vadd.f32 %v8350, %v8261
        %v8431 = vadd.f32 %v8351, %v8130
        %v8432 = vadd.f32 %v8352, %v8132
        %v8433 = vadd.f32 %v8353, %v8263
        %v8434 = vadd.f32 %v8354, %v8265
        %v8435 = vadd.f32 %v8355, %v8136
        %v8436 = vadd.f32 %v8356, %v8138
        %v8437 = vadd.f32 %v8357, %v8269
        %v8438 = vadd.f32 %v8358, %v8271
        %v8439 = vadd.f32 %v8359, %v8140
        %v8440 = vadd.f32 %v8360, %v8142
        %v8441 = vadd.f32 %v8361, %v8273
        %v8442 = vadd.f32 %v8362, %v8275
        %v8443 = vadd.f32 %v8363, %v8146
        %v8444 = vadd.f32 %v8364, %v8148
        %v8445 = vadd.f32 %v8365, %v8279
        %v8446 = vadd.f32 %v8366, %v8281
        %v8447 = vadd.f32 %v8367, %v8150
        %v8448 = vadd.f32 %v8368, %v8152
        %v8449 = vadd.f32 %v8369, %v8283
        %v8450 = vadd.f32 %v8370, %v8285
        %v8451 = vadd.f32 %v8371, %v8156
        %v8452 = vadd.f32 %v8372, %v8158
        %v8453 = vadd.f32 %v8373, %v8289
        %v8454 = vadd.f32 %v8374, %v8291
        %v8455 = vadd.f32 %v8375, %v8160
        %v8456 = vadd.f32 %v8376, %v8162
        %v8457 = vadd.f32 %v8377, %v8293
        %v8458 = vadd.f32 %v8378, %v8295
        %v8459 = vadd.f32 %v8379, %v8166
        %v8460 = vadd.f32 %v8380, %v8168
        %v8461 = vadd.f32 %v8381, %v8299
        %v8462 = vadd.f32 %v8382, %v8301
        %v8463 = vadd.f32 %v8383, %v8170
        %v8464 = vadd.f32 %v8384, %v8172
        %v8465 = vadd.f32 %v8385, %v8303
        %v8466 = vadd.f32 %v8386, %v8305
        %8467 = vst [vmem:[#allocation3] sm:$0xff] %v8387
        %8468 = vst [vmem:[#allocation3 + $0x8] sm:$0xff] %v8388
        %8469 = vst [vmem:[#allocation3 + $0x10] sm:$0xff] %v8389
        %8470 = vst [vmem:[#allocation3 + $0x18] sm:$0xff] %v8390
        %8471 = vst [vmem:[#allocation3 + $0x20] sm:$0xff] %v8391
        %8472 = vst [vmem:[#allocation3 + $0x28] sm:$0xff] %v8392
        %8473 = vst [vmem:[#allocation3 + $0x30] sm:$0xff] %v8393
        %8474 = vst [vmem:[#allocation3 + $0x38] sm:$0xff] %v8394
        %8475 = vst [vmem:[#allocation3 + $0x40] sm:$0xff] %v8395
        %8476 = vst [vmem:[#allocation3 + $0x48] sm:$0xff] %v8396
        %8477 = vst [vmem:[#allocation3 + $0x50] sm:$0xff] %v8397
        %8478 = vst [vmem:[#allocation3 + $0x58] sm:$0xff] %v8398
        %8479 = vst [vmem:[#allocation3 + $0x60] sm:$0xff] %v8399
        %8480 = vst [vmem:[#allocation3 + $0x68] sm:$0xff] %v8400
        %8481 = vst [vmem:[#allocation3 + $0x70] sm:$0xff] %v8401
        %8482 = vst [vmem:[#allocation3 + $0x78] sm:$0xff] %v8402
        %8483 = vst [vmem:[#allocation3 + $0x80] sm:$0xff] %v8403
        %8484 = vst [vmem:[#allocation3 + $0x88] sm:$0xff] %v8404
        %8485 = vst [vmem:[#allocation3 + $0x90] sm:$0xff] %v8405
        %8486 = vst [vmem:[#allocation3 + $0x98] sm:$0xff] %v8406
        %8487 = vst [vmem:[#allocation3 + $0xa0] sm:$0xff] %v8407
        %8488 = vst [vmem:[#allocation3 + $0xa8] sm:$0xff] %v8408
        %8489 = vst [vmem:[#allocation3 + $0xb0] sm:$0xff] %v8409
        %8490 = vst [vmem:[#allocation3 + $0xb8] sm:$0xff] %v8410
        %8491 = vst [vmem:[#allocation3 + $0xc0] sm:$0xff] %v8411
        %8492 = vst [vmem:[#allocation3 + $0xc8] sm:$0xff] %v8412
        %8493 = vst [vmem:[#allocation3 + $0xd0] sm:$0xff] %v8413
        %8494 = vst [vmem:[#allocation3 + $0xd8] sm:$0xff] %v8414
        %8495 = vst [vmem:[#allocation3 + $0xe0] sm:$0xff] %v8415
        %8496 = vst [vmem:[#allocation3 + $0xe8] sm:$0xff] %v8416
        %8497 = vst [vmem:[#allocation3 + $0xf0] sm:$0xff] %v8417
        %8498 = vst [vmem:[#allocation3 + $0xf8] sm:$0xff] %v8418
        %8499 = vst [vmem:[#allocation3 + $0x100] sm:$0xff] %v8419
        %8500 = vst [vmem:[#allocation3 + $0x108] sm:$0xff] %v8420
        %8501 = vst [vmem:[#allocation3 + $0x110] sm:$0xff] %v8421
        %8502 = vst [vmem:[#allocation3 + $0x118] sm:$0xff] %v8422
        %8503 = vst [vmem:[#allocation3 + $0x120] sm:$0xff] %v8423
        %8504 = vst [vmem:[#allocation3 + $0x128] sm:$0xff] %v8424
        %8505 = vst [vmem:[#allocation3 + $0x130] sm:$0xff] %v8425
        %8506 = vst [vmem:[#allocation3 + $0x138] sm:$0xff] %v8426
        %8507 = vst [vmem:[#allocation3 + $0x140] sm:$0xff] %v8427
        %8508 = vst [vmem:[#allocation3 + $0x148] sm:$0xff] %v8428
        %8509 = vst [vmem:[#allocation3 + $0x150] sm:$0xff] %v8429
        %8510 = vst [vmem:[#allocation3 + $0x158] sm:$0xff] %v8430
        %8511 = vst [vmem:[#allocation3 + $0x160] sm:$0xff] %v8431
        %8512 = vst [vmem:[#allocation3 + $0x168] sm:$0xff] %v8432
        %8513 = vst [vmem:[#allocation3 + $0x170] sm:$0xff] %v8433
        %8514 = vst [vmem:[#allocation3 + $0x178] sm:$0xff] %v8434
        %8515 = vst [vmem:[#allocation3 + $0x180] sm:$0xff] %v8435
        %8516 = vst [vmem:[#allocation3 + $0x188] sm:$0xff] %v8436
        %8517 = vst [vmem:[#allocation3 + $0x190] sm:$0xff] %v8437
        %8518 = vst [vmem:[#allocation3 + $0x198] sm:$0xff] %v8438
        %8519 = vst [vmem:[#allocation3 + $0x1a0] sm:$0xff] %v8439
        %8520 = vst [vmem:[#allocation3 + $0x1a8] sm:$0xff] %v8440
        %8521 = vst [vmem:[#allocation3 + $0x1b0] sm:$0xff] %v8441
        %8522 = vst [vmem:[#allocation3 + $0x1b8] sm:$0xff] %v8442
        %8523 = vst [vmem:[#allocation3 + $0x1c0] sm:$0xff] %v8443
        %8524 = vst [vmem:[#allocation3 + $0x1c8] sm:$0xff] %v8444
        %8525 = vst [vmem:[#allocation3 + $0x1d0] sm:$0xff] %v8445
        %8526 = vst [vmem:[#allocation3 + $0x1d8] sm:$0xff] %v8446
        %8527 = vst [vmem:[#allocation3 + $0x1e0] sm:$0xff] %v8447
        %8528 = vst [vmem:[#allocation3 + $0x1e8] sm:$0xff] %v8448
        %8529 = vst [vmem:[#allocation3 + $0x1f0] sm:$0xff] %v8449
        %8530 = vst [vmem:[#allocation3 + $0x1f8] sm:$0xff] %v8450
        %8531 = vst [vmem:[#allocation3 + $0x200] sm:$0xff] %v8451
        %8532 = vst [vmem:[#allocation3 + $0x208] sm:$0xff] %v8452
        %8533 = vst [vmem:[#allocation3 + $0x210] sm:$0xff] %v8453
        %8534 = vst [vmem:[#allocation3 + $0x218] sm:$0xff] %v8454
        %8535 = vst [vmem:[#allocation3 + $0x220] sm:$0xff] %v8455
        %8536 = vst [vmem:[#allocation3 + $0x228] sm:$0xff] %v8456
        %8537 = vst [vmem:[#allocation3 + $0x230] sm:$0xff] %v8457
        %8538 = vst [vmem:[#allocation3 + $0x238] sm:$0xff] %v8458
        %8539 = vst [vmem:[#allocation3 + $0x240] sm:$0xff] %v8459
        %8540 = vst [vmem:[#allocation3 + $0x248] sm:$0xff] %v8460
        %8541 = vst [vmem:[#allocation3 + $0x250] sm:$0xff] %v8461
        %8542 = vst [vmem:[#allocation3 + $0x258] sm:$0xff] %v8462
        %8543 = vst [vmem:[#allocation3 + $0x260] sm:$0xff] %v8463
        %8544 = vst [vmem:[#allocation3 + $0x268] sm:$0xff] %v8464
        %8545 = vst [vmem:[#allocation3 + $0x270] sm:$0xff] %v8465
        %8546 = vst [vmem:[#allocation3 + $0x278] sm:$0xff] %v8466
        %v8547 = vld [vmem:[#allocation3] sm:$0xff]
        %v8548 = vld [vmem:[#allocation3 + $0x8] sm:$0xff]
        %v8549 = vld [vmem:[#allocation3 + $0x10] sm:$0xff]
        %v8550 = vld [vmem:[#allocation3 + $0x18] sm:$0xff]
        %v8551 = vld [vmem:[#allocation3 + $0x20] sm:$0xff]
        %v8552 = vld [vmem:[#allocation3 + $0x28] sm:$0xff]
        %v8553 = vld [vmem:[#allocation3 + $0x30] sm:$0xff]
        %v8554 = vld [vmem:[#allocation3 + $0x38] sm:$0xff]
        %v8555 = vld [vmem:[#allocation3 + $0x40] sm:$0xff]
        %v8556 = vld [vmem:[#allocation3 + $0x48] sm:$0xff]
        %v8557 = vld [vmem:[#allocation3 + $0x50] sm:$0xff]
        %v8558 = vld [vmem:[#allocation3 + $0x58] sm:$0xff]
        %v8559 = vld [vmem:[#allocation3 + $0x60] sm:$0xff]
        %v8560 = vld [vmem:[#allocation3 + $0x68] sm:$0xff]
        %v8561 = vld [vmem:[#allocation3 + $0x70] sm:$0xff]
        %v8562 = vld [vmem:[#allocation3 + $0x78] sm:$0xff]
        %v8563 = vld [vmem:[#allocation3 + $0x80] sm:$0xff]
        %v8564 = vld [vmem:[#allocation3 + $0x88] sm:$0xff]
        %v8565 = vld [vmem:[#allocation3 + $0x90] sm:$0xff]
        %v8566 = vld [vmem:[#allocation3 + $0x98] sm:$0xff]
        %v8567 = vld [vmem:[#allocation3 + $0xa0] sm:$0xff]
        %v8568 = vld [vmem:[#allocation3 + $0xa8] sm:$0xff]
        %v8569 = vld [vmem:[#allocation3 + $0xb0] sm:$0xff]
        %v8570 = vld [vmem:[#allocation3 + $0xb8] sm:$0xff]
        %v8571 = vld [vmem:[#allocation3 + $0xc0] sm:$0xff]
        %v8572 = vld [vmem:[#allocation3 + $0xc8] sm:$0xff]
        %v8573 = vld [vmem:[#allocation3 + $0xd0] sm:$0xff]
        %v8574 = vld [vmem:[#allocation3 + $0xd8] sm:$0xff]
        %v8575 = vld [vmem:[#allocation3 + $0xe0] sm:$0xff]
        %v8576 = vld [vmem:[#allocation3 + $0xe8] sm:$0xff]
        %v8577 = vld [vmem:[#allocation3 + $0xf0] sm:$0xff]
        %v8578 = vld [vmem:[#allocation3 + $0xf8] sm:$0xff]
        %v8579 = vld [vmem:[#allocation3 + $0x100] sm:$0xff]
        %v8580 = vld [vmem:[#allocation3 + $0x108] sm:$0xff]
        %v8581 = vld [vmem:[#allocation3 + $0x110] sm:$0xff]
        %v8582 = vld [vmem:[#allocation3 + $0x118] sm:$0xff]
        %v8583 = vld [vmem:[#allocation3 + $0x120] sm:$0xff]
        %v8584 = vld [vmem:[#allocation3 + $0x128] sm:$0xff]
        %v8585 = vld [vmem:[#allocation3 + $0x130] sm:$0xff]
        %v8586 = vld [vmem:[#allocation3 + $0x138] sm:$0xff]
        %v8587 = vld [vmem:[#allocation3 + $0x140] sm:$0xff]
        %v8588 = vld [vmem:[#allocation3 + $0x148] sm:$0xff]
        %v8589 = vld [vmem:[#allocation3 + $0x150] sm:$0xff]
        %v8590 = vld [vmem:[#allocation3 + $0x158] sm:$0xff]
        %v8591 = vld [vmem:[#allocation3 + $0x160] sm:$0xff]
        %v8592 = vld [vmem:[#allocation3 + $0x168] sm:$0xff]
        %v8593 = vld [vmem:[#allocation3 + $0x170] sm:$0xff]
        %v8594 = vld [vmem:[#allocation3 + $0x178] sm:$0xff]
        %v8595 = vld [vmem:[#allocation3 + $0x180] sm:$0xff]
        %v8596 = vld [vmem:[#allocation3 + $0x188] sm:$0xff]
        %v8597 = vld [vmem:[#allocation3 + $0x190] sm:$0xff]
        %v8598 = vld [vmem:[#allocation3 + $0x198] sm:$0xff]
        %v8599 = vld [vmem:[#allocation3 + $0x1a0] sm:$0xff]
        %v8600 = vld [vmem:[#allocation3 + $0x1a8] sm:$0xff]
        %v8601 = vld [vmem:[#allocation3 + $0x1b0] sm:$0xff]
        %v8602 = vld [vmem:[#allocation3 + $0x1b8] sm:$0xff]
        %v8603 = vld [vmem:[#allocation3 + $0x1c0] sm:$0xff]
        %v8604 = vld [vmem:[#allocation3 + $0x1c8] sm:$0xff]
        %v8605 = vld [vmem:[#allocation3 + $0x1d0] sm:$0xff]
        %v8606 = vld [vmem:[#allocation3 + $0x1d8] sm:$0xff]
        %v8607 = vld [vmem:[#allocation3 + $0x1e0] sm:$0xff]
        %v8608 = vld [vmem:[#allocation3 + $0x1e8] sm:$0xff]
        %v8609 = vld [vmem:[#allocation3 + $0x1f0] sm:$0xff]
        %v8610 = vld [vmem:[#allocation3 + $0x1f8] sm:$0xff]
        %v8611 = vld [vmem:[#allocation3 + $0x200] sm:$0xff]
        %v8612 = vld [vmem:[#allocation3 + $0x208] sm:$0xff]
        %v8613 = vld [vmem:[#allocation3 + $0x210] sm:$0xff]
        %v8614 = vld [vmem:[#allocation3 + $0x218] sm:$0xff]
        %v8615 = vld [vmem:[#allocation3 + $0x220] sm:$0xff]
        %v8616 = vld [vmem:[#allocation3 + $0x228] sm:$0xff]
        %v8617 = vld [vmem:[#allocation3 + $0x230] sm:$0xff]
        %v8618 = vld [vmem:[#allocation3 + $0x238] sm:$0xff]
        %v8619 = vld [vmem:[#allocation3 + $0x240] sm:$0xff]
        %v8620 = vld [vmem:[#allocation3 + $0x248] sm:$0xff]
        %v8621 = vld [vmem:[#allocation3 + $0x250] sm:$0xff]
        %v8622 = vld [vmem:[#allocation3 + $0x258] sm:$0xff]
        %v8623 = vld [vmem:[#allocation3 + $0x260] sm:$0xff]
        %v8624 = vld [vmem:[#allocation3 + $0x268] sm:$0xff]
        %v8625 = vld [vmem:[#allocation3 + $0x270] sm:$0xff]
        %v8626 = vld [vmem:[#allocation3 + $0x278] sm:$0xff]
        %v8627 = vld [vmem:[%s6] sm:$0xf]
        %v8629 = vlaneseq
        %v8630 = vshrl.u32 %v8629, 7
        %v8631 = vsub.s32 0, %v8630
        %v8632 = vrot.slane %v8627, %v8631
        %v8633 = vlaneseq
        %v8634 = vshrl.u32 %v8633, 7
        %v8635 = vsub.s32 1, %v8634
        %v8636 = vrot.slane %v8627, %v8635
        %v8637 = vlaneseq
        %v8638 = vshrl.u32 %v8637, 7
        %v8639 = vsub.s32 2, %v8638
        %v8640 = vrot.slane %v8627, %v8639
        %v8641 = vlaneseq
        %v8642 = vshrl.u32 %v8641, 7
        %v8643 = vsub.s32 3, %v8642
        %v8644 = vrot.slane %v8627, %v8643
        %v8649 = vadd.f32 %v8547, %v8632
        %v8650 = vadd.f32 %v8548, %v8636
        %v8651 = vadd.f32 %v8549, %v8640
        %v8652 = vadd.f32 %v8550, %v8644
        %v8653 = vadd.f32 %v8551, %v8632
        %v8654 = vadd.f32 %v8552, %v8636
        %v8655 = vadd.f32 %v8553, %v8640
        %v8656 = vadd.f32 %v8554, %v8644
        %v8657 = vadd.f32 %v8555, %v8632
        %v8658 = vadd.f32 %v8556, %v8636
        %v8659 = vadd.f32 %v8557, %v8640
        %v8660 = vadd.f32 %v8558, %v8644
        %v8661 = vadd.f32 %v8559, %v8632
        %v8662 = vadd.f32 %v8560, %v8636
        %v8663 = vadd.f32 %v8561, %v8640
        %v8664 = vadd.f32 %v8562, %v8644
        %v8665 = vadd.f32 %v8563, %v8632
        %v8666 = vadd.f32 %v8564, %v8636
        %v8667 = vadd.f32 %v8565, %v8640
        %v8668 = vadd.f32 %v8566, %v8644
        %v8669 = vadd.f32 %v8567, %v8632
        %v8670 = vadd.f32 %v8568, %v8636
        %v8671 = vadd.f32 %v8569, %v8640
        %v8672 = vadd.f32 %v8570, %v8644
        %v8673 = vadd.f32 %v8571, %v8632
        %v8674 = vadd.f32 %v8572, %v8636
        %v8675 = vadd.f32 %v8573, %v8640
        %v8676 = vadd.f32 %v8574, %v8644
        %v8677 = vadd.f32 %v8575, %v8632
        %v8678 = vadd.f32 %v8576, %v8636
        %v8679 = vadd.f32 %v8577, %v8640
        %v8680 = vadd.f32 %v8578, %v8644
        %v8681 = vadd.f32 %v8579, %v8632
        %v8682 = vadd.f32 %v8580, %v8636
        %v8683 = vadd.f32 %v8581, %v8640
        %v8684 = vadd.f32 %v8582, %v8644
        %v8685 = vadd.f32 %v8583, %v8632
        %v8686 = vadd.f32 %v8584, %v8636
        %v8687 = vadd.f32 %v8585, %v8640
        %v8688 = vadd.f32 %v8586, %v8644
        %v8689 = vadd.f32 %v8587, %v8632
        %v8690 = vadd.f32 %v8588, %v8636
        %v8691 = vadd.f32 %v8589, %v8640
        %v8692 = vadd.f32 %v8590, %v8644
        %v8693 = vadd.f32 %v8591, %v8632
        %v8694 = vadd.f32 %v8592, %v8636
        %v8695 = vadd.f32 %v8593, %v8640
        %v8696 = vadd.f32 %v8594, %v8644
        %v8697 = vadd.f32 %v8595, %v8632
        %v8698 = vadd.f32 %v8596, %v8636
        %v8699 = vadd.f32 %v8597, %v8640
        %v8700 = vadd.f32 %v8598, %v8644
        %v8701 = vadd.f32 %v8599, %v8632
        %v8702 = vadd.f32 %v8600, %v8636
        %v8703 = vadd.f32 %v8601, %v8640
        %v8704 = vadd.f32 %v8602, %v8644
        %v8705 = vadd.f32 %v8603, %v8632
        %v8706 = vadd.f32 %v8604, %v8636
        %v8707 = vadd.f32 %v8605, %v8640
        %v8708 = vadd.f32 %v8606, %v8644
        %v8709 = vadd.f32 %v8607, %v8632
        %v8710 = vadd.f32 %v8608, %v8636
        %v8711 = vadd.f32 %v8609, %v8640
        %v8712 = vadd.f32 %v8610, %v8644
        %v8713 = vadd.f32 %v8611, %v8632
        %v8714 = vadd.f32 %v8612, %v8636
        %v8715 = vadd.f32 %v8613, %v8640
        %v8716 = vadd.f32 %v8614, %v8644
        %v8717 = vadd.f32 %v8615, %v8632
        %v8718 = vadd.f32 %v8616, %v8636
        %v8719 = vadd.f32 %v8617, %v8640
        %v8720 = vadd.f32 %v8618, %v8644
        %v8721 = vadd.f32 %v8619, %v8632
        %v8722 = vadd.f32 %v8620, %v8636
        %v8723 = vadd.f32 %v8621, %v8640
        %v8724 = vadd.f32 %v8622, %v8644
        %v8725 = vadd.f32 %v8623, %v8632
        %v8726 = vadd.f32 %v8624, %v8636
        %v8727 = vadd.f32 %v8625, %v8640
        %v8728 = vadd.f32 %v8626, %v8644
        %v8729 = vmax.f32 %v8649, 0.0
        %v8730 = vmax.f32 %v8650, 0.0
        %v8731 = vmax.f32 %v8651, 0.0
        %v8732 = vmax.f32 %v8652, 0.0
        %v8733 = vmax.f32 %v8653, 0.0
        %v8734 = vmax.f32 %v8654, 0.0
        %v8735 = vmax.f32 %v8655, 0.0
        %v8736 = vmax.f32 %v8656, 0.0
        %v8737 = vmax.f32 %v8657, 0.0
        %v8738 = vmax.f32 %v8658, 0.0
        %v8739 = vmax.f32 %v8659, 0.0
        %v8740 = vmax.f32 %v8660, 0.0
        %v8741 = vmax.f32 %v8661, 0.0
        %v8742 = vmax.f32 %v8662, 0.0
        %v8743 = vmax.f32 %v8663, 0.0
        %v8744 = vmax.f32 %v8664, 0.0
        %v8745 = vmax.f32 %v8665, 0.0
        %v8746 = vmax.f32 %v8666, 0.0
        %v8747 = vmax.f32 %v8667, 0.0
        %v8748 = vmax.f32 %v8668, 0.0
        %v8749 = vmax.f32 %v8669, 0.0
        %v8750 = vmax.f32 %v8670, 0.0
        %v8751 = vmax.f32 %v8671, 0.0
        %v8752 = vmax.f32 %v8672, 0.0
        %v8753 = vmax.f32 %v8673, 0.0
        %v8754 = vmax.f32 %v8674, 0.0
        %v8755 = vmax.f32 %v8675, 0.0
        %v8756 = vmax.f32 %v8676, 0.0
        %v8757 = vmax.f32 %v8677, 0.0
        %v8758 = vmax.f32 %v8678, 0.0
        %v8759 = vmax.f32 %v8679, 0.0
        %v8760 = vmax.f32 %v8680, 0.0
        %v8761 = vmax.f32 %v8681, 0.0
        %v8762 = vmax.f32 %v8682, 0.0
        %v8763 = vmax.f32 %v8683, 0.0
        %v8764 = vmax.f32 %v8684, 0.0
        %v8765 = vmax.f32 %v8685, 0.0
        %v8766 = vmax.f32 %v8686, 0.0
        %v8767 = vmax.f32 %v8687, 0.0
        %v8768 = vmax.f32 %v8688, 0.0
        %v8769 = vmax.f32 %v8689, 0.0
        %v8770 = vmax.f32 %v8690, 0.0
        %v8771 = vmax.f32 %v8691, 0.0
        %v8772 = vmax.f32 %v8692, 0.0
        %v8773 = vmax.f32 %v8693, 0.0
        %v8774 = vmax.f32 %v8694, 0.0
        %v8775 = vmax.f32 %v8695, 0.0
        %v8776 = vmax.f32 %v8696, 0.0
        %v8777 = vmax.f32 %v8697, 0.0
        %v8778 = vmax.f32 %v8698, 0.0
        %v8779 = vmax.f32 %v8699, 0.0
        %v8780 = vmax.f32 %v8700, 0.0
        %v8781 = vmax.f32 %v8701, 0.0
        %v8782 = vmax.f32 %v8702, 0.0
        %v8783 = vmax.f32 %v8703, 0.0
        %v8784 = vmax.f32 %v8704, 0.0
        %v8785 = vmax.f32 %v8705, 0.0
        %v8786 = vmax.f32 %v8706, 0.0
        %v8787 = vmax.f32 %v8707, 0.0
        %v8788 = vmax.f32 %v8708, 0.0
        %v8789 = vmax.f32 %v8709, 0.0
        %v8790 = vmax.f32 %v8710, 0.0
        %v8791 = vmax.f32 %v8711, 0.0
        %v8792 = vmax.f32 %v8712, 0.0
        %v8793 = vmax.f32 %v8713, 0.0
        %v8794 = vmax.f32 %v8714, 0.0
        %v8795 = vmax.f32 %v8715, 0.0
        %v8796 = vmax.f32 %v8716, 0.0
        %v8797 = vmax.f32 %v8717, 0.0
        %v8798 = vmax.f32 %v8718, 0.0
        %v8799 = vmax.f32 %v8719, 0.0
        %v8800 = vmax.f32 %v8720, 0.0
        %v8801 = vmax.f32 %v8721, 0.0
        %v8802 = vmax.f32 %v8722, 0.0
        %v8803 = vmax.f32 %v8723, 0.0
        %v8804 = vmax.f32 %v8724, 0.0
        %v8805 = vmax.f32 %v8725, 0.0
        %v8806 = vmax.f32 %v8726, 0.0
        %v8807 = vmax.f32 %v8727, 0.0
        %v8808 = vmax.f32 %v8728, 0.0
        %v8809 = vld [vmem:[%s2] sm:$0xff]
        %v8810 = vld [vmem:[%s2 + $0x8] sm:$0xff]
        %v8811 = vld [vmem:[%s2 + $0x10] sm:$0xff]
        %v8812 = vld [vmem:[%s2 + $0x18] sm:$0xff]
        %v8813 = vld [vmem:[%s2 + $0x20] sm:$0xff]
        %v8814 = vld [vmem:[%s2 + $0x28] sm:$0xff]
        %v8815 = vld [vmem:[%s2 + $0x30] sm:$0xff]
        %v8816 = vld [vmem:[%s2 + $0x38] sm:$0xff]
        %v8817 = vld [vmem:[%s2 + $0x40] sm:$0xff]
        %v8818 = vld [vmem:[%s2 + $0x48] sm:$0xff]
        %v8819 = vld [vmem:[%s2 + $0x50] sm:$0xff]
        %v8820 = vld [vmem:[%s2 + $0x58] sm:$0xff]
        %v8821 = vld [vmem:[%s2 + $0x60] sm:$0xff]
        %v8822 = vld [vmem:[%s2 + $0x68] sm:$0xff]
        %v8823 = vld [vmem:[%s2 + $0x70] sm:$0xff]
        %v8824 = vld [vmem:[%s2 + $0x78] sm:$0xff]
        %v8825 = vld [vmem:[%s2 + $0x80] sm:$0xff]
        %v8826 = vld [vmem:[%s2 + $0x88] sm:$0xff]
        %v8827 = vld [vmem:[%s2 + $0x90] sm:$0xff]
        %v8828 = vld [vmem:[%s2 + $0x98] sm:$0xff]
        %8830 = vset.pattern.permute.xlu0 0
        %8831 = vperm.xlu0 %8830, %v8809
        %v8832 = vpop.permute.xlu0 %8831
        %8835 = vset.pattern.permute.xlu0 0
        %8836 = vperm.xlu0 %8835, %v8810
        %v8837 = vpop.permute.xlu0 %8836
        %8840 = vset.pattern.permute.xlu0 0
        %8841 = vperm.xlu0 %8840, %v8811
        %v8842 = vpop.permute.xlu0 %8841
        %8845 = vset.pattern.permute.xlu0 0
        %8846 = vperm.xlu0 %8845, %v8812
        %v8847 = vpop.permute.xlu0 %8846
        %8850 = vset.pattern.permute.xlu0 0
        %8851 = vperm.xlu0 %8850, %v8813
        %v8852 = vpop.permute.xlu0 %8851
        %8855 = vset.pattern.permute.xlu0 0
        %8856 = vperm.xlu0 %8855, %v8814
        %v8857 = vpop.permute.xlu0 %8856
        %8860 = vset.pattern.permute.xlu0 0
        %8861 = vperm.xlu0 %8860, %v8815
        %v8862 = vpop.permute.xlu0 %8861
        %8865 = vset.pattern.permute.xlu0 0
        %8866 = vperm.xlu0 %8865, %v8816
        %v8867 = vpop.permute.xlu0 %8866
        %8870 = vset.pattern.permute.xlu0 0
        %8871 = vperm.xlu0 %8870, %v8817
        %v8872 = vpop.permute.xlu0 %8871
        %8875 = vset.pattern.permute.xlu0 0
        %8876 = vperm.xlu0 %8875, %v8818
        %v8877 = vpop.permute.xlu0 %8876
        %8880 = vset.pattern.permute.xlu0 0
        %8881 = vperm.xlu0 %8880, %v8819
        %v8882 = vpop.permute.xlu0 %8881
        %8885 = vset.pattern.permute.xlu0 0
        %8886 = vperm.xlu0 %8885, %v8820
        %v8887 = vpop.permute.xlu0 %8886
        %8890 = vset.pattern.permute.xlu0 0
        %8891 = vperm.xlu0 %8890, %v8821
        %v8892 = vpop.permute.xlu0 %8891
        %8895 = vset.pattern.permute.xlu0 0
        %8896 = vperm.xlu0 %8895, %v8822
        %v8897 = vpop.permute.xlu0 %8896
        %8900 = vset.pattern.permute.xlu0 0
        %8901 = vperm.xlu0 %8900, %v8823
        %v8902 = vpop.permute.xlu0 %8901
        %8905 = vset.pattern.permute.xlu0 0
        %8906 = vperm.xlu0 %8905, %v8824
        %v8907 = vpop.permute.xlu0 %8906
        %8910 = vset.pattern.permute.xlu0 0
        %8911 = vperm.xlu0 %8910, %v8825
        %v8912 = vpop.permute.xlu0 %8911
        %8915 = vset.pattern.permute.xlu0 0
        %8916 = vperm.xlu0 %8915, %v8826
        %v8917 = vpop.permute.xlu0 %8916
        %8920 = vset.pattern.permute.xlu0 0
        %8921 = vperm.xlu0 %8920, %v8827
        %v8922 = vpop.permute.xlu0 %8921
        %8925 = vset.pattern.permute.xlu0 0
        %8926 = vperm.xlu0 %8925, %v8828
        %v8927 = vpop.permute.xlu0 %8926
        %v8929 = vmul.f32 %v8729, %v8832
        %v8930 = vmul.f32 %v8730, %v8832
        %v8931 = vmul.f32 %v8731, %v8832
        %v8932 = vmul.f32 %v8732, %v8832
        %v8933 = vmul.f32 %v8733, %v8837
        %v8934 = vmul.f32 %v8734, %v8837
        %v8935 = vmul.f32 %v8735, %v8837
        %v8936 = vmul.f32 %v8736, %v8837
        %v8937 = vmul.f32 %v8737, %v8842
        %v8938 = vmul.f32 %v8738, %v8842
        %v8939 = vmul.f32 %v8739, %v8842
        %v8940 = vmul.f32 %v8740, %v8842
        %v8941 = vmul.f32 %v8741, %v8847
        %v8942 = vmul.f32 %v8742, %v8847
        %v8943 = vmul.f32 %v8743, %v8847
        %v8944 = vmul.f32 %v8744, %v8847
        %v8945 = vmul.f32 %v8745, %v8852
        %v8946 = vmul.f32 %v8746, %v8852
        %v8947 = vmul.f32 %v8747, %v8852
        %v8948 = vmul.f32 %v8748, %v8852
        %v8949 = vmul.f32 %v8749, %v8857
        %v8950 = vmul.f32 %v8750, %v8857
        %v8951 = vmul.f32 %v8751, %v8857
        %v8952 = vmul.f32 %v8752, %v8857
        %v8953 = vmul.f32 %v8753, %v8862
        %v8954 = vmul.f32 %v8754, %v8862
        %v8955 = vmul.f32 %v8755, %v8862
        %v8956 = vmul.f32 %v8756, %v8862
        %v8957 = vmul.f32 %v8757, %v8867
        %v8958 = vmul.f32 %v8758, %v8867
        %v8959 = vmul.f32 %v8759, %v8867
        %v8960 = vmul.f32 %v8760, %v8867
        %v8961 = vmul.f32 %v8761, %v8872
        %v8962 = vmul.f32 %v8762, %v8872
        %v8963 = vmul.f32 %v8763, %v8872
        %v8964 = vmul.f32 %v8764, %v8872
        %v8965 = vmul.f32 %v8765, %v8877
        %v8966 = vmul.f32 %v8766, %v8877
        %v8967 = vmul.f32 %v8767, %v8877
        %v8968 = vmul.f32 %v8768, %v8877
        %v8969 = vmul.f32 %v8769, %v8882
        %v8970 = vmul.f32 %v8770, %v8882
        %v8971 = vmul.f32 %v8771, %v8882
        %v8972 = vmul.f32 %v8772, %v8882
        %v8973 = vmul.f32 %v8773, %v8887
        %v8974 = vmul.f32 %v8774, %v8887
        %v8975 = vmul.f32 %v8775, %v8887
        %v8976 = vmul.f32 %v8776, %v8887
        %v8977 = vmul.f32 %v8777, %v8892
        %v8978 = vmul.f32 %v8778, %v8892
        %v8979 = vmul.f32 %v8779, %v8892
        %v8980 = vmul.f32 %v8780, %v8892
        %v8981 = vmul.f32 %v8781, %v8897
        %v8982 = vmul.f32 %v8782, %v8897
        %v8983 = vmul.f32 %v8783, %v8897
        %v8984 = vmul.f32 %v8784, %v8897
        %v8985 = vmul.f32 %v8785, %v8902
        %v8986 = vmul.f32 %v8786, %v8902
        %v8987 = vmul.f32 %v8787, %v8902
        %v8988 = vmul.f32 %v8788, %v8902
        %v8989 = vmul.f32 %v8789, %v8907
        %v8990 = vmul.f32 %v8790, %v8907
        %v8991 = vmul.f32 %v8791, %v8907
        %v8992 = vmul.f32 %v8792, %v8907
        %v8993 = vmul.f32 %v8793, %v8912
        %v8994 = vmul.f32 %v8794, %v8912
        %v8995 = vmul.f32 %v8795, %v8912
        %v8996 = vmul.f32 %v8796, %v8912
        %v8997 = vmul.f32 %v8797, %v8917
        %v8998 = vmul.f32 %v8798, %v8917
        %v8999 = vmul.f32 %v8799, %v8917
        %v9000 = vmul.f32 %v8800, %v8917
        %v9001 = vmul.f32 %v8801, %v8922
        %v9002 = vmul.f32 %v8802, %v8922
        %v9003 = vmul.f32 %v8803, %v8922
        %v9004 = vmul.f32 %v8804, %v8922
        %v9005 = vmul.f32 %v8805, %v8927
        %v9006 = vmul.f32 %v8806, %v8927
        %v9007 = vmul.f32 %v8807, %v8927
        %v9008 = vmul.f32 %v8808, %v8927
        %v9009 = vld [vmem:[#allocation4] sm:$0xf]
        %v9010 = vmax.f32 %v8929, %v8933
        %v9011 = vmax.f32 %v9010, %v8937
        %v9012 = vmax.f32 %v9011, %v8941
        %v9013 = vmax.f32 %v9012, %v8945
        %v9014 = vmax.f32 %v9013, %v8949
        %v9015 = vmax.f32 %v9014, %v8953
        %v9016 = vmax.f32 %v9015, %v8957
        %v9017 = vmax.f32 %v9016, %v8961
        %v9018 = vmax.f32 %v9017, %v8965
        %v9019 = vmax.f32 %v9018, %v8969
        %v9020 = vmax.f32 %v9019, %v8973
        %v9021 = vmax.f32 %v9020, %v8977
        %v9022 = vmax.f32 %v9021, %v8981
        %v9023 = vmax.f32 %v9022, %v8985
        %v9024 = vmax.f32 %v9023, %v8989
        %v9025 = vmax.f32 %v9024, %v8993
        %v9026 = vmax.f32 %v9025, %v8997
        %v9027 = vmax.f32 %v9026, %v9001
        %v9028 = vmax.f32 %v9027, %v9005
        %v9029 = vrot.slane %v9028, 4
        %v9030 = vmax.f32 %v9028, %v9029
        %v9031 = vrot.slane %v9030, 2
        %v9032 = vmax.f32 %v9030, %v9031
        %v9033 = vrot.slane %v9032, 1
        %v9034 = vmax.f32 %v9032, %v9033
        %v9035 = vmax.f32 %v8930, %v8934
        %v9036 = vmax.f32 %v9035, %v8938
        %v9037 = vmax.f32 %v9036, %v8942
        %v9038 = vmax.f32 %v9037, %v8946
        %v9039 = vmax.f32 %v9038, %v8950
        %v9040 = vmax.f32 %v9039, %v8954
        %v9041 = vmax.f32 %v9040, %v8958
        %v9042 = vmax.f32 %v9041, %v8962
        %v9043 = vmax.f32 %v9042, %v8966
        %v9044 = vmax.f32 %v9043, %v8970
        %v9045 = vmax.f32 %v9044, %v8974
        %v9046 = vmax.f32 %v9045, %v8978
        %v9047 = vmax.f32 %v9046, %v8982
        %v9048 = vmax.f32 %v9047, %v8986
        %v9049 = vmax.f32 %v9048, %v8990
        %v9050 = vmax.f32 %v9049, %v8994
        %v9051 = vmax.f32 %v9050, %v8998
        %v9052 = vmax.f32 %v9051, %v9002
        %v9053 = vmax.f32 %v9052, %v9006
        %v9054 = vrot.slane %v9053, 4
        %v9055 = vmax.f32 %v9053, %v9054
        %v9056 = vrot.slane %v9055, 2
        %v9057 = vmax.f32 %v9055, %v9056
        %v9058 = vrot.slane %v9057, 1
        %v9059 = vmax.f32 %v9057, %v9058
        %v9060 = vmax.f32 %v8931, %v8935
        %v9061 = vmax.f32 %v9060, %v8939
        %v9062 = vmax.f32 %v9061, %v8943
        %v9063 = vmax.f32 %v9062, %v8947
        %v9064 = vmax.f32 %v9063, %v8951
        %v9065 = vmax.f32 %v9064, %v8955
        %v9066 = vmax.f32 %v9065, %v8959
        %v9067 = vmax.f32 %v9066, %v8963
        %v9068 = vmax.f32 %v9067, %v8967
        %v9069 = vmax.f32 %v9068, %v8971
        %v9070 = vmax.f32 %v9069, %v8975
        %v9071 = vmax.f32 %v9070, %v8979
        %v9072 = vmax.f32 %v9071, %v8983
        %v9073 = vmax.f32 %v9072, %v8987
        %v9074 = vmax.f32 %v9073, %v8991
        %v9075 = vmax.f32 %v9074, %v8995
        %v9076 = vmax.f32 %v9075, %v8999
        %v9077 = vmax.f32 %v9076, %v9003
        %v9078 = vmax.f32 %v9077, %v9007
        %v9079 = vrot.slane %v9078, 4
        %v9080 = vmax.f32 %v9078, %v9079
        %v9081 = vrot.slane %v9080, 2
        %v9082 = vmax.f32 %v9080, %v9081
        %v9083 = vrot.slane %v9082, 1
        %v9084 = vmax.f32 %v9082, %v9083
        %v9085 = vmax.f32 %v8932, %v8936
        %v9086 = vmax.f32 %v9085, %v8940
        %v9087 = vmax.f32 %v9086, %v8944
        %v9088 = vmax.f32 %v9087, %v8948
        %v9089 = vmax.f32 %v9088, %v8952
        %v9090 = vmax.f32 %v9089, %v8956
        %v9091 = vmax.f32 %v9090, %v8960
        %v9092 = vmax.f32 %v9091, %v8964
        %v9093 = vmax.f32 %v9092, %v8968
        %v9094 = vmax.f32 %v9093, %v8972
        %v9095 = vmax.f32 %v9094, %v8976
        %v9096 = vmax.f32 %v9095, %v8980
        %v9097 = vmax.f32 %v9096, %v8984
        %v9098 = vmax.f32 %v9097, %v8988
        %v9099 = vmax.f32 %v9098, %v8992
        %v9100 = vmax.f32 %v9099, %v8996
        %v9101 = vmax.f32 %v9100, %v9000
        %v9102 = vmax.f32 %v9101, %v9004
        %v9103 = vmax.f32 %v9102, %v9008
        %v9104 = vrot.slane %v9103, 4
        %v9105 = vmax.f32 %v9103, %v9104
        %v9106 = vrot.slane %v9105, 2
        %v9107 = vmax.f32 %v9105, %v9106
        %v9108 = vrot.slane %v9107, 1
        %v9109 = vmax.f32 %v9107, %v9108
        %v9114 = vcombine.low %v9034, %v9059
        %v9115 = vcombine.low %v9084, %v9109
        %v9117 = vunpack.c.l.s4 1966171168
        %v9118 = vunpack.c.0.s8 %v9117
        %v9119 = vlaneseq
        %v9120 = vshrl.u32 %v9119, 7
        %v9121 = vsub.s32 %v9118, %v9120
        %v9122 = vrot.slane %v9114, %v9121
        %v9124 = vunpack.c.l.s4 1966171168
        %v9125 = vunpack.c.0.s8 %v9124
        %v9126 = vlaneseq
        %v9127 = vshrl.u32 %v9126, 7
        %v9128 = vsub.s32 %v9125, %v9127
        %v9129 = vrot.slane %v9115, %v9128
        %v9130 = vcombine.low %v9122, %v9129
        %v9132 = vunpack.c.l.s4 1966171168
        %v9133 = vunpack.c.0.s8 %v9132
        %v9134 = vlaneseq
        %v9135 = vshrl.u32 %v9134, 7
        %v9136 = vsub.s32 %v9133, %v9135
        %v9137 = vrot.slane %v9130, %v9136
        %v9139 = vmax.f32 %v9009, %v9137
        %v9140 = vlaneseq
        %vm9141 = vcmp.ge.s32.totalorder %v9140, 0
        %vm9142 = vcmp.lt.s32.totalorder %v9140, 512
        %vm9143 = vmand %vm9141, %vm9142
        %9144 = vst.msk [vmem:[#allocation4] sm:$0xf] %vm9143, %v9139
        %p9145 = scmp.eq.s32.totalorder %s27, 1
        // Predicated region
        $region57: #{camnet_forward.1} parent=51 // pred_check
          %p9146 = pneg %p9145
        $region58: #{camnet_forward.1} parent=51 // pred_check_branch
          %9148 = sbr.rel (%p9146) target = $region60
        $region59: #{camnet_forward.1} parent=51 // pred_region
          %v9149 = vld [vmem:[#allocation4] sm:$0xf]
          %v9150 = vmul.f32 %v9149, %v9149
          %v9152 = vlaneseq
          %v9153 = vshrl.u32 %v9152, 7
          %v9154 = vsub.s32 0, %v9153
          %v9155 = vrot.slane %v9150, %v9154
          %v9156 = vlaneseq
          %v9157 = vshrl.u32 %v9156, 7
          %v9158 = vsub.s32 1, %v9157
          %v9159 = vrot.slane %v9150, %v9158
          %v9160 = vlaneseq
          %v9161 = vshrl.u32 %v9160, 7
          %v9162 = vsub.s32 2, %v9161
          %v9163 = vrot.slane %v9150, %v9162
          %v9164 = vlaneseq
          %v9165 = vshrl.u32 %v9164, 7
          %v9166 = vsub.s32 3, %v9165
          %v9167 = vrot.slane %v9150, %v9166
          %vm9172 = vcmask 1040384
          %v9173 = vsel %vm9172, %v9155, 0.0
          %v9174 = vsel %vm9172, %v9159, 0.0
          %v9175 = vadd.f32 %v9173, %v9174
          %v9176 = vsel %vm9172, %v9163, 0.0
          %v9177 = vadd.f32 %v9175, %v9176
          %v9178 = vsel %vm9172, %v9167, 0.0
          %v9179 = vadd.f32 %v9177, %v9178
          %9180 = vadd.xlane.f32.xlu0 %v9179
          %v9181 = vpop.xlane.xlu0 %9180
          %v9182 = vrsqrt.pop %v9181
          %v9183 = vmul.f32 %v9181, %v9182
          %vm9184 = vcmp.eq.f32.partialorder %v9181, inf
          %v9185 = vsel %vm9184, %v9181, %v9183
          %vm9186 = vcmp.eq.f32.partialorder %v9181, 0.0
          %v9187 = vand.u32 %v9181, 2147483648
          %v9188 = vsel %vm9186, %v9187, %v9185
          %v9189 = vadd.f32 %v9188, 1e-06
          %v9190 = vrcp.pop %v9189
          %v9192 = vlaneseq
          %v9193 = vshrl.u32 %v9192, 7
          %v9194 = vsub.s32 0, %v9193
          %v9195 = vrot.slane %v9190, %v9194
          %v9197 = vmul.f32 %v9149, %v9195
          %v9198 = vld [vmem:[%s7] sm:$0xff]
          %v9199 = vld [vmem:[%s7 + $0x8] sm:$0xff]
          %v9200 = vld [vmem:[%s7 + $0x10] sm:$0xff]
          %v9201 = vld [vmem:[%s7 + $0x18] sm:$0xff]
          %v9202 = vld [vmem:[%s7 + $0x20] sm:$0xff]
          %v9203 = vld [vmem:[%s7 + $0x28] sm:$0xff]
          %v9204 = vld [vmem:[%s7 + $0x30] sm:$0xff]
          %v9205 = vld [vmem:[%s7 + $0x38] sm:$0xff]
          %v9206 = vld [vmem:[%s7 + $0x40] sm:$0xff]
          %v9207 = vld [vmem:[%s7 + $0x48] sm:$0xff]
          %v9208 = vld [vmem:[%s7 + $0x50] sm:$0xff]
          %v9209 = vld [vmem:[%s7 + $0x58] sm:$0xff]
          %v9210 = vld [vmem:[%s7 + $0x60] sm:$0xff]
          %v9211 = vld [vmem:[%s7 + $0x68] sm:$0xff]
          %v9212 = vld [vmem:[%s7 + $0x70] sm:$0xff]
          %v9213 = vld [vmem:[%s7 + $0x78] sm:$0xff]
          %v9214 = vld [vmem:[%s7 + $0x80] sm:$0xff]
          %v9215 = vld [vmem:[%s7 + $0x88] sm:$0xff]
          %v9216 = vld [vmem:[%s7 + $0x90] sm:$0xff]
          %v9217 = vld [vmem:[%s7 + $0x98] sm:$0xff]
          %v9218 = vld [vmem:[%s7 + $0xa0] sm:$0xff]
          %v9219 = vld [vmem:[%s7 + $0xa8] sm:$0xff]
          %v9220 = vld [vmem:[%s7 + $0xb0] sm:$0xff]
          %v9221 = vld [vmem:[%s7 + $0xb8] sm:$0xff]
          %v9222 = vld [vmem:[%s7 + $0xc0] sm:$0xff]
          %v9223 = vld [vmem:[%s7 + $0xc8] sm:$0xff]
          %v9224 = vld [vmem:[%s7 + $0xd0] sm:$0xff]
          %v9225 = vld [vmem:[%s7 + $0xd8] sm:$0xff]
          %v9226 = vld [vmem:[%s7 + $0xe0] sm:$0xff]
          %v9227 = vld [vmem:[%s7 + $0xe8] sm:$0xff]
          %v9228 = vld [vmem:[%s7 + $0xf0] sm:$0xff]
          %v9229 = vld [vmem:[%s7 + $0xf8] sm:$0xff]
          %v9230 = vld [vmem:[%s7 + $0x100] sm:$0xff]
          %v9231 = vld [vmem:[%s7 + $0x108] sm:$0xff]
          %v9232 = vld [vmem:[%s7 + $0x110] sm:$0xff]
          %v9233 = vld [vmem:[%s7 + $0x118] sm:$0xff]
          %v9234 = vld [vmem:[%s7 + $0x120] sm:$0xff]
          %v9235 = vld [vmem:[%s7 + $0x128] sm:$0xff]
          %v9236 = vld [vmem:[%s7 + $0x130] sm:$0xff]
          %v9237 = vld [vmem:[%s7 + $0x138] sm:$0xff]
          %v9238 = vld [vmem:[%s7 + $0x140] sm:$0xff]
          %v9239 = vld [vmem:[%s7 + $0x148] sm:$0xff]
          %v9240 = vld [vmem:[%s7 + $0x150] sm:$0xff]
          %v9241 = vld [vmem:[%s7 + $0x158] sm:$0xff]
          %v9242 = vld [vmem:[%s7 + $0x160] sm:$0xff]
          %v9243 = vld [vmem:[%s7 + $0x168] sm:$0xff]
          %v9244 = vld [vmem:[%s7 + $0x170] sm:$0xff]
          %v9245 = vld [vmem:[%s7 + $0x178] sm:$0xff]
          %v9246 = vld [vmem:[%s7 + $0x180] sm:$0xff]
          %v9247 = vld [vmem:[%s7 + $0x188] sm:$0xff]
          %v9248 = vld [vmem:[%s7 + $0x190] sm:$0xff]
          %v9249 = vld [vmem:[%s7 + $0x198] sm:$0xff]
          %v9250 = vld [vmem:[%s7 + $0x1a0] sm:$0xff]
          %v9251 = vld [vmem:[%s7 + $0x1a8] sm:$0xff]
          %v9252 = vld [vmem:[%s7 + $0x1b0] sm:$0xff]
          %v9253 = vld [vmem:[%s7 + $0x1b8] sm:$0xff]
          %v9254 = vld [vmem:[%s7 + $0x1c0] sm:$0xff]
          %v9255 = vld [vmem:[%s7 + $0x1c8] sm:$0xff]
          %v9256 = vld [vmem:[%s7 + $0x1d0] sm:$0xff]
          %v9257 = vld [vmem:[%s7 + $0x1d8] sm:$0xff]
          %v9258 = vld [vmem:[%s7 + $0x1e0] sm:$0xff]
          %v9259 = vld [vmem:[%s7 + $0x1e8] sm:$0xff]
          %v9260 = vld [vmem:[%s7 + $0x1f0] sm:$0xff]
          %v9261 = vld [vmem:[%s7 + $0x1f8] sm:$0xff]
          %v9263 = vlaneseq
          %v9264 = vshrl.u32 %v9263, 7
          %v9265 = vsub.s32 0, %v9264
          %v9266 = vrot.slane %v9197, %v9265
          %v9267 = vlaneseq
          %v9268 = vshrl.u32 %v9267, 7
          %v9269 = vsub.s32 1, %v9268
          %v9270 = vrot.slane %v9197, %v9269
          %v9271 = vlaneseq
          %v9272 = vshrl.u32 %v9271, 7
          %v9273 = vsub.s32 2, %v9272
          %v9274 = vrot.slane %v9197, %v9273
          %v9275 = vlaneseq
          %v9276 = vshrl.u32 %v9275, 7
          %v9277 = vsub.s32 3, %v9276
          %v9278 = vrot.slane %v9197, %v9277
          %9283 = vmatprep.subr.mxu0 0.0
          %9284 = vmatpush1.msra.mxu0 %v9198
          %9285 = vmatprep.subr.mxu0 0.0
          %9286 = vmatpush1.msra.mxu0 %v9199
          %9287 = vmatprep.subr.mxu0 0.0
          %9288 = vmatpush1.msra.mxu0 %v9200
          %9289 = vmatprep.subr.mxu0 0.0
          %9290 = vmatpush1.msra.mxu0 %v9201
          %9291 = vmatprep.subr.mxu0 0.0
          %9292 = vmatpush1.msra.mxu0 %v9202
          %9293 = vmatprep.subr.mxu0 0.0
          %9294 = vmatpush1.msra.mxu0 %v9203
          %9295 = vmatprep.subr.mxu0 0.0
          %9296 = vmatpush1.msra.mxu0 %v9204
          %9297 = vmatprep.subr.mxu0 0.0
          %9298 = vmatpush1.msra.mxu0 %v9205
          %9299 = vmatprep.subr.mxu0 0.0
          %9300 = vmatpush1.msra.mxu0 %v9206
          %9301 = vmatprep.subr.mxu0 0.0
          %9302 = vmatpush1.msra.mxu0 %v9207
          %9303 = vmatprep.subr.mxu0 0.0
          %9304 = vmatpush1.msra.mxu0 %v9208
          %9305 = vmatprep.subr.mxu0 0.0
          %9306 = vmatpush1.msra.mxu0 %v9209
          %9307 = vmatprep.subr.mxu0 0.0
          %9308 = vmatpush1.msra.mxu0 %v9210
          %9309 = vmatprep.subr.mxu0 0.0
          %9310 = vmatpush1.msra.mxu0 %v9211
          %9311 = vmatprep.subr.mxu0 0.0
          %9312 = vmatpush1.msra.mxu0 %v9212
          %9313 = vmatprep.subr.mxu0 0.0
          %9314 = vmatpush1.msra.mxu0 %v9213
          %9315 = vmatprep.subr.mxu0 0.0
          %9316 = vmatpush1.msra.mxu0 %v9214
          %9317 = vmatprep.subr.mxu0 0.0
          %9318 = vmatpush1.msra.mxu0 %v9215
          %9319 = vmatprep.subr.mxu0 0.0
          %9320 = vmatpush1.msra.mxu0 %v9216
          %9321 = vmatprep.subr.mxu0 0.0
          %9322 = vmatpush1.msra.mxu0 %v9217
          %9323 = vmatprep.subr.mxu0 0.0
          %9324 = vmatpush1.msra.mxu0 %v9218
          %9325 = vmatprep.subr.mxu0 0.0
          %9326 = vmatpush1.msra.mxu0 %v9219
          %9327 = vmatprep.subr.mxu0 0.0
          %9328 = vmatpush1.msra.mxu0 %v9220
          %9329 = vmatprep.subr.mxu0 0.0
          %9330 = vmatpush1.msra.mxu0 %v9221
          %9331 = vmatprep.subr.mxu0 0.0
          %9332 = vmatpush1.msra.mxu0 %v9222
          %9333 = vmatprep.subr.mxu0 0.0
          %9334 = vmatpush1.msra.mxu0 %v9223
          %9335 = vmatprep.subr.mxu0 0.0
          %9336 = vmatpush1.msra.mxu0 %v9224
          %9337 = vmatprep.subr.mxu0 0.0
          %9338 = vmatpush1.msra.mxu0 %v9225
          %9339 = vmatprep.subr.mxu0 0.0
          %9340 = vmatpush1.msra.mxu0 %v9226
          %9341 = vmatprep.subr.mxu0 0.0
          %9342 = vmatpush1.msra.mxu0 %v9227
          %9343 = vmatprep.subr.mxu0 0.0
          %9344 = vmatpush1.msra.mxu0 %v9228
          %9345 = vmatprep.subr.mxu0 0.0
          %9346 = vmatpush1.msra.mxu0 %v9229
          %9347 = vmatprep.mubr.f32.mxu0 %v9270
          %9348 = vmatmul.mubr.f32.gmra.mrb[0].mxu0 %v9266
          %v9349 = vpop.f32.mrb[0].mxu0
          %v9350 = vadd.f32 0.0, %v9349
          %v9351 = vpop.f32.mrb[0].mxu0
          %9352 = vdwg.mxu0
          %9353 = vmatprep.subr.mxu0 0.0
          %9354 = vmatpush1.msra.mxu0 %v9230
          %9355 = vmatprep.subr.mxu0 0.0
          %9356 = vmatpush1.msra.mxu0 %v9231
          %9357 = vmatprep.subr.mxu0 0.0
          %9358 = vmatpush1.msra.mxu0 %v9232
          %9359 = vmatprep.subr.mxu0 0.0
          %9360 = vmatpush1.msra.mxu0 %v9233
          %9361 = vmatprep.subr.mxu0 0.0
          %9362 = vmatpush1.msra.mxu0 %v9234
          %9363 = vmatprep.subr.mxu0 0.0
          %9364 = vmatpush1.msra.mxu0 %v9235
          %9365 = vmatprep.subr.mxu0 0.0
          %9366 = vmatpush1.msra.mxu0 %v9236
          %9367 = vmatprep.subr.mxu0 0.0
          %9368 = vmatpush1.msra.mxu0 %v9237
          %9369 = vmatprep.subr.mxu0 0.0
          %9370 = vmatpush1.msra.mxu0 %v9238
          %9371 = vmatprep.subr.mxu0 0.0
          %9372 = vmatpush1.msra.mxu0 %v9239
          %9373 = vmatprep.subr.mxu0 0.0
          %9374 = vmatpush1.msra.mxu0 %v9240
          %9375 = vmatprep.subr.mxu0 0.0
          %9376 = vmatpush1.msra.mxu0 %v9241
          %9377 = vmatprep.subr.mxu0 0.0
          %9378 = vmatpush1.msra.mxu0 %v9242
          %9379 = vmatprep.subr.mxu0 0.0
          %9380 = vmatpush1.msra.mxu0 %v9243
          %9381 = vmatprep.subr.mxu0 0.0
          %9382 = vmatpush1.msra.mxu0 %v9244
          %9383 = vmatprep.subr.mxu0 0.0
          %9384 = vmatpush1.msra.mxu0 %v9245
          %9385 = vmatprep.subr.mxu0 0.0
          %9386 = vmatpush1.msra.mxu0 %v9246
          %9387 = vmatprep.subr.mxu0 0.0
          %9388 = vmatpush1.msra.mxu0 %v9247
          %9389 = vmatprep.subr.mxu0 0.0
          %9390 = vmatpush1.msra.mxu0 %v9248
          %9391 = vmatprep.subr.mxu0 0.0
          %9392 = vmatpush1.msra.mxu0 %v9249
          %9393 = vmatprep.subr.mxu0 0.0
          %9394 = vmatpush1.msra.mxu0 %v9250
          %9395 = vmatprep.subr.mxu0 0.0
          %9396 = vmatpush1.msra.mxu0 %v9251
          %9397 = vmatprep.subr.mxu0 0.0
          %9398 = vmatpush1.msra.mxu0 %v9252
          %9399 = vmatprep.subr.mxu0 0.0
          %9400 = vmatpush1.msra.mxu0 %v9253
          %9401 = vmatprep.subr.mxu0 0.0
          %9402 = vmatpush1.msra.mxu0 %v9254
          %9403 = vmatprep.subr.mxu0 0.0
          %9404 = vmatpush1.msra.mxu0 %v9255
          %9405 = vmatprep.subr.mxu0 0.0
          %9406 = vmatpush1.msra.mxu0 %v9256
          %9407 = vmatprep.subr.mxu0 0.0
          %9408 = vmatpush1.msra.mxu0 %v9257
          %9409 = vmatprep.subr.mxu0 0.0
          %9410 = vmatpush1.msra.mxu0 %v9258
          %9411 = vmatprep.subr.mxu0 0.0
          %9412 = vmatpush1.msra.mxu0 %v9259
          %9413 = vmatprep.subr.mxu0 0.0
          %9414 = vmatpush1.msra.mxu0 %v9260
          %9415 = vmatprep.subr.mxu0 0.0
          %9416 = vmatpush1.msra.mxu0 %v9261
          %9417 = vmatprep.mubr.f32.mxu0 %v9278
          %9418 = vmatmul.mubr.f32.gmra.mrb[0].mxu0 %v9274
          %v9419 = vpop.f32.mrb[0].mxu0
          %v9420 = vadd.f32 %v9350, %v9419
          %v9421 = vpop.f32.mrb[0].mxu0
          %9422 = vdwg.mxu0
          %vm9423 = vcmask 73728
          %9424 = vst.msk [vmem:[%s309] sm:$0x1] %vm9423, %v9420
        $region60: #{camnet_forward.1} parent=51 // pred_fallthru
          _
        %s9425 = sand.u32 %s215, 1
        %s9426 = scalar_lea.sflag [#allocation6], %s9425
        %s9427 = sand.u32 %s215, 1
        %s9428 = scalar_lea.vmem [#allocation5], %s9427
        // Predicated region
        $region61: #{camnet_forward.1} parent=51 // pred_check
          %p9429 = pneg %p225
        $region62: #{camnet_forward.1} parent=51 // pred_check_branch
          %9431 = sbr.rel (%p9429) target = $region64
        $region63: #{camnet_forward.1} parent=51 // pred_region
          %s9433 = ssub.s32 16, 16
          %9434 = vsyncadd %s9426, %s9433
          %s9435 = smul.addr %s26, 16
          %s9436 = scalar_lea.hbm %s8, %s9435
          %s9438 = sshll.u32 %s9428, 4
          %s9439 = int_to_ptr.vmem [resolvable:$true] %s9438
          %9441 = dma.vmem_to_hbm [thread:$0]  %s9439, 16, %s9436, %s9426
        $region64: #{camnet_forward.1} parent=51 // pred_fallthru
          _
      $region52: #{camnet_forward.1} parent=5 // pred_fallthru
        _
      %p9442 = scmp.le.s32.totalorder 2, %s17
      // Predicated region
      $region65: #{camnet_forward.1} parent=5 // pred_check
        %p9443 = pneg %p9442
      $region66: #{camnet_forward.1} parent=5 // pred_check_branch
        %9445 = sbr.rel (%p9443) target = $region68
      $region67: #{camnet_forward.1} parent=5 // pred_region
        %s9446 = ssub.s32 %s17, 2
        // Predicated region
        $region69: #{camnet_forward.1} parent=67 // pred_check
          %p9447 = pneg %p231
        $region70: #{camnet_forward.1} parent=67 // pred_check_branch
          %9449 = sbr.rel (%p9447) target = $region72
        $region71: #{camnet_forward.1} parent=67 // pred_region
          %s9450 = sand.u32 %s216, 1
          %s9451 = scalar_lea.sflag [#allocation6], %s9450
          %s9452 = sand.u32 %s216, 1
          %s9453 = scalar_lea.vmem [#allocation5], %s9452
          %9454 = dma.done %s9451, 16
        $region72: #{camnet_forward.1} parent=67 // pred_fallthru
          _
      $region68: #{camnet_forward.1} parent=5 // pred_fallthru
        _
    $region6: #{camnet_forward.1} parent=1 // loop_footer
      %s21 = sadd.s32 1, %s17
    $region7: #{camnet_forward.1} parent=1 // loop_footer_branch
      %16 = sbr.rel target = $region3
    $region8: #{camnet_forward.1} parent=1 // loop_exit
      _
    %9455 = vsyncpa [#allocation6], 1
    %s9456 = scalar_lea.sflag [#allocation6], 1
    %9457 = vsyncpa %s9456, 1

</llo_original>
